<compile_context>
chip_gen: v7x
topology: tpu7x:2x2x1
jax: 0.10.0
libtpu: 0.0.40
codegen_flags: <defaults>
</compile_context>

<pallas_src>
import jax
import jax.numpy as jnp
from jax.experimental import pallas as pl
from jax.experimental.pallas import tpu as pltpu

HIDDEN = 32 * 32  # 1024, matches nn.Linear(inputs_count, 32*32) etc.
LANES = 128       # TPU lane width; final-layer output padded to a multiple of this.


def _mlp_kernel(x_ref, w1_ref, b1_ref, w2_ref, b2_ref, w3_ref, b3_ref, o_ref):
    """Fused 3-layer MLP on one batch tile: ReLU(ReLU(x@W1+b1)@W2+b2)@W3+b3.

    Weights arrive in bf16 (MXU-native). Matmuls accumulate in f32; bias add is f32;
    inter-layer activations are stored bf16 (halves VMEM scratch / VPU traffic).
    """
    x = x_ref[...].astype(jnp.bfloat16)                       # (TB, D_in) bf16 for the MXU

    h1 = jnp.dot(x, w1_ref[...], preferred_element_type=jnp.float32)
    h1 = jnp.maximum(h1 + b1_ref[...], 0.0).astype(jnp.bfloat16)   # bias+ReLU, keep bf16

    h2 = jnp.dot(h1, w2_ref[...], preferred_element_type=jnp.float32)
    h2 = jnp.maximum(h2 + b2_ref[...], 0.0).astype(jnp.bfloat16)

    out = jnp.dot(h2, w3_ref[...], preferred_element_type=jnp.float32)
    out = out + b3_ref[...]                                   # no activation on final layer
    o_ref[...] = out.astype(o_ref.dtype)                      # lane-dense (TB, n_pad) store


def regular_network_forward(x, params, *, tile_b=512):
    """Forward pass of RegularNetwork.

    Args:
      x: input array [B, ...]; flattened to [B, inputs_count] (nn.Flatten()).
         Ingested in its native dtype (bf16 input avoids any upcast traffic).
      params: dict with w1 [D_in,1024], b1 [1024], w2 [1024,1024], b2 [1024],
              w3 [1024,D_out], b3 [D_out]  (float32).
    Returns:
      logits [B, D_out] float32.
    """
    b = x.shape[0]
    x2d = x.reshape(b, -1)                                    # nn.Flatten(), keep caller dtype
    d_in = x2d.shape[1]

    # --- Parameter prep: bf16 weights, f32 biases, lane-dense padded output layer ---
    w1 = params["w1"].astype(jnp.bfloat16)
    w2 = params["w2"].astype(jnp.bfloat16)
    w3 = params["w3"].astype(jnp.float32)
    d_out = w3.shape[1]
    n_pad = ((d_out + LANES - 1) // LANES) * LANES            # pad N to multiple of 128 lanes
    w3p = jnp.zeros((HIDDEN, n_pad), jnp.float32).at[:, :d_out].set(w3).astype(jnp.bfloat16)

    b1 = params["b1"].reshape(1, -1).astype(jnp.float32)
    b2 = params["b2"].reshape(1, -1).astype(jnp.float32)
    b3p = jnp.zeros((1, n_pad), jnp.float32).at[0, :d_out].set(params["b3"].astype(jnp.float32))

    # --- Batch tiling: prefer a tile that divides B (avoids a full-array pad pass) ---
    if b <= tile_b:
        tb = max(8, ((b + 7) // 8) * 8)                       # single tile, sublane-aligned
        b_pad = tb
    else:
        tb = 0
        for cand in range(tile_b, 63, -8):                    # largest divisor tile, mult. of 8
            if b % cand == 0:
                tb = cand
                break
        if tb == 0:                                           # no divisor found: minimal pad
            tb = tile_b
            b_pad = ((b + tb - 1) // tb) * tb
        else:
            b_pad = b
    if b_pad != b:
        x2d = jnp.pad(x2d, ((0, b_pad - b), (0, 0)))

    grid = (b_pad // tb,)
    resident = pl.Buffered(1)                                 # weights/biases: single VMEM buffer

    out = pl.pallas_call(
        _mlp_kernel,
        out_shape=jax.ShapeDtypeStruct((b_pad, n_pad), jnp.float32),
        grid=grid,
        in_specs=[
            # x: tiled over batch, default double-buffering (pipelined).
            pl.BlockSpec((tb, d_in), lambda i: (i, 0)),
            # Weights & biases: constant index_map + single buffer -> VMEM-resident,
            # DMA'd once per call, no wasted second buffer.
            pl.BlockSpec((d_in, HIDDEN), lambda i: (0, 0), pipeline_mode=resident),
            pl.BlockSpec((1, HIDDEN), lambda i: (0, 0), pipeline_mode=resident),
            pl.BlockSpec((HIDDEN, HIDDEN), lambda i: (0, 0), pipeline_mode=resident),
            pl.BlockSpec((1, HIDDEN), lambda i: (0, 0), pipeline_mode=resident),
            pl.BlockSpec((HIDDEN, n_pad), lambda i: (0, 0), pipeline_mode=resident),
            pl.BlockSpec((1, n_pad), lambda i: (0, 0), pipeline_mode=resident),
        ],
        out_specs=pl.BlockSpec((tb, n_pad), lambda i: (i, 0)),
        compiler_params=pltpu.CompilerParams(
            dimension_semantics=("parallel",),                # batch tiles across v7x TCs
            # VMEM budget @ TB=512, d_in=1024: x 2x2 MiB (f32) + weights ~4.25 MiB (bf16,
            # single-buffered) + out 2x0.25 MiB + h1/h2 scratch ~3-4 MiB  ->  ~13 MiB.
            # 48 MiB gives headroom yet stays under v7x's 64 MiB physical VMEM per TC.
            vmem_limit_bytes=48 << 20,
        ),
    )(x2d, w1, b1, w2, b2, w3p, b3p)

    return out[:b, :d_out]


def init_params(key, inputs_count, outputs_count):
    """Deterministic init mimicking torch.nn.Linear default (U[-1/sqrt(fan_in), 1/sqrt(fan_in)])."""
    def linear(k, fan_in, fan_out):
        kw, kb = jax.random.split(k)
        bound = 1.0 / jnp.sqrt(jnp.float32(fan_in))
        w = jax.random.uniform(kw, (fan_in, fan_out), jnp.float32, -bound, bound)
        b = jax.random.uniform(kb, (fan_out,), jnp.float32, -bound, bound)
        return w, b

    k1, k2, k3 = jax.random.split(key, 3)
    w1, b1 = linear(k1, inputs_count, HIDDEN)
    w2, b2 = linear(k2, HIDDEN, HIDDEN)
    w3, b3 = linear(k3, HIDDEN, outputs_count)
    return {"w1": w1, "b1": b1, "w2": w2, "b2": b2, "w3": w3, "b3": b3}


if __name__ == "__main__":
    key = jax.random.PRNGKey(0)
    k_x, k_p = jax.random.split(key)

    # Input in NCHW; flatten -> inputs_count = 4*16*16 = 1024 features.
    B, C, H, W = 2, 4, 16, 16
    inputs_count = C * H * W
    outputs_count = 10

    x = jax.random.normal(k_x, (B, C, H, W), jnp.float32)
    params = init_params(k_p, inputs_count, outputs_count)

    out = regular_network_forward(x, params)
    out = jax.block_until_ready(out)

    # Pure-JAX f32 reference (kernel uses bf16 weights/activations -> relaxed tolerance).
    x2d = x.reshape(B, -1)
    h1 = jnp.maximum(x2d @ params["w1"] + params["b1"], 0.0)
    h2 = jnp.maximum(h1 @ params["w2"] + params["b2"], 0.0)
    ref = h2 @ params["w3"] + params["b3"]

    assert out.shape == (B, outputs_count)
    assert jnp.allclose(out, ref, atol=5e-2, rtol=5e-2), (
        f"max abs err {jnp.max(jnp.abs(out - ref))}")

    print("KERNEL_OK")
</pallas_src>

<mosaic_0001>
module attributes {stable_mosaic.version = 11 : i64} {
  func.func @_mlp_kernel(%arg0: i32, %arg1: memref<8x1024xf32, #tpu.memory_space<vmem>>, %arg2: memref<1024x1024xbf16, #tpu.memory_space<vmem>>, %arg3: memref<1x1024xf32, #tpu.memory_space<vmem>>, %arg4: memref<1024x1024xbf16, #tpu.memory_space<vmem>>, %arg5: memref<1x1024xf32, #tpu.memory_space<vmem>>, %arg6: memref<1024x128xbf16, #tpu.memory_space<vmem>>, %arg7: memref<1x128xf32, #tpu.memory_space<vmem>>, %arg8: memref<8x128xf32, #tpu.memory_space<vmem>>) attributes {dimension_semantics = [#tpu.dimension_semantics<parallel>], iteration_bounds = array<i64: 1>, scalar_prefetch = 0 : i64, scratch_operands = 0 : i64, tpu.core_type = #tpu.core_type<tc>, window_params = [{transform_indices = @transform_0, window_bounds = array<i64: 8, 1024>}, {pipeline_mode = #tpu.pipeline_mode<synchronous>, transform_indices = @transform_1, window_bounds = array<i64: 1024, 1024>}, {pipeline_mode = #tpu.pipeline_mode<synchronous>, transform_indices = @transform_2, window_bounds = array<i64: 1, 1024>}, {pipeline_mode = #tpu.pipeline_mode<synchronous>, transform_indices = @transform_3, window_bounds = array<i64: 1024, 1024>}, {pipeline_mode = #tpu.pipeline_mode<synchronous>, transform_indices = @transform_4, window_bounds = array<i64: 1, 1024>}, {pipeline_mode = #tpu.pipeline_mode<synchronous>, transform_indices = @transform_5, window_bounds = array<i64: 1024, 128>}, {pipeline_mode = #tpu.pipeline_mode<synchronous>, transform_indices = @transform_6, window_bounds = array<i64: 1, 128>}, {transform_indices = @transform_7, window_bounds = array<i64: 8, 128>}]} {
    %c0 = arith.constant 0 : index
    %c0_0 = arith.constant 0 : index
    %0 = vector.load %arg1[%c0, %c0_0] : memref<8x1024xf32, #tpu.memory_space<vmem>>, vector<8x1024xf32>
    %1 = arith.truncf %0 : vector<8x1024xf32> to vector<8x1024xbf16>
    %c0_1 = arith.constant 0 : index
    %c0_2 = arith.constant 0 : index
    %2 = vector.load %arg2[%c0_1, %c0_2] : memref<1024x1024xbf16, #tpu.memory_space<vmem>>, vector<1024x1024xbf16>
    %cst = arith.constant dense<0.000000e+00> : vector<8x1024xf32>
    %3 = tpu.matmul %1, %2, %cst {dimension_numbers = #tpu.dot_dimension_numbers<[1], [0], [0], [1], [0, 0, 1, 1], [], []>} : vector<8x1024xbf16>, vector<1024x1024xbf16>, vector<8x1024xf32> -> vector<8x1024xf32>
    %c0_3 = arith.constant 0 : index
    %c0_4 = arith.constant 0 : index
    %4 = vector.load %arg3[%c0_3, %c0_4] : memref<1x1024xf32, #tpu.memory_space<vmem>>, vector<1x1024xf32>
    %5 = vector.broadcast %4 : vector<1x1024xf32> to vector<8x1024xf32>
    %6 = arith.addf %3, %5 : vector<8x1024xf32>
    %cst_5 = arith.constant 0.000000e+00 : f32
    %7 = vector.broadcast %cst_5 : f32 to vector<8x1024xf32>
    %8 = arith.maximumf %6, %7 : vector<8x1024xf32>
    %9 = arith.truncf %8 : vector<8x1024xf32> to vector<8x1024xbf16>
    %c0_6 = arith.constant 0 : index
    %c0_7 = arith.constant 0 : index
    %10 = vector.load %arg4[%c0_6, %c0_7] : memref<1024x1024xbf16, #tpu.memory_space<vmem>>, vector<1024x1024xbf16>
    %cst_8 = arith.constant dense<0.000000e+00> : vector<8x1024xf32>
    %11 = tpu.matmul %9, %10, %cst_8 {dimension_numbers = #tpu.dot_dimension_numbers<[1], [0], [0], [1], [0, 0, 1, 1], [], []>} : vector<8x1024xbf16>, vector<1024x1024xbf16>, vector<8x1024xf32> -> vector<8x1024xf32>
    %c0_9 = arith.constant 0 : index
    %c0_10 = arith.constant 0 : index
    %12 = vector.load %arg5[%c0_9, %c0_10] : memref<1x1024xf32, #tpu.memory_space<vmem>>, vector<1x1024xf32>
    %13 = vector.broadcast %12 : vector<1x1024xf32> to vector<8x1024xf32>
    %14 = arith.addf %11, %13 : vector<8x1024xf32>
    %cst_11 = arith.constant 0.000000e+00 : f32
    %15 = vector.broadcast %cst_11 : f32 to vector<8x1024xf32>
    %16 = arith.maximumf %14, %15 : vector<8x1024xf32>
    %17 = arith.truncf %16 : vector<8x1024xf32> to vector<8x1024xbf16>
    %c0_12 = arith.constant 0 : index
    %c0_13 = arith.constant 0 : index
    %18 = vector.load %arg6[%c0_12, %c0_13] : memref<1024x128xbf16, #tpu.memory_space<vmem>>, vector<1024x128xbf16>
    %cst_14 = arith.constant dense<0.000000e+00> : vector<8x128xf32>
    %19 = tpu.matmul %17, %18, %cst_14 {dimension_numbers = #tpu.dot_dimension_numbers<[1], [0], [0], [1], [0, 0, 1, 1], [], []>} : vector<8x1024xbf16>, vector<1024x128xbf16>, vector<8x128xf32> -> vector<8x128xf32>
    %c0_15 = arith.constant 0 : index
    %c0_16 = arith.constant 0 : index
    %20 = vector.load %arg7[%c0_15, %c0_16] : memref<1x128xf32, #tpu.memory_space<vmem>>, vector<1x128xf32>
    %21 = vector.broadcast %20 : vector<1x128xf32> to vector<8x128xf32>
    %22 = arith.addf %19, %21 : vector<8x128xf32>
    %c0_17 = arith.constant 0 : index
    %c0_18 = arith.constant 0 : index
    %23 = vector.load %arg8[%c0_17, %c0_18] : memref<8x128xf32, #tpu.memory_space<vmem>>, vector<8x128xf32>
    tpu.vector_store %arg8[%c0_17, %c0_18], %22 {strides = array<i32>} : memref<8x128xf32, #tpu.memory_space<vmem>>, vector<8x128xf32>,
    return
  }
  func.func @transform_0(%arg0: i32) -> (i32, i32) {
    %c0_i32 = arith.constant 0 : i32
    %c0_i32_0 = arith.constant 0 : i32
    return %arg0, %c0_i32 : i32, i32
  }
  func.func @transform_1(%arg0: i32) -> (i32, i32) {
    %c0_i32 = arith.constant 0 : i32
    %c0_i32_0 = arith.constant 0 : i32
    %c0_i32_1 = arith.constant 0 : i32
    return %c0_i32, %c0_i32_0 : i32, i32
  }
  func.func @transform_2(%arg0: i32) -> (i32, i32) {
    %c0_i32 = arith.constant 0 : i32
    %c0_i32_0 = arith.constant 0 : i32
    %c0_i32_1 = arith.constant 0 : i32
    return %c0_i32, %c0_i32_0 : i32, i32
  }
  func.func @transform_3(%arg0: i32) -> (i32, i32) {
    %c0_i32 = arith.constant 0 : i32
    %c0_i32_0 = arith.constant 0 : i32
    %c0_i32_1 = arith.constant 0 : i32
    return %c0_i32, %c0_i32_0 : i32, i32
  }
  func.func @transform_4(%arg0: i32) -> (i32, i32) {
    %c0_i32 = arith.constant 0 : i32
    %c0_i32_0 = arith.constant 0 : i32
    %c0_i32_1 = arith.constant 0 : i32
    return %c0_i32, %c0_i32_0 : i32, i32
  }
  func.func @transform_5(%arg0: i32) -> (i32, i32) {
    %c0_i32 = arith.constant 0 : i32
    %c0_i32_0 = arith.constant 0 : i32
    %c0_i32_1 = arith.constant 0 : i32
    return %c0_i32, %c0_i32_0 : i32, i32
  }
  func.func @transform_6(%arg0: i32) -> (i32, i32) {
    %c0_i32 = arith.constant 0 : i32
    %c0_i32_0 = arith.constant 0 : i32
    %c0_i32_1 = arith.constant 0 : i32
    return %c0_i32, %c0_i32_0 : i32, i32
  }
  func.func @transform_7(%arg0: i32) -> (i32, i32) {
    %c0_i32 = arith.constant 0 : i32
    %c0_i32_0 = arith.constant 0 : i32
    return %arg0, %c0_i32 : i32, i32
  }
}

</mosaic_0001>

<llo_original>
// kernel: tpu_custom_call.1
$region0: #{tpu_custom_call.1}
  #allocation0 [shape = 'u32[]', space=smem, size = 0x4, offset = 0x4, fixed_abs, tag = 'smem constant byte address 0x4 - core index']
  #allocation1 [shape = 'u32[144,128]{1,0:T(1,128)}', space=vmem, size = 0x12000, scoped, tag = 'internal scratch']
  %s0 = inlined_call_operand.hbm [shape: f32[8,1024], index: 0, kind: input, shape index: {}]
  %s1 = inlined_call_operand.hbm [shape: bf16[1024,1024], index: 1, kind: input, shape index: {}]
  %s2 = inlined_call_operand.hbm [shape: f32[1,1024], index: 2, kind: input, shape index: {}]
  %s3 = inlined_call_operand.hbm [shape: bf16[1024,1024], index: 3, kind: input, shape index: {}]
  %s4 = inlined_call_operand.hbm [shape: f32[1,1024], index: 4, kind: input, shape index: {}]
  %s5 = inlined_call_operand.hbm [shape: bf16[1024,128], index: 5, kind: input, shape index: {}]
  %s6 = inlined_call_operand.hbm [shape: f32[1,128], index: 6, kind: input, shape index: {}]
  %s7 = inlined_call_operand.hbm [shape: f32[8,128], index: 7, kind: output, shape index: {}]
  %s8 = sld [smem:[#allocation0]]
  $region66: #{tpu_custom_call.1} parent=0
    _
  %s10 = ssub.s32 1, %s8
  %s11 = scalar_select 0, %s10, %s8
  $region1: #{tpu_custom_call.1} parent=0
    #allocation2 [shape = 'u8[32768]{0}', space=vmem, size = 0x8000, scoped, tag = 'input window, operand 0, single buffered']
    #allocation3 [shape = 's32[1]{0}', space=sflag, size = 0x4, scoped, tag = 'scoped memory for tpu_custom_call.1']
    #allocation4 [shape = 's32[1]{0}', space=sflag, size = 0x4, scoped, tag = 'scoped memory for tpu_custom_call.1']
    #allocation5 [shape = 'u8[2097152]{0}', space=vmem, size = 0x200000, scoped, tag = 'input window, operand 1, single buffered']
    #allocation6 [shape = 's32[1]{0}', space=sflag, size = 0x4, scoped, tag = 'scoped memory for tpu_custom_call.1']
    #allocation7 [shape = 'u8[4096]{0}', space=vmem, size = 0x1000, scoped, tag = 'input window, operand 2, single buffered']
    #allocation8 [shape = 'u8[2097152]{0}', space=vmem, size = 0x200000, scoped, tag = 'input window, operand 3, single buffered']
    #allocation9 [shape = 's32[1]{0}', space=sflag, size = 0x4, scoped, tag = 'scoped memory for tpu_custom_call.1']
    #allocation10 [shape = 'u8[4096]{0}', space=vmem, size = 0x1000, scoped, tag = 'input window, operand 4, single buffered']
    #allocation11 [shape = 'u8[262144]{0}', space=vmem, size = 0x40000, scoped, tag = 'input window, operand 5, single buffered']
    #allocation12 [shape = 's32[1]{0}', space=sflag, size = 0x4, scoped, tag = 'scoped memory for tpu_custom_call.1']
    #allocation13 [shape = 'u8[512]{0}', space=vmem, size = 0x400, scoped, tag = 'input window, operand 6, single buffered']
    #allocation14 [shape = 'u8[4096]{0}', space=vmem, size = 0x1000, scoped, tag = 'output window, operand 0, single buffered']
    %12 = vsyncpa [#allocation3], 0
    %13 = vsyncpa [#allocation6], 0
    %14 = vsyncpa [#allocation9], 0
    %15 = vsyncpa [#allocation12], 0
    %16 = vsyncpa [#allocation4], 0
    // Predicated region
    $region2: #{tpu_custom_call.1} parent=1 // pred_check
      _
    $region3: #{tpu_custom_call.1} parent=1 // pred_check_branch
      %18 = sbr.rel (0) target = $region5
    $region4: #{tpu_custom_call.1} parent=1 // pred_region
      %s20 = ssub.s32 1024, 1024
      %21 = vsyncadd [#allocation3], %s20
      %s23 = sshll.u32 [#allocation2], 4
      %s24 = int_to_ptr.vmem [resolvable:$true] %s23
      %26 = dma.hbm_to_vmem [thread:$0]  %s0, 1024, %s24, [#allocation3]
    $region5: #{tpu_custom_call.1} parent=1 // pred_fallthru
      _
    // Predicated region
    $region6: #{tpu_custom_call.1} parent=1 // pred_check
      _
    $region7: #{tpu_custom_call.1} parent=1 // pred_check_branch
      %28 = sbr.rel (0) target = $region9
    $region8: #{tpu_custom_call.1} parent=1 // pred_region
      %s30 = ssub.s32 65536, 65536
      %31 = vsyncadd [#allocation6], %s30
      %s32 = sshll.u32 [#allocation5], 4
      %s33 = int_to_ptr.vmem [resolvable:$true] %s32
      %38 = dma.hbm_to_vmem [thread:$0]  %s1, 65536, %s33, [#allocation6], 512, 512, 32
    $region9: #{tpu_custom_call.1} parent=1 // pred_fallthru
      _
    // Predicated region
    $region10: #{tpu_custom_call.1} parent=1 // pred_check
      _
    $region11: #{tpu_custom_call.1} parent=1 // pred_check_branch
      %40 = sbr.rel (0) target = $region13
    $region12: #{tpu_custom_call.1} parent=1 // pred_region
      %s42 = ssub.s32 128, 128
      %43 = vsyncadd [#allocation6], %s42
      %s45 = sshll.u32 [#allocation7], 4
      %s46 = int_to_ptr.vmem [resolvable:$true] %s45
      %48 = dma.hbm_to_vmem [thread:$0]  %s2, 128, %s46, [#allocation6]
    $region13: #{tpu_custom_call.1} parent=1 // pred_fallthru
      _
    // Predicated region
    $region14: #{tpu_custom_call.1} parent=1 // pred_check
      _
    $region15: #{tpu_custom_call.1} parent=1 // pred_check_branch
      %50 = sbr.rel (0) target = $region17
    $region16: #{tpu_custom_call.1} parent=1 // pred_region
      %s52 = ssub.s32 65536, 65536
      %53 = vsyncadd [#allocation9], %s52
      %s54 = sshll.u32 [#allocation8], 4
      %s55 = int_to_ptr.vmem [resolvable:$true] %s54
      %60 = dma.hbm_to_vmem [thread:$0]  %s3, 65536, %s55, [#allocation9], 512, 512, 32
    $region17: #{tpu_custom_call.1} parent=1 // pred_fallthru
      _
    // Predicated region
    $region18: #{tpu_custom_call.1} parent=1 // pred_check
      _
    $region19: #{tpu_custom_call.1} parent=1 // pred_check_branch
      %62 = sbr.rel (0) target = $region21
    $region20: #{tpu_custom_call.1} parent=1 // pred_region
      %s64 = ssub.s32 128, 128
      %65 = vsyncadd [#allocation9], %s64
      %s67 = sshll.u32 [#allocation10], 4
      %s68 = int_to_ptr.vmem [resolvable:$true] %s67
      %70 = dma.hbm_to_vmem [thread:$0]  %s4, 128, %s68, [#allocation9]
    $region21: #{tpu_custom_call.1} parent=1 // pred_fallthru
      _
    // Predicated region
    $region22: #{tpu_custom_call.1} parent=1 // pred_check
      _
    $region23: #{tpu_custom_call.1} parent=1 // pred_check_branch
      %72 = sbr.rel (0) target = $region25
    $region24: #{tpu_custom_call.1} parent=1 // pred_region
      %s74 = ssub.s32 8192, 8192
      %75 = vsyncadd [#allocation12], %s74
      %s76 = sshll.u32 [#allocation11], 4
      %s77 = int_to_ptr.vmem [resolvable:$true] %s76
      %82 = dma.hbm_to_vmem [thread:$0]  %s5, 8192, %s77, [#allocation12], 64, 64, 4
    $region25: #{tpu_custom_call.1} parent=1 // pred_fallthru
      _
    // Predicated region
    $region26: #{tpu_custom_call.1} parent=1 // pred_check
      _
    $region27: #{tpu_custom_call.1} parent=1 // pred_check_branch
      %84 = sbr.rel (0) target = $region29
    $region28: #{tpu_custom_call.1} parent=1 // pred_region
      %s86 = ssub.s32 16, 16
      %87 = vsyncadd [#allocation12], %s86
      %s89 = sshll.u32 [#allocation13], 4
      %s90 = int_to_ptr.vmem [resolvable:$true] %s89
      %92 = dma.hbm_to_vmem [thread:$0]  %s6, 16, %s90, [#allocation12]
    $region29: #{tpu_custom_call.1} parent=1 // pred_fallthru
      _
    // Predicated region
    $region30: #{tpu_custom_call.1} parent=1 // pred_check
      _
    $region31: #{tpu_custom_call.1} parent=1 // pred_check_branch
      %94 = sbr.rel (0) target = $region33
    $region32: #{tpu_custom_call.1} parent=1 // pred_region
      %95 = dma.done [#allocation3], 1024
    $region33: #{tpu_custom_call.1} parent=1 // pred_fallthru
      _
    // Predicated region
    $region34: #{tpu_custom_call.1} parent=1 // pred_check
      _
    $region35: #{tpu_custom_call.1} parent=1 // pred_check_branch
      %97 = sbr.rel (0) target = $region37
    $region36: #{tpu_custom_call.1} parent=1 // pred_region
      %98 = dma.done [#allocation6], 65536
    $region37: #{tpu_custom_call.1} parent=1 // pred_fallthru
      _
    // Predicated region
    $region38: #{tpu_custom_call.1} parent=1 // pred_check
      _
    $region39: #{tpu_custom_call.1} parent=1 // pred_check_branch
      %100 = sbr.rel (0) target = $region41
    $region40: #{tpu_custom_call.1} parent=1 // pred_region
      %101 = dma.done [#allocation6], 128
    $region41: #{tpu_custom_call.1} parent=1 // pred_fallthru
      _
    // Predicated region
    $region42: #{tpu_custom_call.1} parent=1 // pred_check
      _
    $region43: #{tpu_custom_call.1} parent=1 // pred_check_branch
      %103 = sbr.rel (0) target = $region45
    $region44: #{tpu_custom_call.1} parent=1 // pred_region
      %104 = dma.done [#allocation9], 65536
    $region45: #{tpu_custom_call.1} parent=1 // pred_fallthru
      _
    // Predicated region
    $region46: #{tpu_custom_call.1} parent=1 // pred_check
      _
    $region47: #{tpu_custom_call.1} parent=1 // pred_check_branch
      %106 = sbr.rel (0) target = $region49
    $region48: #{tpu_custom_call.1} parent=1 // pred_region
      %107 = dma.done [#allocation9], 128
    $region49: #{tpu_custom_call.1} parent=1 // pred_fallthru
      _
    // Predicated region
    $region50: #{tpu_custom_call.1} parent=1 // pred_check
      _
    $region51: #{tpu_custom_call.1} parent=1 // pred_check_branch
      %109 = sbr.rel (0) target = $region53
    $region52: #{tpu_custom_call.1} parent=1 // pred_region
      %110 = dma.done [#allocation12], 8192
    $region53: #{tpu_custom_call.1} parent=1 // pred_fallthru
      _
    // Predicated region
    $region54: #{tpu_custom_call.1} parent=1 // pred_check
      _
    $region55: #{tpu_custom_call.1} parent=1 // pred_check_branch
      %112 = sbr.rel (0) target = $region57
    $region56: #{tpu_custom_call.1} parent=1 // pred_region
      %113 = dma.done [#allocation12], 16
    $region57: #{tpu_custom_call.1} parent=1 // pred_fallthru
      _
    %v115 = vld [vmem:[#allocation2] sm:$0xff]
    %v116 = vld [vmem:[#allocation2 + $0x8] sm:$0xff]
    %v117 = vld [vmem:[#allocation2 + $0x10] sm:$0xff]
    %v118 = vld [vmem:[#allocation2 + $0x18] sm:$0xff]
    %v119 = vld [vmem:[#allocation2 + $0x20] sm:$0xff]
    %v120 = vld [vmem:[#allocation2 + $0x28] sm:$0xff]
    %v121 = vld [vmem:[#allocation2 + $0x30] sm:$0xff]
    %v122 = vld [vmem:[#allocation2 + $0x38] sm:$0xff]
    %v123 = vpack.c.bf16 %v115, %v115
    %v124 = vpack.c.bf16 %v116, %v116
    %v125 = vpack.c.bf16 %v117, %v117
    %v126 = vpack.c.bf16 %v118, %v118
    %v127 = vpack.c.bf16 %v119, %v119
    %v128 = vpack.c.bf16 %v120, %v120
    %v129 = vpack.c.bf16 %v121, %v121
    %v130 = vpack.c.bf16 %v122, %v122
    %v131 = vld [vmem:[#allocation5] sm:$0xff]
    %v132 = vld [vmem:[#allocation5 + $0x8] sm:$0xff]
    %v133 = vld [vmem:[#allocation5 + $0x10] sm:$0xff]
    %v134 = vld [vmem:[#allocation5 + $0x18] sm:$0xff]
    %v135 = vld [vmem:[#allocation5 + $0x20] sm:$0xff]
    %v136 = vld [vmem:[#allocation5 + $0x28] sm:$0xff]
    %v137 = vld [vmem:[#allocation5 + $0x30] sm:$0xff]
    %v138 = vld [vmem:[#allocation5 + $0x38] sm:$0xff]
    %v139 = vld [vmem:[#allocation5 + $0x40] sm:$0xff]
    %v140 = vld [vmem:[#allocation5 + $0x48] sm:$0xff]
    %v141 = vld [vmem:[#allocation5 + $0x50] sm:$0xff]
    %v142 = vld [vmem:[#allocation5 + $0x58] sm:$0xff]
    %v143 = vld [vmem:[#allocation5 + $0x60] sm:$0xff]
    %v144 = vld [vmem:[#allocation5 + $0x68] sm:$0xff]
    %v145 = vld [vmem:[#allocation5 + $0x70] sm:$0xff]
    %v146 = vld [vmem:[#allocation5 + $0x78] sm:$0xff]
    %v147 = vld [vmem:[#allocation5 + $0x80] sm:$0xff]
    %v148 = vld [vmem:[#allocation5 + $0x88] sm:$0xff]
    %v149 = vld [vmem:[#allocation5 + $0x90] sm:$0xff]
    %v150 = vld [vmem:[#allocation5 + $0x98] sm:$0xff]
    %v151 = vld [vmem:[#allocation5 + $0xa0] sm:$0xff]
    %v152 = vld [vmem:[#allocation5 + $0xa8] sm:$0xff]
    %v153 = vld [vmem:[#allocation5 + $0xb0] sm:$0xff]
    %v154 = vld [vmem:[#allocation5 + $0xb8] sm:$0xff]
    %v155 = vld [vmem:[#allocation5 + $0xc0] sm:$0xff]
    %v156 = vld [vmem:[#allocation5 + $0xc8] sm:$0xff]
    %v157 = vld [vmem:[#allocation5 + $0xd0] sm:$0xff]
    %v158 = vld [vmem:[#allocation5 + $0xd8] sm:$0xff]
    %v159 = vld [vmem:[#allocation5 + $0xe0] sm:$0xff]
    %v160 = vld [vmem:[#allocation5 + $0xe8] sm:$0xff]
    %v161 = vld [vmem:[#allocation5 + $0xf0] sm:$0xff]
    %v162 = vld [vmem:[#allocation5 + $0xf8] sm:$0xff]
    %v163 = vld [vmem:[#allocation5 + $0x100] sm:$0xff]
    %v164 = vld [vmem:[#allocation5 + $0x108] sm:$0xff]
    %v165 = vld [vmem:[#allocation5 + $0x110] sm:$0xff]
    %v166 = vld [vmem:[#allocation5 + $0x118] sm:$0xff]
    %v167 = vld [vmem:[#allocation5 + $0x120] sm:$0xff]
    %v168 = vld [vmem:[#allocation5 + $0x128] sm:$0xff]
    %v169 = vld [vmem:[#allocation5 + $0x130] sm:$0xff]
    %v170 = vld [vmem:[#allocation5 + $0x138] sm:$0xff]
    %v171 = vld [vmem:[#allocation5 + $0x140] sm:$0xff]
    %v172 = vld [vmem:[#allocation5 + $0x148] sm:$0xff]
    %v173 = vld [vmem:[#allocation5 + $0x150] sm:$0xff]
    %v174 = vld [vmem:[#allocation5 + $0x158] sm:$0xff]
    %v175 = vld [vmem:[#allocation5 + $0x160] sm:$0xff]
    %v176 = vld [vmem:[#allocation5 + $0x168] sm:$0xff]
    %v177 = vld [vmem:[#allocation5 + $0x170] sm:$0xff]
    %v178 = vld [vmem:[#allocation5 + $0x178] sm:$0xff]
    %v179 = vld [vmem:[#allocation5 + $0x180] sm:$0xff]
    %v180 = vld [vmem:[#allocation5 + $0x188] sm:$0xff]
    %v181 = vld [vmem:[#allocation5 + $0x190] sm:$0xff]
    %v182 = vld [vmem:[#allocation5 + $0x198] sm:$0xff]
    %v183 = vld [vmem:[#allocation5 + $0x1a0] sm:$0xff]
    %v184 = vld [vmem:[#allocation5 + $0x1a8] sm:$0xff]
    %v185 = vld [vmem:[#allocation5 + $0x1b0] sm:$0xff]
    %v186 = vld [vmem:[#allocation5 + $0x1b8] sm:$0xff]
    %v187 = vld [vmem:[#allocation5 + $0x1c0] sm:$0xff]
    %v188 = vld [vmem:[#allocation5 + $0x1c8] sm:$0xff]
    %v189 = vld [vmem:[#allocation5 + $0x1d0] sm:$0xff]
    %v190 = vld [vmem:[#allocation5 + $0x1d8] sm:$0xff]
    %v191 = vld [vmem:[#allocation5 + $0x1e0] sm:$0xff]
    %v192 = vld [vmem:[#allocation5 + $0x1e8] sm:$0xff]
    %v193 = vld [vmem:[#allocation5 + $0x1f0] sm:$0xff]
    %v194 = vld [vmem:[#allocation5 + $0x1f8] sm:$0xff]
    %v195 = vld [vmem:[#allocation5 + $0x200] sm:$0xff]
    %v196 = vld [vmem:[#allocation5 + $0x208] sm:$0xff]
    %v197 = vld [vmem:[#allocation5 + $0x210] sm:$0xff]
    %v198 = vld [vmem:[#allocation5 + $0x218] sm:$0xff]
    %v199 = vld [vmem:[#allocation5 + $0x220] sm:$0xff]
    %v200 = vld [vmem:[#allocation5 + $0x228] sm:$0xff]
    %v201 = vld [vmem:[#allocation5 + $0x230] sm:$0xff]
    %v202 = vld [vmem:[#allocation5 + $0x238] sm:$0xff]
    %v203 = vld [vmem:[#allocation5 + $0x240] sm:$0xff]
    %v204 = vld [vmem:[#allocation5 + $0x248] sm:$0xff]
    %v205 = vld [vmem:[#allocation5 + $0x250] sm:$0xff]
    %v206 = vld [vmem:[#allocation5 + $0x258] sm:$0xff]
    %v207 = vld [vmem:[#allocation5 + $0x260] sm:$0xff]
    %v208 = vld [vmem:[#allocation5 + $0x268] sm:$0xff]
    %v209 = vld [vmem:[#allocation5 + $0x270] sm:$0xff]
    %v210 = vld [vmem:[#allocation5 + $0x278] sm:$0xff]
    %v211 = vld [vmem:[#allocation5 + $0x280] sm:$0xff]
    %v212 = vld [vmem:[#allocation5 + $0x288] sm:$0xff]
    %v213 = vld [vmem:[#allocation5 + $0x290] sm:$0xff]
    %v214 = vld [vmem:[#allocation5 + $0x298] sm:$0xff]
    %v215 = vld [vmem:[#allocation5 + $0x2a0] sm:$0xff]
    %v216 = vld [vmem:[#allocation5 + $0x2a8] sm:$0xff]
    %v217 = vld [vmem:[#allocation5 + $0x2b0] sm:$0xff]
    %v218 = vld [vmem:[#allocation5 + $0x2b8] sm:$0xff]
    %v219 = vld [vmem:[#allocation5 + $0x2c0] sm:$0xff]
    %v220 = vld [vmem:[#allocation5 + $0x2c8] sm:$0xff]
    %v221 = vld [vmem:[#allocation5 + $0x2d0] sm:$0xff]
    %v222 = vld [vmem:[#allocation5 + $0x2d8] sm:$0xff]
    %v223 = vld [vmem:[#allocation5 + $0x2e0] sm:$0xff]
    %v224 = vld [vmem:[#allocation5 + $0x2e8] sm:$0xff]
    %v225 = vld [vmem:[#allocation5 + $0x2f0] sm:$0xff]
    %v226 = vld [vmem:[#allocation5 + $0x2f8] sm:$0xff]
    %v227 = vld [vmem:[#allocation5 + $0x300] sm:$0xff]
    %v228 = vld [vmem:[#allocation5 + $0x308] sm:$0xff]
    %v229 = vld [vmem:[#allocation5 + $0x310] sm:$0xff]
    %v230 = vld [vmem:[#allocation5 + $0x318] sm:$0xff]
    %v231 = vld [vmem:[#allocation5 + $0x320] sm:$0xff]
    %v232 = vld [vmem:[#allocation5 + $0x328] sm:$0xff]
    %v233 = vld [vmem:[#allocation5 + $0x330] sm:$0xff]
    %v234 = vld [vmem:[#allocation5 + $0x338] sm:$0xff]
    %v235 = vld [vmem:[#allocation5 + $0x340] sm:$0xff]
    %v236 = vld [vmem:[#allocation5 + $0x348] sm:$0xff]
    %v237 = vld [vmem:[#allocation5 + $0x350] sm:$0xff]
    %v238 = vld [vmem:[#allocation5 + $0x358] sm:$0xff]
    %v239 = vld [vmem:[#allocation5 + $0x360] sm:$0xff]
    %v240 = vld [vmem:[#allocation5 + $0x368] sm:$0xff]
    %v241 = vld [vmem:[#allocation5 + $0x370] sm:$0xff]
    %v242 = vld [vmem:[#allocation5 + $0x378] sm:$0xff]
    %v243 = vld [vmem:[#allocation5 + $0x380] sm:$0xff]
    %v244 = vld [vmem:[#allocation5 + $0x388] sm:$0xff]
    %v245 = vld [vmem:[#allocation5 + $0x390] sm:$0xff]
    %v246 = vld [vmem:[#allocation5 + $0x398] sm:$0xff]
    %v247 = vld [vmem:[#allocation5 + $0x3a0] sm:$0xff]
    %v248 = vld [vmem:[#allocation5 + $0x3a8] sm:$0xff]
    %v249 = vld [vmem:[#allocation5 + $0x3b0] sm:$0xff]
    %v250 = vld [vmem:[#allocation5 + $0x3b8] sm:$0xff]
    %v251 = vld [vmem:[#allocation5 + $0x3c0] sm:$0xff]
    %v252 = vld [vmem:[#allocation5 + $0x3c8] sm:$0xff]
    %v253 = vld [vmem:[#allocation5 + $0x3d0] sm:$0xff]
    %v254 = vld [vmem:[#allocation5 + $0x3d8] sm:$0xff]
    %v255 = vld [vmem:[#allocation5 + $0x3e0] sm:$0xff]
    %v256 = vld [vmem:[#allocation5 + $0x3e8] sm:$0xff]
    %v257 = vld [vmem:[#allocation5 + $0x3f0] sm:$0xff]
    %v258 = vld [vmem:[#allocation5 + $0x3f8] sm:$0xff]
    %v259 = vld [vmem:[#allocation5 + $0x400] sm:$0xff]
    %v260 = vld [vmem:[#allocation5 + $0x408] sm:$0xff]
    %v261 = vld [vmem:[#allocation5 + $0x410] sm:$0xff]
    %v262 = vld [vmem:[#allocation5 + $0x418] sm:$0xff]
    %v263 = vld [vmem:[#allocation5 + $0x420] sm:$0xff]
    %v264 = vld [vmem:[#allocation5 + $0x428] sm:$0xff]
    %v265 = vld [vmem:[#allocation5 + $0x430] sm:$0xff]
    %v266 = vld [vmem:[#allocation5 + $0x438] sm:$0xff]
    %v267 = vld [vmem:[#allocation5 + $0x440] sm:$0xff]
    %v268 = vld [vmem:[#allocation5 + $0x448] sm:$0xff]
    %v269 = vld [vmem:[#allocation5 + $0x450] sm:$0xff]
    %v270 = vld [vmem:[#allocation5 + $0x458] sm:$0xff]
    %v271 = vld [vmem:[#allocation5 + $0x460] sm:$0xff]
    %v272 = vld [vmem:[#allocation5 + $0x468] sm:$0xff]
    %v273 = vld [vmem:[#allocation5 + $0x470] sm:$0xff]
    %v274 = vld [vmem:[#allocation5 + $0x478] sm:$0xff]
    %v275 = vld [vmem:[#allocation5 + $0x480] sm:$0xff]
    %v276 = vld [vmem:[#allocation5 + $0x488] sm:$0xff]
    %v277 = vld [vmem:[#allocation5 + $0x490] sm:$0xff]
    %v278 = vld [vmem:[#allocation5 + $0x498] sm:$0xff]
    %v279 = vld [vmem:[#allocation5 + $0x4a0] sm:$0xff]
    %v280 = vld [vmem:[#allocation5 + $0x4a8] sm:$0xff]
    %v281 = vld [vmem:[#allocation5 + $0x4b0] sm:$0xff]
    %v282 = vld [vmem:[#allocation5 + $0x4b8] sm:$0xff]
    %v283 = vld [vmem:[#allocation5 + $0x4c0] sm:$0xff]
    %v284 = vld [vmem:[#allocation5 + $0x4c8] sm:$0xff]
    %v285 = vld [vmem:[#allocation5 + $0x4d0] sm:$0xff]
    %v286 = vld [vmem:[#allocation5 + $0x4d8] sm:$0xff]
    %v287 = vld [vmem:[#allocation5 + $0x4e0] sm:$0xff]
    %v288 = vld [vmem:[#allocation5 + $0x4e8] sm:$0xff]
    %v289 = vld [vmem:[#allocation5 + $0x4f0] sm:$0xff]
    %v290 = vld [vmem:[#allocation5 + $0x4f8] sm:$0xff]
    %v291 = vld [vmem:[#allocation5 + $0x500] sm:$0xff]
    %v292 = vld [vmem:[#allocation5 + $0x508] sm:$0xff]
    %v293 = vld [vmem:[#allocation5 + $0x510] sm:$0xff]
    %v294 = vld [vmem:[#allocation5 + $0x518] sm:$0xff]
    %v295 = vld [vmem:[#allocation5 + $0x520] sm:$0xff]
    %v296 = vld [vmem:[#allocation5 + $0x528] sm:$0xff]
    %v297 = vld [vmem:[#allocation5 + $0x530] sm:$0xff]
    %v298 = vld [vmem:[#allocation5 + $0x538] sm:$0xff]
    %v299 = vld [vmem:[#allocation5 + $0x540] sm:$0xff]
    %v300 = vld [vmem:[#allocation5 + $0x548] sm:$0xff]
    %v301 = vld [vmem:[#allocation5 + $0x550] sm:$0xff]
    %v302 = vld [vmem:[#allocation5 + $0x558] sm:$0xff]
    %v303 = vld [vmem:[#allocation5 + $0x560] sm:$0xff]
    %v304 = vld [vmem:[#allocation5 + $0x568] sm:$0xff]
    %v305 = vld [vmem:[#allocation5 + $0x570] sm:$0xff]
    %v306 = vld [vmem:[#allocation5 + $0x578] sm:$0xff]
    %v307 = vld [vmem:[#allocation5 + $0x580] sm:$0xff]
    %v308 = vld [vmem:[#allocation5 + $0x588] sm:$0xff]
    %v309 = vld [vmem:[#allocation5 + $0x590] sm:$0xff]
    %v310 = vld [vmem:[#allocation5 + $0x598] sm:$0xff]
    %v311 = vld [vmem:[#allocation5 + $0x5a0] sm:$0xff]
    %v312 = vld [vmem:[#allocation5 + $0x5a8] sm:$0xff]
    %v313 = vld [vmem:[#allocation5 + $0x5b0] sm:$0xff]
    %v314 = vld [vmem:[#allocation5 + $0x5b8] sm:$0xff]
    %v315 = vld [vmem:[#allocation5 + $0x5c0] sm:$0xff]
    %v316 = vld [vmem:[#allocation5 + $0x5c8] sm:$0xff]
    %v317 = vld [vmem:[#allocation5 + $0x5d0] sm:$0xff]
    %v318 = vld [vmem:[#allocation5 + $0x5d8] sm:$0xff]
    %v319 = vld [vmem:[#allocation5 + $0x5e0] sm:$0xff]
    %v320 = vld [vmem:[#allocation5 + $0x5e8] sm:$0xff]
    %v321 = vld [vmem:[#allocation5 + $0x5f0] sm:$0xff]
    %v322 = vld [vmem:[#allocation5 + $0x5f8] sm:$0xff]
    %v323 = vld [vmem:[#allocation5 + $0x600] sm:$0xff]
    %v324 = vld [vmem:[#allocation5 + $0x608] sm:$0xff]
    %v325 = vld [vmem:[#allocation5 + $0x610] sm:$0xff]
    %v326 = vld [vmem:[#allocation5 + $0x618] sm:$0xff]
    %v327 = vld [vmem:[#allocation5 + $0x620] sm:$0xff]
    %v328 = vld [vmem:[#allocation5 + $0x628] sm:$0xff]
    %v329 = vld [vmem:[#allocation5 + $0x630] sm:$0xff]
    %v330 = vld [vmem:[#allocation5 + $0x638] sm:$0xff]
    %v331 = vld [vmem:[#allocation5 + $0x640] sm:$0xff]
    %v332 = vld [vmem:[#allocation5 + $0x648] sm:$0xff]
    %v333 = vld [vmem:[#allocation5 + $0x650] sm:$0xff]
    %v334 = vld [vmem:[#allocation5 + $0x658] sm:$0xff]
    %v335 = vld [vmem:[#allocation5 + $0x660] sm:$0xff]
    %v336 = vld [vmem:[#allocation5 + $0x668] sm:$0xff]
    %v337 = vld [vmem:[#allocation5 + $0x670] sm:$0xff]
    %v338 = vld [vmem:[#allocation5 + $0x678] sm:$0xff]
    %v339 = vld [vmem:[#allocation5 + $0x680] sm:$0xff]
    %v340 = vld [vmem:[#allocation5 + $0x688] sm:$0xff]
    %v341 = vld [vmem:[#allocation5 + $0x690] sm:$0xff]
    %v342 = vld [vmem:[#allocation5 + $0x698] sm:$0xff]
    %v343 = vld [vmem:[#allocation5 + $0x6a0] sm:$0xff]
    %v344 = vld [vmem:[#allocation5 + $0x6a8] sm:$0xff]
    %v345 = vld [vmem:[#allocation5 + $0x6b0] sm:$0xff]
    %v346 = vld [vmem:[#allocation5 + $0x6b8] sm:$0xff]
    %v347 = vld [vmem:[#allocation5 + $0x6c0] sm:$0xff]
    %v348 = vld [vmem:[#allocation5 + $0x6c8] sm:$0xff]
    %v349 = vld [vmem:[#allocation5 + $0x6d0] sm:$0xff]
    %v350 = vld [vmem:[#allocation5 + $0x6d8] sm:$0xff]
    %v351 = vld [vmem:[#allocation5 + $0x6e0] sm:$0xff]
    %v352 = vld [vmem:[#allocation5 + $0x6e8] sm:$0xff]
    %v353 = vld [vmem:[#allocation5 + $0x6f0] sm:$0xff]
    %v354 = vld [vmem:[#allocation5 + $0x6f8] sm:$0xff]
    %v355 = vld [vmem:[#allocation5 + $0x700] sm:$0xff]
    %v356 = vld [vmem:[#allocation5 + $0x708] sm:$0xff]
    %v357 = vld [vmem:[#allocation5 + $0x710] sm:$0xff]
    %v358 = vld [vmem:[#allocation5 + $0x718] sm:$0xff]
    %v359 = vld [vmem:[#allocation5 + $0x720] sm:$0xff]
    %v360 = vld [vmem:[#allocation5 + $0x728] sm:$0xff]
    %v361 = vld [vmem:[#allocation5 + $0x730] sm:$0xff]
    %v362 = vld [vmem:[#allocation5 + $0x738] sm:$0xff]
    %v363 = vld [vmem:[#allocation5 + $0x740] sm:$0xff]
    %v364 = vld [vmem:[#allocation5 + $0x748] sm:$0xff]
    %v365 = vld [vmem:[#allocation5 + $0x750] sm:$0xff]
    %v366 = vld [vmem:[#allocation5 + $0x758] sm:$0xff]
    %v367 = vld [vmem:[#allocation5 + $0x760] sm:$0xff]
    %v368 = vld [vmem:[#allocation5 + $0x768] sm:$0xff]
    %v369 = vld [vmem:[#allocation5 + $0x770] sm:$0xff]
    %v370 = vld [vmem:[#allocation5 + $0x778] sm:$0xff]
    %v371 = vld [vmem:[#allocation5 + $0x780] sm:$0xff]
    %v372 = vld [vmem:[#allocation5 + $0x788] sm:$0xff]
    %v373 = vld [vmem:[#allocation5 + $0x790] sm:$0xff]
    %v374 = vld [vmem:[#allocation5 + $0x798] sm:$0xff]
    %v375 = vld [vmem:[#allocation5 + $0x7a0] sm:$0xff]
    %v376 = vld [vmem:[#allocation5 + $0x7a8] sm:$0xff]
    %v377 = vld [vmem:[#allocation5 + $0x7b0] sm:$0xff]
    %v378 = vld [vmem:[#allocation5 + $0x7b8] sm:$0xff]
    %v379 = vld [vmem:[#allocation5 + $0x7c0] sm:$0xff]
    %v380 = vld [vmem:[#allocation5 + $0x7c8] sm:$0xff]
    %v381 = vld [vmem:[#allocation5 + $0x7d0] sm:$0xff]
    %v382 = vld [vmem:[#allocation5 + $0x7d8] sm:$0xff]
    %v383 = vld [vmem:[#allocation5 + $0x7e0] sm:$0xff]
    %v384 = vld [vmem:[#allocation5 + $0x7e8] sm:$0xff]
    %v385 = vld [vmem:[#allocation5 + $0x7f0] sm:$0xff]
    %v386 = vld [vmem:[#allocation5 + $0x7f8] sm:$0xff]
    %v387 = vld [vmem:[#allocation5 + $0x800] sm:$0xff]
    %v388 = vld [vmem:[#allocation5 + $0x808] sm:$0xff]
    %v389 = vld [vmem:[#allocation5 + $0x810] sm:$0xff]
    %v390 = vld [vmem:[#allocation5 + $0x818] sm:$0xff]
    %v391 = vld [vmem:[#allocation5 + $0x820] sm:$0xff]
    %v392 = vld [vmem:[#allocation5 + $0x828] sm:$0xff]
    %v393 = vld [vmem:[#allocation5 + $0x830] sm:$0xff]
    %v394 = vld [vmem:[#allocation5 + $0x838] sm:$0xff]
    %v395 = vld [vmem:[#allocation5 + $0x840] sm:$0xff]
    %v396 = vld [vmem:[#allocation5 + $0x848] sm:$0xff]
    %v397 = vld [vmem:[#allocation5 + $0x850] sm:$0xff]
    %v398 = vld [vmem:[#allocation5 + $0x858] sm:$0xff]
    %v399 = vld [vmem:[#allocation5 + $0x860] sm:$0xff]
    %v400 = vld [vmem:[#allocation5 + $0x868] sm:$0xff]
    %v401 = vld [vmem:[#allocation5 + $0x870] sm:$0xff]
    %v402 = vld [vmem:[#allocation5 + $0x878] sm:$0xff]
    %v403 = vld [vmem:[#allocation5 + $0x880] sm:$0xff]
    %v404 = vld [vmem:[#allocation5 + $0x888] sm:$0xff]
    %v405 = vld [vmem:[#allocation5 + $0x890] sm:$0xff]
    %v406 = vld [vmem:[#allocation5 + $0x898] sm:$0xff]
    %v407 = vld [vmem:[#allocation5 + $0x8a0] sm:$0xff]
    %v408 = vld [vmem:[#allocation5 + $0x8a8] sm:$0xff]
    %v409 = vld [vmem:[#allocation5 + $0x8b0] sm:$0xff]
    %v410 = vld [vmem:[#allocation5 + $0x8b8] sm:$0xff]
    %v411 = vld [vmem:[#allocation5 + $0x8c0] sm:$0xff]
    %v412 = vld [vmem:[#allocation5 + $0x8c8] sm:$0xff]
    %v413 = vld [vmem:[#allocation5 + $0x8d0] sm:$0xff]
    %v414 = vld [vmem:[#allocation5 + $0x8d8] sm:$0xff]
    %v415 = vld [vmem:[#allocation5 + $0x8e0] sm:$0xff]
    %v416 = vld [vmem:[#allocation5 + $0x8e8] sm:$0xff]
    %v417 = vld [vmem:[#allocation5 + $0x8f0] sm:$0xff]
    %v418 = vld [vmem:[#allocation5 + $0x8f8] sm:$0xff]
    %v419 = vld [vmem:[#allocation5 + $0x900] sm:$0xff]
    %v420 = vld [vmem:[#allocation5 + $0x908] sm:$0xff]
    %v421 = vld [vmem:[#allocation5 + $0x910] sm:$0xff]
    %v422 = vld [vmem:[#allocation5 + $0x918] sm:$0xff]
    %v423 = vld [vmem:[#allocation5 + $0x920] sm:$0xff]
    %v424 = vld [vmem:[#allocation5 + $0x928] sm:$0xff]
    %v425 = vld [vmem:[#allocation5 + $0x930] sm:$0xff]
    %v426 = vld [vmem:[#allocation5 + $0x938] sm:$0xff]
    %v427 = vld [vmem:[#allocation5 + $0x940] sm:$0xff]
    %v428 = vld [vmem:[#allocation5 + $0x948] sm:$0xff]
    %v429 = vld [vmem:[#allocation5 + $0x950] sm:$0xff]
    %v430 = vld [vmem:[#allocation5 + $0x958] sm:$0xff]
    %v431 = vld [vmem:[#allocation5 + $0x960] sm:$0xff]
    %v432 = vld [vmem:[#allocation5 + $0x968] sm:$0xff]
    %v433 = vld [vmem:[#allocation5 + $0x970] sm:$0xff]
    %v434 = vld [vmem:[#allocation5 + $0x978] sm:$0xff]
    %v435 = vld [vmem:[#allocation5 + $0x980] sm:$0xff]
    %v436 = vld [vmem:[#allocation5 + $0x988] sm:$0xff]
    %v437 = vld [vmem:[#allocation5 + $0x990] sm:$0xff]
    %v438 = vld [vmem:[#allocation5 + $0x998] sm:$0xff]
    %v439 = vld [vmem:[#allocation5 + $0x9a0] sm:$0xff]
    %v440 = vld [vmem:[#allocation5 + $0x9a8] sm:$0xff]
    %v441 = vld [vmem:[#allocation5 + $0x9b0] sm:$0xff]
    %v442 = vld [vmem:[#allocation5 + $0x9b8] sm:$0xff]
    %v443 = vld [vmem:[#allocation5 + $0x9c0] sm:$0xff]
    %v444 = vld [vmem:[#allocation5 + $0x9c8] sm:$0xff]
    %v445 = vld [vmem:[#allocation5 + $0x9d0] sm:$0xff]
    %v446 = vld [vmem:[#allocation5 + $0x9d8] sm:$0xff]
    %v447 = vld [vmem:[#allocation5 + $0x9e0] sm:$0xff]
    %v448 = vld [vmem:[#allocation5 + $0x9e8] sm:$0xff]
    %v449 = vld [vmem:[#allocation5 + $0x9f0] sm:$0xff]
    %v450 = vld [vmem:[#allocation5 + $0x9f8] sm:$0xff]
    %v451 = vld [vmem:[#allocation5 + $0xa00] sm:$0xff]
    %v452 = vld [vmem:[#allocation5 + $0xa08] sm:$0xff]
    %v453 = vld [vmem:[#allocation5 + $0xa10] sm:$0xff]
    %v454 = vld [vmem:[#allocation5 + $0xa18] sm:$0xff]
    %v455 = vld [vmem:[#allocation5 + $0xa20] sm:$0xff]
    %v456 = vld [vmem:[#allocation5 + $0xa28] sm:$0xff]
    %v457 = vld [vmem:[#allocation5 + $0xa30] sm:$0xff]
    %v458 = vld [vmem:[#allocation5 + $0xa38] sm:$0xff]
    %v459 = vld [vmem:[#allocation5 + $0xa40] sm:$0xff]
    %v460 = vld [vmem:[#allocation5 + $0xa48] sm:$0xff]
    %v461 = vld [vmem:[#allocation5 + $0xa50] sm:$0xff]
    %v462 = vld [vmem:[#allocation5 + $0xa58] sm:$0xff]
    %v463 = vld [vmem:[#allocation5 + $0xa60] sm:$0xff]
    %v464 = vld [vmem:[#allocation5 + $0xa68] sm:$0xff]
    %v465 = vld [vmem:[#allocation5 + $0xa70] sm:$0xff]
    %v466 = vld [vmem:[#allocation5 + $0xa78] sm:$0xff]
    %v467 = vld [vmem:[#allocation5 + $0xa80] sm:$0xff]
    %v468 = vld [vmem:[#allocation5 + $0xa88] sm:$0xff]
    %v469 = vld [vmem:[#allocation5 + $0xa90] sm:$0xff]
    %v470 = vld [vmem:[#allocation5 + $0xa98] sm:$0xff]
    %v471 = vld [vmem:[#allocation5 + $0xaa0] sm:$0xff]
    %v472 = vld [vmem:[#allocation5 + $0xaa8] sm:$0xff]
    %v473 = vld [vmem:[#allocation5 + $0xab0] sm:$0xff]
    %v474 = vld [vmem:[#allocation5 + $0xab8] sm:$0xff]
    %v475 = vld [vmem:[#allocation5 + $0xac0] sm:$0xff]
    %v476 = vld [vmem:[#allocation5 + $0xac8] sm:$0xff]
    %v477 = vld [vmem:[#allocation5 + $0xad0] sm:$0xff]
    %v478 = vld [vmem:[#allocation5 + $0xad8] sm:$0xff]
    %v479 = vld [vmem:[#allocation5 + $0xae0] sm:$0xff]
    %v480 = vld [vmem:[#allocation5 + $0xae8] sm:$0xff]
    %v481 = vld [vmem:[#allocation5 + $0xaf0] sm:$0xff]
    %v482 = vld [vmem:[#allocation5 + $0xaf8] sm:$0xff]
    %v483 = vld [vmem:[#allocation5 + $0xb00] sm:$0xff]
    %v484 = vld [vmem:[#allocation5 + $0xb08] sm:$0xff]
    %v485 = vld [vmem:[#allocation5 + $0xb10] sm:$0xff]
    %v486 = vld [vmem:[#allocation5 + $0xb18] sm:$0xff]
    %v487 = vld [vmem:[#allocation5 + $0xb20] sm:$0xff]
    %v488 = vld [vmem:[#allocation5 + $0xb28] sm:$0xff]
    %v489 = vld [vmem:[#allocation5 + $0xb30] sm:$0xff]
    %v490 = vld [vmem:[#allocation5 + $0xb38] sm:$0xff]
    %v491 = vld [vmem:[#allocation5 + $0xb40] sm:$0xff]
    %v492 = vld [vmem:[#allocation5 + $0xb48] sm:$0xff]
    %v493 = vld [vmem:[#allocation5 + $0xb50] sm:$0xff]
    %v494 = vld [vmem:[#allocation5 + $0xb58] sm:$0xff]
    %v495 = vld [vmem:[#allocation5 + $0xb60] sm:$0xff]
    %v496 = vld [vmem:[#allocation5 + $0xb68] sm:$0xff]
    %v497 = vld [vmem:[#allocation5 + $0xb70] sm:$0xff]
    %v498 = vld [vmem:[#allocation5 + $0xb78] sm:$0xff]
    %v499 = vld [vmem:[#allocation5 + $0xb80] sm:$0xff]
    %v500 = vld [vmem:[#allocation5 + $0xb88] sm:$0xff]
    %v501 = vld [vmem:[#allocation5 + $0xb90] sm:$0xff]
    %v502 = vld [vmem:[#allocation5 + $0xb98] sm:$0xff]
    %v503 = vld [vmem:[#allocation5 + $0xba0] sm:$0xff]
    %v504 = vld [vmem:[#allocation5 + $0xba8] sm:$0xff]
    %v505 = vld [vmem:[#allocation5 + $0xbb0] sm:$0xff]
    %v506 = vld [vmem:[#allocation5 + $0xbb8] sm:$0xff]
    %v507 = vld [vmem:[#allocation5 + $0xbc0] sm:$0xff]
    %v508 = vld [vmem:[#allocation5 + $0xbc8] sm:$0xff]
    %v509 = vld [vmem:[#allocation5 + $0xbd0] sm:$0xff]
    %v510 = vld [vmem:[#allocation5 + $0xbd8] sm:$0xff]
    %v511 = vld [vmem:[#allocation5 + $0xbe0] sm:$0xff]
    %v512 = vld [vmem:[#allocation5 + $0xbe8] sm:$0xff]
    %v513 = vld [vmem:[#allocation5 + $0xbf0] sm:$0xff]
    %v514 = vld [vmem:[#allocation5 + $0xbf8] sm:$0xff]
    %v515 = vld [vmem:[#allocation5 + $0xc00] sm:$0xff]
    %v516 = vld [vmem:[#allocation5 + $0xc08] sm:$0xff]
    %v517 = vld [vmem:[#allocation5 + $0xc10] sm:$0xff]
    %v518 = vld [vmem:[#allocation5 + $0xc18] sm:$0xff]
    %v519 = vld [vmem:[#allocation5 + $0xc20] sm:$0xff]
    %v520 = vld [vmem:[#allocation5 + $0xc28] sm:$0xff]
    %v521 = vld [vmem:[#allocation5 + $0xc30] sm:$0xff]
    %v522 = vld [vmem:[#allocation5 + $0xc38] sm:$0xff]
    %v523 = vld [vmem:[#allocation5 + $0xc40] sm:$0xff]
    %v524 = vld [vmem:[#allocation5 + $0xc48] sm:$0xff]
    %v525 = vld [vmem:[#allocation5 + $0xc50] sm:$0xff]
    %v526 = vld [vmem:[#allocation5 + $0xc58] sm:$0xff]
    %v527 = vld [vmem:[#allocation5 + $0xc60] sm:$0xff]
    %v528 = vld [vmem:[#allocation5 + $0xc68] sm:$0xff]
    %v529 = vld [vmem:[#allocation5 + $0xc70] sm:$0xff]
    %v530 = vld [vmem:[#allocation5 + $0xc78] sm:$0xff]
    %v531 = vld [vmem:[#allocation5 + $0xc80] sm:$0xff]
    %v532 = vld [vmem:[#allocation5 + $0xc88] sm:$0xff]
    %v533 = vld [vmem:[#allocation5 + $0xc90] sm:$0xff]
    %v534 = vld [vmem:[#allocation5 + $0xc98] sm:$0xff]
    %v535 = vld [vmem:[#allocation5 + $0xca0] sm:$0xff]
    %v536 = vld [vmem:[#allocation5 + $0xca8] sm:$0xff]
    %v537 = vld [vmem:[#allocation5 + $0xcb0] sm:$0xff]
    %v538 = vld [vmem:[#allocation5 + $0xcb8] sm:$0xff]
    %v539 = vld [vmem:[#allocation5 + $0xcc0] sm:$0xff]
    %v540 = vld [vmem:[#allocation5 + $0xcc8] sm:$0xff]
    %v541 = vld [vmem:[#allocation5 + $0xcd0] sm:$0xff]
    %v542 = vld [vmem:[#allocation5 + $0xcd8] sm:$0xff]
    %v543 = vld [vmem:[#allocation5 + $0xce0] sm:$0xff]
    %v544 = vld [vmem:[#allocation5 + $0xce8] sm:$0xff]
    %v545 = vld [vmem:[#allocation5 + $0xcf0] sm:$0xff]
    %v546 = vld [vmem:[#allocation5 + $0xcf8] sm:$0xff]
    %v547 = vld [vmem:[#allocation5 + $0xd00] sm:$0xff]
    %v548 = vld [vmem:[#allocation5 + $0xd08] sm:$0xff]
    %v549 = vld [vmem:[#allocation5 + $0xd10] sm:$0xff]
    %v550 = vld [vmem:[#allocation5 + $0xd18] sm:$0xff]
    %v551 = vld [vmem:[#allocation5 + $0xd20] sm:$0xff]
    %v552 = vld [vmem:[#allocation5 + $0xd28] sm:$0xff]
    %v553 = vld [vmem:[#allocation5 + $0xd30] sm:$0xff]
    %v554 = vld [vmem:[#allocation5 + $0xd38] sm:$0xff]
    %v555 = vld [vmem:[#allocation5 + $0xd40] sm:$0xff]
    %v556 = vld [vmem:[#allocation5 + $0xd48] sm:$0xff]
    %v557 = vld [vmem:[#allocation5 + $0xd50] sm:$0xff]
    %v558 = vld [vmem:[#allocation5 + $0xd58] sm:$0xff]
    %v559 = vld [vmem:[#allocation5 + $0xd60] sm:$0xff]
    %v560 = vld [vmem:[#allocation5 + $0xd68] sm:$0xff]
    %v561 = vld [vmem:[#allocation5 + $0xd70] sm:$0xff]
    %v562 = vld [vmem:[#allocation5 + $0xd78] sm:$0xff]
    %v563 = vld [vmem:[#allocation5 + $0xd80] sm:$0xff]
    %v564 = vld [vmem:[#allocation5 + $0xd88] sm:$0xff]
    %v565 = vld [vmem:[#allocation5 + $0xd90] sm:$0xff]
    %v566 = vld [vmem:[#allocation5 + $0xd98] sm:$0xff]
    %v567 = vld [vmem:[#allocation5 + $0xda0] sm:$0xff]
    %v568 = vld [vmem:[#allocation5 + $0xda8] sm:$0xff]
    %v569 = vld [vmem:[#allocation5 + $0xdb0] sm:$0xff]
    %v570 = vld [vmem:[#allocation5 + $0xdb8] sm:$0xff]
    %v571 = vld [vmem:[#allocation5 + $0xdc0] sm:$0xff]
    %v572 = vld [vmem:[#allocation5 + $0xdc8] sm:$0xff]
    %v573 = vld [vmem:[#allocation5 + $0xdd0] sm:$0xff]
    %v574 = vld [vmem:[#allocation5 + $0xdd8] sm:$0xff]
    %v575 = vld [vmem:[#allocation5 + $0xde0] sm:$0xff]
    %v576 = vld [vmem:[#allocation5 + $0xde8] sm:$0xff]
    %v577 = vld [vmem:[#allocation5 + $0xdf0] sm:$0xff]
    %v578 = vld [vmem:[#allocation5 + $0xdf8] sm:$0xff]
    %v579 = vld [vmem:[#allocation5 + $0xe00] sm:$0xff]
    %v580 = vld [vmem:[#allocation5 + $0xe08] sm:$0xff]
    %v581 = vld [vmem:[#allocation5 + $0xe10] sm:$0xff]
    %v582 = vld [vmem:[#allocation5 + $0xe18] sm:$0xff]
    %v583 = vld [vmem:[#allocation5 + $0xe20] sm:$0xff]
    %v584 = vld [vmem:[#allocation5 + $0xe28] sm:$0xff]
    %v585 = vld [vmem:[#allocation5 + $0xe30] sm:$0xff]
    %v586 = vld [vmem:[#allocation5 + $0xe38] sm:$0xff]
    %v587 = vld [vmem:[#allocation5 + $0xe40] sm:$0xff]
    %v588 = vld [vmem:[#allocation5 + $0xe48] sm:$0xff]
    %v589 = vld [vmem:[#allocation5 + $0xe50] sm:$0xff]
    %v590 = vld [vmem:[#allocation5 + $0xe58] sm:$0xff]
    %v591 = vld [vmem:[#allocation5 + $0xe60] sm:$0xff]
    %v592 = vld [vmem:[#allocation5 + $0xe68] sm:$0xff]
    %v593 = vld [vmem:[#allocation5 + $0xe70] sm:$0xff]
    %v594 = vld [vmem:[#allocation5 + $0xe78] sm:$0xff]
    %v595 = vld [vmem:[#allocation5 + $0xe80] sm:$0xff]
    %v596 = vld [vmem:[#allocation5 + $0xe88] sm:$0xff]
    %v597 = vld [vmem:[#allocation5 + $0xe90] sm:$0xff]
    %v598 = vld [vmem:[#allocation5 + $0xe98] sm:$0xff]
    %v599 = vld [vmem:[#allocation5 + $0xea0] sm:$0xff]
    %v600 = vld [vmem:[#allocation5 + $0xea8] sm:$0xff]
    %v601 = vld [vmem:[#allocation5 + $0xeb0] sm:$0xff]
    %v602 = vld [vmem:[#allocation5 + $0xeb8] sm:$0xff]
    %v603 = vld [vmem:[#allocation5 + $0xec0] sm:$0xff]
    %v604 = vld [vmem:[#allocation5 + $0xec8] sm:$0xff]
    %v605 = vld [vmem:[#allocation5 + $0xed0] sm:$0xff]
    %v606 = vld [vmem:[#allocation5 + $0xed8] sm:$0xff]
    %v607 = vld [vmem:[#allocation5 + $0xee0] sm:$0xff]
    %v608 = vld [vmem:[#allocation5 + $0xee8] sm:$0xff]
    %v609 = vld [vmem:[#allocation5 + $0xef0] sm:$0xff]
    %v610 = vld [vmem:[#allocation5 + $0xef8] sm:$0xff]
    %v611 = vld [vmem:[#allocation5 + $0xf00] sm:$0xff]
    %v612 = vld [vmem:[#allocation5 + $0xf08] sm:$0xff]
    %v613 = vld [vmem:[#allocation5 + $0xf10] sm:$0xff]
    %v614 = vld [vmem:[#allocation5 + $0xf18] sm:$0xff]
    %v615 = vld [vmem:[#allocation5 + $0xf20] sm:$0xff]
    %v616 = vld [vmem:[#allocation5 + $0xf28] sm:$0xff]
    %v617 = vld [vmem:[#allocation5 + $0xf30] sm:$0xff]
    %v618 = vld [vmem:[#allocation5 + $0xf38] sm:$0xff]
    %v619 = vld [vmem:[#allocation5 + $0xf40] sm:$0xff]
    %v620 = vld [vmem:[#allocation5 + $0xf48] sm:$0xff]
    %v621 = vld [vmem:[#allocation5 + $0xf50] sm:$0xff]
    %v622 = vld [vmem:[#allocation5 + $0xf58] sm:$0xff]
    %v623 = vld [vmem:[#allocation5 + $0xf60] sm:$0xff]
    %v624 = vld [vmem:[#allocation5 + $0xf68] sm:$0xff]
    %v625 = vld [vmem:[#allocation5 + $0xf70] sm:$0xff]
    %v626 = vld [vmem:[#allocation5 + $0xf78] sm:$0xff]
    %v627 = vld [vmem:[#allocation5 + $0xf80] sm:$0xff]
    %v628 = vld [vmem:[#allocation5 + $0xf88] sm:$0xff]
    %v629 = vld [vmem:[#allocation5 + $0xf90] sm:$0xff]
    %v630 = vld [vmem:[#allocation5 + $0xf98] sm:$0xff]
    %v631 = vld [vmem:[#allocation5 + $0xfa0] sm:$0xff]
    %v632 = vld [vmem:[#allocation5 + $0xfa8] sm:$0xff]
    %v633 = vld [vmem:[#allocation5 + $0xfb0] sm:$0xff]
    %v634 = vld [vmem:[#allocation5 + $0xfb8] sm:$0xff]
    %v635 = vld [vmem:[#allocation5 + $0xfc0] sm:$0xff]
    %v636 = vld [vmem:[#allocation5 + $0xfc8] sm:$0xff]
    %v637 = vld [vmem:[#allocation5 + $0xfd0] sm:$0xff]
    %v638 = vld [vmem:[#allocation5 + $0xfd8] sm:$0xff]
    %v639 = vld [vmem:[#allocation5 + $0xfe0] sm:$0xff]
    %v640 = vld [vmem:[#allocation5 + $0xfe8] sm:$0xff]
    %v641 = vld [vmem:[#allocation5 + $0xff0] sm:$0xff]
    %v642 = vld [vmem:[#allocation5 + $0xff8] sm:$0xff]
    %v643 = vld [vmem:[#allocation7] sm:$0xff]
    %v645 = vlaneseq
    %v646 = vshrl.u32 %v645, 7
    %v647 = vsub.s32 0, %v646
    %v648 = vrot.slane %v643, %v647
    %v649 = vlaneseq
    %v650 = vshrl.u32 %v649, 7
    %v651 = vsub.s32 1, %v650
    %v652 = vrot.slane %v643, %v651
    %v653 = vlaneseq
    %v654 = vshrl.u32 %v653, 7
    %v655 = vsub.s32 2, %v654
    %v656 = vrot.slane %v643, %v655
    %v657 = vlaneseq
    %v658 = vshrl.u32 %v657, 7
    %v659 = vsub.s32 3, %v658
    %v660 = vrot.slane %v643, %v659
    %v661 = vlaneseq
    %v662 = vshrl.u32 %v661, 7
    %v663 = vsub.s32 4, %v662
    %v664 = vrot.slane %v643, %v663
    %v665 = vlaneseq
    %v666 = vshrl.u32 %v665, 7
    %v667 = vsub.s32 5, %v666
    %v668 = vrot.slane %v643, %v667
    %v669 = vlaneseq
    %v670 = vshrl.u32 %v669, 7
    %v671 = vsub.s32 6, %v670
    %v672 = vrot.slane %v643, %v671
    %v673 = vlaneseq
    %v674 = vshrl.u32 %v673, 7
    %v675 = vsub.s32 7, %v674
    %v676 = vrot.slane %v643, %v675
    %v1197 = vunpack.c.l.b16 %v131
    %v1198 = vunpack.c.h.b16 %v131
    %v1199 = vunpack.c.l.b16 %v132
    %v1200 = vunpack.c.h.b16 %v132
    %v1201 = vunpack.c.l.b16 %v133
    %v1202 = vunpack.c.h.b16 %v133
    %v1203 = vunpack.c.l.b16 %v134
    %v1204 = vunpack.c.h.b16 %v134
    %v1205 = vunpack.c.l.b16 %v135
    %v1206 = vunpack.c.h.b16 %v135
    %v1207 = vunpack.c.l.b16 %v136
    %v1208 = vunpack.c.h.b16 %v136
    %v1209 = vunpack.c.l.b16 %v137
    %v1210 = vunpack.c.h.b16 %v137
    %v1211 = vunpack.c.l.b16 %v138
    %v1212 = vunpack.c.h.b16 %v138
    %v1213 = vunpack.c.l.b16 %v139
    %v1214 = vunpack.c.h.b16 %v139
    %v1215 = vunpack.c.l.b16 %v140
    %v1216 = vunpack.c.h.b16 %v140
    %v1217 = vunpack.c.l.b16 %v141
    %v1218 = vunpack.c.h.b16 %v141
    %v1219 = vunpack.c.l.b16 %v142
    %v1220 = vunpack.c.h.b16 %v142
    %v1221 = vunpack.c.l.b16 %v143
    %v1222 = vunpack.c.h.b16 %v143
    %v1223 = vunpack.c.l.b16 %v144
    %v1224 = vunpack.c.h.b16 %v144
    %v1225 = vunpack.c.l.b16 %v145
    %v1226 = vunpack.c.h.b16 %v145
    %v1227 = vunpack.c.l.b16 %v146
    %v1228 = vunpack.c.h.b16 %v146
    %v1229 = vunpack.c.l.b16 %v147
    %v1230 = vunpack.c.h.b16 %v147
    %v1231 = vunpack.c.l.b16 %v148
    %v1232 = vunpack.c.h.b16 %v148
    %v1233 = vunpack.c.l.b16 %v149
    %v1234 = vunpack.c.h.b16 %v149
    %v1235 = vunpack.c.l.b16 %v150
    %v1236 = vunpack.c.h.b16 %v150
    %v1237 = vunpack.c.l.b16 %v151
    %v1238 = vunpack.c.h.b16 %v151
    %v1239 = vunpack.c.l.b16 %v152
    %v1240 = vunpack.c.h.b16 %v152
    %v1241 = vunpack.c.l.b16 %v153
    %v1242 = vunpack.c.h.b16 %v153
    %v1243 = vunpack.c.l.b16 %v154
    %v1244 = vunpack.c.h.b16 %v154
    %v1245 = vunpack.c.l.b16 %v155
    %v1246 = vunpack.c.h.b16 %v155
    %v1247 = vunpack.c.l.b16 %v156
    %v1248 = vunpack.c.h.b16 %v156
    %v1249 = vunpack.c.l.b16 %v157
    %v1250 = vunpack.c.h.b16 %v157
    %v1251 = vunpack.c.l.b16 %v158
    %v1252 = vunpack.c.h.b16 %v158
    %v1253 = vunpack.c.l.b16 %v159
    %v1254 = vunpack.c.h.b16 %v159
    %v1255 = vunpack.c.l.b16 %v160
    %v1256 = vunpack.c.h.b16 %v160
    %v1257 = vunpack.c.l.b16 %v161
    %v1258 = vunpack.c.h.b16 %v161
    %v1259 = vunpack.c.l.b16 %v162
    %v1260 = vunpack.c.h.b16 %v162
    %v1261 = vunpack.c.l.b16 %v163
    %v1262 = vunpack.c.h.b16 %v163
    %v1263 = vunpack.c.l.b16 %v164
    %v1264 = vunpack.c.h.b16 %v164
    %v1265 = vunpack.c.l.b16 %v165
    %v1266 = vunpack.c.h.b16 %v165
    %v1267 = vunpack.c.l.b16 %v166
    %v1268 = vunpack.c.h.b16 %v166
    %v1269 = vunpack.c.l.b16 %v167
    %v1270 = vunpack.c.h.b16 %v167
    %v1271 = vunpack.c.l.b16 %v168
    %v1272 = vunpack.c.h.b16 %v168
    %v1273 = vunpack.c.l.b16 %v169
    %v1274 = vunpack.c.h.b16 %v169
    %v1275 = vunpack.c.l.b16 %v170
    %v1276 = vunpack.c.h.b16 %v170
    %v1277 = vunpack.c.l.b16 %v171
    %v1278 = vunpack.c.h.b16 %v171
    %v1279 = vunpack.c.l.b16 %v172
    %v1280 = vunpack.c.h.b16 %v172
    %v1281 = vunpack.c.l.b16 %v173
    %v1282 = vunpack.c.h.b16 %v173
    %v1283 = vunpack.c.l.b16 %v174
    %v1284 = vunpack.c.h.b16 %v174
    %v1285 = vunpack.c.l.b16 %v175
    %v1286 = vunpack.c.h.b16 %v175
    %v1287 = vunpack.c.l.b16 %v176
    %v1288 = vunpack.c.h.b16 %v176
    %v1289 = vunpack.c.l.b16 %v177
    %v1290 = vunpack.c.h.b16 %v177
    %v1291 = vunpack.c.l.b16 %v178
    %v1292 = vunpack.c.h.b16 %v178
    %v1293 = vunpack.c.l.b16 %v179
    %v1294 = vunpack.c.h.b16 %v179
    %v1295 = vunpack.c.l.b16 %v180
    %v1296 = vunpack.c.h.b16 %v180
    %v1297 = vunpack.c.l.b16 %v181
    %v1298 = vunpack.c.h.b16 %v181
    %v1299 = vunpack.c.l.b16 %v182
    %v1300 = vunpack.c.h.b16 %v182
    %v1301 = vunpack.c.l.b16 %v183
    %v1302 = vunpack.c.h.b16 %v183
    %v1303 = vunpack.c.l.b16 %v184
    %v1304 = vunpack.c.h.b16 %v184
    %v1305 = vunpack.c.l.b16 %v185
    %v1306 = vunpack.c.h.b16 %v185
    %v1307 = vunpack.c.l.b16 %v186
    %v1308 = vunpack.c.h.b16 %v186
    %v1309 = vunpack.c.l.b16 %v187
    %v1310 = vunpack.c.h.b16 %v187
    %v1311 = vunpack.c.l.b16 %v188
    %v1312 = vunpack.c.h.b16 %v188
    %v1313 = vunpack.c.l.b16 %v189
    %v1314 = vunpack.c.h.b16 %v189
    %v1315 = vunpack.c.l.b16 %v190
    %v1316 = vunpack.c.h.b16 %v190
    %v1317 = vunpack.c.l.b16 %v191
    %v1318 = vunpack.c.h.b16 %v191
    %v1319 = vunpack.c.l.b16 %v192
    %v1320 = vunpack.c.h.b16 %v192
    %v1321 = vunpack.c.l.b16 %v193
    %v1322 = vunpack.c.h.b16 %v193
    %v1323 = vunpack.c.l.b16 %v194
    %v1324 = vunpack.c.h.b16 %v194
    %v1325 = vunpack.c.l.b16 %v195
    %v1326 = vunpack.c.h.b16 %v195
    %v1327 = vunpack.c.l.b16 %v196
    %v1328 = vunpack.c.h.b16 %v196
    %v1329 = vunpack.c.l.b16 %v197
    %v1330 = vunpack.c.h.b16 %v197
    %v1331 = vunpack.c.l.b16 %v198
    %v1332 = vunpack.c.h.b16 %v198
    %v1333 = vunpack.c.l.b16 %v199
    %v1334 = vunpack.c.h.b16 %v199
    %v1335 = vunpack.c.l.b16 %v200
    %v1336 = vunpack.c.h.b16 %v200
    %v1337 = vunpack.c.l.b16 %v201
    %v1338 = vunpack.c.h.b16 %v201
    %v1339 = vunpack.c.l.b16 %v202
    %v1340 = vunpack.c.h.b16 %v202
    %v1341 = vunpack.c.l.b16 %v203
    %v1342 = vunpack.c.h.b16 %v203
    %v1343 = vunpack.c.l.b16 %v204
    %v1344 = vunpack.c.h.b16 %v204
    %v1345 = vunpack.c.l.b16 %v205
    %v1346 = vunpack.c.h.b16 %v205
    %v1347 = vunpack.c.l.b16 %v206
    %v1348 = vunpack.c.h.b16 %v206
    %v1349 = vunpack.c.l.b16 %v207
    %v1350 = vunpack.c.h.b16 %v207
    %v1351 = vunpack.c.l.b16 %v208
    %v1352 = vunpack.c.h.b16 %v208
    %v1353 = vunpack.c.l.b16 %v209
    %v1354 = vunpack.c.h.b16 %v209
    %v1355 = vunpack.c.l.b16 %v210
    %v1356 = vunpack.c.h.b16 %v210
    %v1357 = vunpack.c.l.b16 %v211
    %v1358 = vunpack.c.h.b16 %v211
    %v1359 = vunpack.c.l.b16 %v212
    %v1360 = vunpack.c.h.b16 %v212
    %v1361 = vunpack.c.l.b16 %v213
    %v1362 = vunpack.c.h.b16 %v213
    %v1363 = vunpack.c.l.b16 %v214
    %v1364 = vunpack.c.h.b16 %v214
    %v1365 = vunpack.c.l.b16 %v215
    %v1366 = vunpack.c.h.b16 %v215
    %v1367 = vunpack.c.l.b16 %v216
    %v1368 = vunpack.c.h.b16 %v216
    %v1369 = vunpack.c.l.b16 %v217
    %v1370 = vunpack.c.h.b16 %v217
    %v1371 = vunpack.c.l.b16 %v218
    %v1372 = vunpack.c.h.b16 %v218
    %v1373 = vunpack.c.l.b16 %v219
    %v1374 = vunpack.c.h.b16 %v219
    %v1375 = vunpack.c.l.b16 %v220
    %v1376 = vunpack.c.h.b16 %v220
    %v1377 = vunpack.c.l.b16 %v221
    %v1378 = vunpack.c.h.b16 %v221
    %v1379 = vunpack.c.l.b16 %v222
    %v1380 = vunpack.c.h.b16 %v222
    %v1381 = vunpack.c.l.b16 %v223
    %v1382 = vunpack.c.h.b16 %v223
    %v1383 = vunpack.c.l.b16 %v224
    %v1384 = vunpack.c.h.b16 %v224
    %v1385 = vunpack.c.l.b16 %v225
    %v1386 = vunpack.c.h.b16 %v225
    %v1387 = vunpack.c.l.b16 %v226
    %v1388 = vunpack.c.h.b16 %v226
    %v1389 = vunpack.c.l.b16 %v227
    %v1390 = vunpack.c.h.b16 %v227
    %v1391 = vunpack.c.l.b16 %v228
    %v1392 = vunpack.c.h.b16 %v228
    %v1393 = vunpack.c.l.b16 %v229
    %v1394 = vunpack.c.h.b16 %v229
    %v1395 = vunpack.c.l.b16 %v230
    %v1396 = vunpack.c.h.b16 %v230
    %v1397 = vunpack.c.l.b16 %v231
    %v1398 = vunpack.c.h.b16 %v231
    %v1399 = vunpack.c.l.b16 %v232
    %v1400 = vunpack.c.h.b16 %v232
    %v1401 = vunpack.c.l.b16 %v233
    %v1402 = vunpack.c.h.b16 %v233
    %v1403 = vunpack.c.l.b16 %v234
    %v1404 = vunpack.c.h.b16 %v234
    %v1405 = vunpack.c.l.b16 %v235
    %v1406 = vunpack.c.h.b16 %v235
    %v1407 = vunpack.c.l.b16 %v236
    %v1408 = vunpack.c.h.b16 %v236
    %v1409 = vunpack.c.l.b16 %v237
    %v1410 = vunpack.c.h.b16 %v237
    %v1411 = vunpack.c.l.b16 %v238
    %v1412 = vunpack.c.h.b16 %v238
    %v1413 = vunpack.c.l.b16 %v239
    %v1414 = vunpack.c.h.b16 %v239
    %v1415 = vunpack.c.l.b16 %v240
    %v1416 = vunpack.c.h.b16 %v240
    %v1417 = vunpack.c.l.b16 %v241
    %v1418 = vunpack.c.h.b16 %v241
    %v1419 = vunpack.c.l.b16 %v242
    %v1420 = vunpack.c.h.b16 %v242
    %v1421 = vunpack.c.l.b16 %v243
    %v1422 = vunpack.c.h.b16 %v243
    %v1423 = vunpack.c.l.b16 %v244
    %v1424 = vunpack.c.h.b16 %v244
    %v1425 = vunpack.c.l.b16 %v245
    %v1426 = vunpack.c.h.b16 %v245
    %v1427 = vunpack.c.l.b16 %v246
    %v1428 = vunpack.c.h.b16 %v246
    %v1429 = vunpack.c.l.b16 %v247
    %v1430 = vunpack.c.h.b16 %v247
    %v1431 = vunpack.c.l.b16 %v248
    %v1432 = vunpack.c.h.b16 %v248
    %v1433 = vunpack.c.l.b16 %v249
    %v1434 = vunpack.c.h.b16 %v249
    %v1435 = vunpack.c.l.b16 %v250
    %v1436 = vunpack.c.h.b16 %v250
    %v1437 = vunpack.c.l.b16 %v251
    %v1438 = vunpack.c.h.b16 %v251
    %v1439 = vunpack.c.l.b16 %v252
    %v1440 = vunpack.c.h.b16 %v252
    %v1441 = vunpack.c.l.b16 %v253
    %v1442 = vunpack.c.h.b16 %v253
    %v1443 = vunpack.c.l.b16 %v254
    %v1444 = vunpack.c.h.b16 %v254
    %v1445 = vunpack.c.l.b16 %v255
    %v1446 = vunpack.c.h.b16 %v255
    %v1447 = vunpack.c.l.b16 %v256
    %v1448 = vunpack.c.h.b16 %v256
    %v1449 = vunpack.c.l.b16 %v257
    %v1450 = vunpack.c.h.b16 %v257
    %v1451 = vunpack.c.l.b16 %v258
    %v1452 = vunpack.c.h.b16 %v258
    %v1453 = vunpack.c.l.b16 %v259
    %v1454 = vunpack.c.h.b16 %v259
    %v1455 = vunpack.c.l.b16 %v260
    %v1456 = vunpack.c.h.b16 %v260
    %v1457 = vunpack.c.l.b16 %v261
    %v1458 = vunpack.c.h.b16 %v261
    %v1459 = vunpack.c.l.b16 %v262
    %v1460 = vunpack.c.h.b16 %v262
    %v1461 = vunpack.c.l.b16 %v263
    %v1462 = vunpack.c.h.b16 %v263
    %v1463 = vunpack.c.l.b16 %v264
    %v1464 = vunpack.c.h.b16 %v264
    %v1465 = vunpack.c.l.b16 %v265
    %v1466 = vunpack.c.h.b16 %v265
    %v1467 = vunpack.c.l.b16 %v266
    %v1468 = vunpack.c.h.b16 %v266
    %v1469 = vunpack.c.l.b16 %v267
    %v1470 = vunpack.c.h.b16 %v267
    %v1471 = vunpack.c.l.b16 %v268
    %v1472 = vunpack.c.h.b16 %v268
    %v1473 = vunpack.c.l.b16 %v269
    %v1474 = vunpack.c.h.b16 %v269
    %v1475 = vunpack.c.l.b16 %v270
    %v1476 = vunpack.c.h.b16 %v270
    %v1477 = vunpack.c.l.b16 %v271
    %v1478 = vunpack.c.h.b16 %v271
    %v1479 = vunpack.c.l.b16 %v272
    %v1480 = vunpack.c.h.b16 %v272
    %v1481 = vunpack.c.l.b16 %v273
    %v1482 = vunpack.c.h.b16 %v273
    %v1483 = vunpack.c.l.b16 %v274
    %v1484 = vunpack.c.h.b16 %v274
    %v1485 = vunpack.c.l.b16 %v275
    %v1486 = vunpack.c.h.b16 %v275
    %v1487 = vunpack.c.l.b16 %v276
    %v1488 = vunpack.c.h.b16 %v276
    %v1489 = vunpack.c.l.b16 %v277
    %v1490 = vunpack.c.h.b16 %v277
    %v1491 = vunpack.c.l.b16 %v278
    %v1492 = vunpack.c.h.b16 %v278
    %v1493 = vunpack.c.l.b16 %v279
    %v1494 = vunpack.c.h.b16 %v279
    %v1495 = vunpack.c.l.b16 %v280
    %v1496 = vunpack.c.h.b16 %v280
    %v1497 = vunpack.c.l.b16 %v281
    %v1498 = vunpack.c.h.b16 %v281
    %v1499 = vunpack.c.l.b16 %v282
    %v1500 = vunpack.c.h.b16 %v282
    %v1501 = vunpack.c.l.b16 %v283
    %v1502 = vunpack.c.h.b16 %v283
    %v1503 = vunpack.c.l.b16 %v284
    %v1504 = vunpack.c.h.b16 %v284
    %v1505 = vunpack.c.l.b16 %v285
    %v1506 = vunpack.c.h.b16 %v285
    %v1507 = vunpack.c.l.b16 %v286
    %v1508 = vunpack.c.h.b16 %v286
    %v1509 = vunpack.c.l.b16 %v287
    %v1510 = vunpack.c.h.b16 %v287
    %v1511 = vunpack.c.l.b16 %v288
    %v1512 = vunpack.c.h.b16 %v288
    %v1513 = vunpack.c.l.b16 %v289
    %v1514 = vunpack.c.h.b16 %v289
    %v1515 = vunpack.c.l.b16 %v290
    %v1516 = vunpack.c.h.b16 %v290
    %v1517 = vunpack.c.l.b16 %v291
    %v1518 = vunpack.c.h.b16 %v291
    %v1519 = vunpack.c.l.b16 %v292
    %v1520 = vunpack.c.h.b16 %v292
    %v1521 = vunpack.c.l.b16 %v293
    %v1522 = vunpack.c.h.b16 %v293
    %v1523 = vunpack.c.l.b16 %v294
    %v1524 = vunpack.c.h.b16 %v294
    %v1525 = vunpack.c.l.b16 %v295
    %v1526 = vunpack.c.h.b16 %v295
    %v1527 = vunpack.c.l.b16 %v296
    %v1528 = vunpack.c.h.b16 %v296
    %v1529 = vunpack.c.l.b16 %v297
    %v1530 = vunpack.c.h.b16 %v297
    %v1531 = vunpack.c.l.b16 %v298
    %v1532 = vunpack.c.h.b16 %v298
    %v1533 = vunpack.c.l.b16 %v299
    %v1534 = vunpack.c.h.b16 %v299
    %v1535 = vunpack.c.l.b16 %v300
    %v1536 = vunpack.c.h.b16 %v300
    %v1537 = vunpack.c.l.b16 %v301
    %v1538 = vunpack.c.h.b16 %v301
    %v1539 = vunpack.c.l.b16 %v302
    %v1540 = vunpack.c.h.b16 %v302
    %v1541 = vunpack.c.l.b16 %v303
    %v1542 = vunpack.c.h.b16 %v303
    %v1543 = vunpack.c.l.b16 %v304
    %v1544 = vunpack.c.h.b16 %v304
    %v1545 = vunpack.c.l.b16 %v305
    %v1546 = vunpack.c.h.b16 %v305
    %v1547 = vunpack.c.l.b16 %v306
    %v1548 = vunpack.c.h.b16 %v306
    %v1549 = vunpack.c.l.b16 %v307
    %v1550 = vunpack.c.h.b16 %v307
    %v1551 = vunpack.c.l.b16 %v308
    %v1552 = vunpack.c.h.b16 %v308
    %v1553 = vunpack.c.l.b16 %v309
    %v1554 = vunpack.c.h.b16 %v309
    %v1555 = vunpack.c.l.b16 %v310
    %v1556 = vunpack.c.h.b16 %v310
    %v1557 = vunpack.c.l.b16 %v311
    %v1558 = vunpack.c.h.b16 %v311
    %v1559 = vunpack.c.l.b16 %v312
    %v1560 = vunpack.c.h.b16 %v312
    %v1561 = vunpack.c.l.b16 %v313
    %v1562 = vunpack.c.h.b16 %v313
    %v1563 = vunpack.c.l.b16 %v314
    %v1564 = vunpack.c.h.b16 %v314
    %v1565 = vunpack.c.l.b16 %v315
    %v1566 = vunpack.c.h.b16 %v315
    %v1567 = vunpack.c.l.b16 %v316
    %v1568 = vunpack.c.h.b16 %v316
    %v1569 = vunpack.c.l.b16 %v317
    %v1570 = vunpack.c.h.b16 %v317
    %v1571 = vunpack.c.l.b16 %v318
    %v1572 = vunpack.c.h.b16 %v318
    %v1573 = vunpack.c.l.b16 %v319
    %v1574 = vunpack.c.h.b16 %v319
    %v1575 = vunpack.c.l.b16 %v320
    %v1576 = vunpack.c.h.b16 %v320
    %v1577 = vunpack.c.l.b16 %v321
    %v1578 = vunpack.c.h.b16 %v321
    %v1579 = vunpack.c.l.b16 %v322
    %v1580 = vunpack.c.h.b16 %v322
    %v1581 = vunpack.c.l.b16 %v323
    %v1582 = vunpack.c.h.b16 %v323
    %v1583 = vunpack.c.l.b16 %v324
    %v1584 = vunpack.c.h.b16 %v324
    %v1585 = vunpack.c.l.b16 %v325
    %v1586 = vunpack.c.h.b16 %v325
    %v1587 = vunpack.c.l.b16 %v326
    %v1588 = vunpack.c.h.b16 %v326
    %v1589 = vunpack.c.l.b16 %v327
    %v1590 = vunpack.c.h.b16 %v327
    %v1591 = vunpack.c.l.b16 %v328
    %v1592 = vunpack.c.h.b16 %v328
    %v1593 = vunpack.c.l.b16 %v329
    %v1594 = vunpack.c.h.b16 %v329
    %v1595 = vunpack.c.l.b16 %v330
    %v1596 = vunpack.c.h.b16 %v330
    %v1597 = vunpack.c.l.b16 %v331
    %v1598 = vunpack.c.h.b16 %v331
    %v1599 = vunpack.c.l.b16 %v332
    %v1600 = vunpack.c.h.b16 %v332
    %v1601 = vunpack.c.l.b16 %v333
    %v1602 = vunpack.c.h.b16 %v333
    %v1603 = vunpack.c.l.b16 %v334
    %v1604 = vunpack.c.h.b16 %v334
    %v1605 = vunpack.c.l.b16 %v335
    %v1606 = vunpack.c.h.b16 %v335
    %v1607 = vunpack.c.l.b16 %v336
    %v1608 = vunpack.c.h.b16 %v336
    %v1609 = vunpack.c.l.b16 %v337
    %v1610 = vunpack.c.h.b16 %v337
    %v1611 = vunpack.c.l.b16 %v338
    %v1612 = vunpack.c.h.b16 %v338
    %v1613 = vunpack.c.l.b16 %v339
    %v1614 = vunpack.c.h.b16 %v339
    %v1615 = vunpack.c.l.b16 %v340
    %v1616 = vunpack.c.h.b16 %v340
    %v1617 = vunpack.c.l.b16 %v341
    %v1618 = vunpack.c.h.b16 %v341
    %v1619 = vunpack.c.l.b16 %v342
    %v1620 = vunpack.c.h.b16 %v342
    %v1621 = vunpack.c.l.b16 %v343
    %v1622 = vunpack.c.h.b16 %v343
    %v1623 = vunpack.c.l.b16 %v344
    %v1624 = vunpack.c.h.b16 %v344
    %v1625 = vunpack.c.l.b16 %v345
    %v1626 = vunpack.c.h.b16 %v345
    %v1627 = vunpack.c.l.b16 %v346
    %v1628 = vunpack.c.h.b16 %v346
    %v1629 = vunpack.c.l.b16 %v347
    %v1630 = vunpack.c.h.b16 %v347
    %v1631 = vunpack.c.l.b16 %v348
    %v1632 = vunpack.c.h.b16 %v348
    %v1633 = vunpack.c.l.b16 %v349
    %v1634 = vunpack.c.h.b16 %v349
    %v1635 = vunpack.c.l.b16 %v350
    %v1636 = vunpack.c.h.b16 %v350
    %v1637 = vunpack.c.l.b16 %v351
    %v1638 = vunpack.c.h.b16 %v351
    %v1639 = vunpack.c.l.b16 %v352
    %v1640 = vunpack.c.h.b16 %v352
    %v1641 = vunpack.c.l.b16 %v353
    %v1642 = vunpack.c.h.b16 %v353
    %v1643 = vunpack.c.l.b16 %v354
    %v1644 = vunpack.c.h.b16 %v354
    %v1645 = vunpack.c.l.b16 %v355
    %v1646 = vunpack.c.h.b16 %v355
    %v1647 = vunpack.c.l.b16 %v356
    %v1648 = vunpack.c.h.b16 %v356
    %v1649 = vunpack.c.l.b16 %v357
    %v1650 = vunpack.c.h.b16 %v357
    %v1651 = vunpack.c.l.b16 %v358
    %v1652 = vunpack.c.h.b16 %v358
    %v1653 = vunpack.c.l.b16 %v359
    %v1654 = vunpack.c.h.b16 %v359
    %v1655 = vunpack.c.l.b16 %v360
    %v1656 = vunpack.c.h.b16 %v360
    %v1657 = vunpack.c.l.b16 %v361
    %v1658 = vunpack.c.h.b16 %v361
    %v1659 = vunpack.c.l.b16 %v362
    %v1660 = vunpack.c.h.b16 %v362
    %v1661 = vunpack.c.l.b16 %v363
    %v1662 = vunpack.c.h.b16 %v363
    %v1663 = vunpack.c.l.b16 %v364
    %v1664 = vunpack.c.h.b16 %v364
    %v1665 = vunpack.c.l.b16 %v365
    %v1666 = vunpack.c.h.b16 %v365
    %v1667 = vunpack.c.l.b16 %v366
    %v1668 = vunpack.c.h.b16 %v366
    %v1669 = vunpack.c.l.b16 %v367
    %v1670 = vunpack.c.h.b16 %v367
    %v1671 = vunpack.c.l.b16 %v368
    %v1672 = vunpack.c.h.b16 %v368
    %v1673 = vunpack.c.l.b16 %v369
    %v1674 = vunpack.c.h.b16 %v369
    %v1675 = vunpack.c.l.b16 %v370
    %v1676 = vunpack.c.h.b16 %v370
    %v1677 = vunpack.c.l.b16 %v371
    %v1678 = vunpack.c.h.b16 %v371
    %v1679 = vunpack.c.l.b16 %v372
    %v1680 = vunpack.c.h.b16 %v372
    %v1681 = vunpack.c.l.b16 %v373
    %v1682 = vunpack.c.h.b16 %v373
    %v1683 = vunpack.c.l.b16 %v374
    %v1684 = vunpack.c.h.b16 %v374
    %v1685 = vunpack.c.l.b16 %v375
    %v1686 = vunpack.c.h.b16 %v375
    %v1687 = vunpack.c.l.b16 %v376
    %v1688 = vunpack.c.h.b16 %v376
    %v1689 = vunpack.c.l.b16 %v377
    %v1690 = vunpack.c.h.b16 %v377
    %v1691 = vunpack.c.l.b16 %v378
    %v1692 = vunpack.c.h.b16 %v378
    %v1693 = vunpack.c.l.b16 %v379
    %v1694 = vunpack.c.h.b16 %v379
    %v1695 = vunpack.c.l.b16 %v380
    %v1696 = vunpack.c.h.b16 %v380
    %v1697 = vunpack.c.l.b16 %v381
    %v1698 = vunpack.c.h.b16 %v381
    %v1699 = vunpack.c.l.b16 %v382
    %v1700 = vunpack.c.h.b16 %v382
    %v1701 = vunpack.c.l.b16 %v383
    %v1702 = vunpack.c.h.b16 %v383
    %v1703 = vunpack.c.l.b16 %v384
    %v1704 = vunpack.c.h.b16 %v384
    %v1705 = vunpack.c.l.b16 %v385
    %v1706 = vunpack.c.h.b16 %v385
    %v1707 = vunpack.c.l.b16 %v386
    %v1708 = vunpack.c.h.b16 %v386
    %v1709 = vunpack.c.l.b16 %v387
    %v1710 = vunpack.c.h.b16 %v387
    %v1711 = vunpack.c.l.b16 %v388
    %v1712 = vunpack.c.h.b16 %v388
    %v1713 = vunpack.c.l.b16 %v389
    %v1714 = vunpack.c.h.b16 %v389
    %v1715 = vunpack.c.l.b16 %v390
    %v1716 = vunpack.c.h.b16 %v390
    %v1717 = vunpack.c.l.b16 %v391
    %v1718 = vunpack.c.h.b16 %v391
    %v1719 = vunpack.c.l.b16 %v392
    %v1720 = vunpack.c.h.b16 %v392
    %v1721 = vunpack.c.l.b16 %v393
    %v1722 = vunpack.c.h.b16 %v393
    %v1723 = vunpack.c.l.b16 %v394
    %v1724 = vunpack.c.h.b16 %v394
    %v1725 = vunpack.c.l.b16 %v395
    %v1726 = vunpack.c.h.b16 %v395
    %v1727 = vunpack.c.l.b16 %v396
    %v1728 = vunpack.c.h.b16 %v396
    %v1729 = vunpack.c.l.b16 %v397
    %v1730 = vunpack.c.h.b16 %v397
    %v1731 = vunpack.c.l.b16 %v398
    %v1732 = vunpack.c.h.b16 %v398
    %v1733 = vunpack.c.l.b16 %v399
    %v1734 = vunpack.c.h.b16 %v399
    %v1735 = vunpack.c.l.b16 %v400
    %v1736 = vunpack.c.h.b16 %v400
    %v1737 = vunpack.c.l.b16 %v401
    %v1738 = vunpack.c.h.b16 %v401
    %v1739 = vunpack.c.l.b16 %v402
    %v1740 = vunpack.c.h.b16 %v402
    %v1741 = vunpack.c.l.b16 %v403
    %v1742 = vunpack.c.h.b16 %v403
    %v1743 = vunpack.c.l.b16 %v404
    %v1744 = vunpack.c.h.b16 %v404
    %v1745 = vunpack.c.l.b16 %v405
    %v1746 = vunpack.c.h.b16 %v405
    %v1747 = vunpack.c.l.b16 %v406
    %v1748 = vunpack.c.h.b16 %v406
    %v1749 = vunpack.c.l.b16 %v407
    %v1750 = vunpack.c.h.b16 %v407
    %v1751 = vunpack.c.l.b16 %v408
    %v1752 = vunpack.c.h.b16 %v408
    %v1753 = vunpack.c.l.b16 %v409
    %v1754 = vunpack.c.h.b16 %v409
    %v1755 = vunpack.c.l.b16 %v410
    %v1756 = vunpack.c.h.b16 %v410
    %v1757 = vunpack.c.l.b16 %v411
    %v1758 = vunpack.c.h.b16 %v411
    %v1759 = vunpack.c.l.b16 %v412
    %v1760 = vunpack.c.h.b16 %v412
    %v1761 = vunpack.c.l.b16 %v413
    %v1762 = vunpack.c.h.b16 %v413
    %v1763 = vunpack.c.l.b16 %v414
    %v1764 = vunpack.c.h.b16 %v414
    %v1765 = vunpack.c.l.b16 %v415
    %v1766 = vunpack.c.h.b16 %v415
    %v1767 = vunpack.c.l.b16 %v416
    %v1768 = vunpack.c.h.b16 %v416
    %v1769 = vunpack.c.l.b16 %v417
    %v1770 = vunpack.c.h.b16 %v417
    %v1771 = vunpack.c.l.b16 %v418
    %v1772 = vunpack.c.h.b16 %v418
    %v1773 = vunpack.c.l.b16 %v419
    %v1774 = vunpack.c.h.b16 %v419
    %v1775 = vunpack.c.l.b16 %v420
    %v1776 = vunpack.c.h.b16 %v420
    %v1777 = vunpack.c.l.b16 %v421
    %v1778 = vunpack.c.h.b16 %v421
    %v1779 = vunpack.c.l.b16 %v422
    %v1780 = vunpack.c.h.b16 %v422
    %v1781 = vunpack.c.l.b16 %v423
    %v1782 = vunpack.c.h.b16 %v423
    %v1783 = vunpack.c.l.b16 %v424
    %v1784 = vunpack.c.h.b16 %v424
    %v1785 = vunpack.c.l.b16 %v425
    %v1786 = vunpack.c.h.b16 %v425
    %v1787 = vunpack.c.l.b16 %v426
    %v1788 = vunpack.c.h.b16 %v426
    %v1789 = vunpack.c.l.b16 %v427
    %v1790 = vunpack.c.h.b16 %v427
    %v1791 = vunpack.c.l.b16 %v428
    %v1792 = vunpack.c.h.b16 %v428
    %v1793 = vunpack.c.l.b16 %v429
    %v1794 = vunpack.c.h.b16 %v429
    %v1795 = vunpack.c.l.b16 %v430
    %v1796 = vunpack.c.h.b16 %v430
    %v1797 = vunpack.c.l.b16 %v431
    %v1798 = vunpack.c.h.b16 %v431
    %v1799 = vunpack.c.l.b16 %v432
    %v1800 = vunpack.c.h.b16 %v432
    %v1801 = vunpack.c.l.b16 %v433
    %v1802 = vunpack.c.h.b16 %v433
    %v1803 = vunpack.c.l.b16 %v434
    %v1804 = vunpack.c.h.b16 %v434
    %v1805 = vunpack.c.l.b16 %v435
    %v1806 = vunpack.c.h.b16 %v435
    %v1807 = vunpack.c.l.b16 %v436
    %v1808 = vunpack.c.h.b16 %v436
    %v1809 = vunpack.c.l.b16 %v437
    %v1810 = vunpack.c.h.b16 %v437
    %v1811 = vunpack.c.l.b16 %v438
    %v1812 = vunpack.c.h.b16 %v438
    %v1813 = vunpack.c.l.b16 %v439
    %v1814 = vunpack.c.h.b16 %v439
    %v1815 = vunpack.c.l.b16 %v440
    %v1816 = vunpack.c.h.b16 %v440
    %v1817 = vunpack.c.l.b16 %v441
    %v1818 = vunpack.c.h.b16 %v441
    %v1819 = vunpack.c.l.b16 %v442
    %v1820 = vunpack.c.h.b16 %v442
    %v1821 = vunpack.c.l.b16 %v443
    %v1822 = vunpack.c.h.b16 %v443
    %v1823 = vunpack.c.l.b16 %v444
    %v1824 = vunpack.c.h.b16 %v444
    %v1825 = vunpack.c.l.b16 %v445
    %v1826 = vunpack.c.h.b16 %v445
    %v1827 = vunpack.c.l.b16 %v446
    %v1828 = vunpack.c.h.b16 %v446
    %v1829 = vunpack.c.l.b16 %v447
    %v1830 = vunpack.c.h.b16 %v447
    %v1831 = vunpack.c.l.b16 %v448
    %v1832 = vunpack.c.h.b16 %v448
    %v1833 = vunpack.c.l.b16 %v449
    %v1834 = vunpack.c.h.b16 %v449
    %v1835 = vunpack.c.l.b16 %v450
    %v1836 = vunpack.c.h.b16 %v450
    %v1837 = vunpack.c.l.b16 %v451
    %v1838 = vunpack.c.h.b16 %v451
    %v1839 = vunpack.c.l.b16 %v452
    %v1840 = vunpack.c.h.b16 %v452
    %v1841 = vunpack.c.l.b16 %v453
    %v1842 = vunpack.c.h.b16 %v453
    %v1843 = vunpack.c.l.b16 %v454
    %v1844 = vunpack.c.h.b16 %v454
    %v1845 = vunpack.c.l.b16 %v455
    %v1846 = vunpack.c.h.b16 %v455
    %v1847 = vunpack.c.l.b16 %v456
    %v1848 = vunpack.c.h.b16 %v456
    %v1849 = vunpack.c.l.b16 %v457
    %v1850 = vunpack.c.h.b16 %v457
    %v1851 = vunpack.c.l.b16 %v458
    %v1852 = vunpack.c.h.b16 %v458
    %v1853 = vunpack.c.l.b16 %v459
    %v1854 = vunpack.c.h.b16 %v459
    %v1855 = vunpack.c.l.b16 %v460
    %v1856 = vunpack.c.h.b16 %v460
    %v1857 = vunpack.c.l.b16 %v461
    %v1858 = vunpack.c.h.b16 %v461
    %v1859 = vunpack.c.l.b16 %v462
    %v1860 = vunpack.c.h.b16 %v462
    %v1861 = vunpack.c.l.b16 %v463
    %v1862 = vunpack.c.h.b16 %v463
    %v1863 = vunpack.c.l.b16 %v464
    %v1864 = vunpack.c.h.b16 %v464
    %v1865 = vunpack.c.l.b16 %v465
    %v1866 = vunpack.c.h.b16 %v465
    %v1867 = vunpack.c.l.b16 %v466
    %v1868 = vunpack.c.h.b16 %v466
    %v1869 = vunpack.c.l.b16 %v467
    %v1870 = vunpack.c.h.b16 %v467
    %v1871 = vunpack.c.l.b16 %v468
    %v1872 = vunpack.c.h.b16 %v468
    %v1873 = vunpack.c.l.b16 %v469
    %v1874 = vunpack.c.h.b16 %v469
    %v1875 = vunpack.c.l.b16 %v470
    %v1876 = vunpack.c.h.b16 %v470
    %v1877 = vunpack.c.l.b16 %v471
    %v1878 = vunpack.c.h.b16 %v471
    %v1879 = vunpack.c.l.b16 %v472
    %v1880 = vunpack.c.h.b16 %v472
    %v1881 = vunpack.c.l.b16 %v473
    %v1882 = vunpack.c.h.b16 %v473
    %v1883 = vunpack.c.l.b16 %v474
    %v1884 = vunpack.c.h.b16 %v474
    %v1885 = vunpack.c.l.b16 %v475
    %v1886 = vunpack.c.h.b16 %v475
    %v1887 = vunpack.c.l.b16 %v476
    %v1888 = vunpack.c.h.b16 %v476
    %v1889 = vunpack.c.l.b16 %v477
    %v1890 = vunpack.c.h.b16 %v477
    %v1891 = vunpack.c.l.b16 %v478
    %v1892 = vunpack.c.h.b16 %v478
    %v1893 = vunpack.c.l.b16 %v479
    %v1894 = vunpack.c.h.b16 %v479
    %v1895 = vunpack.c.l.b16 %v480
    %v1896 = vunpack.c.h.b16 %v480
    %v1897 = vunpack.c.l.b16 %v481
    %v1898 = vunpack.c.h.b16 %v481
    %v1899 = vunpack.c.l.b16 %v482
    %v1900 = vunpack.c.h.b16 %v482
    %v1901 = vunpack.c.l.b16 %v483
    %v1902 = vunpack.c.h.b16 %v483
    %v1903 = vunpack.c.l.b16 %v484
    %v1904 = vunpack.c.h.b16 %v484
    %v1905 = vunpack.c.l.b16 %v485
    %v1906 = vunpack.c.h.b16 %v485
    %v1907 = vunpack.c.l.b16 %v486
    %v1908 = vunpack.c.h.b16 %v486
    %v1909 = vunpack.c.l.b16 %v487
    %v1910 = vunpack.c.h.b16 %v487
    %v1911 = vunpack.c.l.b16 %v488
    %v1912 = vunpack.c.h.b16 %v488
    %v1913 = vunpack.c.l.b16 %v489
    %v1914 = vunpack.c.h.b16 %v489
    %v1915 = vunpack.c.l.b16 %v490
    %v1916 = vunpack.c.h.b16 %v490
    %v1917 = vunpack.c.l.b16 %v491
    %v1918 = vunpack.c.h.b16 %v491
    %v1919 = vunpack.c.l.b16 %v492
    %v1920 = vunpack.c.h.b16 %v492
    %v1921 = vunpack.c.l.b16 %v493
    %v1922 = vunpack.c.h.b16 %v493
    %v1923 = vunpack.c.l.b16 %v494
    %v1924 = vunpack.c.h.b16 %v494
    %v1925 = vunpack.c.l.b16 %v495
    %v1926 = vunpack.c.h.b16 %v495
    %v1927 = vunpack.c.l.b16 %v496
    %v1928 = vunpack.c.h.b16 %v496
    %v1929 = vunpack.c.l.b16 %v497
    %v1930 = vunpack.c.h.b16 %v497
    %v1931 = vunpack.c.l.b16 %v498
    %v1932 = vunpack.c.h.b16 %v498
    %v1933 = vunpack.c.l.b16 %v499
    %v1934 = vunpack.c.h.b16 %v499
    %v1935 = vunpack.c.l.b16 %v500
    %v1936 = vunpack.c.h.b16 %v500
    %v1937 = vunpack.c.l.b16 %v501
    %v1938 = vunpack.c.h.b16 %v501
    %v1939 = vunpack.c.l.b16 %v502
    %v1940 = vunpack.c.h.b16 %v502
    %v1941 = vunpack.c.l.b16 %v503
    %v1942 = vunpack.c.h.b16 %v503
    %v1943 = vunpack.c.l.b16 %v504
    %v1944 = vunpack.c.h.b16 %v504
    %v1945 = vunpack.c.l.b16 %v505
    %v1946 = vunpack.c.h.b16 %v505
    %v1947 = vunpack.c.l.b16 %v506
    %v1948 = vunpack.c.h.b16 %v506
    %v1949 = vunpack.c.l.b16 %v507
    %v1950 = vunpack.c.h.b16 %v507
    %v1951 = vunpack.c.l.b16 %v508
    %v1952 = vunpack.c.h.b16 %v508
    %v1953 = vunpack.c.l.b16 %v509
    %v1954 = vunpack.c.h.b16 %v509
    %v1955 = vunpack.c.l.b16 %v510
    %v1956 = vunpack.c.h.b16 %v510
    %v1957 = vunpack.c.l.b16 %v511
    %v1958 = vunpack.c.h.b16 %v511
    %v1959 = vunpack.c.l.b16 %v512
    %v1960 = vunpack.c.h.b16 %v512
    %v1961 = vunpack.c.l.b16 %v513
    %v1962 = vunpack.c.h.b16 %v513
    %v1963 = vunpack.c.l.b16 %v514
    %v1964 = vunpack.c.h.b16 %v514
    %v1965 = vunpack.c.l.b16 %v515
    %v1966 = vunpack.c.h.b16 %v515
    %v1967 = vunpack.c.l.b16 %v516
    %v1968 = vunpack.c.h.b16 %v516
    %v1969 = vunpack.c.l.b16 %v517
    %v1970 = vunpack.c.h.b16 %v517
    %v1971 = vunpack.c.l.b16 %v518
    %v1972 = vunpack.c.h.b16 %v518
    %v1973 = vunpack.c.l.b16 %v519
    %v1974 = vunpack.c.h.b16 %v519
    %v1975 = vunpack.c.l.b16 %v520
    %v1976 = vunpack.c.h.b16 %v520
    %v1977 = vunpack.c.l.b16 %v521
    %v1978 = vunpack.c.h.b16 %v521
    %v1979 = vunpack.c.l.b16 %v522
    %v1980 = vunpack.c.h.b16 %v522
    %v1981 = vunpack.c.l.b16 %v523
    %v1982 = vunpack.c.h.b16 %v523
    %v1983 = vunpack.c.l.b16 %v524
    %v1984 = vunpack.c.h.b16 %v524
    %v1985 = vunpack.c.l.b16 %v525
    %v1986 = vunpack.c.h.b16 %v525
    %v1987 = vunpack.c.l.b16 %v526
    %v1988 = vunpack.c.h.b16 %v526
    %v1989 = vunpack.c.l.b16 %v527
    %v1990 = vunpack.c.h.b16 %v527
    %v1991 = vunpack.c.l.b16 %v528
    %v1992 = vunpack.c.h.b16 %v528
    %v1993 = vunpack.c.l.b16 %v529
    %v1994 = vunpack.c.h.b16 %v529
    %v1995 = vunpack.c.l.b16 %v530
    %v1996 = vunpack.c.h.b16 %v530
    %v1997 = vunpack.c.l.b16 %v531
    %v1998 = vunpack.c.h.b16 %v531
    %v1999 = vunpack.c.l.b16 %v532
    %v2000 = vunpack.c.h.b16 %v532
    %v2001 = vunpack.c.l.b16 %v533
    %v2002 = vunpack.c.h.b16 %v533
    %v2003 = vunpack.c.l.b16 %v534
    %v2004 = vunpack.c.h.b16 %v534
    %v2005 = vunpack.c.l.b16 %v535
    %v2006 = vunpack.c.h.b16 %v535
    %v2007 = vunpack.c.l.b16 %v536
    %v2008 = vunpack.c.h.b16 %v536
    %v2009 = vunpack.c.l.b16 %v537
    %v2010 = vunpack.c.h.b16 %v537
    %v2011 = vunpack.c.l.b16 %v538
    %v2012 = vunpack.c.h.b16 %v538
    %v2013 = vunpack.c.l.b16 %v539
    %v2014 = vunpack.c.h.b16 %v539
    %v2015 = vunpack.c.l.b16 %v540
    %v2016 = vunpack.c.h.b16 %v540
    %v2017 = vunpack.c.l.b16 %v541
    %v2018 = vunpack.c.h.b16 %v541
    %v2019 = vunpack.c.l.b16 %v542
    %v2020 = vunpack.c.h.b16 %v542
    %v2021 = vunpack.c.l.b16 %v543
    %v2022 = vunpack.c.h.b16 %v543
    %v2023 = vunpack.c.l.b16 %v544
    %v2024 = vunpack.c.h.b16 %v544
    %v2025 = vunpack.c.l.b16 %v545
    %v2026 = vunpack.c.h.b16 %v545
    %v2027 = vunpack.c.l.b16 %v546
    %v2028 = vunpack.c.h.b16 %v546
    %v2029 = vunpack.c.l.b16 %v547
    %v2030 = vunpack.c.h.b16 %v547
    %v2031 = vunpack.c.l.b16 %v548
    %v2032 = vunpack.c.h.b16 %v548
    %v2033 = vunpack.c.l.b16 %v549
    %v2034 = vunpack.c.h.b16 %v549
    %v2035 = vunpack.c.l.b16 %v550
    %v2036 = vunpack.c.h.b16 %v550
    %v2037 = vunpack.c.l.b16 %v551
    %v2038 = vunpack.c.h.b16 %v551
    %v2039 = vunpack.c.l.b16 %v552
    %v2040 = vunpack.c.h.b16 %v552
    %v2041 = vunpack.c.l.b16 %v553
    %v2042 = vunpack.c.h.b16 %v553
    %v2043 = vunpack.c.l.b16 %v554
    %v2044 = vunpack.c.h.b16 %v554
    %v2045 = vunpack.c.l.b16 %v555
    %v2046 = vunpack.c.h.b16 %v555
    %v2047 = vunpack.c.l.b16 %v556
    %v2048 = vunpack.c.h.b16 %v556
    %v2049 = vunpack.c.l.b16 %v557
    %v2050 = vunpack.c.h.b16 %v557
    %v2051 = vunpack.c.l.b16 %v558
    %v2052 = vunpack.c.h.b16 %v558
    %v2053 = vunpack.c.l.b16 %v559
    %v2054 = vunpack.c.h.b16 %v559
    %v2055 = vunpack.c.l.b16 %v560
    %v2056 = vunpack.c.h.b16 %v560
    %v2057 = vunpack.c.l.b16 %v561
    %v2058 = vunpack.c.h.b16 %v561
    %v2059 = vunpack.c.l.b16 %v562
    %v2060 = vunpack.c.h.b16 %v562
    %v2061 = vunpack.c.l.b16 %v563
    %v2062 = vunpack.c.h.b16 %v563
    %v2063 = vunpack.c.l.b16 %v564
    %v2064 = vunpack.c.h.b16 %v564
    %v2065 = vunpack.c.l.b16 %v565
    %v2066 = vunpack.c.h.b16 %v565
    %v2067 = vunpack.c.l.b16 %v566
    %v2068 = vunpack.c.h.b16 %v566
    %v2069 = vunpack.c.l.b16 %v567
    %v2070 = vunpack.c.h.b16 %v567
    %v2071 = vunpack.c.l.b16 %v568
    %v2072 = vunpack.c.h.b16 %v568
    %v2073 = vunpack.c.l.b16 %v569
    %v2074 = vunpack.c.h.b16 %v569
    %v2075 = vunpack.c.l.b16 %v570
    %v2076 = vunpack.c.h.b16 %v570
    %v2077 = vunpack.c.l.b16 %v571
    %v2078 = vunpack.c.h.b16 %v571
    %v2079 = vunpack.c.l.b16 %v572
    %v2080 = vunpack.c.h.b16 %v572
    %v2081 = vunpack.c.l.b16 %v573
    %v2082 = vunpack.c.h.b16 %v573
    %v2083 = vunpack.c.l.b16 %v574
    %v2084 = vunpack.c.h.b16 %v574
    %v2085 = vunpack.c.l.b16 %v575
    %v2086 = vunpack.c.h.b16 %v575
    %v2087 = vunpack.c.l.b16 %v576
    %v2088 = vunpack.c.h.b16 %v576
    %v2089 = vunpack.c.l.b16 %v577
    %v2090 = vunpack.c.h.b16 %v577
    %v2091 = vunpack.c.l.b16 %v578
    %v2092 = vunpack.c.h.b16 %v578
    %v2093 = vunpack.c.l.b16 %v579
    %v2094 = vunpack.c.h.b16 %v579
    %v2095 = vunpack.c.l.b16 %v580
    %v2096 = vunpack.c.h.b16 %v580
    %v2097 = vunpack.c.l.b16 %v581
    %v2098 = vunpack.c.h.b16 %v581
    %v2099 = vunpack.c.l.b16 %v582
    %v2100 = vunpack.c.h.b16 %v582
    %v2101 = vunpack.c.l.b16 %v583
    %v2102 = vunpack.c.h.b16 %v583
    %v2103 = vunpack.c.l.b16 %v584
    %v2104 = vunpack.c.h.b16 %v584
    %v2105 = vunpack.c.l.b16 %v585
    %v2106 = vunpack.c.h.b16 %v585
    %v2107 = vunpack.c.l.b16 %v586
    %v2108 = vunpack.c.h.b16 %v586
    %v2109 = vunpack.c.l.b16 %v587
    %v2110 = vunpack.c.h.b16 %v587
    %v2111 = vunpack.c.l.b16 %v588
    %v2112 = vunpack.c.h.b16 %v588
    %v2113 = vunpack.c.l.b16 %v589
    %v2114 = vunpack.c.h.b16 %v589
    %v2115 = vunpack.c.l.b16 %v590
    %v2116 = vunpack.c.h.b16 %v590
    %v2117 = vunpack.c.l.b16 %v591
    %v2118 = vunpack.c.h.b16 %v591
    %v2119 = vunpack.c.l.b16 %v592
    %v2120 = vunpack.c.h.b16 %v592
    %v2121 = vunpack.c.l.b16 %v593
    %v2122 = vunpack.c.h.b16 %v593
    %v2123 = vunpack.c.l.b16 %v594
    %v2124 = vunpack.c.h.b16 %v594
    %v2125 = vunpack.c.l.b16 %v595
    %v2126 = vunpack.c.h.b16 %v595
    %v2127 = vunpack.c.l.b16 %v596
    %v2128 = vunpack.c.h.b16 %v596
    %v2129 = vunpack.c.l.b16 %v597
    %v2130 = vunpack.c.h.b16 %v597
    %v2131 = vunpack.c.l.b16 %v598
    %v2132 = vunpack.c.h.b16 %v598
    %v2133 = vunpack.c.l.b16 %v599
    %v2134 = vunpack.c.h.b16 %v599
    %v2135 = vunpack.c.l.b16 %v600
    %v2136 = vunpack.c.h.b16 %v600
    %v2137 = vunpack.c.l.b16 %v601
    %v2138 = vunpack.c.h.b16 %v601
    %v2139 = vunpack.c.l.b16 %v602
    %v2140 = vunpack.c.h.b16 %v602
    %v2141 = vunpack.c.l.b16 %v603
    %v2142 = vunpack.c.h.b16 %v603
    %v2143 = vunpack.c.l.b16 %v604
    %v2144 = vunpack.c.h.b16 %v604
    %v2145 = vunpack.c.l.b16 %v605
    %v2146 = vunpack.c.h.b16 %v605
    %v2147 = vunpack.c.l.b16 %v606
    %v2148 = vunpack.c.h.b16 %v606
    %v2149 = vunpack.c.l.b16 %v607
    %v2150 = vunpack.c.h.b16 %v607
    %v2151 = vunpack.c.l.b16 %v608
    %v2152 = vunpack.c.h.b16 %v608
    %v2153 = vunpack.c.l.b16 %v609
    %v2154 = vunpack.c.h.b16 %v609
    %v2155 = vunpack.c.l.b16 %v610
    %v2156 = vunpack.c.h.b16 %v610
    %v2157 = vunpack.c.l.b16 %v611
    %v2158 = vunpack.c.h.b16 %v611
    %v2159 = vunpack.c.l.b16 %v612
    %v2160 = vunpack.c.h.b16 %v612
    %v2161 = vunpack.c.l.b16 %v613
    %v2162 = vunpack.c.h.b16 %v613
    %v2163 = vunpack.c.l.b16 %v614
    %v2164 = vunpack.c.h.b16 %v614
    %v2165 = vunpack.c.l.b16 %v615
    %v2166 = vunpack.c.h.b16 %v615
    %v2167 = vunpack.c.l.b16 %v616
    %v2168 = vunpack.c.h.b16 %v616
    %v2169 = vunpack.c.l.b16 %v617
    %v2170 = vunpack.c.h.b16 %v617
    %v2171 = vunpack.c.l.b16 %v618
    %v2172 = vunpack.c.h.b16 %v618
    %v2173 = vunpack.c.l.b16 %v619
    %v2174 = vunpack.c.h.b16 %v619
    %v2175 = vunpack.c.l.b16 %v620
    %v2176 = vunpack.c.h.b16 %v620
    %v2177 = vunpack.c.l.b16 %v621
    %v2178 = vunpack.c.h.b16 %v621
    %v2179 = vunpack.c.l.b16 %v622
    %v2180 = vunpack.c.h.b16 %v622
    %v2181 = vunpack.c.l.b16 %v623
    %v2182 = vunpack.c.h.b16 %v623
    %v2183 = vunpack.c.l.b16 %v624
    %v2184 = vunpack.c.h.b16 %v624
    %v2185 = vunpack.c.l.b16 %v625
    %v2186 = vunpack.c.h.b16 %v625
    %v2187 = vunpack.c.l.b16 %v626
    %v2188 = vunpack.c.h.b16 %v626
    %v2189 = vunpack.c.l.b16 %v627
    %v2190 = vunpack.c.h.b16 %v627
    %v2191 = vunpack.c.l.b16 %v628
    %v2192 = vunpack.c.h.b16 %v628
    %v2193 = vunpack.c.l.b16 %v629
    %v2194 = vunpack.c.h.b16 %v629
    %v2195 = vunpack.c.l.b16 %v630
    %v2196 = vunpack.c.h.b16 %v630
    %v2197 = vunpack.c.l.b16 %v631
    %v2198 = vunpack.c.h.b16 %v631
    %v2199 = vunpack.c.l.b16 %v632
    %v2200 = vunpack.c.h.b16 %v632
    %v2201 = vunpack.c.l.b16 %v633
    %v2202 = vunpack.c.h.b16 %v633
    %v2203 = vunpack.c.l.b16 %v634
    %v2204 = vunpack.c.h.b16 %v634
    %v2205 = vunpack.c.l.b16 %v635
    %v2206 = vunpack.c.h.b16 %v635
    %v2207 = vunpack.c.l.b16 %v636
    %v2208 = vunpack.c.h.b16 %v636
    %v2209 = vunpack.c.l.b16 %v637
    %v2210 = vunpack.c.h.b16 %v637
    %v2211 = vunpack.c.l.b16 %v638
    %v2212 = vunpack.c.h.b16 %v638
    %v2213 = vunpack.c.l.b16 %v639
    %v2214 = vunpack.c.h.b16 %v639
    %v2215 = vunpack.c.l.b16 %v640
    %v2216 = vunpack.c.h.b16 %v640
    %v2217 = vunpack.c.l.b16 %v641
    %v2218 = vunpack.c.h.b16 %v641
    %v2219 = vunpack.c.l.b16 %v642
    %v2220 = vunpack.c.h.b16 %v642
    %v2221 = vpack.c.b16 %v1205, %v1197
    %v2222 = vpack.c.b16 %v1206, %v1198
    %v2223 = vpack.c.b16 %v1207, %v1199
    %v2224 = vpack.c.b16 %v1208, %v1200
    %v2225 = vpack.c.b16 %v1209, %v1201
    %v2226 = vpack.c.b16 %v1210, %v1202
    %v2227 = vpack.c.b16 %v1211, %v1203
    %v2228 = vpack.c.b16 %v1212, %v1204
    %v2229 = vpack.c.b16 %v1221, %v1213
    %v2230 = vpack.c.b16 %v1222, %v1214
    %v2231 = vpack.c.b16 %v1223, %v1215
    %v2232 = vpack.c.b16 %v1224, %v1216
    %v2233 = vpack.c.b16 %v1225, %v1217
    %v2234 = vpack.c.b16 %v1226, %v1218
    %v2235 = vpack.c.b16 %v1227, %v1219
    %v2236 = vpack.c.b16 %v1228, %v1220
    %v2237 = vpack.c.b16 %v1237, %v1229
    %v2238 = vpack.c.b16 %v1238, %v1230
    %v2239 = vpack.c.b16 %v1239, %v1231
    %v2240 = vpack.c.b16 %v1240, %v1232
    %v2241 = vpack.c.b16 %v1241, %v1233
    %v2242 = vpack.c.b16 %v1242, %v1234
    %v2243 = vpack.c.b16 %v1243, %v1235
    %v2244 = vpack.c.b16 %v1244, %v1236
    %v2245 = vpack.c.b16 %v1253, %v1245
    %v2246 = vpack.c.b16 %v1254, %v1246
    %v2247 = vpack.c.b16 %v1255, %v1247
    %v2248 = vpack.c.b16 %v1256, %v1248
    %v2249 = vpack.c.b16 %v1257, %v1249
    %v2250 = vpack.c.b16 %v1258, %v1250
    %v2251 = vpack.c.b16 %v1259, %v1251
    %v2252 = vpack.c.b16 %v1260, %v1252
    %v2253 = vpack.c.b16 %v1269, %v1261
    %v2254 = vpack.c.b16 %v1270, %v1262
    %v2255 = vpack.c.b16 %v1271, %v1263
    %v2256 = vpack.c.b16 %v1272, %v1264
    %v2257 = vpack.c.b16 %v1273, %v1265
    %v2258 = vpack.c.b16 %v1274, %v1266
    %v2259 = vpack.c.b16 %v1275, %v1267
    %v2260 = vpack.c.b16 %v1276, %v1268
    %v2261 = vpack.c.b16 %v1285, %v1277
    %v2262 = vpack.c.b16 %v1286, %v1278
    %v2263 = vpack.c.b16 %v1287, %v1279
    %v2264 = vpack.c.b16 %v1288, %v1280
    %v2265 = vpack.c.b16 %v1289, %v1281
    %v2266 = vpack.c.b16 %v1290, %v1282
    %v2267 = vpack.c.b16 %v1291, %v1283
    %v2268 = vpack.c.b16 %v1292, %v1284
    %v2269 = vpack.c.b16 %v1301, %v1293
    %v2270 = vpack.c.b16 %v1302, %v1294
    %v2271 = vpack.c.b16 %v1303, %v1295
    %v2272 = vpack.c.b16 %v1304, %v1296
    %v2273 = vpack.c.b16 %v1305, %v1297
    %v2274 = vpack.c.b16 %v1306, %v1298
    %v2275 = vpack.c.b16 %v1307, %v1299
    %v2276 = vpack.c.b16 %v1308, %v1300
    %v2277 = vpack.c.b16 %v1317, %v1309
    %v2278 = vpack.c.b16 %v1318, %v1310
    %v2279 = vpack.c.b16 %v1319, %v1311
    %v2280 = vpack.c.b16 %v1320, %v1312
    %v2281 = vpack.c.b16 %v1321, %v1313
    %v2282 = vpack.c.b16 %v1322, %v1314
    %v2283 = vpack.c.b16 %v1323, %v1315
    %v2284 = vpack.c.b16 %v1324, %v1316
    %v2285 = vpack.c.b16 %v1333, %v1325
    %v2286 = vpack.c.b16 %v1334, %v1326
    %v2287 = vpack.c.b16 %v1335, %v1327
    %v2288 = vpack.c.b16 %v1336, %v1328
    %v2289 = vpack.c.b16 %v1337, %v1329
    %v2290 = vpack.c.b16 %v1338, %v1330
    %v2291 = vpack.c.b16 %v1339, %v1331
    %v2292 = vpack.c.b16 %v1340, %v1332
    %v2293 = vpack.c.b16 %v1349, %v1341
    %v2294 = vpack.c.b16 %v1350, %v1342
    %v2295 = vpack.c.b16 %v1351, %v1343
    %v2296 = vpack.c.b16 %v1352, %v1344
    %v2297 = vpack.c.b16 %v1353, %v1345
    %v2298 = vpack.c.b16 %v1354, %v1346
    %v2299 = vpack.c.b16 %v1355, %v1347
    %v2300 = vpack.c.b16 %v1356, %v1348
    %v2301 = vpack.c.b16 %v1365, %v1357
    %v2302 = vpack.c.b16 %v1366, %v1358
    %v2303 = vpack.c.b16 %v1367, %v1359
    %v2304 = vpack.c.b16 %v1368, %v1360
    %v2305 = vpack.c.b16 %v1369, %v1361
    %v2306 = vpack.c.b16 %v1370, %v1362
    %v2307 = vpack.c.b16 %v1371, %v1363
    %v2308 = vpack.c.b16 %v1372, %v1364
    %v2309 = vpack.c.b16 %v1381, %v1373
    %v2310 = vpack.c.b16 %v1382, %v1374
    %v2311 = vpack.c.b16 %v1383, %v1375
    %v2312 = vpack.c.b16 %v1384, %v1376
    %v2313 = vpack.c.b16 %v1385, %v1377
    %v2314 = vpack.c.b16 %v1386, %v1378
    %v2315 = vpack.c.b16 %v1387, %v1379
    %v2316 = vpack.c.b16 %v1388, %v1380
    %v2317 = vpack.c.b16 %v1397, %v1389
    %v2318 = vpack.c.b16 %v1398, %v1390
    %v2319 = vpack.c.b16 %v1399, %v1391
    %v2320 = vpack.c.b16 %v1400, %v1392
    %v2321 = vpack.c.b16 %v1401, %v1393
    %v2322 = vpack.c.b16 %v1402, %v1394
    %v2323 = vpack.c.b16 %v1403, %v1395
    %v2324 = vpack.c.b16 %v1404, %v1396
    %v2325 = vpack.c.b16 %v1413, %v1405
    %v2326 = vpack.c.b16 %v1414, %v1406
    %v2327 = vpack.c.b16 %v1415, %v1407
    %v2328 = vpack.c.b16 %v1416, %v1408
    %v2329 = vpack.c.b16 %v1417, %v1409
    %v2330 = vpack.c.b16 %v1418, %v1410
    %v2331 = vpack.c.b16 %v1419, %v1411
    %v2332 = vpack.c.b16 %v1420, %v1412
    %v2333 = vpack.c.b16 %v1429, %v1421
    %v2334 = vpack.c.b16 %v1430, %v1422
    %v2335 = vpack.c.b16 %v1431, %v1423
    %v2336 = vpack.c.b16 %v1432, %v1424
    %v2337 = vpack.c.b16 %v1433, %v1425
    %v2338 = vpack.c.b16 %v1434, %v1426
    %v2339 = vpack.c.b16 %v1435, %v1427
    %v2340 = vpack.c.b16 %v1436, %v1428
    %v2341 = vpack.c.b16 %v1445, %v1437
    %v2342 = vpack.c.b16 %v1446, %v1438
    %v2343 = vpack.c.b16 %v1447, %v1439
    %v2344 = vpack.c.b16 %v1448, %v1440
    %v2345 = vpack.c.b16 %v1449, %v1441
    %v2346 = vpack.c.b16 %v1450, %v1442
    %v2347 = vpack.c.b16 %v1451, %v1443
    %v2348 = vpack.c.b16 %v1452, %v1444
    %v2349 = vpack.c.b16 %v1461, %v1453
    %v2350 = vpack.c.b16 %v1462, %v1454
    %v2351 = vpack.c.b16 %v1463, %v1455
    %v2352 = vpack.c.b16 %v1464, %v1456
    %v2353 = vpack.c.b16 %v1465, %v1457
    %v2354 = vpack.c.b16 %v1466, %v1458
    %v2355 = vpack.c.b16 %v1467, %v1459
    %v2356 = vpack.c.b16 %v1468, %v1460
    %v2357 = vpack.c.b16 %v1477, %v1469
    %v2358 = vpack.c.b16 %v1478, %v1470
    %v2359 = vpack.c.b16 %v1479, %v1471
    %v2360 = vpack.c.b16 %v1480, %v1472
    %v2361 = vpack.c.b16 %v1481, %v1473
    %v2362 = vpack.c.b16 %v1482, %v1474
    %v2363 = vpack.c.b16 %v1483, %v1475
    %v2364 = vpack.c.b16 %v1484, %v1476
    %v2365 = vpack.c.b16 %v1493, %v1485
    %v2366 = vpack.c.b16 %v1494, %v1486
    %v2367 = vpack.c.b16 %v1495, %v1487
    %v2368 = vpack.c.b16 %v1496, %v1488
    %v2369 = vpack.c.b16 %v1497, %v1489
    %v2370 = vpack.c.b16 %v1498, %v1490
    %v2371 = vpack.c.b16 %v1499, %v1491
    %v2372 = vpack.c.b16 %v1500, %v1492
    %v2373 = vpack.c.b16 %v1509, %v1501
    %v2374 = vpack.c.b16 %v1510, %v1502
    %v2375 = vpack.c.b16 %v1511, %v1503
    %v2376 = vpack.c.b16 %v1512, %v1504
    %v2377 = vpack.c.b16 %v1513, %v1505
    %v2378 = vpack.c.b16 %v1514, %v1506
    %v2379 = vpack.c.b16 %v1515, %v1507
    %v2380 = vpack.c.b16 %v1516, %v1508
    %v2381 = vpack.c.b16 %v1525, %v1517
    %v2382 = vpack.c.b16 %v1526, %v1518
    %v2383 = vpack.c.b16 %v1527, %v1519
    %v2384 = vpack.c.b16 %v1528, %v1520
    %v2385 = vpack.c.b16 %v1529, %v1521
    %v2386 = vpack.c.b16 %v1530, %v1522
    %v2387 = vpack.c.b16 %v1531, %v1523
    %v2388 = vpack.c.b16 %v1532, %v1524
    %v2389 = vpack.c.b16 %v1541, %v1533
    %v2390 = vpack.c.b16 %v1542, %v1534
    %v2391 = vpack.c.b16 %v1543, %v1535
    %v2392 = vpack.c.b16 %v1544, %v1536
    %v2393 = vpack.c.b16 %v1545, %v1537
    %v2394 = vpack.c.b16 %v1546, %v1538
    %v2395 = vpack.c.b16 %v1547, %v1539
    %v2396 = vpack.c.b16 %v1548, %v1540
    %v2397 = vpack.c.b16 %v1557, %v1549
    %v2398 = vpack.c.b16 %v1558, %v1550
    %v2399 = vpack.c.b16 %v1559, %v1551
    %v2400 = vpack.c.b16 %v1560, %v1552
    %v2401 = vpack.c.b16 %v1561, %v1553
    %v2402 = vpack.c.b16 %v1562, %v1554
    %v2403 = vpack.c.b16 %v1563, %v1555
    %v2404 = vpack.c.b16 %v1564, %v1556
    %v2405 = vpack.c.b16 %v1573, %v1565
    %v2406 = vpack.c.b16 %v1574, %v1566
    %v2407 = vpack.c.b16 %v1575, %v1567
    %v2408 = vpack.c.b16 %v1576, %v1568
    %v2409 = vpack.c.b16 %v1577, %v1569
    %v2410 = vpack.c.b16 %v1578, %v1570
    %v2411 = vpack.c.b16 %v1579, %v1571
    %v2412 = vpack.c.b16 %v1580, %v1572
    %v2413 = vpack.c.b16 %v1589, %v1581
    %v2414 = vpack.c.b16 %v1590, %v1582
    %v2415 = vpack.c.b16 %v1591, %v1583
    %v2416 = vpack.c.b16 %v1592, %v1584
    %v2417 = vpack.c.b16 %v1593, %v1585
    %v2418 = vpack.c.b16 %v1594, %v1586
    %v2419 = vpack.c.b16 %v1595, %v1587
    %v2420 = vpack.c.b16 %v1596, %v1588
    %v2421 = vpack.c.b16 %v1605, %v1597
    %v2422 = vpack.c.b16 %v1606, %v1598
    %v2423 = vpack.c.b16 %v1607, %v1599
    %v2424 = vpack.c.b16 %v1608, %v1600
    %v2425 = vpack.c.b16 %v1609, %v1601
    %v2426 = vpack.c.b16 %v1610, %v1602
    %v2427 = vpack.c.b16 %v1611, %v1603
    %v2428 = vpack.c.b16 %v1612, %v1604
    %v2429 = vpack.c.b16 %v1621, %v1613
    %v2430 = vpack.c.b16 %v1622, %v1614
    %v2431 = vpack.c.b16 %v1623, %v1615
    %v2432 = vpack.c.b16 %v1624, %v1616
    %v2433 = vpack.c.b16 %v1625, %v1617
    %v2434 = vpack.c.b16 %v1626, %v1618
    %v2435 = vpack.c.b16 %v1627, %v1619
    %v2436 = vpack.c.b16 %v1628, %v1620
    %v2437 = vpack.c.b16 %v1637, %v1629
    %v2438 = vpack.c.b16 %v1638, %v1630
    %v2439 = vpack.c.b16 %v1639, %v1631
    %v2440 = vpack.c.b16 %v1640, %v1632
    %v2441 = vpack.c.b16 %v1641, %v1633
    %v2442 = vpack.c.b16 %v1642, %v1634
    %v2443 = vpack.c.b16 %v1643, %v1635
    %v2444 = vpack.c.b16 %v1644, %v1636
    %v2445 = vpack.c.b16 %v1653, %v1645
    %v2446 = vpack.c.b16 %v1654, %v1646
    %v2447 = vpack.c.b16 %v1655, %v1647
    %v2448 = vpack.c.b16 %v1656, %v1648
    %v2449 = vpack.c.b16 %v1657, %v1649
    %v2450 = vpack.c.b16 %v1658, %v1650
    %v2451 = vpack.c.b16 %v1659, %v1651
    %v2452 = vpack.c.b16 %v1660, %v1652
    %v2453 = vpack.c.b16 %v1669, %v1661
    %v2454 = vpack.c.b16 %v1670, %v1662
    %v2455 = vpack.c.b16 %v1671, %v1663
    %v2456 = vpack.c.b16 %v1672, %v1664
    %v2457 = vpack.c.b16 %v1673, %v1665
    %v2458 = vpack.c.b16 %v1674, %v1666
    %v2459 = vpack.c.b16 %v1675, %v1667
    %v2460 = vpack.c.b16 %v1676, %v1668
    %v2461 = vpack.c.b16 %v1685, %v1677
    %v2462 = vpack.c.b16 %v1686, %v1678
    %v2463 = vpack.c.b16 %v1687, %v1679
    %v2464 = vpack.c.b16 %v1688, %v1680
    %v2465 = vpack.c.b16 %v1689, %v1681
    %v2466 = vpack.c.b16 %v1690, %v1682
    %v2467 = vpack.c.b16 %v1691, %v1683
    %v2468 = vpack.c.b16 %v1692, %v1684
    %v2469 = vpack.c.b16 %v1701, %v1693
    %v2470 = vpack.c.b16 %v1702, %v1694
    %v2471 = vpack.c.b16 %v1703, %v1695
    %v2472 = vpack.c.b16 %v1704, %v1696
    %v2473 = vpack.c.b16 %v1705, %v1697
    %v2474 = vpack.c.b16 %v1706, %v1698
    %v2475 = vpack.c.b16 %v1707, %v1699
    %v2476 = vpack.c.b16 %v1708, %v1700
    %v2477 = vpack.c.b16 %v1717, %v1709
    %v2478 = vpack.c.b16 %v1718, %v1710
    %v2479 = vpack.c.b16 %v1719, %v1711
    %v2480 = vpack.c.b16 %v1720, %v1712
    %v2481 = vpack.c.b16 %v1721, %v1713
    %v2482 = vpack.c.b16 %v1722, %v1714
    %v2483 = vpack.c.b16 %v1723, %v1715
    %v2484 = vpack.c.b16 %v1724, %v1716
    %v2485 = vpack.c.b16 %v1733, %v1725
    %v2486 = vpack.c.b16 %v1734, %v1726
    %v2487 = vpack.c.b16 %v1735, %v1727
    %v2488 = vpack.c.b16 %v1736, %v1728
    %v2489 = vpack.c.b16 %v1737, %v1729
    %v2490 = vpack.c.b16 %v1738, %v1730
    %v2491 = vpack.c.b16 %v1739, %v1731
    %v2492 = vpack.c.b16 %v1740, %v1732
    %v2493 = vpack.c.b16 %v1749, %v1741
    %v2494 = vpack.c.b16 %v1750, %v1742
    %v2495 = vpack.c.b16 %v1751, %v1743
    %v2496 = vpack.c.b16 %v1752, %v1744
    %v2497 = vpack.c.b16 %v1753, %v1745
    %v2498 = vpack.c.b16 %v1754, %v1746
    %v2499 = vpack.c.b16 %v1755, %v1747
    %v2500 = vpack.c.b16 %v1756, %v1748
    %v2501 = vpack.c.b16 %v1765, %v1757
    %v2502 = vpack.c.b16 %v1766, %v1758
    %v2503 = vpack.c.b16 %v1767, %v1759
    %v2504 = vpack.c.b16 %v1768, %v1760
    %v2505 = vpack.c.b16 %v1769, %v1761
    %v2506 = vpack.c.b16 %v1770, %v1762
    %v2507 = vpack.c.b16 %v1771, %v1763
    %v2508 = vpack.c.b16 %v1772, %v1764
    %v2509 = vpack.c.b16 %v1781, %v1773
    %v2510 = vpack.c.b16 %v1782, %v1774
    %v2511 = vpack.c.b16 %v1783, %v1775
    %v2512 = vpack.c.b16 %v1784, %v1776
    %v2513 = vpack.c.b16 %v1785, %v1777
    %v2514 = vpack.c.b16 %v1786, %v1778
    %v2515 = vpack.c.b16 %v1787, %v1779
    %v2516 = vpack.c.b16 %v1788, %v1780
    %v2517 = vpack.c.b16 %v1797, %v1789
    %v2518 = vpack.c.b16 %v1798, %v1790
    %v2519 = vpack.c.b16 %v1799, %v1791
    %v2520 = vpack.c.b16 %v1800, %v1792
    %v2521 = vpack.c.b16 %v1801, %v1793
    %v2522 = vpack.c.b16 %v1802, %v1794
    %v2523 = vpack.c.b16 %v1803, %v1795
    %v2524 = vpack.c.b16 %v1804, %v1796
    %v2525 = vpack.c.b16 %v1813, %v1805
    %v2526 = vpack.c.b16 %v1814, %v1806
    %v2527 = vpack.c.b16 %v1815, %v1807
    %v2528 = vpack.c.b16 %v1816, %v1808
    %v2529 = vpack.c.b16 %v1817, %v1809
    %v2530 = vpack.c.b16 %v1818, %v1810
    %v2531 = vpack.c.b16 %v1819, %v1811
    %v2532 = vpack.c.b16 %v1820, %v1812
    %v2533 = vpack.c.b16 %v1829, %v1821
    %v2534 = vpack.c.b16 %v1830, %v1822
    %v2535 = vpack.c.b16 %v1831, %v1823
    %v2536 = vpack.c.b16 %v1832, %v1824
    %v2537 = vpack.c.b16 %v1833, %v1825
    %v2538 = vpack.c.b16 %v1834, %v1826
    %v2539 = vpack.c.b16 %v1835, %v1827
    %v2540 = vpack.c.b16 %v1836, %v1828
    %v2541 = vpack.c.b16 %v1845, %v1837
    %v2542 = vpack.c.b16 %v1846, %v1838
    %v2543 = vpack.c.b16 %v1847, %v1839
    %v2544 = vpack.c.b16 %v1848, %v1840
    %v2545 = vpack.c.b16 %v1849, %v1841
    %v2546 = vpack.c.b16 %v1850, %v1842
    %v2547 = vpack.c.b16 %v1851, %v1843
    %v2548 = vpack.c.b16 %v1852, %v1844
    %v2549 = vpack.c.b16 %v1861, %v1853
    %v2550 = vpack.c.b16 %v1862, %v1854
    %v2551 = vpack.c.b16 %v1863, %v1855
    %v2552 = vpack.c.b16 %v1864, %v1856
    %v2553 = vpack.c.b16 %v1865, %v1857
    %v2554 = vpack.c.b16 %v1866, %v1858
    %v2555 = vpack.c.b16 %v1867, %v1859
    %v2556 = vpack.c.b16 %v1868, %v1860
    %v2557 = vpack.c.b16 %v1877, %v1869
    %v2558 = vpack.c.b16 %v1878, %v1870
    %v2559 = vpack.c.b16 %v1879, %v1871
    %v2560 = vpack.c.b16 %v1880, %v1872
    %v2561 = vpack.c.b16 %v1881, %v1873
    %v2562 = vpack.c.b16 %v1882, %v1874
    %v2563 = vpack.c.b16 %v1883, %v1875
    %v2564 = vpack.c.b16 %v1884, %v1876
    %v2565 = vpack.c.b16 %v1893, %v1885
    %v2566 = vpack.c.b16 %v1894, %v1886
    %v2567 = vpack.c.b16 %v1895, %v1887
    %v2568 = vpack.c.b16 %v1896, %v1888
    %v2569 = vpack.c.b16 %v1897, %v1889
    %v2570 = vpack.c.b16 %v1898, %v1890
    %v2571 = vpack.c.b16 %v1899, %v1891
    %v2572 = vpack.c.b16 %v1900, %v1892
    %v2573 = vpack.c.b16 %v1909, %v1901
    %v2574 = vpack.c.b16 %v1910, %v1902
    %v2575 = vpack.c.b16 %v1911, %v1903
    %v2576 = vpack.c.b16 %v1912, %v1904
    %v2577 = vpack.c.b16 %v1913, %v1905
    %v2578 = vpack.c.b16 %v1914, %v1906
    %v2579 = vpack.c.b16 %v1915, %v1907
    %v2580 = vpack.c.b16 %v1916, %v1908
    %v2581 = vpack.c.b16 %v1925, %v1917
    %v2582 = vpack.c.b16 %v1926, %v1918
    %v2583 = vpack.c.b16 %v1927, %v1919
    %v2584 = vpack.c.b16 %v1928, %v1920
    %v2585 = vpack.c.b16 %v1929, %v1921
    %v2586 = vpack.c.b16 %v1930, %v1922
    %v2587 = vpack.c.b16 %v1931, %v1923
    %v2588 = vpack.c.b16 %v1932, %v1924
    %v2589 = vpack.c.b16 %v1941, %v1933
    %v2590 = vpack.c.b16 %v1942, %v1934
    %v2591 = vpack.c.b16 %v1943, %v1935
    %v2592 = vpack.c.b16 %v1944, %v1936
    %v2593 = vpack.c.b16 %v1945, %v1937
    %v2594 = vpack.c.b16 %v1946, %v1938
    %v2595 = vpack.c.b16 %v1947, %v1939
    %v2596 = vpack.c.b16 %v1948, %v1940
    %v2597 = vpack.c.b16 %v1957, %v1949
    %v2598 = vpack.c.b16 %v1958, %v1950
    %v2599 = vpack.c.b16 %v1959, %v1951
    %v2600 = vpack.c.b16 %v1960, %v1952
    %v2601 = vpack.c.b16 %v1961, %v1953
    %v2602 = vpack.c.b16 %v1962, %v1954
    %v2603 = vpack.c.b16 %v1963, %v1955
    %v2604 = vpack.c.b16 %v1964, %v1956
    %v2605 = vpack.c.b16 %v1973, %v1965
    %v2606 = vpack.c.b16 %v1974, %v1966
    %v2607 = vpack.c.b16 %v1975, %v1967
    %v2608 = vpack.c.b16 %v1976, %v1968
    %v2609 = vpack.c.b16 %v1977, %v1969
    %v2610 = vpack.c.b16 %v1978, %v1970
    %v2611 = vpack.c.b16 %v1979, %v1971
    %v2612 = vpack.c.b16 %v1980, %v1972
    %v2613 = vpack.c.b16 %v1989, %v1981
    %v2614 = vpack.c.b16 %v1990, %v1982
    %v2615 = vpack.c.b16 %v1991, %v1983
    %v2616 = vpack.c.b16 %v1992, %v1984
    %v2617 = vpack.c.b16 %v1993, %v1985
    %v2618 = vpack.c.b16 %v1994, %v1986
    %v2619 = vpack.c.b16 %v1995, %v1987
    %v2620 = vpack.c.b16 %v1996, %v1988
    %v2621 = vpack.c.b16 %v2005, %v1997
    %v2622 = vpack.c.b16 %v2006, %v1998
    %v2623 = vpack.c.b16 %v2007, %v1999
    %v2624 = vpack.c.b16 %v2008, %v2000
    %v2625 = vpack.c.b16 %v2009, %v2001
    %v2626 = vpack.c.b16 %v2010, %v2002
    %v2627 = vpack.c.b16 %v2011, %v2003
    %v2628 = vpack.c.b16 %v2012, %v2004
    %v2629 = vpack.c.b16 %v2021, %v2013
    %v2630 = vpack.c.b16 %v2022, %v2014
    %v2631 = vpack.c.b16 %v2023, %v2015
    %v2632 = vpack.c.b16 %v2024, %v2016
    %v2633 = vpack.c.b16 %v2025, %v2017
    %v2634 = vpack.c.b16 %v2026, %v2018
    %v2635 = vpack.c.b16 %v2027, %v2019
    %v2636 = vpack.c.b16 %v2028, %v2020
    %v2637 = vpack.c.b16 %v2037, %v2029
    %v2638 = vpack.c.b16 %v2038, %v2030
    %v2639 = vpack.c.b16 %v2039, %v2031
    %v2640 = vpack.c.b16 %v2040, %v2032
    %v2641 = vpack.c.b16 %v2041, %v2033
    %v2642 = vpack.c.b16 %v2042, %v2034
    %v2643 = vpack.c.b16 %v2043, %v2035
    %v2644 = vpack.c.b16 %v2044, %v2036
    %v2645 = vpack.c.b16 %v2053, %v2045
    %v2646 = vpack.c.b16 %v2054, %v2046
    %v2647 = vpack.c.b16 %v2055, %v2047
    %v2648 = vpack.c.b16 %v2056, %v2048
    %v2649 = vpack.c.b16 %v2057, %v2049
    %v2650 = vpack.c.b16 %v2058, %v2050
    %v2651 = vpack.c.b16 %v2059, %v2051
    %v2652 = vpack.c.b16 %v2060, %v2052
    %v2653 = vpack.c.b16 %v2069, %v2061
    %v2654 = vpack.c.b16 %v2070, %v2062
    %v2655 = vpack.c.b16 %v2071, %v2063
    %v2656 = vpack.c.b16 %v2072, %v2064
    %v2657 = vpack.c.b16 %v2073, %v2065
    %v2658 = vpack.c.b16 %v2074, %v2066
    %v2659 = vpack.c.b16 %v2075, %v2067
    %v2660 = vpack.c.b16 %v2076, %v2068
    %v2661 = vpack.c.b16 %v2085, %v2077
    %v2662 = vpack.c.b16 %v2086, %v2078
    %v2663 = vpack.c.b16 %v2087, %v2079
    %v2664 = vpack.c.b16 %v2088, %v2080
    %v2665 = vpack.c.b16 %v2089, %v2081
    %v2666 = vpack.c.b16 %v2090, %v2082
    %v2667 = vpack.c.b16 %v2091, %v2083
    %v2668 = vpack.c.b16 %v2092, %v2084
    %v2669 = vpack.c.b16 %v2101, %v2093
    %v2670 = vpack.c.b16 %v2102, %v2094
    %v2671 = vpack.c.b16 %v2103, %v2095
    %v2672 = vpack.c.b16 %v2104, %v2096
    %v2673 = vpack.c.b16 %v2105, %v2097
    %v2674 = vpack.c.b16 %v2106, %v2098
    %v2675 = vpack.c.b16 %v2107, %v2099
    %v2676 = vpack.c.b16 %v2108, %v2100
    %v2677 = vpack.c.b16 %v2117, %v2109
    %v2678 = vpack.c.b16 %v2118, %v2110
    %v2679 = vpack.c.b16 %v2119, %v2111
    %v2680 = vpack.c.b16 %v2120, %v2112
    %v2681 = vpack.c.b16 %v2121, %v2113
    %v2682 = vpack.c.b16 %v2122, %v2114
    %v2683 = vpack.c.b16 %v2123, %v2115
    %v2684 = vpack.c.b16 %v2124, %v2116
    %v2685 = vpack.c.b16 %v2133, %v2125
    %v2686 = vpack.c.b16 %v2134, %v2126
    %v2687 = vpack.c.b16 %v2135, %v2127
    %v2688 = vpack.c.b16 %v2136, %v2128
    %v2689 = vpack.c.b16 %v2137, %v2129
    %v2690 = vpack.c.b16 %v2138, %v2130
    %v2691 = vpack.c.b16 %v2139, %v2131
    %v2692 = vpack.c.b16 %v2140, %v2132
    %v2693 = vpack.c.b16 %v2149, %v2141
    %v2694 = vpack.c.b16 %v2150, %v2142
    %v2695 = vpack.c.b16 %v2151, %v2143
    %v2696 = vpack.c.b16 %v2152, %v2144
    %v2697 = vpack.c.b16 %v2153, %v2145
    %v2698 = vpack.c.b16 %v2154, %v2146
    %v2699 = vpack.c.b16 %v2155, %v2147
    %v2700 = vpack.c.b16 %v2156, %v2148
    %v2701 = vpack.c.b16 %v2165, %v2157
    %v2702 = vpack.c.b16 %v2166, %v2158
    %v2703 = vpack.c.b16 %v2167, %v2159
    %v2704 = vpack.c.b16 %v2168, %v2160
    %v2705 = vpack.c.b16 %v2169, %v2161
    %v2706 = vpack.c.b16 %v2170, %v2162
    %v2707 = vpack.c.b16 %v2171, %v2163
    %v2708 = vpack.c.b16 %v2172, %v2164
    %v2709 = vpack.c.b16 %v2181, %v2173
    %v2710 = vpack.c.b16 %v2182, %v2174
    %v2711 = vpack.c.b16 %v2183, %v2175
    %v2712 = vpack.c.b16 %v2184, %v2176
    %v2713 = vpack.c.b16 %v2185, %v2177
    %v2714 = vpack.c.b16 %v2186, %v2178
    %v2715 = vpack.c.b16 %v2187, %v2179
    %v2716 = vpack.c.b16 %v2188, %v2180
    %v2717 = vpack.c.b16 %v2197, %v2189
    %v2718 = vpack.c.b16 %v2198, %v2190
    %v2719 = vpack.c.b16 %v2199, %v2191
    %v2720 = vpack.c.b16 %v2200, %v2192
    %v2721 = vpack.c.b16 %v2201, %v2193
    %v2722 = vpack.c.b16 %v2202, %v2194
    %v2723 = vpack.c.b16 %v2203, %v2195
    %v2724 = vpack.c.b16 %v2204, %v2196
    %v2725 = vpack.c.b16 %v2213, %v2205
    %v2726 = vpack.c.b16 %v2214, %v2206
    %v2727 = vpack.c.b16 %v2215, %v2207
    %v2728 = vpack.c.b16 %v2216, %v2208
    %v2729 = vpack.c.b16 %v2217, %v2209
    %v2730 = vpack.c.b16 %v2218, %v2210
    %v2731 = vpack.c.b16 %v2219, %v2211
    %v2732 = vpack.c.b16 %v2220, %v2212
    %3245 = vmatprep.subr.bf16.mxu0 %v2222
    %3246 = vmatpush1.bf16.msra.mxu0 %v2221
    %3247 = vmatprep.subr.bf16.mxu0 %v2230
    %3248 = vmatpush1.bf16.msra.mxu0 %v2229
    %3249 = vmatprep.subr.bf16.mxu0 %v2238
    %3250 = vmatpush1.bf16.msra.mxu0 %v2237
    %3251 = vmatprep.subr.bf16.mxu0 %v2246
    %3252 = vmatpush1.bf16.msra.mxu0 %v2245
    %3253 = vmatprep.subr.bf16.mxu0 %v2254
    %3254 = vmatpush1.bf16.msra.mxu0 %v2253
    %3255 = vmatprep.subr.bf16.mxu0 %v2262
    %3256 = vmatpush1.bf16.msra.mxu0 %v2261
    %3257 = vmatprep.subr.bf16.mxu0 %v2270
    %3258 = vmatpush1.bf16.msra.mxu0 %v2269
    %3259 = vmatprep.subr.bf16.mxu0 %v2278
    %3260 = vmatpush1.bf16.msra.mxu0 %v2277
    %3261 = vmatprep.subr.bf16.mxu0 %v2286
    %3262 = vmatpush1.bf16.msra.mxu0 %v2285
    %3263 = vmatprep.subr.bf16.mxu0 %v2294
    %3264 = vmatpush1.bf16.msra.mxu0 %v2293
    %3265 = vmatprep.subr.bf16.mxu0 %v2302
    %3266 = vmatpush1.bf16.msra.mxu0 %v2301
    %3267 = vmatprep.subr.bf16.mxu0 %v2310
    %3268 = vmatpush1.bf16.msra.mxu0 %v2309
    %3269 = vmatprep.subr.bf16.mxu0 %v2318
    %3270 = vmatpush1.bf16.msra.mxu0 %v2317
    %3271 = vmatprep.subr.bf16.mxu0 %v2326
    %3272 = vmatpush1.bf16.msra.mxu0 %v2325
    %3273 = vmatprep.subr.bf16.mxu0 %v2334
    %3274 = vmatpush1.bf16.msra.mxu0 %v2333
    %3275 = vmatprep.subr.bf16.mxu0 %v2342
    %3276 = vmatpush1.bf16.msra.mxu0 %v2341
    %3277 = vmatprep.mubr.bf16.mxu0 %v124
    %3278 = vmatmul.mubr.bf16.gmra.mrb[0].mxu0 %v123
    %v3279 = vpop.f32.mrb[0].mxu0
    %v3280 = vadd.f32 %v648, %v3279
    %v3281 = vpop.f32.mrb[0].mxu0
    %v3282 = vadd.f32 %v652, %v3281
    %v3283 = vpop.f32.mrb[0].mxu0
    %v3284 = vpop.f32.mrb[0].mxu0
    %3285 = vdwg.mxu0
    %3286 = vmatprep.subr.bf16.mxu0 %v2350
    %3287 = vmatpush1.bf16.msra.mxu0 %v2349
    %3288 = vmatprep.subr.bf16.mxu0 %v2358
    %3289 = vmatpush1.bf16.msra.mxu0 %v2357
    %3290 = vmatprep.subr.bf16.mxu0 %v2366
    %3291 = vmatpush1.bf16.msra.mxu0 %v2365
    %3292 = vmatprep.subr.bf16.mxu0 %v2374
    %3293 = vmatpush1.bf16.msra.mxu0 %v2373
    %3294 = vmatprep.subr.bf16.mxu0 %v2382
    %3295 = vmatpush1.bf16.msra.mxu0 %v2381
    %3296 = vmatprep.subr.bf16.mxu0 %v2390
    %3297 = vmatpush1.bf16.msra.mxu0 %v2389
    %3298 = vmatprep.subr.bf16.mxu0 %v2398
    %3299 = vmatpush1.bf16.msra.mxu0 %v2397
    %3300 = vmatprep.subr.bf16.mxu0 %v2406
    %3301 = vmatpush1.bf16.msra.mxu0 %v2405
    %3302 = vmatprep.subr.bf16.mxu0 %v2414
    %3303 = vmatpush1.bf16.msra.mxu0 %v2413
    %3304 = vmatprep.subr.bf16.mxu0 %v2422
    %3305 = vmatpush1.bf16.msra.mxu0 %v2421
    %3306 = vmatprep.subr.bf16.mxu0 %v2430
    %3307 = vmatpush1.bf16.msra.mxu0 %v2429
    %3308 = vmatprep.subr.bf16.mxu0 %v2438
    %3309 = vmatpush1.bf16.msra.mxu0 %v2437
    %3310 = vmatprep.subr.bf16.mxu0 %v2446
    %3311 = vmatpush1.bf16.msra.mxu0 %v2445
    %3312 = vmatprep.subr.bf16.mxu0 %v2454
    %3313 = vmatpush1.bf16.msra.mxu0 %v2453
    %3314 = vmatprep.subr.bf16.mxu0 %v2462
    %3315 = vmatpush1.bf16.msra.mxu0 %v2461
    %3316 = vmatprep.subr.bf16.mxu0 %v2470
    %3317 = vmatpush1.bf16.msra.mxu0 %v2469
    %3318 = vmatprep.mubr.bf16.mxu0 %v126
    %3319 = vmatmul.mubr.bf16.gmra.mrb[0].mxu0 %v125
    %v3320 = vpop.f32.mrb[0].mxu0
    %v3321 = vadd.f32 %v3280, %v3320
    %v3322 = vpop.f32.mrb[0].mxu0
    %v3323 = vadd.f32 %v3282, %v3322
    %v3324 = vpop.f32.mrb[0].mxu0
    %v3325 = vpop.f32.mrb[0].mxu0
    %3326 = vdwg.mxu0
    %3327 = vmatprep.subr.bf16.mxu0 %v2478
    %3328 = vmatpush1.bf16.msra.mxu0 %v2477
    %3329 = vmatprep.subr.bf16.mxu0 %v2486
    %3330 = vmatpush1.bf16.msra.mxu0 %v2485
    %3331 = vmatprep.subr.bf16.mxu0 %v2494
    %3332 = vmatpush1.bf16.msra.mxu0 %v2493
    %3333 = vmatprep.subr.bf16.mxu0 %v2502
    %3334 = vmatpush1.bf16.msra.mxu0 %v2501
    %3335 = vmatprep.subr.bf16.mxu0 %v2510
    %3336 = vmatpush1.bf16.msra.mxu0 %v2509
    %3337 = vmatprep.subr.bf16.mxu0 %v2518
    %3338 = vmatpush1.bf16.msra.mxu0 %v2517
    %3339 = vmatprep.subr.bf16.mxu0 %v2526
    %3340 = vmatpush1.bf16.msra.mxu0 %v2525
    %3341 = vmatprep.subr.bf16.mxu0 %v2534
    %3342 = vmatpush1.bf16.msra.mxu0 %v2533
    %3343 = vmatprep.subr.bf16.mxu0 %v2542
    %3344 = vmatpush1.bf16.msra.mxu0 %v2541
    %3345 = vmatprep.subr.bf16.mxu0 %v2550
    %3346 = vmatpush1.bf16.msra.mxu0 %v2549
    %3347 = vmatprep.subr.bf16.mxu0 %v2558
    %3348 = vmatpush1.bf16.msra.mxu0 %v2557
    %3349 = vmatprep.subr.bf16.mxu0 %v2566
    %3350 = vmatpush1.bf16.msra.mxu0 %v2565
    %3351 = vmatprep.subr.bf16.mxu0 %v2574
    %3352 = vmatpush1.bf16.msra.mxu0 %v2573
    %3353 = vmatprep.subr.bf16.mxu0 %v2582
    %3354 = vmatpush1.bf16.msra.mxu0 %v2581
    %3355 = vmatprep.subr.bf16.mxu0 %v2590
    %3356 = vmatpush1.bf16.msra.mxu0 %v2589
    %3357 = vmatprep.subr.bf16.mxu0 %v2598
    %3358 = vmatpush1.bf16.msra.mxu0 %v2597
    %3359 = vmatprep.mubr.bf16.mxu0 %v128
    %3360 = vmatmul.mubr.bf16.gmra.mrb[0].mxu0 %v127
    %v3361 = vpop.f32.mrb[0].mxu0
    %v3362 = vadd.f32 %v3321, %v3361
    %v3363 = vpop.f32.mrb[0].mxu0
    %v3364 = vadd.f32 %v3323, %v3363
    %v3365 = vpop.f32.mrb[0].mxu0
    %v3366 = vpop.f32.mrb[0].mxu0
    %3367 = vdwg.mxu0
    %3368 = vmatprep.subr.bf16.mxu0 %v2606
    %3369 = vmatpush1.bf16.msra.mxu0 %v2605
    %3370 = vmatprep.subr.bf16.mxu0 %v2614
    %3371 = vmatpush1.bf16.msra.mxu0 %v2613
    %3372 = vmatprep.subr.bf16.mxu0 %v2622
    %3373 = vmatpush1.bf16.msra.mxu0 %v2621
    %3374 = vmatprep.subr.bf16.mxu0 %v2630
    %3375 = vmatpush1.bf16.msra.mxu0 %v2629
    %3376 = vmatprep.subr.bf16.mxu0 %v2638
    %3377 = vmatpush1.bf16.msra.mxu0 %v2637
    %3378 = vmatprep.subr.bf16.mxu0 %v2646
    %3379 = vmatpush1.bf16.msra.mxu0 %v2645
    %3380 = vmatprep.subr.bf16.mxu0 %v2654
    %3381 = vmatpush1.bf16.msra.mxu0 %v2653
    %3382 = vmatprep.subr.bf16.mxu0 %v2662
    %3383 = vmatpush1.bf16.msra.mxu0 %v2661
    %3384 = vmatprep.subr.bf16.mxu0 %v2670
    %3385 = vmatpush1.bf16.msra.mxu0 %v2669
    %3386 = vmatprep.subr.bf16.mxu0 %v2678
    %3387 = vmatpush1.bf16.msra.mxu0 %v2677
    %3388 = vmatprep.subr.bf16.mxu0 %v2686
    %3389 = vmatpush1.bf16.msra.mxu0 %v2685
    %3390 = vmatprep.subr.bf16.mxu0 %v2694
    %3391 = vmatpush1.bf16.msra.mxu0 %v2693
    %3392 = vmatprep.subr.bf16.mxu0 %v2702
    %3393 = vmatpush1.bf16.msra.mxu0 %v2701
    %3394 = vmatprep.subr.bf16.mxu0 %v2710
    %3395 = vmatpush1.bf16.msra.mxu0 %v2709
    %3396 = vmatprep.subr.bf16.mxu0 %v2718
    %3397 = vmatpush1.bf16.msra.mxu0 %v2717
    %3398 = vmatprep.subr.bf16.mxu0 %v2726
    %3399 = vmatpush1.bf16.msra.mxu0 %v2725
    %3400 = vmatprep.mubr.bf16.mxu0 %v130
    %3401 = vmatmul.mubr.bf16.gmra.mrb[0].mxu0 %v129
    %v3402 = vpop.f32.mrb[0].mxu0
    %v3403 = vadd.f32 %v3362, %v3402
    %v3404 = vpop.f32.mrb[0].mxu0
    %v3405 = vadd.f32 %v3364, %v3404
    %v3406 = vpop.f32.mrb[0].mxu0
    %v3407 = vpop.f32.mrb[0].mxu0
    %3408 = vdwg.mxu0
    %3409 = vmatprep.subr.bf16.mxu0 %v2224
    %3410 = vmatpush1.bf16.msra.mxu0 %v2223
    %3411 = vmatprep.subr.bf16.mxu0 %v2232
    %3412 = vmatpush1.bf16.msra.mxu0 %v2231
    %3413 = vmatprep.subr.bf16.mxu0 %v2240
    %3414 = vmatpush1.bf16.msra.mxu0 %v2239
    %3415 = vmatprep.subr.bf16.mxu0 %v2248
    %3416 = vmatpush1.bf16.msra.mxu0 %v2247
    %3417 = vmatprep.subr.bf16.mxu0 %v2256
    %3418 = vmatpush1.bf16.msra.mxu0 %v2255
    %3419 = vmatprep.subr.bf16.mxu0 %v2264
    %3420 = vmatpush1.bf16.msra.mxu0 %v2263
    %3421 = vmatprep.subr.bf16.mxu0 %v2272
    %3422 = vmatpush1.bf16.msra.mxu0 %v2271
    %3423 = vmatprep.subr.bf16.mxu0 %v2280
    %3424 = vmatpush1.bf16.msra.mxu0 %v2279
    %3425 = vmatprep.subr.bf16.mxu0 %v2288
    %3426 = vmatpush1.bf16.msra.mxu0 %v2287
    %3427 = vmatprep.subr.bf16.mxu0 %v2296
    %3428 = vmatpush1.bf16.msra.mxu0 %v2295
    %3429 = vmatprep.subr.bf16.mxu0 %v2304
    %3430 = vmatpush1.bf16.msra.mxu0 %v2303
    %3431 = vmatprep.subr.bf16.mxu0 %v2312
    %3432 = vmatpush1.bf16.msra.mxu0 %v2311
    %3433 = vmatprep.subr.bf16.mxu0 %v2320
    %3434 = vmatpush1.bf16.msra.mxu0 %v2319
    %3435 = vmatprep.subr.bf16.mxu0 %v2328
    %3436 = vmatpush1.bf16.msra.mxu0 %v2327
    %3437 = vmatprep.subr.bf16.mxu0 %v2336
    %3438 = vmatpush1.bf16.msra.mxu0 %v2335
    %3439 = vmatprep.subr.bf16.mxu0 %v2344
    %3440 = vmatpush1.bf16.msra.mxu0 %v2343
    %3441 = vmatprep.mubr.bf16.mxu0 %v124
    %3442 = vmatmul.mubr.bf16.gmra.mrb[0].mxu0 %v123
    %v3443 = vpop.f32.mrb[0].mxu0
    %v3444 = vadd.f32 %v656, %v3443
    %v3445 = vpop.f32.mrb[0].mxu0
    %v3446 = vadd.f32 %v660, %v3445
    %v3447 = vpop.f32.mrb[0].mxu0
    %v3448 = vpop.f32.mrb[0].mxu0
    %3449 = vdwg.mxu0
    %3450 = vmatprep.subr.bf16.mxu0 %v2352
    %3451 = vmatpush1.bf16.msra.mxu0 %v2351
    %3452 = vmatprep.subr.bf16.mxu0 %v2360
    %3453 = vmatpush1.bf16.msra.mxu0 %v2359
    %3454 = vmatprep.subr.bf16.mxu0 %v2368
    %3455 = vmatpush1.bf16.msra.mxu0 %v2367
    %3456 = vmatprep.subr.bf16.mxu0 %v2376
    %3457 = vmatpush1.bf16.msra.mxu0 %v2375
    %3458 = vmatprep.subr.bf16.mxu0 %v2384
    %3459 = vmatpush1.bf16.msra.mxu0 %v2383
    %3460 = vmatprep.subr.bf16.mxu0 %v2392
    %3461 = vmatpush1.bf16.msra.mxu0 %v2391
    %3462 = vmatprep.subr.bf16.mxu0 %v2400
    %3463 = vmatpush1.bf16.msra.mxu0 %v2399
    %3464 = vmatprep.subr.bf16.mxu0 %v2408
    %3465 = vmatpush1.bf16.msra.mxu0 %v2407
    %3466 = vmatprep.subr.bf16.mxu0 %v2416
    %3467 = vmatpush1.bf16.msra.mxu0 %v2415
    %3468 = vmatprep.subr.bf16.mxu0 %v2424
    %3469 = vmatpush1.bf16.msra.mxu0 %v2423
    %3470 = vmatprep.subr.bf16.mxu0 %v2432
    %3471 = vmatpush1.bf16.msra.mxu0 %v2431
    %3472 = vmatprep.subr.bf16.mxu0 %v2440
    %3473 = vmatpush1.bf16.msra.mxu0 %v2439
    %3474 = vmatprep.subr.bf16.mxu0 %v2448
    %3475 = vmatpush1.bf16.msra.mxu0 %v2447
    %3476 = vmatprep.subr.bf16.mxu0 %v2456
    %3477 = vmatpush1.bf16.msra.mxu0 %v2455
    %3478 = vmatprep.subr.bf16.mxu0 %v2464
    %3479 = vmatpush1.bf16.msra.mxu0 %v2463
    %3480 = vmatprep.subr.bf16.mxu0 %v2472
    %3481 = vmatpush1.bf16.msra.mxu0 %v2471
    %3482 = vmatprep.mubr.bf16.mxu0 %v126
    %3483 = vmatmul.mubr.bf16.gmra.mrb[0].mxu0 %v125
    %v3484 = vpop.f32.mrb[0].mxu0
    %v3485 = vadd.f32 %v3444, %v3484
    %v3486 = vpop.f32.mrb[0].mxu0
    %v3487 = vadd.f32 %v3446, %v3486
    %v3488 = vpop.f32.mrb[0].mxu0
    %v3489 = vpop.f32.mrb[0].mxu0
    %3490 = vdwg.mxu0
    %3491 = vmatprep.subr.bf16.mxu0 %v2480
    %3492 = vmatpush1.bf16.msra.mxu0 %v2479
    %3493 = vmatprep.subr.bf16.mxu0 %v2488
    %3494 = vmatpush1.bf16.msra.mxu0 %v2487
    %3495 = vmatprep.subr.bf16.mxu0 %v2496
    %3496 = vmatpush1.bf16.msra.mxu0 %v2495
    %3497 = vmatprep.subr.bf16.mxu0 %v2504
    %3498 = vmatpush1.bf16.msra.mxu0 %v2503
    %3499 = vmatprep.subr.bf16.mxu0 %v2512
    %3500 = vmatpush1.bf16.msra.mxu0 %v2511
    %3501 = vmatprep.subr.bf16.mxu0 %v2520
    %3502 = vmatpush1.bf16.msra.mxu0 %v2519
    %3503 = vmatprep.subr.bf16.mxu0 %v2528
    %3504 = vmatpush1.bf16.msra.mxu0 %v2527
    %3505 = vmatprep.subr.bf16.mxu0 %v2536
    %3506 = vmatpush1.bf16.msra.mxu0 %v2535
    %3507 = vmatprep.subr.bf16.mxu0 %v2544
    %3508 = vmatpush1.bf16.msra.mxu0 %v2543
    %3509 = vmatprep.subr.bf16.mxu0 %v2552
    %3510 = vmatpush1.bf16.msra.mxu0 %v2551
    %3511 = vmatprep.subr.bf16.mxu0 %v2560
    %3512 = vmatpush1.bf16.msra.mxu0 %v2559
    %3513 = vmatprep.subr.bf16.mxu0 %v2568
    %3514 = vmatpush1.bf16.msra.mxu0 %v2567
    %3515 = vmatprep.subr.bf16.mxu0 %v2576
    %3516 = vmatpush1.bf16.msra.mxu0 %v2575
    %3517 = vmatprep.subr.bf16.mxu0 %v2584
    %3518 = vmatpush1.bf16.msra.mxu0 %v2583
    %3519 = vmatprep.subr.bf16.mxu0 %v2592
    %3520 = vmatpush1.bf16.msra.mxu0 %v2591
    %3521 = vmatprep.subr.bf16.mxu0 %v2600
    %3522 = vmatpush1.bf16.msra.mxu0 %v2599
    %3523 = vmatprep.mubr.bf16.mxu0 %v128
    %3524 = vmatmul.mubr.bf16.gmra.mrb[0].mxu0 %v127
    %v3525 = vpop.f32.mrb[0].mxu0
    %v3526 = vadd.f32 %v3485, %v3525
    %v3527 = vpop.f32.mrb[0].mxu0
    %v3528 = vadd.f32 %v3487, %v3527
    %v3529 = vpop.f32.mrb[0].mxu0
    %v3530 = vpop.f32.mrb[0].mxu0
    %3531 = vdwg.mxu0
    %3532 = vmatprep.subr.bf16.mxu0 %v2608
    %3533 = vmatpush1.bf16.msra.mxu0 %v2607
    %3534 = vmatprep.subr.bf16.mxu0 %v2616
    %3535 = vmatpush1.bf16.msra.mxu0 %v2615
    %3536 = vmatprep.subr.bf16.mxu0 %v2624
    %3537 = vmatpush1.bf16.msra.mxu0 %v2623
    %3538 = vmatprep.subr.bf16.mxu0 %v2632
    %3539 = vmatpush1.bf16.msra.mxu0 %v2631
    %3540 = vmatprep.subr.bf16.mxu0 %v2640
    %3541 = vmatpush1.bf16.msra.mxu0 %v2639
    %3542 = vmatprep.subr.bf16.mxu0 %v2648
    %3543 = vmatpush1.bf16.msra.mxu0 %v2647
    %3544 = vmatprep.subr.bf16.mxu0 %v2656
    %3545 = vmatpush1.bf16.msra.mxu0 %v2655
    %3546 = vmatprep.subr.bf16.mxu0 %v2664
    %3547 = vmatpush1.bf16.msra.mxu0 %v2663
    %3548 = vmatprep.subr.bf16.mxu0 %v2672
    %3549 = vmatpush1.bf16.msra.mxu0 %v2671
    %3550 = vmatprep.subr.bf16.mxu0 %v2680
    %3551 = vmatpush1.bf16.msra.mxu0 %v2679
    %3552 = vmatprep.subr.bf16.mxu0 %v2688
    %3553 = vmatpush1.bf16.msra.mxu0 %v2687
    %3554 = vmatprep.subr.bf16.mxu0 %v2696
    %3555 = vmatpush1.bf16.msra.mxu0 %v2695
    %3556 = vmatprep.subr.bf16.mxu0 %v2704
    %3557 = vmatpush1.bf16.msra.mxu0 %v2703
    %3558 = vmatprep.subr.bf16.mxu0 %v2712
    %3559 = vmatpush1.bf16.msra.mxu0 %v2711
    %3560 = vmatprep.subr.bf16.mxu0 %v2720
    %3561 = vmatpush1.bf16.msra.mxu0 %v2719
    %3562 = vmatprep.subr.bf16.mxu0 %v2728
    %3563 = vmatpush1.bf16.msra.mxu0 %v2727
    %3564 = vmatprep.mubr.bf16.mxu0 %v130
    %3565 = vmatmul.mubr.bf16.gmra.mrb[0].mxu0 %v129
    %v3566 = vpop.f32.mrb[0].mxu0
    %v3567 = vadd.f32 %v3526, %v3566
    %v3568 = vpop.f32.mrb[0].mxu0
    %v3569 = vadd.f32 %v3528, %v3568
    %v3570 = vpop.f32.mrb[0].mxu0
    %v3571 = vpop.f32.mrb[0].mxu0
    %3572 = vdwg.mxu0
    %3573 = vmatprep.subr.bf16.mxu0 %v2226
    %3574 = vmatpush1.bf16.msra.mxu0 %v2225
    %3575 = vmatprep.subr.bf16.mxu0 %v2234
    %3576 = vmatpush1.bf16.msra.mxu0 %v2233
    %3577 = vmatprep.subr.bf16.mxu0 %v2242
    %3578 = vmatpush1.bf16.msra.mxu0 %v2241
    %3579 = vmatprep.subr.bf16.mxu0 %v2250
    %3580 = vmatpush1.bf16.msra.mxu0 %v2249
    %3581 = vmatprep.subr.bf16.mxu0 %v2258
    %3582 = vmatpush1.bf16.msra.mxu0 %v2257
    %3583 = vmatprep.subr.bf16.mxu0 %v2266
    %3584 = vmatpush1.bf16.msra.mxu0 %v2265
    %3585 = vmatprep.subr.bf16.mxu0 %v2274
    %3586 = vmatpush1.bf16.msra.mxu0 %v2273
    %3587 = vmatprep.subr.bf16.mxu0 %v2282
    %3588 = vmatpush1.bf16.msra.mxu0 %v2281
    %3589 = vmatprep.subr.bf16.mxu0 %v2290
    %3590 = vmatpush1.bf16.msra.mxu0 %v2289
    %3591 = vmatprep.subr.bf16.mxu0 %v2298
    %3592 = vmatpush1.bf16.msra.mxu0 %v2297
    %3593 = vmatprep.subr.bf16.mxu0 %v2306
    %3594 = vmatpush1.bf16.msra.mxu0 %v2305
    %3595 = vmatprep.subr.bf16.mxu0 %v2314
    %3596 = vmatpush1.bf16.msra.mxu0 %v2313
    %3597 = vmatprep.subr.bf16.mxu0 %v2322
    %3598 = vmatpush1.bf16.msra.mxu0 %v2321
    %3599 = vmatprep.subr.bf16.mxu0 %v2330
    %3600 = vmatpush1.bf16.msra.mxu0 %v2329
    %3601 = vmatprep.subr.bf16.mxu0 %v2338
    %3602 = vmatpush1.bf16.msra.mxu0 %v2337
    %3603 = vmatprep.subr.bf16.mxu0 %v2346
    %3604 = vmatpush1.bf16.msra.mxu0 %v2345
    %3605 = vmatprep.mubr.bf16.mxu0 %v124
    %3606 = vmatmul.mubr.bf16.gmra.mrb[0].mxu0 %v123
    %v3607 = vpop.f32.mrb[0].mxu0
    %v3608 = vadd.f32 %v664, %v3607
    %v3609 = vpop.f32.mrb[0].mxu0
    %v3610 = vadd.f32 %v668, %v3609
    %v3611 = vpop.f32.mrb[0].mxu0
    %v3612 = vpop.f32.mrb[0].mxu0
    %3613 = vdwg.mxu0
    %3614 = vmatprep.subr.bf16.mxu0 %v2354
    %3615 = vmatpush1.bf16.msra.mxu0 %v2353
    %3616 = vmatprep.subr.bf16.mxu0 %v2362
    %3617 = vmatpush1.bf16.msra.mxu0 %v2361
    %3618 = vmatprep.subr.bf16.mxu0 %v2370
    %3619 = vmatpush1.bf16.msra.mxu0 %v2369
    %3620 = vmatprep.subr.bf16.mxu0 %v2378
    %3621 = vmatpush1.bf16.msra.mxu0 %v2377
    %3622 = vmatprep.subr.bf16.mxu0 %v2386
    %3623 = vmatpush1.bf16.msra.mxu0 %v2385
    %3624 = vmatprep.subr.bf16.mxu0 %v2394
    %3625 = vmatpush1.bf16.msra.mxu0 %v2393
    %3626 = vmatprep.subr.bf16.mxu0 %v2402
    %3627 = vmatpush1.bf16.msra.mxu0 %v2401
    %3628 = vmatprep.subr.bf16.mxu0 %v2410
    %3629 = vmatpush1.bf16.msra.mxu0 %v2409
    %3630 = vmatprep.subr.bf16.mxu0 %v2418
    %3631 = vmatpush1.bf16.msra.mxu0 %v2417
    %3632 = vmatprep.subr.bf16.mxu0 %v2426
    %3633 = vmatpush1.bf16.msra.mxu0 %v2425
    %3634 = vmatprep.subr.bf16.mxu0 %v2434
    %3635 = vmatpush1.bf16.msra.mxu0 %v2433
    %3636 = vmatprep.subr.bf16.mxu0 %v2442
    %3637 = vmatpush1.bf16.msra.mxu0 %v2441
    %3638 = vmatprep.subr.bf16.mxu0 %v2450
    %3639 = vmatpush1.bf16.msra.mxu0 %v2449
    %3640 = vmatprep.subr.bf16.mxu0 %v2458
    %3641 = vmatpush1.bf16.msra.mxu0 %v2457
    %3642 = vmatprep.subr.bf16.mxu0 %v2466
    %3643 = vmatpush1.bf16.msra.mxu0 %v2465
    %3644 = vmatprep.subr.bf16.mxu0 %v2474
    %3645 = vmatpush1.bf16.msra.mxu0 %v2473
    %3646 = vmatprep.mubr.bf16.mxu0 %v126
    %3647 = vmatmul.mubr.bf16.gmra.mrb[0].mxu0 %v125
    %v3648 = vpop.f32.mrb[0].mxu0
    %v3649 = vadd.f32 %v3608, %v3648
    %v3650 = vpop.f32.mrb[0].mxu0
    %v3651 = vadd.f32 %v3610, %v3650
    %v3652 = vpop.f32.mrb[0].mxu0
    %v3653 = vpop.f32.mrb[0].mxu0
    %3654 = vdwg.mxu0
    %3655 = vmatprep.subr.bf16.mxu0 %v2482
    %3656 = vmatpush1.bf16.msra.mxu0 %v2481
    %3657 = vmatprep.subr.bf16.mxu0 %v2490
    %3658 = vmatpush1.bf16.msra.mxu0 %v2489
    %3659 = vmatprep.subr.bf16.mxu0 %v2498
    %3660 = vmatpush1.bf16.msra.mxu0 %v2497
    %3661 = vmatprep.subr.bf16.mxu0 %v2506
    %3662 = vmatpush1.bf16.msra.mxu0 %v2505
    %3663 = vmatprep.subr.bf16.mxu0 %v2514
    %3664 = vmatpush1.bf16.msra.mxu0 %v2513
    %3665 = vmatprep.subr.bf16.mxu0 %v2522
    %3666 = vmatpush1.bf16.msra.mxu0 %v2521
    %3667 = vmatprep.subr.bf16.mxu0 %v2530
    %3668 = vmatpush1.bf16.msra.mxu0 %v2529
    %3669 = vmatprep.subr.bf16.mxu0 %v2538
    %3670 = vmatpush1.bf16.msra.mxu0 %v2537
    %3671 = vmatprep.subr.bf16.mxu0 %v2546
    %3672 = vmatpush1.bf16.msra.mxu0 %v2545
    %3673 = vmatprep.subr.bf16.mxu0 %v2554
    %3674 = vmatpush1.bf16.msra.mxu0 %v2553
    %3675 = vmatprep.subr.bf16.mxu0 %v2562
    %3676 = vmatpush1.bf16.msra.mxu0 %v2561
    %3677 = vmatprep.subr.bf16.mxu0 %v2570
    %3678 = vmatpush1.bf16.msra.mxu0 %v2569
    %3679 = vmatprep.subr.bf16.mxu0 %v2578
    %3680 = vmatpush1.bf16.msra.mxu0 %v2577
    %3681 = vmatprep.subr.bf16.mxu0 %v2586
    %3682 = vmatpush1.bf16.msra.mxu0 %v2585
    %3683 = vmatprep.subr.bf16.mxu0 %v2594
    %3684 = vmatpush1.bf16.msra.mxu0 %v2593
    %3685 = vmatprep.subr.bf16.mxu0 %v2602
    %3686 = vmatpush1.bf16.msra.mxu0 %v2601
    %3687 = vmatprep.mubr.bf16.mxu0 %v128
    %3688 = vmatmul.mubr.bf16.gmra.mrb[0].mxu0 %v127
    %v3689 = vpop.f32.mrb[0].mxu0
    %v3690 = vadd.f32 %v3649, %v3689
    %v3691 = vpop.f32.mrb[0].mxu0
    %v3692 = vadd.f32 %v3651, %v3691
    %v3693 = vpop.f32.mrb[0].mxu0
    %v3694 = vpop.f32.mrb[0].mxu0
    %3695 = vdwg.mxu0
    %3696 = vmatprep.subr.bf16.mxu0 %v2610
    %3697 = vmatpush1.bf16.msra.mxu0 %v2609
    %3698 = vmatprep.subr.bf16.mxu0 %v2618
    %3699 = vmatpush1.bf16.msra.mxu0 %v2617
    %3700 = vmatprep.subr.bf16.mxu0 %v2626
    %3701 = vmatpush1.bf16.msra.mxu0 %v2625
    %3702 = vmatprep.subr.bf16.mxu0 %v2634
    %3703 = vmatpush1.bf16.msra.mxu0 %v2633
    %3704 = vmatprep.subr.bf16.mxu0 %v2642
    %3705 = vmatpush1.bf16.msra.mxu0 %v2641
    %3706 = vmatprep.subr.bf16.mxu0 %v2650
    %3707 = vmatpush1.bf16.msra.mxu0 %v2649
    %3708 = vmatprep.subr.bf16.mxu0 %v2658
    %3709 = vmatpush1.bf16.msra.mxu0 %v2657
    %3710 = vmatprep.subr.bf16.mxu0 %v2666
    %3711 = vmatpush1.bf16.msra.mxu0 %v2665
    %3712 = vmatprep.subr.bf16.mxu0 %v2674
    %3713 = vmatpush1.bf16.msra.mxu0 %v2673
    %3714 = vmatprep.subr.bf16.mxu0 %v2682
    %3715 = vmatpush1.bf16.msra.mxu0 %v2681
    %3716 = vmatprep.subr.bf16.mxu0 %v2690
    %3717 = vmatpush1.bf16.msra.mxu0 %v2689
    %3718 = vmatprep.subr.bf16.mxu0 %v2698
    %3719 = vmatpush1.bf16.msra.mxu0 %v2697
    %3720 = vmatprep.subr.bf16.mxu0 %v2706
    %3721 = vmatpush1.bf16.msra.mxu0 %v2705
    %3722 = vmatprep.subr.bf16.mxu0 %v2714
    %3723 = vmatpush1.bf16.msra.mxu0 %v2713
    %3724 = vmatprep.subr.bf16.mxu0 %v2722
    %3725 = vmatpush1.bf16.msra.mxu0 %v2721
    %3726 = vmatprep.subr.bf16.mxu0 %v2730
    %3727 = vmatpush1.bf16.msra.mxu0 %v2729
    %3728 = vmatprep.mubr.bf16.mxu0 %v130
    %3729 = vmatmul.mubr.bf16.gmra.mrb[0].mxu0 %v129
    %v3730 = vpop.f32.mrb[0].mxu0
    %v3731 = vadd.f32 %v3690, %v3730
    %v3732 = vpop.f32.mrb[0].mxu0
    %v3733 = vadd.f32 %v3692, %v3732
    %v3734 = vpop.f32.mrb[0].mxu0
    %v3735 = vpop.f32.mrb[0].mxu0
    %3736 = vdwg.mxu0
    %3737 = vmatprep.subr.bf16.mxu0 %v2228
    %3738 = vmatpush1.bf16.msra.mxu0 %v2227
    %3739 = vmatprep.subr.bf16.mxu0 %v2236
    %3740 = vmatpush1.bf16.msra.mxu0 %v2235
    %3741 = vmatprep.subr.bf16.mxu0 %v2244
    %3742 = vmatpush1.bf16.msra.mxu0 %v2243
    %3743 = vmatprep.subr.bf16.mxu0 %v2252
    %3744 = vmatpush1.bf16.msra.mxu0 %v2251
    %3745 = vmatprep.subr.bf16.mxu0 %v2260
    %3746 = vmatpush1.bf16.msra.mxu0 %v2259
    %3747 = vmatprep.subr.bf16.mxu0 %v2268
    %3748 = vmatpush1.bf16.msra.mxu0 %v2267
    %3749 = vmatprep.subr.bf16.mxu0 %v2276
    %3750 = vmatpush1.bf16.msra.mxu0 %v2275
    %3751 = vmatprep.subr.bf16.mxu0 %v2284
    %3752 = vmatpush1.bf16.msra.mxu0 %v2283
    %3753 = vmatprep.subr.bf16.mxu0 %v2292
    %3754 = vmatpush1.bf16.msra.mxu0 %v2291
    %3755 = vmatprep.subr.bf16.mxu0 %v2300
    %3756 = vmatpush1.bf16.msra.mxu0 %v2299
    %3757 = vmatprep.subr.bf16.mxu0 %v2308
    %3758 = vmatpush1.bf16.msra.mxu0 %v2307
    %3759 = vmatprep.subr.bf16.mxu0 %v2316
    %3760 = vmatpush1.bf16.msra.mxu0 %v2315
    %3761 = vmatprep.subr.bf16.mxu0 %v2324
    %3762 = vmatpush1.bf16.msra.mxu0 %v2323
    %3763 = vmatprep.subr.bf16.mxu0 %v2332
    %3764 = vmatpush1.bf16.msra.mxu0 %v2331
    %3765 = vmatprep.subr.bf16.mxu0 %v2340
    %3766 = vmatpush1.bf16.msra.mxu0 %v2339
    %3767 = vmatprep.subr.bf16.mxu0 %v2348
    %3768 = vmatpush1.bf16.msra.mxu0 %v2347
    %3769 = vmatprep.mubr.bf16.mxu0 %v124
    %3770 = vmatmul.mubr.bf16.gmra.mrb[0].mxu0 %v123
    %v3771 = vpop.f32.mrb[0].mxu0
    %v3772 = vadd.f32 %v672, %v3771
    %v3773 = vpop.f32.mrb[0].mxu0
    %v3774 = vadd.f32 %v676, %v3773
    %v3775 = vpop.f32.mrb[0].mxu0
    %v3776 = vpop.f32.mrb[0].mxu0
    %3777 = vdwg.mxu0
    %3778 = vmatprep.subr.bf16.mxu0 %v2356
    %3779 = vmatpush1.bf16.msra.mxu0 %v2355
    %3780 = vmatprep.subr.bf16.mxu0 %v2364
    %3781 = vmatpush1.bf16.msra.mxu0 %v2363
    %3782 = vmatprep.subr.bf16.mxu0 %v2372
    %3783 = vmatpush1.bf16.msra.mxu0 %v2371
    %3784 = vmatprep.subr.bf16.mxu0 %v2380
    %3785 = vmatpush1.bf16.msra.mxu0 %v2379
    %3786 = vmatprep.subr.bf16.mxu0 %v2388
    %3787 = vmatpush1.bf16.msra.mxu0 %v2387
    %3788 = vmatprep.subr.bf16.mxu0 %v2396
    %3789 = vmatpush1.bf16.msra.mxu0 %v2395
    %3790 = vmatprep.subr.bf16.mxu0 %v2404
    %3791 = vmatpush1.bf16.msra.mxu0 %v2403
    %3792 = vmatprep.subr.bf16.mxu0 %v2412
    %3793 = vmatpush1.bf16.msra.mxu0 %v2411
    %3794 = vmatprep.subr.bf16.mxu0 %v2420
    %3795 = vmatpush1.bf16.msra.mxu0 %v2419
    %3796 = vmatprep.subr.bf16.mxu0 %v2428
    %3797 = vmatpush1.bf16.msra.mxu0 %v2427
    %3798 = vmatprep.subr.bf16.mxu0 %v2436
    %3799 = vmatpush1.bf16.msra.mxu0 %v2435
    %3800 = vmatprep.subr.bf16.mxu0 %v2444
    %3801 = vmatpush1.bf16.msra.mxu0 %v2443
    %3802 = vmatprep.subr.bf16.mxu0 %v2452
    %3803 = vmatpush1.bf16.msra.mxu0 %v2451
    %3804 = vmatprep.subr.bf16.mxu0 %v2460
    %3805 = vmatpush1.bf16.msra.mxu0 %v2459
    %3806 = vmatprep.subr.bf16.mxu0 %v2468
    %3807 = vmatpush1.bf16.msra.mxu0 %v2467
    %3808 = vmatprep.subr.bf16.mxu0 %v2476
    %3809 = vmatpush1.bf16.msra.mxu0 %v2475
    %3810 = vmatprep.mubr.bf16.mxu0 %v126
    %3811 = vmatmul.mubr.bf16.gmra.mrb[0].mxu0 %v125
    %v3812 = vpop.f32.mrb[0].mxu0
    %v3813 = vadd.f32 %v3772, %v3812
    %v3814 = vpop.f32.mrb[0].mxu0
    %v3815 = vadd.f32 %v3774, %v3814
    %v3816 = vpop.f32.mrb[0].mxu0
    %v3817 = vpop.f32.mrb[0].mxu0
    %3818 = vdwg.mxu0
    %3819 = vmatprep.subr.bf16.mxu0 %v2484
    %3820 = vmatpush1.bf16.msra.mxu0 %v2483
    %3821 = vmatprep.subr.bf16.mxu0 %v2492
    %3822 = vmatpush1.bf16.msra.mxu0 %v2491
    %3823 = vmatprep.subr.bf16.mxu0 %v2500
    %3824 = vmatpush1.bf16.msra.mxu0 %v2499
    %3825 = vmatprep.subr.bf16.mxu0 %v2508
    %3826 = vmatpush1.bf16.msra.mxu0 %v2507
    %3827 = vmatprep.subr.bf16.mxu0 %v2516
    %3828 = vmatpush1.bf16.msra.mxu0 %v2515
    %3829 = vmatprep.subr.bf16.mxu0 %v2524
    %3830 = vmatpush1.bf16.msra.mxu0 %v2523
    %3831 = vmatprep.subr.bf16.mxu0 %v2532
    %3832 = vmatpush1.bf16.msra.mxu0 %v2531
    %3833 = vmatprep.subr.bf16.mxu0 %v2540
    %3834 = vmatpush1.bf16.msra.mxu0 %v2539
    %3835 = vmatprep.subr.bf16.mxu0 %v2548
    %3836 = vmatpush1.bf16.msra.mxu0 %v2547
    %3837 = vmatprep.subr.bf16.mxu0 %v2556
    %3838 = vmatpush1.bf16.msra.mxu0 %v2555
    %3839 = vmatprep.subr.bf16.mxu0 %v2564
    %3840 = vmatpush1.bf16.msra.mxu0 %v2563
    %3841 = vmatprep.subr.bf16.mxu0 %v2572
    %3842 = vmatpush1.bf16.msra.mxu0 %v2571
    %3843 = vmatprep.subr.bf16.mxu0 %v2580
    %3844 = vmatpush1.bf16.msra.mxu0 %v2579
    %3845 = vmatprep.subr.bf16.mxu0 %v2588
    %3846 = vmatpush1.bf16.msra.mxu0 %v2587
    %3847 = vmatprep.subr.bf16.mxu0 %v2596
    %3848 = vmatpush1.bf16.msra.mxu0 %v2595
    %3849 = vmatprep.subr.bf16.mxu0 %v2604
    %3850 = vmatpush1.bf16.msra.mxu0 %v2603
    %3851 = vmatprep.mubr.bf16.mxu0 %v128
    %3852 = vmatmul.mubr.bf16.gmra.mrb[0].mxu0 %v127
    %v3853 = vpop.f32.mrb[0].mxu0
    %v3854 = vadd.f32 %v3813, %v3853
    %v3855 = vpop.f32.mrb[0].mxu0
    %v3856 = vadd.f32 %v3815, %v3855
    %v3857 = vpop.f32.mrb[0].mxu0
    %v3858 = vpop.f32.mrb[0].mxu0
    %3859 = vdwg.mxu0
    %3860 = vmatprep.subr.bf16.mxu0 %v2612
    %3861 = vmatpush1.bf16.msra.mxu0 %v2611
    %3862 = vmatprep.subr.bf16.mxu0 %v2620
    %3863 = vmatpush1.bf16.msra.mxu0 %v2619
    %3864 = vmatprep.subr.bf16.mxu0 %v2628
    %3865 = vmatpush1.bf16.msra.mxu0 %v2627
    %3866 = vmatprep.subr.bf16.mxu0 %v2636
    %3867 = vmatpush1.bf16.msra.mxu0 %v2635
    %3868 = vmatprep.subr.bf16.mxu0 %v2644
    %3869 = vmatpush1.bf16.msra.mxu0 %v2643
    %3870 = vmatprep.subr.bf16.mxu0 %v2652
    %3871 = vmatpush1.bf16.msra.mxu0 %v2651
    %3872 = vmatprep.subr.bf16.mxu0 %v2660
    %3873 = vmatpush1.bf16.msra.mxu0 %v2659
    %3874 = vmatprep.subr.bf16.mxu0 %v2668
    %3875 = vmatpush1.bf16.msra.mxu0 %v2667
    %3876 = vmatprep.subr.bf16.mxu0 %v2676
    %3877 = vmatpush1.bf16.msra.mxu0 %v2675
    %3878 = vmatprep.subr.bf16.mxu0 %v2684
    %3879 = vmatpush1.bf16.msra.mxu0 %v2683
    %3880 = vmatprep.subr.bf16.mxu0 %v2692
    %3881 = vmatpush1.bf16.msra.mxu0 %v2691
    %3882 = vmatprep.subr.bf16.mxu0 %v2700
    %3883 = vmatpush1.bf16.msra.mxu0 %v2699
    %3884 = vmatprep.subr.bf16.mxu0 %v2708
    %3885 = vmatpush1.bf16.msra.mxu0 %v2707
    %3886 = vmatprep.subr.bf16.mxu0 %v2716
    %3887 = vmatpush1.bf16.msra.mxu0 %v2715
    %3888 = vmatprep.subr.bf16.mxu0 %v2724
    %3889 = vmatpush1.bf16.msra.mxu0 %v2723
    %3890 = vmatprep.subr.bf16.mxu0 %v2732
    %3891 = vmatpush1.bf16.msra.mxu0 %v2731
    %3892 = vmatprep.mubr.bf16.mxu0 %v130
    %3893 = vmatmul.mubr.bf16.gmra.mrb[0].mxu0 %v129
    %v3894 = vpop.f32.mrb[0].mxu0
    %v3895 = vadd.f32 %v3854, %v3894
    %v3896 = vpop.f32.mrb[0].mxu0
    %v3897 = vadd.f32 %v3856, %v3896
    %v3898 = vpop.f32.mrb[0].mxu0
    %v3899 = vpop.f32.mrb[0].mxu0
    %3900 = vdwg.mxu0
    %v3901 = vmax.f32 %v3403, 0.0
    %v3902 = vmax.f32 %v3405, 0.0
    %v3903 = vmax.f32 %v3567, 0.0
    %v3904 = vmax.f32 %v3569, 0.0
    %v3905 = vmax.f32 %v3731, 0.0
    %v3906 = vmax.f32 %v3733, 0.0
    %v3907 = vmax.f32 %v3895, 0.0
    %v3908 = vmax.f32 %v3897, 0.0
    %v3909 = vpack.c.bf16 %v3901, %v3901
    %v3910 = vpack.c.bf16 %v3902, %v3902
    %v3911 = vpack.c.bf16 %v3903, %v3903
    %v3912 = vpack.c.bf16 %v3904, %v3904
    %v3913 = vpack.c.bf16 %v3905, %v3905
    %v3914 = vpack.c.bf16 %v3906, %v3906
    %v3915 = vpack.c.bf16 %v3907, %v3907
    %v3916 = vpack.c.bf16 %v3908, %v3908
    %v3917 = vld [vmem:[#allocation8] sm:$0xff]
    %v3918 = vld [vmem:[#allocation8 + $0x8] sm:$0xff]
    %v3919 = vld [vmem:[#allocation8 + $0x10] sm:$0xff]
    %v3920 = vld [vmem:[#allocation8 + $0x18] sm:$0xff]
    %v3921 = vld [vmem:[#allocation8 + $0x20] sm:$0xff]
    %v3922 = vld [vmem:[#allocation8 + $0x28] sm:$0xff]
    %v3923 = vld [vmem:[#allocation8 + $0x30] sm:$0xff]
    %v3924 = vld [vmem:[#allocation8 + $0x38] sm:$0xff]
    %v3925 = vld [vmem:[#allocation8 + $0x40] sm:$0xff]
    %v3926 = vld [vmem:[#allocation8 + $0x48] sm:$0xff]
    %v3927 = vld [vmem:[#allocation8 + $0x50] sm:$0xff]
    %v3928 = vld [vmem:[#allocation8 + $0x58] sm:$0xff]
    %v3929 = vld [vmem:[#allocation8 + $0x60] sm:$0xff]
    %v3930 = vld [vmem:[#allocation8 + $0x68] sm:$0xff]
    %v3931 = vld [vmem:[#allocation8 + $0x70] sm:$0xff]
    %v3932 = vld [vmem:[#allocation8 + $0x78] sm:$0xff]
    %v3933 = vld [vmem:[#allocation8 + $0x80] sm:$0xff]
    %v3934 = vld [vmem:[#allocation8 + $0x88] sm:$0xff]
    %v3935 = vld [vmem:[#allocation8 + $0x90] sm:$0xff]
    %v3936 = vld [vmem:[#allocation8 + $0x98] sm:$0xff]
    %v3937 = vld [vmem:[#allocation8 + $0xa0] sm:$0xff]
    %v3938 = vld [vmem:[#allocation8 + $0xa8] sm:$0xff]
    %v3939 = vld [vmem:[#allocation8 + $0xb0] sm:$0xff]
    %v3940 = vld [vmem:[#allocation8 + $0xb8] sm:$0xff]
    %v3941 = vld [vmem:[#allocation8 + $0xc0] sm:$0xff]
    %v3942 = vld [vmem:[#allocation8 + $0xc8] sm:$0xff]
    %v3943 = vld [vmem:[#allocation8 + $0xd0] sm:$0xff]
    %v3944 = vld [vmem:[#allocation8 + $0xd8] sm:$0xff]
    %v3945 = vld [vmem:[#allocation8 + $0xe0] sm:$0xff]
    %v3946 = vld [vmem:[#allocation8 + $0xe8] sm:$0xff]
    %v3947 = vld [vmem:[#allocation8 + $0xf0] sm:$0xff]
    %v3948 = vld [vmem:[#allocation8 + $0xf8] sm:$0xff]
    %v3949 = vld [vmem:[#allocation8 + $0x100] sm:$0xff]
    %v3950 = vld [vmem:[#allocation8 + $0x108] sm:$0xff]
    %v3951 = vld [vmem:[#allocation8 + $0x110] sm:$0xff]
    %v3952 = vld [vmem:[#allocation8 + $0x118] sm:$0xff]
    %v3953 = vld [vmem:[#allocation8 + $0x120] sm:$0xff]
    %v3954 = vld [vmem:[#allocation8 + $0x128] sm:$0xff]
    %v3955 = vld [vmem:[#allocation8 + $0x130] sm:$0xff]
    %v3956 = vld [vmem:[#allocation8 + $0x138] sm:$0xff]
    %v3957 = vld [vmem:[#allocation8 + $0x140] sm:$0xff]
    %v3958 = vld [vmem:[#allocation8 + $0x148] sm:$0xff]
    %v3959 = vld [vmem:[#allocation8 + $0x150] sm:$0xff]
    %v3960 = vld [vmem:[#allocation8 + $0x158] sm:$0xff]
    %v3961 = vld [vmem:[#allocation8 + $0x160] sm:$0xff]
    %v3962 = vld [vmem:[#allocation8 + $0x168] sm:$0xff]
    %v3963 = vld [vmem:[#allocation8 + $0x170] sm:$0xff]
    %v3964 = vld [vmem:[#allocation8 + $0x178] sm:$0xff]
    %v3965 = vld [vmem:[#allocation8 + $0x180] sm:$0xff]
    %v3966 = vld [vmem:[#allocation8 + $0x188] sm:$0xff]
    %v3967 = vld [vmem:[#allocation8 + $0x190] sm:$0xff]
    %v3968 = vld [vmem:[#allocation8 + $0x198] sm:$0xff]
    %v3969 = vld [vmem:[#allocation8 + $0x1a0] sm:$0xff]
    %v3970 = vld [vmem:[#allocation8 + $0x1a8] sm:$0xff]
    %v3971 = vld [vmem:[#allocation8 + $0x1b0] sm:$0xff]
    %v3972 = vld [vmem:[#allocation8 + $0x1b8] sm:$0xff]
    %v3973 = vld [vmem:[#allocation8 + $0x1c0] sm:$0xff]
    %v3974 = vld [vmem:[#allocation8 + $0x1c8] sm:$0xff]
    %v3975 = vld [vmem:[#allocation8 + $0x1d0] sm:$0xff]
    %v3976 = vld [vmem:[#allocation8 + $0x1d8] sm:$0xff]
    %v3977 = vld [vmem:[#allocation8 + $0x1e0] sm:$0xff]
    %v3978 = vld [vmem:[#allocation8 + $0x1e8] sm:$0xff]
    %v3979 = vld [vmem:[#allocation8 + $0x1f0] sm:$0xff]
    %v3980 = vld [vmem:[#allocation8 + $0x1f8] sm:$0xff]
    %v3981 = vld [vmem:[#allocation8 + $0x200] sm:$0xff]
    %v3982 = vld [vmem:[#allocation8 + $0x208] sm:$0xff]
    %v3983 = vld [vmem:[#allocation8 + $0x210] sm:$0xff]
    %v3984 = vld [vmem:[#allocation8 + $0x218] sm:$0xff]
    %v3985 = vld [vmem:[#allocation8 + $0x220] sm:$0xff]
    %v3986 = vld [vmem:[#allocation8 + $0x228] sm:$0xff]
    %v3987 = vld [vmem:[#allocation8 + $0x230] sm:$0xff]
    %v3988 = vld [vmem:[#allocation8 + $0x238] sm:$0xff]
    %v3989 = vld [vmem:[#allocation8 + $0x240] sm:$0xff]
    %v3990 = vld [vmem:[#allocation8 + $0x248] sm:$0xff]
    %v3991 = vld [vmem:[#allocation8 + $0x250] sm:$0xff]
    %v3992 = vld [vmem:[#allocation8 + $0x258] sm:$0xff]
    %v3993 = vld [vmem:[#allocation8 + $0x260] sm:$0xff]
    %v3994 = vld [vmem:[#allocation8 + $0x268] sm:$0xff]
    %v3995 = vld [vmem:[#allocation8 + $0x270] sm:$0xff]
    %v3996 = vld [vmem:[#allocation8 + $0x278] sm:$0xff]
    %v3997 = vld [vmem:[#allocation8 + $0x280] sm:$0xff]
    %v3998 = vld [vmem:[#allocation8 + $0x288] sm:$0xff]
    %v3999 = vld [vmem:[#allocation8 + $0x290] sm:$0xff]
    %v4000 = vld [vmem:[#allocation8 + $0x298] sm:$0xff]
    %v4001 = vld [vmem:[#allocation8 + $0x2a0] sm:$0xff]
    %v4002 = vld [vmem:[#allocation8 + $0x2a8] sm:$0xff]
    %v4003 = vld [vmem:[#allocation8 + $0x2b0] sm:$0xff]
    %v4004 = vld [vmem:[#allocation8 + $0x2b8] sm:$0xff]
    %v4005 = vld [vmem:[#allocation8 + $0x2c0] sm:$0xff]
    %v4006 = vld [vmem:[#allocation8 + $0x2c8] sm:$0xff]
    %v4007 = vld [vmem:[#allocation8 + $0x2d0] sm:$0xff]
    %v4008 = vld [vmem:[#allocation8 + $0x2d8] sm:$0xff]
    %v4009 = vld [vmem:[#allocation8 + $0x2e0] sm:$0xff]
    %v4010 = vld [vmem:[#allocation8 + $0x2e8] sm:$0xff]
    %v4011 = vld [vmem:[#allocation8 + $0x2f0] sm:$0xff]
    %v4012 = vld [vmem:[#allocation8 + $0x2f8] sm:$0xff]
    %v4013 = vld [vmem:[#allocation8 + $0x300] sm:$0xff]
    %v4014 = vld [vmem:[#allocation8 + $0x308] sm:$0xff]
    %v4015 = vld [vmem:[#allocation8 + $0x310] sm:$0xff]
    %v4016 = vld [vmem:[#allocation8 + $0x318] sm:$0xff]
    %v4017 = vld [vmem:[#allocation8 + $0x320] sm:$0xff]
    %v4018 = vld [vmem:[#allocation8 + $0x328] sm:$0xff]
    %v4019 = vld [vmem:[#allocation8 + $0x330] sm:$0xff]
    %v4020 = vld [vmem:[#allocation8 + $0x338] sm:$0xff]
    %v4021 = vld [vmem:[#allocation8 + $0x340] sm:$0xff]
    %v4022 = vld [vmem:[#allocation8 + $0x348] sm:$0xff]
    %v4023 = vld [vmem:[#allocation8 + $0x350] sm:$0xff]
    %v4024 = vld [vmem:[#allocation8 + $0x358] sm:$0xff]
    %v4025 = vld [vmem:[#allocation8 + $0x360] sm:$0xff]
    %v4026 = vld [vmem:[#allocation8 + $0x368] sm:$0xff]
    %v4027 = vld [vmem:[#allocation8 + $0x370] sm:$0xff]
    %v4028 = vld [vmem:[#allocation8 + $0x378] sm:$0xff]
    %v4029 = vld [vmem:[#allocation8 + $0x380] sm:$0xff]
    %v4030 = vld [vmem:[#allocation8 + $0x388] sm:$0xff]
    %v4031 = vld [vmem:[#allocation8 + $0x390] sm:$0xff]
    %v4032 = vld [vmem:[#allocation8 + $0x398] sm:$0xff]
    %v4033 = vld [vmem:[#allocation8 + $0x3a0] sm:$0xff]
    %v4034 = vld [vmem:[#allocation8 + $0x3a8] sm:$0xff]
    %v4035 = vld [vmem:[#allocation8 + $0x3b0] sm:$0xff]
    %v4036 = vld [vmem:[#allocation8 + $0x3b8] sm:$0xff]
    %v4037 = vld [vmem:[#allocation8 + $0x3c0] sm:$0xff]
    %v4038 = vld [vmem:[#allocation8 + $0x3c8] sm:$0xff]
    %v4039 = vld [vmem:[#allocation8 + $0x3d0] sm:$0xff]
    %v4040 = vld [vmem:[#allocation8 + $0x3d8] sm:$0xff]
    %v4041 = vld [vmem:[#allocation8 + $0x3e0] sm:$0xff]
    %v4042 = vld [vmem:[#allocation8 + $0x3e8] sm:$0xff]
    %v4043 = vld [vmem:[#allocation8 + $0x3f0] sm:$0xff]
    %v4044 = vld [vmem:[#allocation8 + $0x3f8] sm:$0xff]
    %v4045 = vld [vmem:[#allocation8 + $0x400] sm:$0xff]
    %v4046 = vld [vmem:[#allocation8 + $0x408] sm:$0xff]
    %v4047 = vld [vmem:[#allocation8 + $0x410] sm:$0xff]
    %v4048 = vld [vmem:[#allocation8 + $0x418] sm:$0xff]
    %v4049 = vld [vmem:[#allocation8 + $0x420] sm:$0xff]
    %v4050 = vld [vmem:[#allocation8 + $0x428] sm:$0xff]
    %v4051 = vld [vmem:[#allocation8 + $0x430] sm:$0xff]
    %v4052 = vld [vmem:[#allocation8 + $0x438] sm:$0xff]
    %v4053 = vld [vmem:[#allocation8 + $0x440] sm:$0xff]
    %v4054 = vld [vmem:[#allocation8 + $0x448] sm:$0xff]
    %v4055 = vld [vmem:[#allocation8 + $0x450] sm:$0xff]
    %v4056 = vld [vmem:[#allocation8 + $0x458] sm:$0xff]
    %v4057 = vld [vmem:[#allocation8 + $0x460] sm:$0xff]
    %v4058 = vld [vmem:[#allocation8 + $0x468] sm:$0xff]
    %v4059 = vld [vmem:[#allocation8 + $0x470] sm:$0xff]
    %v4060 = vld [vmem:[#allocation8 + $0x478] sm:$0xff]
    %v4061 = vld [vmem:[#allocation8 + $0x480] sm:$0xff]
    %v4062 = vld [vmem:[#allocation8 + $0x488] sm:$0xff]
    %v4063 = vld [vmem:[#allocation8 + $0x490] sm:$0xff]
    %v4064 = vld [vmem:[#allocation8 + $0x498] sm:$0xff]
    %v4065 = vld [vmem:[#allocation8 + $0x4a0] sm:$0xff]
    %v4066 = vld [vmem:[#allocation8 + $0x4a8] sm:$0xff]
    %v4067 = vld [vmem:[#allocation8 + $0x4b0] sm:$0xff]
    %v4068 = vld [vmem:[#allocation8 + $0x4b8] sm:$0xff]
    %v4069 = vld [vmem:[#allocation8 + $0x4c0] sm:$0xff]
    %v4070 = vld [vmem:[#allocation8 + $0x4c8] sm:$0xff]
    %v4071 = vld [vmem:[#allocation8 + $0x4d0] sm:$0xff]
    %v4072 = vld [vmem:[#allocation8 + $0x4d8] sm:$0xff]
    %v4073 = vld [vmem:[#allocation8 + $0x4e0] sm:$0xff]
    %v4074 = vld [vmem:[#allocation8 + $0x4e8] sm:$0xff]
    %v4075 = vld [vmem:[#allocation8 + $0x4f0] sm:$0xff]
    %v4076 = vld [vmem:[#allocation8 + $0x4f8] sm:$0xff]
    %v4077 = vld [vmem:[#allocation8 + $0x500] sm:$0xff]
    %v4078 = vld [vmem:[#allocation8 + $0x508] sm:$0xff]
    %v4079 = vld [vmem:[#allocation8 + $0x510] sm:$0xff]
    %v4080 = vld [vmem:[#allocation8 + $0x518] sm:$0xff]
    %v4081 = vld [vmem:[#allocation8 + $0x520] sm:$0xff]
    %v4082 = vld [vmem:[#allocation8 + $0x528] sm:$0xff]
    %v4083 = vld [vmem:[#allocation8 + $0x530] sm:$0xff]
    %v4084 = vld [vmem:[#allocation8 + $0x538] sm:$0xff]
    %v4085 = vld [vmem:[#allocation8 + $0x540] sm:$0xff]
    %v4086 = vld [vmem:[#allocation8 + $0x548] sm:$0xff]
    %v4087 = vld [vmem:[#allocation8 + $0x550] sm:$0xff]
    %v4088 = vld [vmem:[#allocation8 + $0x558] sm:$0xff]
    %v4089 = vld [vmem:[#allocation8 + $0x560] sm:$0xff]
    %v4090 = vld [vmem:[#allocation8 + $0x568] sm:$0xff]
    %v4091 = vld [vmem:[#allocation8 + $0x570] sm:$0xff]
    %v4092 = vld [vmem:[#allocation8 + $0x578] sm:$0xff]
    %v4093 = vld [vmem:[#allocation8 + $0x580] sm:$0xff]
    %v4094 = vld [vmem:[#allocation8 + $0x588] sm:$0xff]
    %v4095 = vld [vmem:[#allocation8 + $0x590] sm:$0xff]
    %v4096 = vld [vmem:[#allocation8 + $0x598] sm:$0xff]
    %v4097 = vld [vmem:[#allocation8 + $0x5a0] sm:$0xff]
    %v4098 = vld [vmem:[#allocation8 + $0x5a8] sm:$0xff]
    %v4099 = vld [vmem:[#allocation8 + $0x5b0] sm:$0xff]
    %v4100 = vld [vmem:[#allocation8 + $0x5b8] sm:$0xff]
    %v4101 = vld [vmem:[#allocation8 + $0x5c0] sm:$0xff]
    %v4102 = vld [vmem:[#allocation8 + $0x5c8] sm:$0xff]
    %v4103 = vld [vmem:[#allocation8 + $0x5d0] sm:$0xff]
    %v4104 = vld [vmem:[#allocation8 + $0x5d8] sm:$0xff]
    %v4105 = vld [vmem:[#allocation8 + $0x5e0] sm:$0xff]
    %v4106 = vld [vmem:[#allocation8 + $0x5e8] sm:$0xff]
    %v4107 = vld [vmem:[#allocation8 + $0x5f0] sm:$0xff]
    %v4108 = vld [vmem:[#allocation8 + $0x5f8] sm:$0xff]
    %v4109 = vld [vmem:[#allocation8 + $0x600] sm:$0xff]
    %v4110 = vld [vmem:[#allocation8 + $0x608] sm:$0xff]
    %v4111 = vld [vmem:[#allocation8 + $0x610] sm:$0xff]
    %v4112 = vld [vmem:[#allocation8 + $0x618] sm:$0xff]
    %v4113 = vld [vmem:[#allocation8 + $0x620] sm:$0xff]
    %v4114 = vld [vmem:[#allocation8 + $0x628] sm:$0xff]
    %v4115 = vld [vmem:[#allocation8 + $0x630] sm:$0xff]
    %v4116 = vld [vmem:[#allocation8 + $0x638] sm:$0xff]
    %v4117 = vld [vmem:[#allocation8 + $0x640] sm:$0xff]
    %v4118 = vld [vmem:[#allocation8 + $0x648] sm:$0xff]
    %v4119 = vld [vmem:[#allocation8 + $0x650] sm:$0xff]
    %v4120 = vld [vmem:[#allocation8 + $0x658] sm:$0xff]
    %v4121 = vld [vmem:[#allocation8 + $0x660] sm:$0xff]
    %v4122 = vld [vmem:[#allocation8 + $0x668] sm:$0xff]
    %v4123 = vld [vmem:[#allocation8 + $0x670] sm:$0xff]
    %v4124 = vld [vmem:[#allocation8 + $0x678] sm:$0xff]
    %v4125 = vld [vmem:[#allocation8 + $0x680] sm:$0xff]
    %v4126 = vld [vmem:[#allocation8 + $0x688] sm:$0xff]
    %v4127 = vld [vmem:[#allocation8 + $0x690] sm:$0xff]
    %v4128 = vld [vmem:[#allocation8 + $0x698] sm:$0xff]
    %v4129 = vld [vmem:[#allocation8 + $0x6a0] sm:$0xff]
    %v4130 = vld [vmem:[#allocation8 + $0x6a8] sm:$0xff]
    %v4131 = vld [vmem:[#allocation8 + $0x6b0] sm:$0xff]
    %v4132 = vld [vmem:[#allocation8 + $0x6b8] sm:$0xff]
    %v4133 = vld [vmem:[#allocation8 + $0x6c0] sm:$0xff]
    %v4134 = vld [vmem:[#allocation8 + $0x6c8] sm:$0xff]
    %v4135 = vld [vmem:[#allocation8 + $0x6d0] sm:$0xff]
    %v4136 = vld [vmem:[#allocation8 + $0x6d8] sm:$0xff]
    %v4137 = vld [vmem:[#allocation8 + $0x6e0] sm:$0xff]
    %v4138 = vld [vmem:[#allocation8 + $0x6e8] sm:$0xff]
    %v4139 = vld [vmem:[#allocation8 + $0x6f0] sm:$0xff]
    %v4140 = vld [vmem:[#allocation8 + $0x6f8] sm:$0xff]
    %v4141 = vld [vmem:[#allocation8 + $0x700] sm:$0xff]
    %v4142 = vld [vmem:[#allocation8 + $0x708] sm:$0xff]
    %v4143 = vld [vmem:[#allocation8 + $0x710] sm:$0xff]
    %v4144 = vld [vmem:[#allocation8 + $0x718] sm:$0xff]
    %v4145 = vld [vmem:[#allocation8 + $0x720] sm:$0xff]
    %v4146 = vld [vmem:[#allocation8 + $0x728] sm:$0xff]
    %v4147 = vld [vmem:[#allocation8 + $0x730] sm:$0xff]
    %v4148 = vld [vmem:[#allocation8 + $0x738] sm:$0xff]
    %v4149 = vld [vmem:[#allocation8 + $0x740] sm:$0xff]
    %v4150 = vld [vmem:[#allocation8 + $0x748] sm:$0xff]
    %v4151 = vld [vmem:[#allocation8 + $0x750] sm:$0xff]
    %v4152 = vld [vmem:[#allocation8 + $0x758] sm:$0xff]
    %v4153 = vld [vmem:[#allocation8 + $0x760] sm:$0xff]
    %v4154 = vld [vmem:[#allocation8 + $0x768] sm:$0xff]
    %v4155 = vld [vmem:[#allocation8 + $0x770] sm:$0xff]
    %v4156 = vld [vmem:[#allocation8 + $0x778] sm:$0xff]
    %v4157 = vld [vmem:[#allocation8 + $0x780] sm:$0xff]
    %v4158 = vld [vmem:[#allocation8 + $0x788] sm:$0xff]
    %v4159 = vld [vmem:[#allocation8 + $0x790] sm:$0xff]
    %v4160 = vld [vmem:[#allocation8 + $0x798] sm:$0xff]
    %v4161 = vld [vmem:[#allocation8 + $0x7a0] sm:$0xff]
    %v4162 = vld [vmem:[#allocation8 + $0x7a8] sm:$0xff]
    %v4163 = vld [vmem:[#allocation8 + $0x7b0] sm:$0xff]
    %v4164 = vld [vmem:[#allocation8 + $0x7b8] sm:$0xff]
    %v4165 = vld [vmem:[#allocation8 + $0x7c0] sm:$0xff]
    %v4166 = vld [vmem:[#allocation8 + $0x7c8] sm:$0xff]
    %v4167 = vld [vmem:[#allocation8 + $0x7d0] sm:$0xff]
    %v4168 = vld [vmem:[#allocation8 + $0x7d8] sm:$0xff]
    %v4169 = vld [vmem:[#allocation8 + $0x7e0] sm:$0xff]
    %v4170 = vld [vmem:[#allocation8 + $0x7e8] sm:$0xff]
    %v4171 = vld [vmem:[#allocation8 + $0x7f0] sm:$0xff]
    %v4172 = vld [vmem:[#allocation8 + $0x7f8] sm:$0xff]
    %v4173 = vld [vmem:[#allocation8 + $0x800] sm:$0xff]
    %v4174 = vld [vmem:[#allocation8 + $0x808] sm:$0xff]
    %v4175 = vld [vmem:[#allocation8 + $0x810] sm:$0xff]
    %v4176 = vld [vmem:[#allocation8 + $0x818] sm:$0xff]
    %v4177 = vld [vmem:[#allocation8 + $0x820] sm:$0xff]
    %v4178 = vld [vmem:[#allocation8 + $0x828] sm:$0xff]
    %v4179 = vld [vmem:[#allocation8 + $0x830] sm:$0xff]
    %v4180 = vld [vmem:[#allocation8 + $0x838] sm:$0xff]
    %v4181 = vld [vmem:[#allocation8 + $0x840] sm:$0xff]
    %v4182 = vld [vmem:[#allocation8 + $0x848] sm:$0xff]
    %v4183 = vld [vmem:[#allocation8 + $0x850] sm:$0xff]
    %v4184 = vld [vmem:[#allocation8 + $0x858] sm:$0xff]
    %v4185 = vld [vmem:[#allocation8 + $0x860] sm:$0xff]
    %v4186 = vld [vmem:[#allocation8 + $0x868] sm:$0xff]
    %v4187 = vld [vmem:[#allocation8 + $0x870] sm:$0xff]
    %v4188 = vld [vmem:[#allocation8 + $0x878] sm:$0xff]
    %v4189 = vld [vmem:[#allocation8 + $0x880] sm:$0xff]
    %v4190 = vld [vmem:[#allocation8 + $0x888] sm:$0xff]
    %v4191 = vld [vmem:[#allocation8 + $0x890] sm:$0xff]
    %v4192 = vld [vmem:[#allocation8 + $0x898] sm:$0xff]
    %v4193 = vld [vmem:[#allocation8 + $0x8a0] sm:$0xff]
    %v4194 = vld [vmem:[#allocation8 + $0x8a8] sm:$0xff]
    %v4195 = vld [vmem:[#allocation8 + $0x8b0] sm:$0xff]
    %v4196 = vld [vmem:[#allocation8 + $0x8b8] sm:$0xff]
    %v4197 = vld [vmem:[#allocation8 + $0x8c0] sm:$0xff]
    %v4198 = vld [vmem:[#allocation8 + $0x8c8] sm:$0xff]
    %v4199 = vld [vmem:[#allocation8 + $0x8d0] sm:$0xff]
    %v4200 = vld [vmem:[#allocation8 + $0x8d8] sm:$0xff]
    %v4201 = vld [vmem:[#allocation8 + $0x8e0] sm:$0xff]
    %v4202 = vld [vmem:[#allocation8 + $0x8e8] sm:$0xff]
    %v4203 = vld [vmem:[#allocation8 + $0x8f0] sm:$0xff]
    %v4204 = vld [vmem:[#allocation8 + $0x8f8] sm:$0xff]
    %v4205 = vld [vmem:[#allocation8 + $0x900] sm:$0xff]
    %v4206 = vld [vmem:[#allocation8 + $0x908] sm:$0xff]
    %v4207 = vld [vmem:[#allocation8 + $0x910] sm:$0xff]
    %v4208 = vld [vmem:[#allocation8 + $0x918] sm:$0xff]
    %v4209 = vld [vmem:[#allocation8 + $0x920] sm:$0xff]
    %v4210 = vld [vmem:[#allocation8 + $0x928] sm:$0xff]
    %v4211 = vld [vmem:[#allocation8 + $0x930] sm:$0xff]
    %v4212 = vld [vmem:[#allocation8 + $0x938] sm:$0xff]
    %v4213 = vld [vmem:[#allocation8 + $0x940] sm:$0xff]
    %v4214 = vld [vmem:[#allocation8 + $0x948] sm:$0xff]
    %v4215 = vld [vmem:[#allocation8 + $0x950] sm:$0xff]
    %v4216 = vld [vmem:[#allocation8 + $0x958] sm:$0xff]
    %v4217 = vld [vmem:[#allocation8 + $0x960] sm:$0xff]
    %v4218 = vld [vmem:[#allocation8 + $0x968] sm:$0xff]
    %v4219 = vld [vmem:[#allocation8 + $0x970] sm:$0xff]
    %v4220 = vld [vmem:[#allocation8 + $0x978] sm:$0xff]
    %v4221 = vld [vmem:[#allocation8 + $0x980] sm:$0xff]
    %v4222 = vld [vmem:[#allocation8 + $0x988] sm:$0xff]
    %v4223 = vld [vmem:[#allocation8 + $0x990] sm:$0xff]
    %v4224 = vld [vmem:[#allocation8 + $0x998] sm:$0xff]
    %v4225 = vld [vmem:[#allocation8 + $0x9a0] sm:$0xff]
    %v4226 = vld [vmem:[#allocation8 + $0x9a8] sm:$0xff]
    %v4227 = vld [vmem:[#allocation8 + $0x9b0] sm:$0xff]
    %v4228 = vld [vmem:[#allocation8 + $0x9b8] sm:$0xff]
    %v4229 = vld [vmem:[#allocation8 + $0x9c0] sm:$0xff]
    %v4230 = vld [vmem:[#allocation8 + $0x9c8] sm:$0xff]
    %v4231 = vld [vmem:[#allocation8 + $0x9d0] sm:$0xff]
    %v4232 = vld [vmem:[#allocation8 + $0x9d8] sm:$0xff]
    %v4233 = vld [vmem:[#allocation8 + $0x9e0] sm:$0xff]
    %v4234 = vld [vmem:[#allocation8 + $0x9e8] sm:$0xff]
    %v4235 = vld [vmem:[#allocation8 + $0x9f0] sm:$0xff]
    %v4236 = vld [vmem:[#allocation8 + $0x9f8] sm:$0xff]
    %v4237 = vld [vmem:[#allocation8 + $0xa00] sm:$0xff]
    %v4238 = vld [vmem:[#allocation8 + $0xa08] sm:$0xff]
    %v4239 = vld [vmem:[#allocation8 + $0xa10] sm:$0xff]
    %v4240 = vld [vmem:[#allocation8 + $0xa18] sm:$0xff]
    %v4241 = vld [vmem:[#allocation8 + $0xa20] sm:$0xff]
    %v4242 = vld [vmem:[#allocation8 + $0xa28] sm:$0xff]
    %v4243 = vld [vmem:[#allocation8 + $0xa30] sm:$0xff]
    %v4244 = vld [vmem:[#allocation8 + $0xa38] sm:$0xff]
    %v4245 = vld [vmem:[#allocation8 + $0xa40] sm:$0xff]
    %v4246 = vld [vmem:[#allocation8 + $0xa48] sm:$0xff]
    %v4247 = vld [vmem:[#allocation8 + $0xa50] sm:$0xff]
    %v4248 = vld [vmem:[#allocation8 + $0xa58] sm:$0xff]
    %v4249 = vld [vmem:[#allocation8 + $0xa60] sm:$0xff]
    %v4250 = vld [vmem:[#allocation8 + $0xa68] sm:$0xff]
    %v4251 = vld [vmem:[#allocation8 + $0xa70] sm:$0xff]
    %v4252 = vld [vmem:[#allocation8 + $0xa78] sm:$0xff]
    %v4253 = vld [vmem:[#allocation8 + $0xa80] sm:$0xff]
    %v4254 = vld [vmem:[#allocation8 + $0xa88] sm:$0xff]
    %v4255 = vld [vmem:[#allocation8 + $0xa90] sm:$0xff]
    %v4256 = vld [vmem:[#allocation8 + $0xa98] sm:$0xff]
    %v4257 = vld [vmem:[#allocation8 + $0xaa0] sm:$0xff]
    %v4258 = vld [vmem:[#allocation8 + $0xaa8] sm:$0xff]
    %v4259 = vld [vmem:[#allocation8 + $0xab0] sm:$0xff]
    %v4260 = vld [vmem:[#allocation8 + $0xab8] sm:$0xff]
    %v4261 = vld [vmem:[#allocation8 + $0xac0] sm:$0xff]
    %v4262 = vld [vmem:[#allocation8 + $0xac8] sm:$0xff]
    %v4263 = vld [vmem:[#allocation8 + $0xad0] sm:$0xff]
    %v4264 = vld [vmem:[#allocation8 + $0xad8] sm:$0xff]
    %v4265 = vld [vmem:[#allocation8 + $0xae0] sm:$0xff]
    %v4266 = vld [vmem:[#allocation8 + $0xae8] sm:$0xff]
    %v4267 = vld [vmem:[#allocation8 + $0xaf0] sm:$0xff]
    %v4268 = vld [vmem:[#allocation8 + $0xaf8] sm:$0xff]
    %v4269 = vld [vmem:[#allocation8 + $0xb00] sm:$0xff]
    %v4270 = vld [vmem:[#allocation8 + $0xb08] sm:$0xff]
    %v4271 = vld [vmem:[#allocation8 + $0xb10] sm:$0xff]
    %v4272 = vld [vmem:[#allocation8 + $0xb18] sm:$0xff]
    %v4273 = vld [vmem:[#allocation8 + $0xb20] sm:$0xff]
    %v4274 = vld [vmem:[#allocation8 + $0xb28] sm:$0xff]
    %v4275 = vld [vmem:[#allocation8 + $0xb30] sm:$0xff]
    %v4276 = vld [vmem:[#allocation8 + $0xb38] sm:$0xff]
    %v4277 = vld [vmem:[#allocation8 + $0xb40] sm:$0xff]
    %v4278 = vld [vmem:[#allocation8 + $0xb48] sm:$0xff]
    %v4279 = vld [vmem:[#allocation8 + $0xb50] sm:$0xff]
    %v4280 = vld [vmem:[#allocation8 + $0xb58] sm:$0xff]
    %v4281 = vld [vmem:[#allocation8 + $0xb60] sm:$0xff]
    %v4282 = vld [vmem:[#allocation8 + $0xb68] sm:$0xff]
    %v4283 = vld [vmem:[#allocation8 + $0xb70] sm:$0xff]
    %v4284 = vld [vmem:[#allocation8 + $0xb78] sm:$0xff]
    %v4285 = vld [vmem:[#allocation8 + $0xb80] sm:$0xff]
    %v4286 = vld [vmem:[#allocation8 + $0xb88] sm:$0xff]
    %v4287 = vld [vmem:[#allocation8 + $0xb90] sm:$0xff]
    %v4288 = vld [vmem:[#allocation8 + $0xb98] sm:$0xff]
    %v4289 = vld [vmem:[#allocation8 + $0xba0] sm:$0xff]
    %v4290 = vld [vmem:[#allocation8 + $0xba8] sm:$0xff]
    %v4291 = vld [vmem:[#allocation8 + $0xbb0] sm:$0xff]
    %v4292 = vld [vmem:[#allocation8 + $0xbb8] sm:$0xff]
    %v4293 = vld [vmem:[#allocation8 + $0xbc0] sm:$0xff]
    %v4294 = vld [vmem:[#allocation8 + $0xbc8] sm:$0xff]
    %v4295 = vld [vmem:[#allocation8 + $0xbd0] sm:$0xff]
    %v4296 = vld [vmem:[#allocation8 + $0xbd8] sm:$0xff]
    %v4297 = vld [vmem:[#allocation8 + $0xbe0] sm:$0xff]
    %v4298 = vld [vmem:[#allocation8 + $0xbe8] sm:$0xff]
    %v4299 = vld [vmem:[#allocation8 + $0xbf0] sm:$0xff]
    %v4300 = vld [vmem:[#allocation8 + $0xbf8] sm:$0xff]
    %v4301 = vld [vmem:[#allocation8 + $0xc00] sm:$0xff]
    %v4302 = vld [vmem:[#allocation8 + $0xc08] sm:$0xff]
    %v4303 = vld [vmem:[#allocation8 + $0xc10] sm:$0xff]
    %v4304 = vld [vmem:[#allocation8 + $0xc18] sm:$0xff]
    %v4305 = vld [vmem:[#allocation8 + $0xc20] sm:$0xff]
    %v4306 = vld [vmem:[#allocation8 + $0xc28] sm:$0xff]
    %v4307 = vld [vmem:[#allocation8 + $0xc30] sm:$0xff]
    %v4308 = vld [vmem:[#allocation8 + $0xc38] sm:$0xff]
    %v4309 = vld [vmem:[#allocation8 + $0xc40] sm:$0xff]
    %v4310 = vld [vmem:[#allocation8 + $0xc48] sm:$0xff]
    %v4311 = vld [vmem:[#allocation8 + $0xc50] sm:$0xff]
    %v4312 = vld [vmem:[#allocation8 + $0xc58] sm:$0xff]
    %v4313 = vld [vmem:[#allocation8 + $0xc60] sm:$0xff]
    %v4314 = vld [vmem:[#allocation8 + $0xc68] sm:$0xff]
    %v4315 = vld [vmem:[#allocation8 + $0xc70] sm:$0xff]
    %v4316 = vld [vmem:[#allocation8 + $0xc78] sm:$0xff]
    %v4317 = vld [vmem:[#allocation8 + $0xc80] sm:$0xff]
    %v4318 = vld [vmem:[#allocation8 + $0xc88] sm:$0xff]
    %v4319 = vld [vmem:[#allocation8 + $0xc90] sm:$0xff]
    %v4320 = vld [vmem:[#allocation8 + $0xc98] sm:$0xff]
    %v4321 = vld [vmem:[#allocation8 + $0xca0] sm:$0xff]
    %v4322 = vld [vmem:[#allocation8 + $0xca8] sm:$0xff]
    %v4323 = vld [vmem:[#allocation8 + $0xcb0] sm:$0xff]
    %v4324 = vld [vmem:[#allocation8 + $0xcb8] sm:$0xff]
    %v4325 = vld [vmem:[#allocation8 + $0xcc0] sm:$0xff]
    %v4326 = vld [vmem:[#allocation8 + $0xcc8] sm:$0xff]
    %v4327 = vld [vmem:[#allocation8 + $0xcd0] sm:$0xff]
    %v4328 = vld [vmem:[#allocation8 + $0xcd8] sm:$0xff]
    %v4329 = vld [vmem:[#allocation8 + $0xce0] sm:$0xff]
    %v4330 = vld [vmem:[#allocation8 + $0xce8] sm:$0xff]
    %v4331 = vld [vmem:[#allocation8 + $0xcf0] sm:$0xff]
    %v4332 = vld [vmem:[#allocation8 + $0xcf8] sm:$0xff]
    %v4333 = vld [vmem:[#allocation8 + $0xd00] sm:$0xff]
    %v4334 = vld [vmem:[#allocation8 + $0xd08] sm:$0xff]
    %v4335 = vld [vmem:[#allocation8 + $0xd10] sm:$0xff]
    %v4336 = vld [vmem:[#allocation8 + $0xd18] sm:$0xff]
    %v4337 = vld [vmem:[#allocation8 + $0xd20] sm:$0xff]
    %v4338 = vld [vmem:[#allocation8 + $0xd28] sm:$0xff]
    %v4339 = vld [vmem:[#allocation8 + $0xd30] sm:$0xff]
    %v4340 = vld [vmem:[#allocation8 + $0xd38] sm:$0xff]
    %v4341 = vld [vmem:[#allocation8 + $0xd40] sm:$0xff]
    %v4342 = vld [vmem:[#allocation8 + $0xd48] sm:$0xff]
    %v4343 = vld [vmem:[#allocation8 + $0xd50] sm:$0xff]
    %v4344 = vld [vmem:[#allocation8 + $0xd58] sm:$0xff]
    %v4345 = vld [vmem:[#allocation8 + $0xd60] sm:$0xff]
    %v4346 = vld [vmem:[#allocation8 + $0xd68] sm:$0xff]
    %v4347 = vld [vmem:[#allocation8 + $0xd70] sm:$0xff]
    %v4348 = vld [vmem:[#allocation8 + $0xd78] sm:$0xff]
    %v4349 = vld [vmem:[#allocation8 + $0xd80] sm:$0xff]
    %v4350 = vld [vmem:[#allocation8 + $0xd88] sm:$0xff]
    %v4351 = vld [vmem:[#allocation8 + $0xd90] sm:$0xff]
    %v4352 = vld [vmem:[#allocation8 + $0xd98] sm:$0xff]
    %v4353 = vld [vmem:[#allocation8 + $0xda0] sm:$0xff]
    %v4354 = vld [vmem:[#allocation8 + $0xda8] sm:$0xff]
    %v4355 = vld [vmem:[#allocation8 + $0xdb0] sm:$0xff]
    %v4356 = vld [vmem:[#allocation8 + $0xdb8] sm:$0xff]
    %v4357 = vld [vmem:[#allocation8 + $0xdc0] sm:$0xff]
    %v4358 = vld [vmem:[#allocation8 + $0xdc8] sm:$0xff]
    %v4359 = vld [vmem:[#allocation8 + $0xdd0] sm:$0xff]
    %v4360 = vld [vmem:[#allocation8 + $0xdd8] sm:$0xff]
    %v4361 = vld [vmem:[#allocation8 + $0xde0] sm:$0xff]
    %v4362 = vld [vmem:[#allocation8 + $0xde8] sm:$0xff]
    %v4363 = vld [vmem:[#allocation8 + $0xdf0] sm:$0xff]
    %v4364 = vld [vmem:[#allocation8 + $0xdf8] sm:$0xff]
    %v4365 = vld [vmem:[#allocation8 + $0xe00] sm:$0xff]
    %v4366 = vld [vmem:[#allocation8 + $0xe08] sm:$0xff]
    %v4367 = vld [vmem:[#allocation8 + $0xe10] sm:$0xff]
    %v4368 = vld [vmem:[#allocation8 + $0xe18] sm:$0xff]
    %v4369 = vld [vmem:[#allocation8 + $0xe20] sm:$0xff]
    %v4370 = vld [vmem:[#allocation8 + $0xe28] sm:$0xff]
    %v4371 = vld [vmem:[#allocation8 + $0xe30] sm:$0xff]
    %v4372 = vld [vmem:[#allocation8 + $0xe38] sm:$0xff]
    %v4373 = vld [vmem:[#allocation8 + $0xe40] sm:$0xff]
    %v4374 = vld [vmem:[#allocation8 + $0xe48] sm:$0xff]
    %v4375 = vld [vmem:[#allocation8 + $0xe50] sm:$0xff]
    %v4376 = vld [vmem:[#allocation8 + $0xe58] sm:$0xff]
    %v4377 = vld [vmem:[#allocation8 + $0xe60] sm:$0xff]
    %v4378 = vld [vmem:[#allocation8 + $0xe68] sm:$0xff]
    %v4379 = vld [vmem:[#allocation8 + $0xe70] sm:$0xff]
    %v4380 = vld [vmem:[#allocation8 + $0xe78] sm:$0xff]
    %v4381 = vld [vmem:[#allocation8 + $0xe80] sm:$0xff]
    %v4382 = vld [vmem:[#allocation8 + $0xe88] sm:$0xff]
    %v4383 = vld [vmem:[#allocation8 + $0xe90] sm:$0xff]
    %v4384 = vld [vmem:[#allocation8 + $0xe98] sm:$0xff]
    %v4385 = vld [vmem:[#allocation8 + $0xea0] sm:$0xff]
    %v4386 = vld [vmem:[#allocation8 + $0xea8] sm:$0xff]
    %v4387 = vld [vmem:[#allocation8 + $0xeb0] sm:$0xff]
    %v4388 = vld [vmem:[#allocation8 + $0xeb8] sm:$0xff]
    %v4389 = vld [vmem:[#allocation8 + $0xec0] sm:$0xff]
    %v4390 = vld [vmem:[#allocation8 + $0xec8] sm:$0xff]
    %v4391 = vld [vmem:[#allocation8 + $0xed0] sm:$0xff]
    %v4392 = vld [vmem:[#allocation8 + $0xed8] sm:$0xff]
    %v4393 = vld [vmem:[#allocation8 + $0xee0] sm:$0xff]
    %v4394 = vld [vmem:[#allocation8 + $0xee8] sm:$0xff]
    %v4395 = vld [vmem:[#allocation8 + $0xef0] sm:$0xff]
    %v4396 = vld [vmem:[#allocation8 + $0xef8] sm:$0xff]
    %v4397 = vld [vmem:[#allocation8 + $0xf00] sm:$0xff]
    %v4398 = vld [vmem:[#allocation8 + $0xf08] sm:$0xff]
    %v4399 = vld [vmem:[#allocation8 + $0xf10] sm:$0xff]
    %v4400 = vld [vmem:[#allocation8 + $0xf18] sm:$0xff]
    %v4401 = vld [vmem:[#allocation8 + $0xf20] sm:$0xff]
    %v4402 = vld [vmem:[#allocation8 + $0xf28] sm:$0xff]
    %v4403 = vld [vmem:[#allocation8 + $0xf30] sm:$0xff]
    %v4404 = vld [vmem:[#allocation8 + $0xf38] sm:$0xff]
    %v4405 = vld [vmem:[#allocation8 + $0xf40] sm:$0xff]
    %v4406 = vld [vmem:[#allocation8 + $0xf48] sm:$0xff]
    %v4407 = vld [vmem:[#allocation8 + $0xf50] sm:$0xff]
    %v4408 = vld [vmem:[#allocation8 + $0xf58] sm:$0xff]
    %v4409 = vld [vmem:[#allocation8 + $0xf60] sm:$0xff]
    %v4410 = vld [vmem:[#allocation8 + $0xf68] sm:$0xff]
    %v4411 = vld [vmem:[#allocation8 + $0xf70] sm:$0xff]
    %v4412 = vld [vmem:[#allocation8 + $0xf78] sm:$0xff]
    %v4413 = vld [vmem:[#allocation8 + $0xf80] sm:$0xff]
    %v4414 = vld [vmem:[#allocation8 + $0xf88] sm:$0xff]
    %v4415 = vld [vmem:[#allocation8 + $0xf90] sm:$0xff]
    %v4416 = vld [vmem:[#allocation8 + $0xf98] sm:$0xff]
    %v4417 = vld [vmem:[#allocation8 + $0xfa0] sm:$0xff]
    %v4418 = vld [vmem:[#allocation8 + $0xfa8] sm:$0xff]
    %v4419 = vld [vmem:[#allocation8 + $0xfb0] sm:$0xff]
    %v4420 = vld [vmem:[#allocation8 + $0xfb8] sm:$0xff]
    %v4421 = vld [vmem:[#allocation8 + $0xfc0] sm:$0xff]
    %v4422 = vld [vmem:[#allocation8 + $0xfc8] sm:$0xff]
    %v4423 = vld [vmem:[#allocation8 + $0xfd0] sm:$0xff]
    %v4424 = vld [vmem:[#allocation8 + $0xfd8] sm:$0xff]
    %v4425 = vld [vmem:[#allocation8 + $0xfe0] sm:$0xff]
    %v4426 = vld [vmem:[#allocation8 + $0xfe8] sm:$0xff]
    %v4427 = vld [vmem:[#allocation8 + $0xff0] sm:$0xff]
    %v4428 = vld [vmem:[#allocation8 + $0xff8] sm:$0xff]
    %v4429 = vld [vmem:[#allocation10] sm:$0xff]
    %v4431 = vlaneseq
    %v4432 = vshrl.u32 %v4431, 7
    %v4433 = vsub.s32 0, %v4432
    %v4434 = vrot.slane %v4429, %v4433
    %v4435 = vlaneseq
    %v4436 = vshrl.u32 %v4435, 7
    %v4437 = vsub.s32 1, %v4436
    %v4438 = vrot.slane %v4429, %v4437
    %v4439 = vlaneseq
    %v4440 = vshrl.u32 %v4439, 7
    %v4441 = vsub.s32 2, %v4440
    %v4442 = vrot.slane %v4429, %v4441
    %v4443 = vlaneseq
    %v4444 = vshrl.u32 %v4443, 7
    %v4445 = vsub.s32 3, %v4444
    %v4446 = vrot.slane %v4429, %v4445
    %v4447 = vlaneseq
    %v4448 = vshrl.u32 %v4447, 7
    %v4449 = vsub.s32 4, %v4448
    %v4450 = vrot.slane %v4429, %v4449
    %v4451 = vlaneseq
    %v4452 = vshrl.u32 %v4451, 7
    %v4453 = vsub.s32 5, %v4452
    %v4454 = vrot.slane %v4429, %v4453
    %v4455 = vlaneseq
    %v4456 = vshrl.u32 %v4455, 7
    %v4457 = vsub.s32 6, %v4456
    %v4458 = vrot.slane %v4429, %v4457
    %v4459 = vlaneseq
    %v4460 = vshrl.u32 %v4459, 7
    %v4461 = vsub.s32 7, %v4460
    %v4462 = vrot.slane %v4429, %v4461
    %v4983 = vunpack.c.l.b16 %v3917
    %v4984 = vunpack.c.h.b16 %v3917
    %v4985 = vunpack.c.l.b16 %v3918
    %v4986 = vunpack.c.h.b16 %v3918
    %v4987 = vunpack.c.l.b16 %v3919
    %v4988 = vunpack.c.h.b16 %v3919
    %v4989 = vunpack.c.l.b16 %v3920
    %v4990 = vunpack.c.h.b16 %v3920
    %v4991 = vunpack.c.l.b16 %v3921
    %v4992 = vunpack.c.h.b16 %v3921
    %v4993 = vunpack.c.l.b16 %v3922
    %v4994 = vunpack.c.h.b16 %v3922
    %v4995 = vunpack.c.l.b16 %v3923
    %v4996 = vunpack.c.h.b16 %v3923
    %v4997 = vunpack.c.l.b16 %v3924
    %v4998 = vunpack.c.h.b16 %v3924
    %v4999 = vunpack.c.l.b16 %v3925
    %v5000 = vunpack.c.h.b16 %v3925
    %v5001 = vunpack.c.l.b16 %v3926
    %v5002 = vunpack.c.h.b16 %v3926
    %v5003 = vunpack.c.l.b16 %v3927
    %v5004 = vunpack.c.h.b16 %v3927
    %v5005 = vunpack.c.l.b16 %v3928
    %v5006 = vunpack.c.h.b16 %v3928
    %v5007 = vunpack.c.l.b16 %v3929
    %v5008 = vunpack.c.h.b16 %v3929
    %v5009 = vunpack.c.l.b16 %v3930
    %v5010 = vunpack.c.h.b16 %v3930
    %v5011 = vunpack.c.l.b16 %v3931
    %v5012 = vunpack.c.h.b16 %v3931
    %v5013 = vunpack.c.l.b16 %v3932
    %v5014 = vunpack.c.h.b16 %v3932
    %v5015 = vunpack.c.l.b16 %v3933
    %v5016 = vunpack.c.h.b16 %v3933
    %v5017 = vunpack.c.l.b16 %v3934
    %v5018 = vunpack.c.h.b16 %v3934
    %v5019 = vunpack.c.l.b16 %v3935
    %v5020 = vunpack.c.h.b16 %v3935
    %v5021 = vunpack.c.l.b16 %v3936
    %v5022 = vunpack.c.h.b16 %v3936
    %v5023 = vunpack.c.l.b16 %v3937
    %v5024 = vunpack.c.h.b16 %v3937
    %v5025 = vunpack.c.l.b16 %v3938
    %v5026 = vunpack.c.h.b16 %v3938
    %v5027 = vunpack.c.l.b16 %v3939
    %v5028 = vunpack.c.h.b16 %v3939
    %v5029 = vunpack.c.l.b16 %v3940
    %v5030 = vunpack.c.h.b16 %v3940
    %v5031 = vunpack.c.l.b16 %v3941
    %v5032 = vunpack.c.h.b16 %v3941
    %v5033 = vunpack.c.l.b16 %v3942
    %v5034 = vunpack.c.h.b16 %v3942
    %v5035 = vunpack.c.l.b16 %v3943
    %v5036 = vunpack.c.h.b16 %v3943
    %v5037 = vunpack.c.l.b16 %v3944
    %v5038 = vunpack.c.h.b16 %v3944
    %v5039 = vunpack.c.l.b16 %v3945
    %v5040 = vunpack.c.h.b16 %v3945
    %v5041 = vunpack.c.l.b16 %v3946
    %v5042 = vunpack.c.h.b16 %v3946
    %v5043 = vunpack.c.l.b16 %v3947
    %v5044 = vunpack.c.h.b16 %v3947
    %v5045 = vunpack.c.l.b16 %v3948
    %v5046 = vunpack.c.h.b16 %v3948
    %v5047 = vunpack.c.l.b16 %v3949
    %v5048 = vunpack.c.h.b16 %v3949
    %v5049 = vunpack.c.l.b16 %v3950
    %v5050 = vunpack.c.h.b16 %v3950
    %v5051 = vunpack.c.l.b16 %v3951
    %v5052 = vunpack.c.h.b16 %v3951
    %v5053 = vunpack.c.l.b16 %v3952
    %v5054 = vunpack.c.h.b16 %v3952
    %v5055 = vunpack.c.l.b16 %v3953
    %v5056 = vunpack.c.h.b16 %v3953
    %v5057 = vunpack.c.l.b16 %v3954
    %v5058 = vunpack.c.h.b16 %v3954
    %v5059 = vunpack.c.l.b16 %v3955
    %v5060 = vunpack.c.h.b16 %v3955
    %v5061 = vunpack.c.l.b16 %v3956
    %v5062 = vunpack.c.h.b16 %v3956
    %v5063 = vunpack.c.l.b16 %v3957
    %v5064 = vunpack.c.h.b16 %v3957
    %v5065 = vunpack.c.l.b16 %v3958
    %v5066 = vunpack.c.h.b16 %v3958
    %v5067 = vunpack.c.l.b16 %v3959
    %v5068 = vunpack.c.h.b16 %v3959
    %v5069 = vunpack.c.l.b16 %v3960
    %v5070 = vunpack.c.h.b16 %v3960
    %v5071 = vunpack.c.l.b16 %v3961
    %v5072 = vunpack.c.h.b16 %v3961
    %v5073 = vunpack.c.l.b16 %v3962
    %v5074 = vunpack.c.h.b16 %v3962
    %v5075 = vunpack.c.l.b16 %v3963
    %v5076 = vunpack.c.h.b16 %v3963
    %v5077 = vunpack.c.l.b16 %v3964
    %v5078 = vunpack.c.h.b16 %v3964
    %v5079 = vunpack.c.l.b16 %v3965
    %v5080 = vunpack.c.h.b16 %v3965
    %v5081 = vunpack.c.l.b16 %v3966
    %v5082 = vunpack.c.h.b16 %v3966
    %v5083 = vunpack.c.l.b16 %v3967
    %v5084 = vunpack.c.h.b16 %v3967
    %v5085 = vunpack.c.l.b16 %v3968
    %v5086 = vunpack.c.h.b16 %v3968
    %v5087 = vunpack.c.l.b16 %v3969
    %v5088 = vunpack.c.h.b16 %v3969
    %v5089 = vunpack.c.l.b16 %v3970
    %v5090 = vunpack.c.h.b16 %v3970
    %v5091 = vunpack.c.l.b16 %v3971
    %v5092 = vunpack.c.h.b16 %v3971
    %v5093 = vunpack.c.l.b16 %v3972
    %v5094 = vunpack.c.h.b16 %v3972
    %v5095 = vunpack.c.l.b16 %v3973
    %v5096 = vunpack.c.h.b16 %v3973
    %v5097 = vunpack.c.l.b16 %v3974
    %v5098 = vunpack.c.h.b16 %v3974
    %v5099 = vunpack.c.l.b16 %v3975
    %v5100 = vunpack.c.h.b16 %v3975
    %v5101 = vunpack.c.l.b16 %v3976
    %v5102 = vunpack.c.h.b16 %v3976
    %v5103 = vunpack.c.l.b16 %v3977
    %v5104 = vunpack.c.h.b16 %v3977
    %v5105 = vunpack.c.l.b16 %v3978
    %v5106 = vunpack.c.h.b16 %v3978
    %v5107 = vunpack.c.l.b16 %v3979
    %v5108 = vunpack.c.h.b16 %v3979
    %v5109 = vunpack.c.l.b16 %v3980
    %v5110 = vunpack.c.h.b16 %v3980
    %v5111 = vunpack.c.l.b16 %v3981
    %v5112 = vunpack.c.h.b16 %v3981
    %v5113 = vunpack.c.l.b16 %v3982
    %v5114 = vunpack.c.h.b16 %v3982
    %v5115 = vunpack.c.l.b16 %v3983
    %v5116 = vunpack.c.h.b16 %v3983
    %v5117 = vunpack.c.l.b16 %v3984
    %v5118 = vunpack.c.h.b16 %v3984
    %v5119 = vunpack.c.l.b16 %v3985
    %v5120 = vunpack.c.h.b16 %v3985
    %v5121 = vunpack.c.l.b16 %v3986
    %v5122 = vunpack.c.h.b16 %v3986
    %v5123 = vunpack.c.l.b16 %v3987
    %v5124 = vunpack.c.h.b16 %v3987
    %v5125 = vunpack.c.l.b16 %v3988
    %v5126 = vunpack.c.h.b16 %v3988
    %v5127 = vunpack.c.l.b16 %v3989
    %v5128 = vunpack.c.h.b16 %v3989
    %v5129 = vunpack.c.l.b16 %v3990
    %v5130 = vunpack.c.h.b16 %v3990
    %v5131 = vunpack.c.l.b16 %v3991
    %v5132 = vunpack.c.h.b16 %v3991
    %v5133 = vunpack.c.l.b16 %v3992
    %v5134 = vunpack.c.h.b16 %v3992
    %v5135 = vunpack.c.l.b16 %v3993
    %v5136 = vunpack.c.h.b16 %v3993
    %v5137 = vunpack.c.l.b16 %v3994
    %v5138 = vunpack.c.h.b16 %v3994
    %v5139 = vunpack.c.l.b16 %v3995
    %v5140 = vunpack.c.h.b16 %v3995
    %v5141 = vunpack.c.l.b16 %v3996
    %v5142 = vunpack.c.h.b16 %v3996
    %v5143 = vunpack.c.l.b16 %v3997
    %v5144 = vunpack.c.h.b16 %v3997
    %v5145 = vunpack.c.l.b16 %v3998
    %v5146 = vunpack.c.h.b16 %v3998
    %v5147 = vunpack.c.l.b16 %v3999
    %v5148 = vunpack.c.h.b16 %v3999
    %v5149 = vunpack.c.l.b16 %v4000
    %v5150 = vunpack.c.h.b16 %v4000
    %v5151 = vunpack.c.l.b16 %v4001
    %v5152 = vunpack.c.h.b16 %v4001
    %v5153 = vunpack.c.l.b16 %v4002
    %v5154 = vunpack.c.h.b16 %v4002
    %v5155 = vunpack.c.l.b16 %v4003
    %v5156 = vunpack.c.h.b16 %v4003
    %v5157 = vunpack.c.l.b16 %v4004
    %v5158 = vunpack.c.h.b16 %v4004
    %v5159 = vunpack.c.l.b16 %v4005
    %v5160 = vunpack.c.h.b16 %v4005
    %v5161 = vunpack.c.l.b16 %v4006
    %v5162 = vunpack.c.h.b16 %v4006
    %v5163 = vunpack.c.l.b16 %v4007
    %v5164 = vunpack.c.h.b16 %v4007
    %v5165 = vunpack.c.l.b16 %v4008
    %v5166 = vunpack.c.h.b16 %v4008
    %v5167 = vunpack.c.l.b16 %v4009
    %v5168 = vunpack.c.h.b16 %v4009
    %v5169 = vunpack.c.l.b16 %v4010
    %v5170 = vunpack.c.h.b16 %v4010
    %v5171 = vunpack.c.l.b16 %v4011
    %v5172 = vunpack.c.h.b16 %v4011
    %v5173 = vunpack.c.l.b16 %v4012
    %v5174 = vunpack.c.h.b16 %v4012
    %v5175 = vunpack.c.l.b16 %v4013
    %v5176 = vunpack.c.h.b16 %v4013
    %v5177 = vunpack.c.l.b16 %v4014
    %v5178 = vunpack.c.h.b16 %v4014
    %v5179 = vunpack.c.l.b16 %v4015
    %v5180 = vunpack.c.h.b16 %v4015
    %v5181 = vunpack.c.l.b16 %v4016
    %v5182 = vunpack.c.h.b16 %v4016
    %v5183 = vunpack.c.l.b16 %v4017
    %v5184 = vunpack.c.h.b16 %v4017
    %v5185 = vunpack.c.l.b16 %v4018
    %v5186 = vunpack.c.h.b16 %v4018
    %v5187 = vunpack.c.l.b16 %v4019
    %v5188 = vunpack.c.h.b16 %v4019
    %v5189 = vunpack.c.l.b16 %v4020
    %v5190 = vunpack.c.h.b16 %v4020
    %v5191 = vunpack.c.l.b16 %v4021
    %v5192 = vunpack.c.h.b16 %v4021
    %v5193 = vunpack.c.l.b16 %v4022
    %v5194 = vunpack.c.h.b16 %v4022
    %v5195 = vunpack.c.l.b16 %v4023
    %v5196 = vunpack.c.h.b16 %v4023
    %v5197 = vunpack.c.l.b16 %v4024
    %v5198 = vunpack.c.h.b16 %v4024
    %v5199 = vunpack.c.l.b16 %v4025
    %v5200 = vunpack.c.h.b16 %v4025
    %v5201 = vunpack.c.l.b16 %v4026
    %v5202 = vunpack.c.h.b16 %v4026
    %v5203 = vunpack.c.l.b16 %v4027
    %v5204 = vunpack.c.h.b16 %v4027
    %v5205 = vunpack.c.l.b16 %v4028
    %v5206 = vunpack.c.h.b16 %v4028
    %v5207 = vunpack.c.l.b16 %v4029
    %v5208 = vunpack.c.h.b16 %v4029
    %v5209 = vunpack.c.l.b16 %v4030
    %v5210 = vunpack.c.h.b16 %v4030
    %v5211 = vunpack.c.l.b16 %v4031
    %v5212 = vunpack.c.h.b16 %v4031
    %v5213 = vunpack.c.l.b16 %v4032
    %v5214 = vunpack.c.h.b16 %v4032
    %v5215 = vunpack.c.l.b16 %v4033
    %v5216 = vunpack.c.h.b16 %v4033
    %v5217 = vunpack.c.l.b16 %v4034
    %v5218 = vunpack.c.h.b16 %v4034
    %v5219 = vunpack.c.l.b16 %v4035
    %v5220 = vunpack.c.h.b16 %v4035
    %v5221 = vunpack.c.l.b16 %v4036
    %v5222 = vunpack.c.h.b16 %v4036
    %v5223 = vunpack.c.l.b16 %v4037
    %v5224 = vunpack.c.h.b16 %v4037
    %v5225 = vunpack.c.l.b16 %v4038
    %v5226 = vunpack.c.h.b16 %v4038
    %v5227 = vunpack.c.l.b16 %v4039
    %v5228 = vunpack.c.h.b16 %v4039
    %v5229 = vunpack.c.l.b16 %v4040
    %v5230 = vunpack.c.h.b16 %v4040
    %v5231 = vunpack.c.l.b16 %v4041
    %v5232 = vunpack.c.h.b16 %v4041
    %v5233 = vunpack.c.l.b16 %v4042
    %v5234 = vunpack.c.h.b16 %v4042
    %v5235 = vunpack.c.l.b16 %v4043
    %v5236 = vunpack.c.h.b16 %v4043
    %v5237 = vunpack.c.l.b16 %v4044
    %v5238 = vunpack.c.h.b16 %v4044
    %v5239 = vunpack.c.l.b16 %v4045
    %v5240 = vunpack.c.h.b16 %v4045
    %v5241 = vunpack.c.l.b16 %v4046
    %v5242 = vunpack.c.h.b16 %v4046
    %v5243 = vunpack.c.l.b16 %v4047
    %v5244 = vunpack.c.h.b16 %v4047
    %v5245 = vunpack.c.l.b16 %v4048
    %v5246 = vunpack.c.h.b16 %v4048
    %v5247 = vunpack.c.l.b16 %v4049
    %v5248 = vunpack.c.h.b16 %v4049
    %v5249 = vunpack.c.l.b16 %v4050
    %v5250 = vunpack.c.h.b16 %v4050
    %v5251 = vunpack.c.l.b16 %v4051
    %v5252 = vunpack.c.h.b16 %v4051
    %v5253 = vunpack.c.l.b16 %v4052
    %v5254 = vunpack.c.h.b16 %v4052
    %v5255 = vunpack.c.l.b16 %v4053
    %v5256 = vunpack.c.h.b16 %v4053
    %v5257 = vunpack.c.l.b16 %v4054
    %v5258 = vunpack.c.h.b16 %v4054
    %v5259 = vunpack.c.l.b16 %v4055
    %v5260 = vunpack.c.h.b16 %v4055
    %v5261 = vunpack.c.l.b16 %v4056
    %v5262 = vunpack.c.h.b16 %v4056
    %v5263 = vunpack.c.l.b16 %v4057
    %v5264 = vunpack.c.h.b16 %v4057
    %v5265 = vunpack.c.l.b16 %v4058
    %v5266 = vunpack.c.h.b16 %v4058
    %v5267 = vunpack.c.l.b16 %v4059
    %v5268 = vunpack.c.h.b16 %v4059
    %v5269 = vunpack.c.l.b16 %v4060
    %v5270 = vunpack.c.h.b16 %v4060
    %v5271 = vunpack.c.l.b16 %v4061
    %v5272 = vunpack.c.h.b16 %v4061
    %v5273 = vunpack.c.l.b16 %v4062
    %v5274 = vunpack.c.h.b16 %v4062
    %v5275 = vunpack.c.l.b16 %v4063
    %v5276 = vunpack.c.h.b16 %v4063
    %v5277 = vunpack.c.l.b16 %v4064
    %v5278 = vunpack.c.h.b16 %v4064
    %v5279 = vunpack.c.l.b16 %v4065
    %v5280 = vunpack.c.h.b16 %v4065
    %v5281 = vunpack.c.l.b16 %v4066
    %v5282 = vunpack.c.h.b16 %v4066
    %v5283 = vunpack.c.l.b16 %v4067
    %v5284 = vunpack.c.h.b16 %v4067
    %v5285 = vunpack.c.l.b16 %v4068
    %v5286 = vunpack.c.h.b16 %v4068
    %v5287 = vunpack.c.l.b16 %v4069
    %v5288 = vunpack.c.h.b16 %v4069
    %v5289 = vunpack.c.l.b16 %v4070
    %v5290 = vunpack.c.h.b16 %v4070
    %v5291 = vunpack.c.l.b16 %v4071
    %v5292 = vunpack.c.h.b16 %v4071
    %v5293 = vunpack.c.l.b16 %v4072
    %v5294 = vunpack.c.h.b16 %v4072
    %v5295 = vunpack.c.l.b16 %v4073
    %v5296 = vunpack.c.h.b16 %v4073
    %v5297 = vunpack.c.l.b16 %v4074
    %v5298 = vunpack.c.h.b16 %v4074
    %v5299 = vunpack.c.l.b16 %v4075
    %v5300 = vunpack.c.h.b16 %v4075
    %v5301 = vunpack.c.l.b16 %v4076
    %v5302 = vunpack.c.h.b16 %v4076
    %v5303 = vunpack.c.l.b16 %v4077
    %v5304 = vunpack.c.h.b16 %v4077
    %v5305 = vunpack.c.l.b16 %v4078
    %v5306 = vunpack.c.h.b16 %v4078
    %v5307 = vunpack.c.l.b16 %v4079
    %v5308 = vunpack.c.h.b16 %v4079
    %v5309 = vunpack.c.l.b16 %v4080
    %v5310 = vunpack.c.h.b16 %v4080
    %v5311 = vunpack.c.l.b16 %v4081
    %v5312 = vunpack.c.h.b16 %v4081
    %v5313 = vunpack.c.l.b16 %v4082
    %v5314 = vunpack.c.h.b16 %v4082
    %v5315 = vunpack.c.l.b16 %v4083
    %v5316 = vunpack.c.h.b16 %v4083
    %v5317 = vunpack.c.l.b16 %v4084
    %v5318 = vunpack.c.h.b16 %v4084
    %v5319 = vunpack.c.l.b16 %v4085
    %v5320 = vunpack.c.h.b16 %v4085
    %v5321 = vunpack.c.l.b16 %v4086
    %v5322 = vunpack.c.h.b16 %v4086
    %v5323 = vunpack.c.l.b16 %v4087
    %v5324 = vunpack.c.h.b16 %v4087
    %v5325 = vunpack.c.l.b16 %v4088
    %v5326 = vunpack.c.h.b16 %v4088
    %v5327 = vunpack.c.l.b16 %v4089
    %v5328 = vunpack.c.h.b16 %v4089
    %v5329 = vunpack.c.l.b16 %v4090
    %v5330 = vunpack.c.h.b16 %v4090
    %v5331 = vunpack.c.l.b16 %v4091
    %v5332 = vunpack.c.h.b16 %v4091
    %v5333 = vunpack.c.l.b16 %v4092
    %v5334 = vunpack.c.h.b16 %v4092
    %v5335 = vunpack.c.l.b16 %v4093
    %v5336 = vunpack.c.h.b16 %v4093
    %v5337 = vunpack.c.l.b16 %v4094
    %v5338 = vunpack.c.h.b16 %v4094
    %v5339 = vunpack.c.l.b16 %v4095
    %v5340 = vunpack.c.h.b16 %v4095
    %v5341 = vunpack.c.l.b16 %v4096
    %v5342 = vunpack.c.h.b16 %v4096
    %v5343 = vunpack.c.l.b16 %v4097
    %v5344 = vunpack.c.h.b16 %v4097
    %v5345 = vunpack.c.l.b16 %v4098
    %v5346 = vunpack.c.h.b16 %v4098
    %v5347 = vunpack.c.l.b16 %v4099
    %v5348 = vunpack.c.h.b16 %v4099
    %v5349 = vunpack.c.l.b16 %v4100
    %v5350 = vunpack.c.h.b16 %v4100
    %v5351 = vunpack.c.l.b16 %v4101
    %v5352 = vunpack.c.h.b16 %v4101
    %v5353 = vunpack.c.l.b16 %v4102
    %v5354 = vunpack.c.h.b16 %v4102
    %v5355 = vunpack.c.l.b16 %v4103
    %v5356 = vunpack.c.h.b16 %v4103
    %v5357 = vunpack.c.l.b16 %v4104
    %v5358 = vunpack.c.h.b16 %v4104
    %v5359 = vunpack.c.l.b16 %v4105
    %v5360 = vunpack.c.h.b16 %v4105
    %v5361 = vunpack.c.l.b16 %v4106
    %v5362 = vunpack.c.h.b16 %v4106
    %v5363 = vunpack.c.l.b16 %v4107
    %v5364 = vunpack.c.h.b16 %v4107
    %v5365 = vunpack.c.l.b16 %v4108
    %v5366 = vunpack.c.h.b16 %v4108
    %v5367 = vunpack.c.l.b16 %v4109
    %v5368 = vunpack.c.h.b16 %v4109
    %v5369 = vunpack.c.l.b16 %v4110
    %v5370 = vunpack.c.h.b16 %v4110
    %v5371 = vunpack.c.l.b16 %v4111
    %v5372 = vunpack.c.h.b16 %v4111
    %v5373 = vunpack.c.l.b16 %v4112
    %v5374 = vunpack.c.h.b16 %v4112
    %v5375 = vunpack.c.l.b16 %v4113
    %v5376 = vunpack.c.h.b16 %v4113
    %v5377 = vunpack.c.l.b16 %v4114
    %v5378 = vunpack.c.h.b16 %v4114
    %v5379 = vunpack.c.l.b16 %v4115
    %v5380 = vunpack.c.h.b16 %v4115
    %v5381 = vunpack.c.l.b16 %v4116
    %v5382 = vunpack.c.h.b16 %v4116
    %v5383 = vunpack.c.l.b16 %v4117
    %v5384 = vunpack.c.h.b16 %v4117
    %v5385 = vunpack.c.l.b16 %v4118
    %v5386 = vunpack.c.h.b16 %v4118
    %v5387 = vunpack.c.l.b16 %v4119
    %v5388 = vunpack.c.h.b16 %v4119
    %v5389 = vunpack.c.l.b16 %v4120
    %v5390 = vunpack.c.h.b16 %v4120
    %v5391 = vunpack.c.l.b16 %v4121
    %v5392 = vunpack.c.h.b16 %v4121
    %v5393 = vunpack.c.l.b16 %v4122
    %v5394 = vunpack.c.h.b16 %v4122
    %v5395 = vunpack.c.l.b16 %v4123
    %v5396 = vunpack.c.h.b16 %v4123
    %v5397 = vunpack.c.l.b16 %v4124
    %v5398 = vunpack.c.h.b16 %v4124
    %v5399 = vunpack.c.l.b16 %v4125
    %v5400 = vunpack.c.h.b16 %v4125
    %v5401 = vunpack.c.l.b16 %v4126
    %v5402 = vunpack.c.h.b16 %v4126
    %v5403 = vunpack.c.l.b16 %v4127
    %v5404 = vunpack.c.h.b16 %v4127
    %v5405 = vunpack.c.l.b16 %v4128
    %v5406 = vunpack.c.h.b16 %v4128
    %v5407 = vunpack.c.l.b16 %v4129
    %v5408 = vunpack.c.h.b16 %v4129
    %v5409 = vunpack.c.l.b16 %v4130
    %v5410 = vunpack.c.h.b16 %v4130
    %v5411 = vunpack.c.l.b16 %v4131
    %v5412 = vunpack.c.h.b16 %v4131
    %v5413 = vunpack.c.l.b16 %v4132
    %v5414 = vunpack.c.h.b16 %v4132
    %v5415 = vunpack.c.l.b16 %v4133
    %v5416 = vunpack.c.h.b16 %v4133
    %v5417 = vunpack.c.l.b16 %v4134
    %v5418 = vunpack.c.h.b16 %v4134
    %v5419 = vunpack.c.l.b16 %v4135
    %v5420 = vunpack.c.h.b16 %v4135
    %v5421 = vunpack.c.l.b16 %v4136
    %v5422 = vunpack.c.h.b16 %v4136
    %v5423 = vunpack.c.l.b16 %v4137
    %v5424 = vunpack.c.h.b16 %v4137
    %v5425 = vunpack.c.l.b16 %v4138
    %v5426 = vunpack.c.h.b16 %v4138
    %v5427 = vunpack.c.l.b16 %v4139
    %v5428 = vunpack.c.h.b16 %v4139
    %v5429 = vunpack.c.l.b16 %v4140
    %v5430 = vunpack.c.h.b16 %v4140
    %v5431 = vunpack.c.l.b16 %v4141
    %v5432 = vunpack.c.h.b16 %v4141
    %v5433 = vunpack.c.l.b16 %v4142
    %v5434 = vunpack.c.h.b16 %v4142
    %v5435 = vunpack.c.l.b16 %v4143
    %v5436 = vunpack.c.h.b16 %v4143
    %v5437 = vunpack.c.l.b16 %v4144
    %v5438 = vunpack.c.h.b16 %v4144
    %v5439 = vunpack.c.l.b16 %v4145
    %v5440 = vunpack.c.h.b16 %v4145
    %v5441 = vunpack.c.l.b16 %v4146
    %v5442 = vunpack.c.h.b16 %v4146
    %v5443 = vunpack.c.l.b16 %v4147
    %v5444 = vunpack.c.h.b16 %v4147
    %v5445 = vunpack.c.l.b16 %v4148
    %v5446 = vunpack.c.h.b16 %v4148
    %v5447 = vunpack.c.l.b16 %v4149
    %v5448 = vunpack.c.h.b16 %v4149
    %v5449 = vunpack.c.l.b16 %v4150
    %v5450 = vunpack.c.h.b16 %v4150
    %v5451 = vunpack.c.l.b16 %v4151
    %v5452 = vunpack.c.h.b16 %v4151
    %v5453 = vunpack.c.l.b16 %v4152
    %v5454 = vunpack.c.h.b16 %v4152
    %v5455 = vunpack.c.l.b16 %v4153
    %v5456 = vunpack.c.h.b16 %v4153
    %v5457 = vunpack.c.l.b16 %v4154
    %v5458 = vunpack.c.h.b16 %v4154
    %v5459 = vunpack.c.l.b16 %v4155
    %v5460 = vunpack.c.h.b16 %v4155
    %v5461 = vunpack.c.l.b16 %v4156
    %v5462 = vunpack.c.h.b16 %v4156
    %v5463 = vunpack.c.l.b16 %v4157
    %v5464 = vunpack.c.h.b16 %v4157
    %v5465 = vunpack.c.l.b16 %v4158
    %v5466 = vunpack.c.h.b16 %v4158
    %v5467 = vunpack.c.l.b16 %v4159
    %v5468 = vunpack.c.h.b16 %v4159
    %v5469 = vunpack.c.l.b16 %v4160
    %v5470 = vunpack.c.h.b16 %v4160
    %v5471 = vunpack.c.l.b16 %v4161
    %v5472 = vunpack.c.h.b16 %v4161
    %v5473 = vunpack.c.l.b16 %v4162
    %v5474 = vunpack.c.h.b16 %v4162
    %v5475 = vunpack.c.l.b16 %v4163
    %v5476 = vunpack.c.h.b16 %v4163
    %v5477 = vunpack.c.l.b16 %v4164
    %v5478 = vunpack.c.h.b16 %v4164
    %v5479 = vunpack.c.l.b16 %v4165
    %v5480 = vunpack.c.h.b16 %v4165
    %v5481 = vunpack.c.l.b16 %v4166
    %v5482 = vunpack.c.h.b16 %v4166
    %v5483 = vunpack.c.l.b16 %v4167
    %v5484 = vunpack.c.h.b16 %v4167
    %v5485 = vunpack.c.l.b16 %v4168
    %v5486 = vunpack.c.h.b16 %v4168
    %v5487 = vunpack.c.l.b16 %v4169
    %v5488 = vunpack.c.h.b16 %v4169
    %v5489 = vunpack.c.l.b16 %v4170
    %v5490 = vunpack.c.h.b16 %v4170
    %v5491 = vunpack.c.l.b16 %v4171
    %v5492 = vunpack.c.h.b16 %v4171
    %v5493 = vunpack.c.l.b16 %v4172
    %v5494 = vunpack.c.h.b16 %v4172
    %v5495 = vunpack.c.l.b16 %v4173
    %v5496 = vunpack.c.h.b16 %v4173
    %v5497 = vunpack.c.l.b16 %v4174
    %v5498 = vunpack.c.h.b16 %v4174
    %v5499 = vunpack.c.l.b16 %v4175
    %v5500 = vunpack.c.h.b16 %v4175
    %v5501 = vunpack.c.l.b16 %v4176
    %v5502 = vunpack.c.h.b16 %v4176
    %v5503 = vunpack.c.l.b16 %v4177
    %v5504 = vunpack.c.h.b16 %v4177
    %v5505 = vunpack.c.l.b16 %v4178
    %v5506 = vunpack.c.h.b16 %v4178
    %v5507 = vunpack.c.l.b16 %v4179
    %v5508 = vunpack.c.h.b16 %v4179
    %v5509 = vunpack.c.l.b16 %v4180
    %v5510 = vunpack.c.h.b16 %v4180
    %v5511 = vunpack.c.l.b16 %v4181
    %v5512 = vunpack.c.h.b16 %v4181
    %v5513 = vunpack.c.l.b16 %v4182
    %v5514 = vunpack.c.h.b16 %v4182
    %v5515 = vunpack.c.l.b16 %v4183
    %v5516 = vunpack.c.h.b16 %v4183
    %v5517 = vunpack.c.l.b16 %v4184
    %v5518 = vunpack.c.h.b16 %v4184
    %v5519 = vunpack.c.l.b16 %v4185
    %v5520 = vunpack.c.h.b16 %v4185
    %v5521 = vunpack.c.l.b16 %v4186
    %v5522 = vunpack.c.h.b16 %v4186
    %v5523 = vunpack.c.l.b16 %v4187
    %v5524 = vunpack.c.h.b16 %v4187
    %v5525 = vunpack.c.l.b16 %v4188
    %v5526 = vunpack.c.h.b16 %v4188
    %v5527 = vunpack.c.l.b16 %v4189
    %v5528 = vunpack.c.h.b16 %v4189
    %v5529 = vunpack.c.l.b16 %v4190
    %v5530 = vunpack.c.h.b16 %v4190
    %v5531 = vunpack.c.l.b16 %v4191
    %v5532 = vunpack.c.h.b16 %v4191
    %v5533 = vunpack.c.l.b16 %v4192
    %v5534 = vunpack.c.h.b16 %v4192
    %v5535 = vunpack.c.l.b16 %v4193
    %v5536 = vunpack.c.h.b16 %v4193
    %v5537 = vunpack.c.l.b16 %v4194
    %v5538 = vunpack.c.h.b16 %v4194
    %v5539 = vunpack.c.l.b16 %v4195
    %v5540 = vunpack.c.h.b16 %v4195
    %v5541 = vunpack.c.l.b16 %v4196
    %v5542 = vunpack.c.h.b16 %v4196
    %v5543 = vunpack.c.l.b16 %v4197
    %v5544 = vunpack.c.h.b16 %v4197
    %v5545 = vunpack.c.l.b16 %v4198
    %v5546 = vunpack.c.h.b16 %v4198
    %v5547 = vunpack.c.l.b16 %v4199
    %v5548 = vunpack.c.h.b16 %v4199
    %v5549 = vunpack.c.l.b16 %v4200
    %v5550 = vunpack.c.h.b16 %v4200
    %v5551 = vunpack.c.l.b16 %v4201
    %v5552 = vunpack.c.h.b16 %v4201
    %v5553 = vunpack.c.l.b16 %v4202
    %v5554 = vunpack.c.h.b16 %v4202
    %v5555 = vunpack.c.l.b16 %v4203
    %v5556 = vunpack.c.h.b16 %v4203
    %v5557 = vunpack.c.l.b16 %v4204
    %v5558 = vunpack.c.h.b16 %v4204
    %v5559 = vunpack.c.l.b16 %v4205
    %v5560 = vunpack.c.h.b16 %v4205
    %v5561 = vunpack.c.l.b16 %v4206
    %v5562 = vunpack.c.h.b16 %v4206
    %v5563 = vunpack.c.l.b16 %v4207
    %v5564 = vunpack.c.h.b16 %v4207
    %v5565 = vunpack.c.l.b16 %v4208
    %v5566 = vunpack.c.h.b16 %v4208
    %v5567 = vunpack.c.l.b16 %v4209
    %v5568 = vunpack.c.h.b16 %v4209
    %v5569 = vunpack.c.l.b16 %v4210
    %v5570 = vunpack.c.h.b16 %v4210
    %v5571 = vunpack.c.l.b16 %v4211
    %v5572 = vunpack.c.h.b16 %v4211
    %v5573 = vunpack.c.l.b16 %v4212
    %v5574 = vunpack.c.h.b16 %v4212
    %v5575 = vunpack.c.l.b16 %v4213
    %v5576 = vunpack.c.h.b16 %v4213
    %v5577 = vunpack.c.l.b16 %v4214
    %v5578 = vunpack.c.h.b16 %v4214
    %v5579 = vunpack.c.l.b16 %v4215
    %v5580 = vunpack.c.h.b16 %v4215
    %v5581 = vunpack.c.l.b16 %v4216
    %v5582 = vunpack.c.h.b16 %v4216
    %v5583 = vunpack.c.l.b16 %v4217
    %v5584 = vunpack.c.h.b16 %v4217
    %v5585 = vunpack.c.l.b16 %v4218
    %v5586 = vunpack.c.h.b16 %v4218
    %v5587 = vunpack.c.l.b16 %v4219
    %v5588 = vunpack.c.h.b16 %v4219
    %v5589 = vunpack.c.l.b16 %v4220
    %v5590 = vunpack.c.h.b16 %v4220
    %v5591 = vunpack.c.l.b16 %v4221
    %v5592 = vunpack.c.h.b16 %v4221
    %v5593 = vunpack.c.l.b16 %v4222
    %v5594 = vunpack.c.h.b16 %v4222
    %v5595 = vunpack.c.l.b16 %v4223
    %v5596 = vunpack.c.h.b16 %v4223
    %v5597 = vunpack.c.l.b16 %v4224
    %v5598 = vunpack.c.h.b16 %v4224
    %v5599 = vunpack.c.l.b16 %v4225
    %v5600 = vunpack.c.h.b16 %v4225
    %v5601 = vunpack.c.l.b16 %v4226
    %v5602 = vunpack.c.h.b16 %v4226
    %v5603 = vunpack.c.l.b16 %v4227
    %v5604 = vunpack.c.h.b16 %v4227
    %v5605 = vunpack.c.l.b16 %v4228
    %v5606 = vunpack.c.h.b16 %v4228
    %v5607 = vunpack.c.l.b16 %v4229
    %v5608 = vunpack.c.h.b16 %v4229
    %v5609 = vunpack.c.l.b16 %v4230
    %v5610 = vunpack.c.h.b16 %v4230
    %v5611 = vunpack.c.l.b16 %v4231
    %v5612 = vunpack.c.h.b16 %v4231
    %v5613 = vunpack.c.l.b16 %v4232
    %v5614 = vunpack.c.h.b16 %v4232
    %v5615 = vunpack.c.l.b16 %v4233
    %v5616 = vunpack.c.h.b16 %v4233
    %v5617 = vunpack.c.l.b16 %v4234
    %v5618 = vunpack.c.h.b16 %v4234
    %v5619 = vunpack.c.l.b16 %v4235
    %v5620 = vunpack.c.h.b16 %v4235
    %v5621 = vunpack.c.l.b16 %v4236
    %v5622 = vunpack.c.h.b16 %v4236
    %v5623 = vunpack.c.l.b16 %v4237
    %v5624 = vunpack.c.h.b16 %v4237
    %v5625 = vunpack.c.l.b16 %v4238
    %v5626 = vunpack.c.h.b16 %v4238
    %v5627 = vunpack.c.l.b16 %v4239
    %v5628 = vunpack.c.h.b16 %v4239
    %v5629 = vunpack.c.l.b16 %v4240
    %v5630 = vunpack.c.h.b16 %v4240
    %v5631 = vunpack.c.l.b16 %v4241
    %v5632 = vunpack.c.h.b16 %v4241
    %v5633 = vunpack.c.l.b16 %v4242
    %v5634 = vunpack.c.h.b16 %v4242
    %v5635 = vunpack.c.l.b16 %v4243
    %v5636 = vunpack.c.h.b16 %v4243
    %v5637 = vunpack.c.l.b16 %v4244
    %v5638 = vunpack.c.h.b16 %v4244
    %v5639 = vunpack.c.l.b16 %v4245
    %v5640 = vunpack.c.h.b16 %v4245
    %v5641 = vunpack.c.l.b16 %v4246
    %v5642 = vunpack.c.h.b16 %v4246
    %v5643 = vunpack.c.l.b16 %v4247
    %v5644 = vunpack.c.h.b16 %v4247
    %v5645 = vunpack.c.l.b16 %v4248
    %v5646 = vunpack.c.h.b16 %v4248
    %v5647 = vunpack.c.l.b16 %v4249
    %v5648 = vunpack.c.h.b16 %v4249
    %v5649 = vunpack.c.l.b16 %v4250
    %v5650 = vunpack.c.h.b16 %v4250
    %v5651 = vunpack.c.l.b16 %v4251
    %v5652 = vunpack.c.h.b16 %v4251
    %v5653 = vunpack.c.l.b16 %v4252
    %v5654 = vunpack.c.h.b16 %v4252
    %v5655 = vunpack.c.l.b16 %v4253
    %v5656 = vunpack.c.h.b16 %v4253
    %v5657 = vunpack.c.l.b16 %v4254
    %v5658 = vunpack.c.h.b16 %v4254
    %v5659 = vunpack.c.l.b16 %v4255
    %v5660 = vunpack.c.h.b16 %v4255
    %v5661 = vunpack.c.l.b16 %v4256
    %v5662 = vunpack.c.h.b16 %v4256
    %v5663 = vunpack.c.l.b16 %v4257
    %v5664 = vunpack.c.h.b16 %v4257
    %v5665 = vunpack.c.l.b16 %v4258
    %v5666 = vunpack.c.h.b16 %v4258
    %v5667 = vunpack.c.l.b16 %v4259
    %v5668 = vunpack.c.h.b16 %v4259
    %v5669 = vunpack.c.l.b16 %v4260
    %v5670 = vunpack.c.h.b16 %v4260
    %v5671 = vunpack.c.l.b16 %v4261
    %v5672 = vunpack.c.h.b16 %v4261
    %v5673 = vunpack.c.l.b16 %v4262
    %v5674 = vunpack.c.h.b16 %v4262
    %v5675 = vunpack.c.l.b16 %v4263
    %v5676 = vunpack.c.h.b16 %v4263
    %v5677 = vunpack.c.l.b16 %v4264
    %v5678 = vunpack.c.h.b16 %v4264
    %v5679 = vunpack.c.l.b16 %v4265
    %v5680 = vunpack.c.h.b16 %v4265
    %v5681 = vunpack.c.l.b16 %v4266
    %v5682 = vunpack.c.h.b16 %v4266
    %v5683 = vunpack.c.l.b16 %v4267
    %v5684 = vunpack.c.h.b16 %v4267
    %v5685 = vunpack.c.l.b16 %v4268
    %v5686 = vunpack.c.h.b16 %v4268
    %v5687 = vunpack.c.l.b16 %v4269
    %v5688 = vunpack.c.h.b16 %v4269
    %v5689 = vunpack.c.l.b16 %v4270
    %v5690 = vunpack.c.h.b16 %v4270
    %v5691 = vunpack.c.l.b16 %v4271
    %v5692 = vunpack.c.h.b16 %v4271
    %v5693 = vunpack.c.l.b16 %v4272
    %v5694 = vunpack.c.h.b16 %v4272
    %v5695 = vunpack.c.l.b16 %v4273
    %v5696 = vunpack.c.h.b16 %v4273
    %v5697 = vunpack.c.l.b16 %v4274
    %v5698 = vunpack.c.h.b16 %v4274
    %v5699 = vunpack.c.l.b16 %v4275
    %v5700 = vunpack.c.h.b16 %v4275
    %v5701 = vunpack.c.l.b16 %v4276
    %v5702 = vunpack.c.h.b16 %v4276
    %v5703 = vunpack.c.l.b16 %v4277
    %v5704 = vunpack.c.h.b16 %v4277
    %v5705 = vunpack.c.l.b16 %v4278
    %v5706 = vunpack.c.h.b16 %v4278
    %v5707 = vunpack.c.l.b16 %v4279
    %v5708 = vunpack.c.h.b16 %v4279
    %v5709 = vunpack.c.l.b16 %v4280
    %v5710 = vunpack.c.h.b16 %v4280
    %v5711 = vunpack.c.l.b16 %v4281
    %v5712 = vunpack.c.h.b16 %v4281
    %v5713 = vunpack.c.l.b16 %v4282
    %v5714 = vunpack.c.h.b16 %v4282
    %v5715 = vunpack.c.l.b16 %v4283
    %v5716 = vunpack.c.h.b16 %v4283
    %v5717 = vunpack.c.l.b16 %v4284
    %v5718 = vunpack.c.h.b16 %v4284
    %v5719 = vunpack.c.l.b16 %v4285
    %v5720 = vunpack.c.h.b16 %v4285
    %v5721 = vunpack.c.l.b16 %v4286
    %v5722 = vunpack.c.h.b16 %v4286
    %v5723 = vunpack.c.l.b16 %v4287
    %v5724 = vunpack.c.h.b16 %v4287
    %v5725 = vunpack.c.l.b16 %v4288
    %v5726 = vunpack.c.h.b16 %v4288
    %v5727 = vunpack.c.l.b16 %v4289
    %v5728 = vunpack.c.h.b16 %v4289
    %v5729 = vunpack.c.l.b16 %v4290
    %v5730 = vunpack.c.h.b16 %v4290
    %v5731 = vunpack.c.l.b16 %v4291
    %v5732 = vunpack.c.h.b16 %v4291
    %v5733 = vunpack.c.l.b16 %v4292
    %v5734 = vunpack.c.h.b16 %v4292
    %v5735 = vunpack.c.l.b16 %v4293
    %v5736 = vunpack.c.h.b16 %v4293
    %v5737 = vunpack.c.l.b16 %v4294
    %v5738 = vunpack.c.h.b16 %v4294
    %v5739 = vunpack.c.l.b16 %v4295
    %v5740 = vunpack.c.h.b16 %v4295
    %v5741 = vunpack.c.l.b16 %v4296
    %v5742 = vunpack.c.h.b16 %v4296
    %v5743 = vunpack.c.l.b16 %v4297
    %v5744 = vunpack.c.h.b16 %v4297
    %v5745 = vunpack.c.l.b16 %v4298
    %v5746 = vunpack.c.h.b16 %v4298
    %v5747 = vunpack.c.l.b16 %v4299
    %v5748 = vunpack.c.h.b16 %v4299
    %v5749 = vunpack.c.l.b16 %v4300
    %v5750 = vunpack.c.h.b16 %v4300
    %v5751 = vunpack.c.l.b16 %v4301
    %v5752 = vunpack.c.h.b16 %v4301
    %v5753 = vunpack.c.l.b16 %v4302
    %v5754 = vunpack.c.h.b16 %v4302
    %v5755 = vunpack.c.l.b16 %v4303
    %v5756 = vunpack.c.h.b16 %v4303
    %v5757 = vunpack.c.l.b16 %v4304
    %v5758 = vunpack.c.h.b16 %v4304
    %v5759 = vunpack.c.l.b16 %v4305
    %v5760 = vunpack.c.h.b16 %v4305
    %v5761 = vunpack.c.l.b16 %v4306
    %v5762 = vunpack.c.h.b16 %v4306
    %v5763 = vunpack.c.l.b16 %v4307
    %v5764 = vunpack.c.h.b16 %v4307
    %v5765 = vunpack.c.l.b16 %v4308
    %v5766 = vunpack.c.h.b16 %v4308
    %v5767 = vunpack.c.l.b16 %v4309
    %v5768 = vunpack.c.h.b16 %v4309
    %v5769 = vunpack.c.l.b16 %v4310
    %v5770 = vunpack.c.h.b16 %v4310
    %v5771 = vunpack.c.l.b16 %v4311
    %v5772 = vunpack.c.h.b16 %v4311
    %v5773 = vunpack.c.l.b16 %v4312
    %v5774 = vunpack.c.h.b16 %v4312
    %v5775 = vunpack.c.l.b16 %v4313
    %v5776 = vunpack.c.h.b16 %v4313
    %v5777 = vunpack.c.l.b16 %v4314
    %v5778 = vunpack.c.h.b16 %v4314
    %v5779 = vunpack.c.l.b16 %v4315
    %v5780 = vunpack.c.h.b16 %v4315
    %v5781 = vunpack.c.l.b16 %v4316
    %v5782 = vunpack.c.h.b16 %v4316
    %v5783 = vunpack.c.l.b16 %v4317
    %v5784 = vunpack.c.h.b16 %v4317
    %v5785 = vunpack.c.l.b16 %v4318
    %v5786 = vunpack.c.h.b16 %v4318
    %v5787 = vunpack.c.l.b16 %v4319
    %v5788 = vunpack.c.h.b16 %v4319
    %v5789 = vunpack.c.l.b16 %v4320
    %v5790 = vunpack.c.h.b16 %v4320
    %v5791 = vunpack.c.l.b16 %v4321
    %v5792 = vunpack.c.h.b16 %v4321
    %v5793 = vunpack.c.l.b16 %v4322
    %v5794 = vunpack.c.h.b16 %v4322
    %v5795 = vunpack.c.l.b16 %v4323
    %v5796 = vunpack.c.h.b16 %v4323
    %v5797 = vunpack.c.l.b16 %v4324
    %v5798 = vunpack.c.h.b16 %v4324
    %v5799 = vunpack.c.l.b16 %v4325
    %v5800 = vunpack.c.h.b16 %v4325
    %v5801 = vunpack.c.l.b16 %v4326
    %v5802 = vunpack.c.h.b16 %v4326
    %v5803 = vunpack.c.l.b16 %v4327
    %v5804 = vunpack.c.h.b16 %v4327
    %v5805 = vunpack.c.l.b16 %v4328
    %v5806 = vunpack.c.h.b16 %v4328
    %v5807 = vunpack.c.l.b16 %v4329
    %v5808 = vunpack.c.h.b16 %v4329
    %v5809 = vunpack.c.l.b16 %v4330
    %v5810 = vunpack.c.h.b16 %v4330
    %v5811 = vunpack.c.l.b16 %v4331
    %v5812 = vunpack.c.h.b16 %v4331
    %v5813 = vunpack.c.l.b16 %v4332
    %v5814 = vunpack.c.h.b16 %v4332
    %v5815 = vunpack.c.l.b16 %v4333
    %v5816 = vunpack.c.h.b16 %v4333
    %v5817 = vunpack.c.l.b16 %v4334
    %v5818 = vunpack.c.h.b16 %v4334
    %v5819 = vunpack.c.l.b16 %v4335
    %v5820 = vunpack.c.h.b16 %v4335
    %v5821 = vunpack.c.l.b16 %v4336
    %v5822 = vunpack.c.h.b16 %v4336
    %v5823 = vunpack.c.l.b16 %v4337
    %v5824 = vunpack.c.h.b16 %v4337
    %v5825 = vunpack.c.l.b16 %v4338
    %v5826 = vunpack.c.h.b16 %v4338
    %v5827 = vunpack.c.l.b16 %v4339
    %v5828 = vunpack.c.h.b16 %v4339
    %v5829 = vunpack.c.l.b16 %v4340
    %v5830 = vunpack.c.h.b16 %v4340
    %v5831 = vunpack.c.l.b16 %v4341
    %v5832 = vunpack.c.h.b16 %v4341
    %v5833 = vunpack.c.l.b16 %v4342
    %v5834 = vunpack.c.h.b16 %v4342
    %v5835 = vunpack.c.l.b16 %v4343
    %v5836 = vunpack.c.h.b16 %v4343
    %v5837 = vunpack.c.l.b16 %v4344
    %v5838 = vunpack.c.h.b16 %v4344
    %v5839 = vunpack.c.l.b16 %v4345
    %v5840 = vunpack.c.h.b16 %v4345
    %v5841 = vunpack.c.l.b16 %v4346
    %v5842 = vunpack.c.h.b16 %v4346
    %v5843 = vunpack.c.l.b16 %v4347
    %v5844 = vunpack.c.h.b16 %v4347
    %v5845 = vunpack.c.l.b16 %v4348
    %v5846 = vunpack.c.h.b16 %v4348
    %v5847 = vunpack.c.l.b16 %v4349
    %v5848 = vunpack.c.h.b16 %v4349
    %v5849 = vunpack.c.l.b16 %v4350
    %v5850 = vunpack.c.h.b16 %v4350
    %v5851 = vunpack.c.l.b16 %v4351
    %v5852 = vunpack.c.h.b16 %v4351
    %v5853 = vunpack.c.l.b16 %v4352
    %v5854 = vunpack.c.h.b16 %v4352
    %v5855 = vunpack.c.l.b16 %v4353
    %v5856 = vunpack.c.h.b16 %v4353
    %v5857 = vunpack.c.l.b16 %v4354
    %v5858 = vunpack.c.h.b16 %v4354
    %v5859 = vunpack.c.l.b16 %v4355
    %v5860 = vunpack.c.h.b16 %v4355
    %v5861 = vunpack.c.l.b16 %v4356
    %v5862 = vunpack.c.h.b16 %v4356
    %v5863 = vunpack.c.l.b16 %v4357
    %v5864 = vunpack.c.h.b16 %v4357
    %v5865 = vunpack.c.l.b16 %v4358
    %v5866 = vunpack.c.h.b16 %v4358
    %v5867 = vunpack.c.l.b16 %v4359
    %v5868 = vunpack.c.h.b16 %v4359
    %v5869 = vunpack.c.l.b16 %v4360
    %v5870 = vunpack.c.h.b16 %v4360
    %v5871 = vunpack.c.l.b16 %v4361
    %v5872 = vunpack.c.h.b16 %v4361
    %v5873 = vunpack.c.l.b16 %v4362
    %v5874 = vunpack.c.h.b16 %v4362
    %v5875 = vunpack.c.l.b16 %v4363
    %v5876 = vunpack.c.h.b16 %v4363
    %v5877 = vunpack.c.l.b16 %v4364
    %v5878 = vunpack.c.h.b16 %v4364
    %v5879 = vunpack.c.l.b16 %v4365
    %v5880 = vunpack.c.h.b16 %v4365
    %v5881 = vunpack.c.l.b16 %v4366
    %v5882 = vunpack.c.h.b16 %v4366
    %v5883 = vunpack.c.l.b16 %v4367
    %v5884 = vunpack.c.h.b16 %v4367
    %v5885 = vunpack.c.l.b16 %v4368
    %v5886 = vunpack.c.h.b16 %v4368
    %v5887 = vunpack.c.l.b16 %v4369
    %v5888 = vunpack.c.h.b16 %v4369
    %v5889 = vunpack.c.l.b16 %v4370
    %v5890 = vunpack.c.h.b16 %v4370
    %v5891 = vunpack.c.l.b16 %v4371
    %v5892 = vunpack.c.h.b16 %v4371
    %v5893 = vunpack.c.l.b16 %v4372
    %v5894 = vunpack.c.h.b16 %v4372
    %v5895 = vunpack.c.l.b16 %v4373
    %v5896 = vunpack.c.h.b16 %v4373
    %v5897 = vunpack.c.l.b16 %v4374
    %v5898 = vunpack.c.h.b16 %v4374
    %v5899 = vunpack.c.l.b16 %v4375
    %v5900 = vunpack.c.h.b16 %v4375
    %v5901 = vunpack.c.l.b16 %v4376
    %v5902 = vunpack.c.h.b16 %v4376
    %v5903 = vunpack.c.l.b16 %v4377
    %v5904 = vunpack.c.h.b16 %v4377
    %v5905 = vunpack.c.l.b16 %v4378
    %v5906 = vunpack.c.h.b16 %v4378
    %v5907 = vunpack.c.l.b16 %v4379
    %v5908 = vunpack.c.h.b16 %v4379
    %v5909 = vunpack.c.l.b16 %v4380
    %v5910 = vunpack.c.h.b16 %v4380
    %v5911 = vunpack.c.l.b16 %v4381
    %v5912 = vunpack.c.h.b16 %v4381
    %v5913 = vunpack.c.l.b16 %v4382
    %v5914 = vunpack.c.h.b16 %v4382
    %v5915 = vunpack.c.l.b16 %v4383
    %v5916 = vunpack.c.h.b16 %v4383
    %v5917 = vunpack.c.l.b16 %v4384
    %v5918 = vunpack.c.h.b16 %v4384
    %v5919 = vunpack.c.l.b16 %v4385
    %v5920 = vunpack.c.h.b16 %v4385
    %v5921 = vunpack.c.l.b16 %v4386
    %v5922 = vunpack.c.h.b16 %v4386
    %v5923 = vunpack.c.l.b16 %v4387
    %v5924 = vunpack.c.h.b16 %v4387
    %v5925 = vunpack.c.l.b16 %v4388
    %v5926 = vunpack.c.h.b16 %v4388
    %v5927 = vunpack.c.l.b16 %v4389
    %v5928 = vunpack.c.h.b16 %v4389
    %v5929 = vunpack.c.l.b16 %v4390
    %v5930 = vunpack.c.h.b16 %v4390
    %v5931 = vunpack.c.l.b16 %v4391
    %v5932 = vunpack.c.h.b16 %v4391
    %v5933 = vunpack.c.l.b16 %v4392
    %v5934 = vunpack.c.h.b16 %v4392
    %v5935 = vunpack.c.l.b16 %v4393
    %v5936 = vunpack.c.h.b16 %v4393
    %v5937 = vunpack.c.l.b16 %v4394
    %v5938 = vunpack.c.h.b16 %v4394
    %v5939 = vunpack.c.l.b16 %v4395
    %v5940 = vunpack.c.h.b16 %v4395
    %v5941 = vunpack.c.l.b16 %v4396
    %v5942 = vunpack.c.h.b16 %v4396
    %v5943 = vunpack.c.l.b16 %v4397
    %v5944 = vunpack.c.h.b16 %v4397
    %v5945 = vunpack.c.l.b16 %v4398
    %v5946 = vunpack.c.h.b16 %v4398
    %v5947 = vunpack.c.l.b16 %v4399
    %v5948 = vunpack.c.h.b16 %v4399
    %v5949 = vunpack.c.l.b16 %v4400
    %v5950 = vunpack.c.h.b16 %v4400
    %v5951 = vunpack.c.l.b16 %v4401
    %v5952 = vunpack.c.h.b16 %v4401
    %v5953 = vunpack.c.l.b16 %v4402
    %v5954 = vunpack.c.h.b16 %v4402
    %v5955 = vunpack.c.l.b16 %v4403
    %v5956 = vunpack.c.h.b16 %v4403
    %v5957 = vunpack.c.l.b16 %v4404
    %v5958 = vunpack.c.h.b16 %v4404
    %v5959 = vunpack.c.l.b16 %v4405
    %v5960 = vunpack.c.h.b16 %v4405
    %v5961 = vunpack.c.l.b16 %v4406
    %v5962 = vunpack.c.h.b16 %v4406
    %v5963 = vunpack.c.l.b16 %v4407
    %v5964 = vunpack.c.h.b16 %v4407
    %v5965 = vunpack.c.l.b16 %v4408
    %v5966 = vunpack.c.h.b16 %v4408
    %v5967 = vunpack.c.l.b16 %v4409
    %v5968 = vunpack.c.h.b16 %v4409
    %v5969 = vunpack.c.l.b16 %v4410
    %v5970 = vunpack.c.h.b16 %v4410
    %v5971 = vunpack.c.l.b16 %v4411
    %v5972 = vunpack.c.h.b16 %v4411
    %v5973 = vunpack.c.l.b16 %v4412
    %v5974 = vunpack.c.h.b16 %v4412
    %v5975 = vunpack.c.l.b16 %v4413
    %v5976 = vunpack.c.h.b16 %v4413
    %v5977 = vunpack.c.l.b16 %v4414
    %v5978 = vunpack.c.h.b16 %v4414
    %v5979 = vunpack.c.l.b16 %v4415
    %v5980 = vunpack.c.h.b16 %v4415
    %v5981 = vunpack.c.l.b16 %v4416
    %v5982 = vunpack.c.h.b16 %v4416
    %v5983 = vunpack.c.l.b16 %v4417
    %v5984 = vunpack.c.h.b16 %v4417
    %v5985 = vunpack.c.l.b16 %v4418
    %v5986 = vunpack.c.h.b16 %v4418
    %v5987 = vunpack.c.l.b16 %v4419
    %v5988 = vunpack.c.h.b16 %v4419
    %v5989 = vunpack.c.l.b16 %v4420
    %v5990 = vunpack.c.h.b16 %v4420
    %v5991 = vunpack.c.l.b16 %v4421
    %v5992 = vunpack.c.h.b16 %v4421
    %v5993 = vunpack.c.l.b16 %v4422
    %v5994 = vunpack.c.h.b16 %v4422
    %v5995 = vunpack.c.l.b16 %v4423
    %v5996 = vunpack.c.h.b16 %v4423
    %v5997 = vunpack.c.l.b16 %v4424
    %v5998 = vunpack.c.h.b16 %v4424
    %v5999 = vunpack.c.l.b16 %v4425
    %v6000 = vunpack.c.h.b16 %v4425
    %v6001 = vunpack.c.l.b16 %v4426
    %v6002 = vunpack.c.h.b16 %v4426
    %v6003 = vunpack.c.l.b16 %v4427
    %v6004 = vunpack.c.h.b16 %v4427
    %v6005 = vunpack.c.l.b16 %v4428
    %v6006 = vunpack.c.h.b16 %v4428
    %v6007 = vpack.c.b16 %v4991, %v4983
    %v6008 = vpack.c.b16 %v4992, %v4984
    %v6009 = vpack.c.b16 %v4993, %v4985
    %v6010 = vpack.c.b16 %v4994, %v4986
    %v6011 = vpack.c.b16 %v4995, %v4987
    %v6012 = vpack.c.b16 %v4996, %v4988
    %v6013 = vpack.c.b16 %v4997, %v4989
    %v6014 = vpack.c.b16 %v4998, %v4990
    %v6015 = vpack.c.b16 %v5007, %v4999
    %v6016 = vpack.c.b16 %v5008, %v5000
    %v6017 = vpack.c.b16 %v5009, %v5001
    %v6018 = vpack.c.b16 %v5010, %v5002
    %v6019 = vpack.c.b16 %v5011, %v5003
    %v6020 = vpack.c.b16 %v5012, %v5004
    %v6021 = vpack.c.b16 %v5013, %v5005
    %v6022 = vpack.c.b16 %v5014, %v5006
    %v6023 = vpack.c.b16 %v5023, %v5015
    %v6024 = vpack.c.b16 %v5024, %v5016
    %v6025 = vpack.c.b16 %v5025, %v5017
    %v6026 = vpack.c.b16 %v5026, %v5018
    %v6027 = vpack.c.b16 %v5027, %v5019
    %v6028 = vpack.c.b16 %v5028, %v5020
    %v6029 = vpack.c.b16 %v5029, %v5021
    %v6030 = vpack.c.b16 %v5030, %v5022
    %v6031 = vpack.c.b16 %v5039, %v5031
    %v6032 = vpack.c.b16 %v5040, %v5032
    %v6033 = vpack.c.b16 %v5041, %v5033
    %v6034 = vpack.c.b16 %v5042, %v5034
    %v6035 = vpack.c.b16 %v5043, %v5035
    %v6036 = vpack.c.b16 %v5044, %v5036
    %v6037 = vpack.c.b16 %v5045, %v5037
    %v6038 = vpack.c.b16 %v5046, %v5038
    %v6039 = vpack.c.b16 %v5055, %v5047
    %v6040 = vpack.c.b16 %v5056, %v5048
    %v6041 = vpack.c.b16 %v5057, %v5049
    %v6042 = vpack.c.b16 %v5058, %v5050
    %v6043 = vpack.c.b16 %v5059, %v5051
    %v6044 = vpack.c.b16 %v5060, %v5052
    %v6045 = vpack.c.b16 %v5061, %v5053
    %v6046 = vpack.c.b16 %v5062, %v5054
    %v6047 = vpack.c.b16 %v5071, %v5063
    %v6048 = vpack.c.b16 %v5072, %v5064
    %v6049 = vpack.c.b16 %v5073, %v5065
    %v6050 = vpack.c.b16 %v5074, %v5066
    %v6051 = vpack.c.b16 %v5075, %v5067
    %v6052 = vpack.c.b16 %v5076, %v5068
    %v6053 = vpack.c.b16 %v5077, %v5069
    %v6054 = vpack.c.b16 %v5078, %v5070
    %v6055 = vpack.c.b16 %v5087, %v5079
    %v6056 = vpack.c.b16 %v5088, %v5080
    %v6057 = vpack.c.b16 %v5089, %v5081
    %v6058 = vpack.c.b16 %v5090, %v5082
    %v6059 = vpack.c.b16 %v5091, %v5083
    %v6060 = vpack.c.b16 %v5092, %v5084
    %v6061 = vpack.c.b16 %v5093, %v5085
    %v6062 = vpack.c.b16 %v5094, %v5086
    %v6063 = vpack.c.b16 %v5103, %v5095
    %v6064 = vpack.c.b16 %v5104, %v5096
    %v6065 = vpack.c.b16 %v5105, %v5097
    %v6066 = vpack.c.b16 %v5106, %v5098
    %v6067 = vpack.c.b16 %v5107, %v5099
    %v6068 = vpack.c.b16 %v5108, %v5100
    %v6069 = vpack.c.b16 %v5109, %v5101
    %v6070 = vpack.c.b16 %v5110, %v5102
    %v6071 = vpack.c.b16 %v5119, %v5111
    %v6072 = vpack.c.b16 %v5120, %v5112
    %v6073 = vpack.c.b16 %v5121, %v5113
    %v6074 = vpack.c.b16 %v5122, %v5114
    %v6075 = vpack.c.b16 %v5123, %v5115
    %v6076 = vpack.c.b16 %v5124, %v5116
    %v6077 = vpack.c.b16 %v5125, %v5117
    %v6078 = vpack.c.b16 %v5126, %v5118
    %v6079 = vpack.c.b16 %v5135, %v5127
    %v6080 = vpack.c.b16 %v5136, %v5128
    %v6081 = vpack.c.b16 %v5137, %v5129
    %v6082 = vpack.c.b16 %v5138, %v5130
    %v6083 = vpack.c.b16 %v5139, %v5131
    %v6084 = vpack.c.b16 %v5140, %v5132
    %v6085 = vpack.c.b16 %v5141, %v5133
    %v6086 = vpack.c.b16 %v5142, %v5134
    %v6087 = vpack.c.b16 %v5151, %v5143
    %v6088 = vpack.c.b16 %v5152, %v5144
    %v6089 = vpack.c.b16 %v5153, %v5145
    %v6090 = vpack.c.b16 %v5154, %v5146
    %v6091 = vpack.c.b16 %v5155, %v5147
    %v6092 = vpack.c.b16 %v5156, %v5148
    %v6093 = vpack.c.b16 %v5157, %v5149
    %v6094 = vpack.c.b16 %v5158, %v5150
    %v6095 = vpack.c.b16 %v5167, %v5159
    %v6096 = vpack.c.b16 %v5168, %v5160
    %v6097 = vpack.c.b16 %v5169, %v5161
    %v6098 = vpack.c.b16 %v5170, %v5162
    %v6099 = vpack.c.b16 %v5171, %v5163
    %v6100 = vpack.c.b16 %v5172, %v5164
    %v6101 = vpack.c.b16 %v5173, %v5165
    %v6102 = vpack.c.b16 %v5174, %v5166
    %v6103 = vpack.c.b16 %v5183, %v5175
    %v6104 = vpack.c.b16 %v5184, %v5176
    %v6105 = vpack.c.b16 %v5185, %v5177
    %v6106 = vpack.c.b16 %v5186, %v5178
    %v6107 = vpack.c.b16 %v5187, %v5179
    %v6108 = vpack.c.b16 %v5188, %v5180
    %v6109 = vpack.c.b16 %v5189, %v5181
    %v6110 = vpack.c.b16 %v5190, %v5182
    %v6111 = vpack.c.b16 %v5199, %v5191
    %v6112 = vpack.c.b16 %v5200, %v5192
    %v6113 = vpack.c.b16 %v5201, %v5193
    %v6114 = vpack.c.b16 %v5202, %v5194
    %v6115 = vpack.c.b16 %v5203, %v5195
    %v6116 = vpack.c.b16 %v5204, %v5196
    %v6117 = vpack.c.b16 %v5205, %v5197
    %v6118 = vpack.c.b16 %v5206, %v5198
    %v6119 = vpack.c.b16 %v5215, %v5207
    %v6120 = vpack.c.b16 %v5216, %v5208
    %v6121 = vpack.c.b16 %v5217, %v5209
    %v6122 = vpack.c.b16 %v5218, %v5210
    %v6123 = vpack.c.b16 %v5219, %v5211
    %v6124 = vpack.c.b16 %v5220, %v5212
    %v6125 = vpack.c.b16 %v5221, %v5213
    %v6126 = vpack.c.b16 %v5222, %v5214
    %v6127 = vpack.c.b16 %v5231, %v5223
    %v6128 = vpack.c.b16 %v5232, %v5224
    %v6129 = vpack.c.b16 %v5233, %v5225
    %v6130 = vpack.c.b16 %v5234, %v5226
    %v6131 = vpack.c.b16 %v5235, %v5227
    %v6132 = vpack.c.b16 %v5236, %v5228
    %v6133 = vpack.c.b16 %v5237, %v5229
    %v6134 = vpack.c.b16 %v5238, %v5230
    %v6135 = vpack.c.b16 %v5247, %v5239
    %v6136 = vpack.c.b16 %v5248, %v5240
    %v6137 = vpack.c.b16 %v5249, %v5241
    %v6138 = vpack.c.b16 %v5250, %v5242
    %v6139 = vpack.c.b16 %v5251, %v5243
    %v6140 = vpack.c.b16 %v5252, %v5244
    %v6141 = vpack.c.b16 %v5253, %v5245
    %v6142 = vpack.c.b16 %v5254, %v5246
    %v6143 = vpack.c.b16 %v5263, %v5255
    %v6144 = vpack.c.b16 %v5264, %v5256
    %v6145 = vpack.c.b16 %v5265, %v5257
    %v6146 = vpack.c.b16 %v5266, %v5258
    %v6147 = vpack.c.b16 %v5267, %v5259
    %v6148 = vpack.c.b16 %v5268, %v5260
    %v6149 = vpack.c.b16 %v5269, %v5261
    %v6150 = vpack.c.b16 %v5270, %v5262
    %v6151 = vpack.c.b16 %v5279, %v5271
    %v6152 = vpack.c.b16 %v5280, %v5272
    %v6153 = vpack.c.b16 %v5281, %v5273
    %v6154 = vpack.c.b16 %v5282, %v5274
    %v6155 = vpack.c.b16 %v5283, %v5275
    %v6156 = vpack.c.b16 %v5284, %v5276
    %v6157 = vpack.c.b16 %v5285, %v5277
    %v6158 = vpack.c.b16 %v5286, %v5278
    %v6159 = vpack.c.b16 %v5295, %v5287
    %v6160 = vpack.c.b16 %v5296, %v5288
    %v6161 = vpack.c.b16 %v5297, %v5289
    %v6162 = vpack.c.b16 %v5298, %v5290
    %v6163 = vpack.c.b16 %v5299, %v5291
    %v6164 = vpack.c.b16 %v5300, %v5292
    %v6165 = vpack.c.b16 %v5301, %v5293
    %v6166 = vpack.c.b16 %v5302, %v5294
    %v6167 = vpack.c.b16 %v5311, %v5303
    %v6168 = vpack.c.b16 %v5312, %v5304
    %v6169 = vpack.c.b16 %v5313, %v5305
    %v6170 = vpack.c.b16 %v5314, %v5306
    %v6171 = vpack.c.b16 %v5315, %v5307
    %v6172 = vpack.c.b16 %v5316, %v5308
    %v6173 = vpack.c.b16 %v5317, %v5309
    %v6174 = vpack.c.b16 %v5318, %v5310
    %v6175 = vpack.c.b16 %v5327, %v5319
    %v6176 = vpack.c.b16 %v5328, %v5320
    %v6177 = vpack.c.b16 %v5329, %v5321
    %v6178 = vpack.c.b16 %v5330, %v5322
    %v6179 = vpack.c.b16 %v5331, %v5323
    %v6180 = vpack.c.b16 %v5332, %v5324
    %v6181 = vpack.c.b16 %v5333, %v5325
    %v6182 = vpack.c.b16 %v5334, %v5326
    %v6183 = vpack.c.b16 %v5343, %v5335
    %v6184 = vpack.c.b16 %v5344, %v5336
    %v6185 = vpack.c.b16 %v5345, %v5337
    %v6186 = vpack.c.b16 %v5346, %v5338
    %v6187 = vpack.c.b16 %v5347, %v5339
    %v6188 = vpack.c.b16 %v5348, %v5340
    %v6189 = vpack.c.b16 %v5349, %v5341
    %v6190 = vpack.c.b16 %v5350, %v5342
    %v6191 = vpack.c.b16 %v5359, %v5351
    %v6192 = vpack.c.b16 %v5360, %v5352
    %v6193 = vpack.c.b16 %v5361, %v5353
    %v6194 = vpack.c.b16 %v5362, %v5354
    %v6195 = vpack.c.b16 %v5363, %v5355
    %v6196 = vpack.c.b16 %v5364, %v5356
    %v6197 = vpack.c.b16 %v5365, %v5357
    %v6198 = vpack.c.b16 %v5366, %v5358
    %v6199 = vpack.c.b16 %v5375, %v5367
    %v6200 = vpack.c.b16 %v5376, %v5368
    %v6201 = vpack.c.b16 %v5377, %v5369
    %v6202 = vpack.c.b16 %v5378, %v5370
    %v6203 = vpack.c.b16 %v5379, %v5371
    %v6204 = vpack.c.b16 %v5380, %v5372
    %v6205 = vpack.c.b16 %v5381, %v5373
    %v6206 = vpack.c.b16 %v5382, %v5374
    %v6207 = vpack.c.b16 %v5391, %v5383
    %v6208 = vpack.c.b16 %v5392, %v5384
    %v6209 = vpack.c.b16 %v5393, %v5385
    %v6210 = vpack.c.b16 %v5394, %v5386
    %v6211 = vpack.c.b16 %v5395, %v5387
    %v6212 = vpack.c.b16 %v5396, %v5388
    %v6213 = vpack.c.b16 %v5397, %v5389
    %v6214 = vpack.c.b16 %v5398, %v5390
    %v6215 = vpack.c.b16 %v5407, %v5399
    %v6216 = vpack.c.b16 %v5408, %v5400
    %v6217 = vpack.c.b16 %v5409, %v5401
    %v6218 = vpack.c.b16 %v5410, %v5402
    %v6219 = vpack.c.b16 %v5411, %v5403
    %v6220 = vpack.c.b16 %v5412, %v5404
    %v6221 = vpack.c.b16 %v5413, %v5405
    %v6222 = vpack.c.b16 %v5414, %v5406
    %v6223 = vpack.c.b16 %v5423, %v5415
    %v6224 = vpack.c.b16 %v5424, %v5416
    %v6225 = vpack.c.b16 %v5425, %v5417
    %v6226 = vpack.c.b16 %v5426, %v5418
    %v6227 = vpack.c.b16 %v5427, %v5419
    %v6228 = vpack.c.b16 %v5428, %v5420
    %v6229 = vpack.c.b16 %v5429, %v5421
    %v6230 = vpack.c.b16 %v5430, %v5422
    %v6231 = vpack.c.b16 %v5439, %v5431
    %v6232 = vpack.c.b16 %v5440, %v5432
    %v6233 = vpack.c.b16 %v5441, %v5433
    %v6234 = vpack.c.b16 %v5442, %v5434
    %v6235 = vpack.c.b16 %v5443, %v5435
    %v6236 = vpack.c.b16 %v5444, %v5436
    %v6237 = vpack.c.b16 %v5445, %v5437
    %v6238 = vpack.c.b16 %v5446, %v5438
    %v6239 = vpack.c.b16 %v5455, %v5447
    %v6240 = vpack.c.b16 %v5456, %v5448
    %v6241 = vpack.c.b16 %v5457, %v5449
    %v6242 = vpack.c.b16 %v5458, %v5450
    %v6243 = vpack.c.b16 %v5459, %v5451
    %v6244 = vpack.c.b16 %v5460, %v5452
    %v6245 = vpack.c.b16 %v5461, %v5453
    %v6246 = vpack.c.b16 %v5462, %v5454
    %v6247 = vpack.c.b16 %v5471, %v5463
    %v6248 = vpack.c.b16 %v5472, %v5464
    %v6249 = vpack.c.b16 %v5473, %v5465
    %v6250 = vpack.c.b16 %v5474, %v5466
    %v6251 = vpack.c.b16 %v5475, %v5467
    %v6252 = vpack.c.b16 %v5476, %v5468
    %v6253 = vpack.c.b16 %v5477, %v5469
    %v6254 = vpack.c.b16 %v5478, %v5470
    %v6255 = vpack.c.b16 %v5487, %v5479
    %v6256 = vpack.c.b16 %v5488, %v5480
    %v6257 = vpack.c.b16 %v5489, %v5481
    %v6258 = vpack.c.b16 %v5490, %v5482
    %v6259 = vpack.c.b16 %v5491, %v5483
    %v6260 = vpack.c.b16 %v5492, %v5484
    %v6261 = vpack.c.b16 %v5493, %v5485
    %v6262 = vpack.c.b16 %v5494, %v5486
    %v6263 = vpack.c.b16 %v5503, %v5495
    %v6264 = vpack.c.b16 %v5504, %v5496
    %v6265 = vpack.c.b16 %v5505, %v5497
    %v6266 = vpack.c.b16 %v5506, %v5498
    %v6267 = vpack.c.b16 %v5507, %v5499
    %v6268 = vpack.c.b16 %v5508, %v5500
    %v6269 = vpack.c.b16 %v5509, %v5501
    %v6270 = vpack.c.b16 %v5510, %v5502
    %v6271 = vpack.c.b16 %v5519, %v5511
    %v6272 = vpack.c.b16 %v5520, %v5512
    %v6273 = vpack.c.b16 %v5521, %v5513
    %v6274 = vpack.c.b16 %v5522, %v5514
    %v6275 = vpack.c.b16 %v5523, %v5515
    %v6276 = vpack.c.b16 %v5524, %v5516
    %v6277 = vpack.c.b16 %v5525, %v5517
    %v6278 = vpack.c.b16 %v5526, %v5518
    %v6279 = vpack.c.b16 %v5535, %v5527
    %v6280 = vpack.c.b16 %v5536, %v5528
    %v6281 = vpack.c.b16 %v5537, %v5529
    %v6282 = vpack.c.b16 %v5538, %v5530
    %v6283 = vpack.c.b16 %v5539, %v5531
    %v6284 = vpack.c.b16 %v5540, %v5532
    %v6285 = vpack.c.b16 %v5541, %v5533
    %v6286 = vpack.c.b16 %v5542, %v5534
    %v6287 = vpack.c.b16 %v5551, %v5543
    %v6288 = vpack.c.b16 %v5552, %v5544
    %v6289 = vpack.c.b16 %v5553, %v5545
    %v6290 = vpack.c.b16 %v5554, %v5546
    %v6291 = vpack.c.b16 %v5555, %v5547
    %v6292 = vpack.c.b16 %v5556, %v5548
    %v6293 = vpack.c.b16 %v5557, %v5549
    %v6294 = vpack.c.b16 %v5558, %v5550
    %v6295 = vpack.c.b16 %v5567, %v5559
    %v6296 = vpack.c.b16 %v5568, %v5560
    %v6297 = vpack.c.b16 %v5569, %v5561
    %v6298 = vpack.c.b16 %v5570, %v5562
    %v6299 = vpack.c.b16 %v5571, %v5563
    %v6300 = vpack.c.b16 %v5572, %v5564
    %v6301 = vpack.c.b16 %v5573, %v5565
    %v6302 = vpack.c.b16 %v5574, %v5566
    %v6303 = vpack.c.b16 %v5583, %v5575
    %v6304 = vpack.c.b16 %v5584, %v5576
    %v6305 = vpack.c.b16 %v5585, %v5577
    %v6306 = vpack.c.b16 %v5586, %v5578
    %v6307 = vpack.c.b16 %v5587, %v5579
    %v6308 = vpack.c.b16 %v5588, %v5580
    %v6309 = vpack.c.b16 %v5589, %v5581
    %v6310 = vpack.c.b16 %v5590, %v5582
    %v6311 = vpack.c.b16 %v5599, %v5591
    %v6312 = vpack.c.b16 %v5600, %v5592
    %v6313 = vpack.c.b16 %v5601, %v5593
    %v6314 = vpack.c.b16 %v5602, %v5594
    %v6315 = vpack.c.b16 %v5603, %v5595
    %v6316 = vpack.c.b16 %v5604, %v5596
    %v6317 = vpack.c.b16 %v5605, %v5597
    %v6318 = vpack.c.b16 %v5606, %v5598
    %v6319 = vpack.c.b16 %v5615, %v5607
    %v6320 = vpack.c.b16 %v5616, %v5608
    %v6321 = vpack.c.b16 %v5617, %v5609
    %v6322 = vpack.c.b16 %v5618, %v5610
    %v6323 = vpack.c.b16 %v5619, %v5611
    %v6324 = vpack.c.b16 %v5620, %v5612
    %v6325 = vpack.c.b16 %v5621, %v5613
    %v6326 = vpack.c.b16 %v5622, %v5614
    %v6327 = vpack.c.b16 %v5631, %v5623
    %v6328 = vpack.c.b16 %v5632, %v5624
    %v6329 = vpack.c.b16 %v5633, %v5625
    %v6330 = vpack.c.b16 %v5634, %v5626
    %v6331 = vpack.c.b16 %v5635, %v5627
    %v6332 = vpack.c.b16 %v5636, %v5628
    %v6333 = vpack.c.b16 %v5637, %v5629
    %v6334 = vpack.c.b16 %v5638, %v5630
    %v6335 = vpack.c.b16 %v5647, %v5639
    %v6336 = vpack.c.b16 %v5648, %v5640
    %v6337 = vpack.c.b16 %v5649, %v5641
    %v6338 = vpack.c.b16 %v5650, %v5642
    %v6339 = vpack.c.b16 %v5651, %v5643
    %v6340 = vpack.c.b16 %v5652, %v5644
    %v6341 = vpack.c.b16 %v5653, %v5645
    %v6342 = vpack.c.b16 %v5654, %v5646
    %v6343 = vpack.c.b16 %v5663, %v5655
    %v6344 = vpack.c.b16 %v5664, %v5656
    %v6345 = vpack.c.b16 %v5665, %v5657
    %v6346 = vpack.c.b16 %v5666, %v5658
    %v6347 = vpack.c.b16 %v5667, %v5659
    %v6348 = vpack.c.b16 %v5668, %v5660
    %v6349 = vpack.c.b16 %v5669, %v5661
    %v6350 = vpack.c.b16 %v5670, %v5662
    %v6351 = vpack.c.b16 %v5679, %v5671
    %v6352 = vpack.c.b16 %v5680, %v5672
    %v6353 = vpack.c.b16 %v5681, %v5673
    %v6354 = vpack.c.b16 %v5682, %v5674
    %v6355 = vpack.c.b16 %v5683, %v5675
    %v6356 = vpack.c.b16 %v5684, %v5676
    %v6357 = vpack.c.b16 %v5685, %v5677
    %v6358 = vpack.c.b16 %v5686, %v5678
    %v6359 = vpack.c.b16 %v5695, %v5687
    %v6360 = vpack.c.b16 %v5696, %v5688
    %v6361 = vpack.c.b16 %v5697, %v5689
    %v6362 = vpack.c.b16 %v5698, %v5690
    %v6363 = vpack.c.b16 %v5699, %v5691
    %v6364 = vpack.c.b16 %v5700, %v5692
    %v6365 = vpack.c.b16 %v5701, %v5693
    %v6366 = vpack.c.b16 %v5702, %v5694
    %v6367 = vpack.c.b16 %v5711, %v5703
    %v6368 = vpack.c.b16 %v5712, %v5704
    %v6369 = vpack.c.b16 %v5713, %v5705
    %v6370 = vpack.c.b16 %v5714, %v5706
    %v6371 = vpack.c.b16 %v5715, %v5707
    %v6372 = vpack.c.b16 %v5716, %v5708
    %v6373 = vpack.c.b16 %v5717, %v5709
    %v6374 = vpack.c.b16 %v5718, %v5710
    %v6375 = vpack.c.b16 %v5727, %v5719
    %v6376 = vpack.c.b16 %v5728, %v5720
    %v6377 = vpack.c.b16 %v5729, %v5721
    %v6378 = vpack.c.b16 %v5730, %v5722
    %v6379 = vpack.c.b16 %v5731, %v5723
    %v6380 = vpack.c.b16 %v5732, %v5724
    %v6381 = vpack.c.b16 %v5733, %v5725
    %v6382 = vpack.c.b16 %v5734, %v5726
    %v6383 = vpack.c.b16 %v5743, %v5735
    %v6384 = vpack.c.b16 %v5744, %v5736
    %v6385 = vpack.c.b16 %v5745, %v5737
    %v6386 = vpack.c.b16 %v5746, %v5738
    %v6387 = vpack.c.b16 %v5747, %v5739
    %v6388 = vpack.c.b16 %v5748, %v5740
    %v6389 = vpack.c.b16 %v5749, %v5741
    %v6390 = vpack.c.b16 %v5750, %v5742
    %v6391 = vpack.c.b16 %v5759, %v5751
    %v6392 = vpack.c.b16 %v5760, %v5752
    %v6393 = vpack.c.b16 %v5761, %v5753
    %v6394 = vpack.c.b16 %v5762, %v5754
    %v6395 = vpack.c.b16 %v5763, %v5755
    %v6396 = vpack.c.b16 %v5764, %v5756
    %v6397 = vpack.c.b16 %v5765, %v5757
    %v6398 = vpack.c.b16 %v5766, %v5758
    %v6399 = vpack.c.b16 %v5775, %v5767
    %v6400 = vpack.c.b16 %v5776, %v5768
    %v6401 = vpack.c.b16 %v5777, %v5769
    %v6402 = vpack.c.b16 %v5778, %v5770
    %v6403 = vpack.c.b16 %v5779, %v5771
    %v6404 = vpack.c.b16 %v5780, %v5772
    %v6405 = vpack.c.b16 %v5781, %v5773
    %v6406 = vpack.c.b16 %v5782, %v5774
    %v6407 = vpack.c.b16 %v5791, %v5783
    %v6408 = vpack.c.b16 %v5792, %v5784
    %v6409 = vpack.c.b16 %v5793, %v5785
    %v6410 = vpack.c.b16 %v5794, %v5786
    %v6411 = vpack.c.b16 %v5795, %v5787
    %v6412 = vpack.c.b16 %v5796, %v5788
    %v6413 = vpack.c.b16 %v5797, %v5789
    %v6414 = vpack.c.b16 %v5798, %v5790
    %v6415 = vpack.c.b16 %v5807, %v5799
    %v6416 = vpack.c.b16 %v5808, %v5800
    %v6417 = vpack.c.b16 %v5809, %v5801
    %v6418 = vpack.c.b16 %v5810, %v5802
    %v6419 = vpack.c.b16 %v5811, %v5803
    %v6420 = vpack.c.b16 %v5812, %v5804
    %v6421 = vpack.c.b16 %v5813, %v5805
    %v6422 = vpack.c.b16 %v5814, %v5806
    %v6423 = vpack.c.b16 %v5823, %v5815
    %v6424 = vpack.c.b16 %v5824, %v5816
    %v6425 = vpack.c.b16 %v5825, %v5817
    %v6426 = vpack.c.b16 %v5826, %v5818
    %v6427 = vpack.c.b16 %v5827, %v5819
    %v6428 = vpack.c.b16 %v5828, %v5820
    %v6429 = vpack.c.b16 %v5829, %v5821
    %v6430 = vpack.c.b16 %v5830, %v5822
    %v6431 = vpack.c.b16 %v5839, %v5831
    %v6432 = vpack.c.b16 %v5840, %v5832
    %v6433 = vpack.c.b16 %v5841, %v5833
    %v6434 = vpack.c.b16 %v5842, %v5834
    %v6435 = vpack.c.b16 %v5843, %v5835
    %v6436 = vpack.c.b16 %v5844, %v5836
    %v6437 = vpack.c.b16 %v5845, %v5837
    %v6438 = vpack.c.b16 %v5846, %v5838
    %v6439 = vpack.c.b16 %v5855, %v5847
    %v6440 = vpack.c.b16 %v5856, %v5848
    %v6441 = vpack.c.b16 %v5857, %v5849
    %v6442 = vpack.c.b16 %v5858, %v5850
    %v6443 = vpack.c.b16 %v5859, %v5851
    %v6444 = vpack.c.b16 %v5860, %v5852
    %v6445 = vpack.c.b16 %v5861, %v5853
    %v6446 = vpack.c.b16 %v5862, %v5854
    %v6447 = vpack.c.b16 %v5871, %v5863
    %v6448 = vpack.c.b16 %v5872, %v5864
    %v6449 = vpack.c.b16 %v5873, %v5865
    %v6450 = vpack.c.b16 %v5874, %v5866
    %v6451 = vpack.c.b16 %v5875, %v5867
    %v6452 = vpack.c.b16 %v5876, %v5868
    %v6453 = vpack.c.b16 %v5877, %v5869
    %v6454 = vpack.c.b16 %v5878, %v5870
    %v6455 = vpack.c.b16 %v5887, %v5879
    %v6456 = vpack.c.b16 %v5888, %v5880
    %v6457 = vpack.c.b16 %v5889, %v5881
    %v6458 = vpack.c.b16 %v5890, %v5882
    %v6459 = vpack.c.b16 %v5891, %v5883
    %v6460 = vpack.c.b16 %v5892, %v5884
    %v6461 = vpack.c.b16 %v5893, %v5885
    %v6462 = vpack.c.b16 %v5894, %v5886
    %v6463 = vpack.c.b16 %v5903, %v5895
    %v6464 = vpack.c.b16 %v5904, %v5896
    %v6465 = vpack.c.b16 %v5905, %v5897
    %v6466 = vpack.c.b16 %v5906, %v5898
    %v6467 = vpack.c.b16 %v5907, %v5899
    %v6468 = vpack.c.b16 %v5908, %v5900
    %v6469 = vpack.c.b16 %v5909, %v5901
    %v6470 = vpack.c.b16 %v5910, %v5902
    %v6471 = vpack.c.b16 %v5919, %v5911
    %v6472 = vpack.c.b16 %v5920, %v5912
    %v6473 = vpack.c.b16 %v5921, %v5913
    %v6474 = vpack.c.b16 %v5922, %v5914
    %v6475 = vpack.c.b16 %v5923, %v5915
    %v6476 = vpack.c.b16 %v5924, %v5916
    %v6477 = vpack.c.b16 %v5925, %v5917
    %v6478 = vpack.c.b16 %v5926, %v5918
    %v6479 = vpack.c.b16 %v5935, %v5927
    %v6480 = vpack.c.b16 %v5936, %v5928
    %v6481 = vpack.c.b16 %v5937, %v5929
    %v6482 = vpack.c.b16 %v5938, %v5930
    %v6483 = vpack.c.b16 %v5939, %v5931
    %v6484 = vpack.c.b16 %v5940, %v5932
    %v6485 = vpack.c.b16 %v5941, %v5933
    %v6486 = vpack.c.b16 %v5942, %v5934
    %v6487 = vpack.c.b16 %v5951, %v5943
    %v6488 = vpack.c.b16 %v5952, %v5944
    %v6489 = vpack.c.b16 %v5953, %v5945
    %v6490 = vpack.c.b16 %v5954, %v5946
    %v6491 = vpack.c.b16 %v5955, %v5947
    %v6492 = vpack.c.b16 %v5956, %v5948
    %v6493 = vpack.c.b16 %v5957, %v5949
    %v6494 = vpack.c.b16 %v5958, %v5950
    %v6495 = vpack.c.b16 %v5967, %v5959
    %v6496 = vpack.c.b16 %v5968, %v5960
    %v6497 = vpack.c.b16 %v5969, %v5961
    %v6498 = vpack.c.b16 %v5970, %v5962
    %v6499 = vpack.c.b16 %v5971, %v5963
    %v6500 = vpack.c.b16 %v5972, %v5964
    %v6501 = vpack.c.b16 %v5973, %v5965
    %v6502 = vpack.c.b16 %v5974, %v5966
    %v6503 = vpack.c.b16 %v5983, %v5975
    %v6504 = vpack.c.b16 %v5984, %v5976
    %v6505 = vpack.c.b16 %v5985, %v5977
    %v6506 = vpack.c.b16 %v5986, %v5978
    %v6507 = vpack.c.b16 %v5987, %v5979
    %v6508 = vpack.c.b16 %v5988, %v5980
    %v6509 = vpack.c.b16 %v5989, %v5981
    %v6510 = vpack.c.b16 %v5990, %v5982
    %v6511 = vpack.c.b16 %v5999, %v5991
    %v6512 = vpack.c.b16 %v6000, %v5992
    %v6513 = vpack.c.b16 %v6001, %v5993
    %v6514 = vpack.c.b16 %v6002, %v5994
    %v6515 = vpack.c.b16 %v6003, %v5995
    %v6516 = vpack.c.b16 %v6004, %v5996
    %v6517 = vpack.c.b16 %v6005, %v5997
    %v6518 = vpack.c.b16 %v6006, %v5998
    %7031 = vmatprep.subr.bf16.mxu0 %v6008
    %7032 = vmatpush1.bf16.msra.mxu0 %v6007
    %7033 = vmatprep.subr.bf16.mxu0 %v6016
    %7034 = vmatpush1.bf16.msra.mxu0 %v6015
    %7035 = vmatprep.subr.bf16.mxu0 %v6024
    %7036 = vmatpush1.bf16.msra.mxu0 %v6023
    %7037 = vmatprep.subr.bf16.mxu0 %v6032
    %7038 = vmatpush1.bf16.msra.mxu0 %v6031
    %7039 = vmatprep.subr.bf16.mxu0 %v6040
    %7040 = vmatpush1.bf16.msra.mxu0 %v6039
    %7041 = vmatprep.subr.bf16.mxu0 %v6048
    %7042 = vmatpush1.bf16.msra.mxu0 %v6047
    %7043 = vmatprep.subr.bf16.mxu0 %v6056
    %7044 = vmatpush1.bf16.msra.mxu0 %v6055
    %7045 = vmatprep.subr.bf16.mxu0 %v6064
    %7046 = vmatpush1.bf16.msra.mxu0 %v6063
    %7047 = vmatprep.subr.bf16.mxu0 %v6072
    %7048 = vmatpush1.bf16.msra.mxu0 %v6071
    %7049 = vmatprep.subr.bf16.mxu0 %v6080
    %7050 = vmatpush1.bf16.msra.mxu0 %v6079
    %7051 = vmatprep.subr.bf16.mxu0 %v6088
    %7052 = vmatpush1.bf16.msra.mxu0 %v6087
    %7053 = vmatprep.subr.bf16.mxu0 %v6096
    %7054 = vmatpush1.bf16.msra.mxu0 %v6095
    %7055 = vmatprep.subr.bf16.mxu0 %v6104
    %7056 = vmatpush1.bf16.msra.mxu0 %v6103
    %7057 = vmatprep.subr.bf16.mxu0 %v6112
    %7058 = vmatpush1.bf16.msra.mxu0 %v6111
    %7059 = vmatprep.subr.bf16.mxu0 %v6120
    %7060 = vmatpush1.bf16.msra.mxu0 %v6119
    %7061 = vmatprep.subr.bf16.mxu0 %v6128
    %7062 = vmatpush1.bf16.msra.mxu0 %v6127
    %7063 = vmatprep.mubr.bf16.mxu0 %v3910
    %7064 = vmatmul.mubr.bf16.gmra.mrb[0].mxu0 %v3909
    %v7065 = vpop.f32.mrb[0].mxu0
    %v7066 = vadd.f32 %v4434, %v7065
    %v7067 = vpop.f32.mrb[0].mxu0
    %v7068 = vadd.f32 %v4438, %v7067
    %v7069 = vpop.f32.mrb[0].mxu0
    %v7070 = vpop.f32.mrb[0].mxu0
    %7071 = vdwg.mxu0
    %7072 = vmatprep.subr.bf16.mxu0 %v6136
    %7073 = vmatpush1.bf16.msra.mxu0 %v6135
    %7074 = vmatprep.subr.bf16.mxu0 %v6144
    %7075 = vmatpush1.bf16.msra.mxu0 %v6143
    %7076 = vmatprep.subr.bf16.mxu0 %v6152
    %7077 = vmatpush1.bf16.msra.mxu0 %v6151
    %7078 = vmatprep.subr.bf16.mxu0 %v6160
    %7079 = vmatpush1.bf16.msra.mxu0 %v6159
    %7080 = vmatprep.subr.bf16.mxu0 %v6168
    %7081 = vmatpush1.bf16.msra.mxu0 %v6167
    %7082 = vmatprep.subr.bf16.mxu0 %v6176
    %7083 = vmatpush1.bf16.msra.mxu0 %v6175
    %7084 = vmatprep.subr.bf16.mxu0 %v6184
    %7085 = vmatpush1.bf16.msra.mxu0 %v6183
    %7086 = vmatprep.subr.bf16.mxu0 %v6192
    %7087 = vmatpush1.bf16.msra.mxu0 %v6191
    %7088 = vmatprep.subr.bf16.mxu0 %v6200
    %7089 = vmatpush1.bf16.msra.mxu0 %v6199
    %7090 = vmatprep.subr.bf16.mxu0 %v6208
    %7091 = vmatpush1.bf16.msra.mxu0 %v6207
    %7092 = vmatprep.subr.bf16.mxu0 %v6216
    %7093 = vmatpush1.bf16.msra.mxu0 %v6215
    %7094 = vmatprep.subr.bf16.mxu0 %v6224
    %7095 = vmatpush1.bf16.msra.mxu0 %v6223
    %7096 = vmatprep.subr.bf16.mxu0 %v6232
    %7097 = vmatpush1.bf16.msra.mxu0 %v6231
    %7098 = vmatprep.subr.bf16.mxu0 %v6240
    %7099 = vmatpush1.bf16.msra.mxu0 %v6239
    %7100 = vmatprep.subr.bf16.mxu0 %v6248
    %7101 = vmatpush1.bf16.msra.mxu0 %v6247
    %7102 = vmatprep.subr.bf16.mxu0 %v6256
    %7103 = vmatpush1.bf16.msra.mxu0 %v6255
    %7104 = vmatprep.mubr.bf16.mxu0 %v3912
    %7105 = vmatmul.mubr.bf16.gmra.mrb[0].mxu0 %v3911
    %v7106 = vpop.f32.mrb[0].mxu0
    %v7107 = vadd.f32 %v7066, %v7106
    %v7108 = vpop.f32.mrb[0].mxu0
    %v7109 = vadd.f32 %v7068, %v7108
    %v7110 = vpop.f32.mrb[0].mxu0
    %v7111 = vpop.f32.mrb[0].mxu0
    %7112 = vdwg.mxu0
    %7113 = vmatprep.subr.bf16.mxu0 %v6264
    %7114 = vmatpush1.bf16.msra.mxu0 %v6263
    %7115 = vmatprep.subr.bf16.mxu0 %v6272
    %7116 = vmatpush1.bf16.msra.mxu0 %v6271
    %7117 = vmatprep.subr.bf16.mxu0 %v6280
    %7118 = vmatpush1.bf16.msra.mxu0 %v6279
    %7119 = vmatprep.subr.bf16.mxu0 %v6288
    %7120 = vmatpush1.bf16.msra.mxu0 %v6287
    %7121 = vmatprep.subr.bf16.mxu0 %v6296
    %7122 = vmatpush1.bf16.msra.mxu0 %v6295
    %7123 = vmatprep.subr.bf16.mxu0 %v6304
    %7124 = vmatpush1.bf16.msra.mxu0 %v6303
    %7125 = vmatprep.subr.bf16.mxu0 %v6312
    %7126 = vmatpush1.bf16.msra.mxu0 %v6311
    %7127 = vmatprep.subr.bf16.mxu0 %v6320
    %7128 = vmatpush1.bf16.msra.mxu0 %v6319
    %7129 = vmatprep.subr.bf16.mxu0 %v6328
    %7130 = vmatpush1.bf16.msra.mxu0 %v6327
    %7131 = vmatprep.subr.bf16.mxu0 %v6336
    %7132 = vmatpush1.bf16.msra.mxu0 %v6335
    %7133 = vmatprep.subr.bf16.mxu0 %v6344
    %7134 = vmatpush1.bf16.msra.mxu0 %v6343
    %7135 = vmatprep.subr.bf16.mxu0 %v6352
    %7136 = vmatpush1.bf16.msra.mxu0 %v6351
    %7137 = vmatprep.subr.bf16.mxu0 %v6360
    %7138 = vmatpush1.bf16.msra.mxu0 %v6359
    %7139 = vmatprep.subr.bf16.mxu0 %v6368
    %7140 = vmatpush1.bf16.msra.mxu0 %v6367
    %7141 = vmatprep.subr.bf16.mxu0 %v6376
    %7142 = vmatpush1.bf16.msra.mxu0 %v6375
    %7143 = vmatprep.subr.bf16.mxu0 %v6384
    %7144 = vmatpush1.bf16.msra.mxu0 %v6383
    %7145 = vmatprep.mubr.bf16.mxu0 %v3914
    %7146 = vmatmul.mubr.bf16.gmra.mrb[0].mxu0 %v3913
    %v7147 = vpop.f32.mrb[0].mxu0
    %v7148 = vadd.f32 %v7107, %v7147
    %v7149 = vpop.f32.mrb[0].mxu0
    %v7150 = vadd.f32 %v7109, %v7149
    %v7151 = vpop.f32.mrb[0].mxu0
    %v7152 = vpop.f32.mrb[0].mxu0
    %7153 = vdwg.mxu0
    %7154 = vmatprep.subr.bf16.mxu0 %v6392
    %7155 = vmatpush1.bf16.msra.mxu0 %v6391
    %7156 = vmatprep.subr.bf16.mxu0 %v6400
    %7157 = vmatpush1.bf16.msra.mxu0 %v6399
    %7158 = vmatprep.subr.bf16.mxu0 %v6408
    %7159 = vmatpush1.bf16.msra.mxu0 %v6407
    %7160 = vmatprep.subr.bf16.mxu0 %v6416
    %7161 = vmatpush1.bf16.msra.mxu0 %v6415
    %7162 = vmatprep.subr.bf16.mxu0 %v6424
    %7163 = vmatpush1.bf16.msra.mxu0 %v6423
    %7164 = vmatprep.subr.bf16.mxu0 %v6432
    %7165 = vmatpush1.bf16.msra.mxu0 %v6431
    %7166 = vmatprep.subr.bf16.mxu0 %v6440
    %7167 = vmatpush1.bf16.msra.mxu0 %v6439
    %7168 = vmatprep.subr.bf16.mxu0 %v6448
    %7169 = vmatpush1.bf16.msra.mxu0 %v6447
    %7170 = vmatprep.subr.bf16.mxu0 %v6456
    %7171 = vmatpush1.bf16.msra.mxu0 %v6455
    %7172 = vmatprep.subr.bf16.mxu0 %v6464
    %7173 = vmatpush1.bf16.msra.mxu0 %v6463
    %7174 = vmatprep.subr.bf16.mxu0 %v6472
    %7175 = vmatpush1.bf16.msra.mxu0 %v6471
    %7176 = vmatprep.subr.bf16.mxu0 %v6480
    %7177 = vmatpush1.bf16.msra.mxu0 %v6479
    %7178 = vmatprep.subr.bf16.mxu0 %v6488
    %7179 = vmatpush1.bf16.msra.mxu0 %v6487
    %7180 = vmatprep.subr.bf16.mxu0 %v6496
    %7181 = vmatpush1.bf16.msra.mxu0 %v6495
    %7182 = vmatprep.subr.bf16.mxu0 %v6504
    %7183 = vmatpush1.bf16.msra.mxu0 %v6503
    %7184 = vmatprep.subr.bf16.mxu0 %v6512
    %7185 = vmatpush1.bf16.msra.mxu0 %v6511
    %7186 = vmatprep.mubr.bf16.mxu0 %v3916
    %7187 = vmatmul.mubr.bf16.gmra.mrb[0].mxu0 %v3915
    %v7188 = vpop.f32.mrb[0].mxu0
    %v7189 = vadd.f32 %v7148, %v7188
    %v7190 = vpop.f32.mrb[0].mxu0
    %v7191 = vadd.f32 %v7150, %v7190
    %v7192 = vpop.f32.mrb[0].mxu0
    %v7193 = vpop.f32.mrb[0].mxu0
    %7194 = vdwg.mxu0
    %7195 = vmatprep.subr.bf16.mxu0 %v6010
    %7196 = vmatpush1.bf16.msra.mxu0 %v6009
    %7197 = vmatprep.subr.bf16.mxu0 %v6018
    %7198 = vmatpush1.bf16.msra.mxu0 %v6017
    %7199 = vmatprep.subr.bf16.mxu0 %v6026
    %7200 = vmatpush1.bf16.msra.mxu0 %v6025
    %7201 = vmatprep.subr.bf16.mxu0 %v6034
    %7202 = vmatpush1.bf16.msra.mxu0 %v6033
    %7203 = vmatprep.subr.bf16.mxu0 %v6042
    %7204 = vmatpush1.bf16.msra.mxu0 %v6041
    %7205 = vmatprep.subr.bf16.mxu0 %v6050
    %7206 = vmatpush1.bf16.msra.mxu0 %v6049
    %7207 = vmatprep.subr.bf16.mxu0 %v6058
    %7208 = vmatpush1.bf16.msra.mxu0 %v6057
    %7209 = vmatprep.subr.bf16.mxu0 %v6066
    %7210 = vmatpush1.bf16.msra.mxu0 %v6065
    %7211 = vmatprep.subr.bf16.mxu0 %v6074
    %7212 = vmatpush1.bf16.msra.mxu0 %v6073
    %7213 = vmatprep.subr.bf16.mxu0 %v6082
    %7214 = vmatpush1.bf16.msra.mxu0 %v6081
    %7215 = vmatprep.subr.bf16.mxu0 %v6090
    %7216 = vmatpush1.bf16.msra.mxu0 %v6089
    %7217 = vmatprep.subr.bf16.mxu0 %v6098
    %7218 = vmatpush1.bf16.msra.mxu0 %v6097
    %7219 = vmatprep.subr.bf16.mxu0 %v6106
    %7220 = vmatpush1.bf16.msra.mxu0 %v6105
    %7221 = vmatprep.subr.bf16.mxu0 %v6114
    %7222 = vmatpush1.bf16.msra.mxu0 %v6113
    %7223 = vmatprep.subr.bf16.mxu0 %v6122
    %7224 = vmatpush1.bf16.msra.mxu0 %v6121
    %7225 = vmatprep.subr.bf16.mxu0 %v6130
    %7226 = vmatpush1.bf16.msra.mxu0 %v6129
    %7227 = vmatprep.mubr.bf16.mxu0 %v3910
    %7228 = vmatmul.mubr.bf16.gmra.mrb[0].mxu0 %v3909
    %v7229 = vpop.f32.mrb[0].mxu0
    %v7230 = vadd.f32 %v4442, %v7229
    %v7231 = vpop.f32.mrb[0].mxu0
    %v7232 = vadd.f32 %v4446, %v7231
    %v7233 = vpop.f32.mrb[0].mxu0
    %v7234 = vpop.f32.mrb[0].mxu0
    %7235 = vdwg.mxu0
    %7236 = vmatprep.subr.bf16.mxu0 %v6138
    %7237 = vmatpush1.bf16.msra.mxu0 %v6137
    %7238 = vmatprep.subr.bf16.mxu0 %v6146
    %7239 = vmatpush1.bf16.msra.mxu0 %v6145
    %7240 = vmatprep.subr.bf16.mxu0 %v6154
    %7241 = vmatpush1.bf16.msra.mxu0 %v6153
    %7242 = vmatprep.subr.bf16.mxu0 %v6162
    %7243 = vmatpush1.bf16.msra.mxu0 %v6161
    %7244 = vmatprep.subr.bf16.mxu0 %v6170
    %7245 = vmatpush1.bf16.msra.mxu0 %v6169
    %7246 = vmatprep.subr.bf16.mxu0 %v6178
    %7247 = vmatpush1.bf16.msra.mxu0 %v6177
    %7248 = vmatprep.subr.bf16.mxu0 %v6186
    %7249 = vmatpush1.bf16.msra.mxu0 %v6185
    %7250 = vmatprep.subr.bf16.mxu0 %v6194
    %7251 = vmatpush1.bf16.msra.mxu0 %v6193
    %7252 = vmatprep.subr.bf16.mxu0 %v6202
    %7253 = vmatpush1.bf16.msra.mxu0 %v6201
    %7254 = vmatprep.subr.bf16.mxu0 %v6210
    %7255 = vmatpush1.bf16.msra.mxu0 %v6209
    %7256 = vmatprep.subr.bf16.mxu0 %v6218
    %7257 = vmatpush1.bf16.msra.mxu0 %v6217
    %7258 = vmatprep.subr.bf16.mxu0 %v6226
    %7259 = vmatpush1.bf16.msra.mxu0 %v6225
    %7260 = vmatprep.subr.bf16.mxu0 %v6234
    %7261 = vmatpush1.bf16.msra.mxu0 %v6233
    %7262 = vmatprep.subr.bf16.mxu0 %v6242
    %7263 = vmatpush1.bf16.msra.mxu0 %v6241
    %7264 = vmatprep.subr.bf16.mxu0 %v6250
    %7265 = vmatpush1.bf16.msra.mxu0 %v6249
    %7266 = vmatprep.subr.bf16.mxu0 %v6258
    %7267 = vmatpush1.bf16.msra.mxu0 %v6257
    %7268 = vmatprep.mubr.bf16.mxu0 %v3912
    %7269 = vmatmul.mubr.bf16.gmra.mrb[0].mxu0 %v3911
    %v7270 = vpop.f32.mrb[0].mxu0
    %v7271 = vadd.f32 %v7230, %v7270
    %v7272 = vpop.f32.mrb[0].mxu0
    %v7273 = vadd.f32 %v7232, %v7272
    %v7274 = vpop.f32.mrb[0].mxu0
    %v7275 = vpop.f32.mrb[0].mxu0
    %7276 = vdwg.mxu0
    %7277 = vmatprep.subr.bf16.mxu0 %v6266
    %7278 = vmatpush1.bf16.msra.mxu0 %v6265
    %7279 = vmatprep.subr.bf16.mxu0 %v6274
    %7280 = vmatpush1.bf16.msra.mxu0 %v6273
    %7281 = vmatprep.subr.bf16.mxu0 %v6282
    %7282 = vmatpush1.bf16.msra.mxu0 %v6281
    %7283 = vmatprep.subr.bf16.mxu0 %v6290
    %7284 = vmatpush1.bf16.msra.mxu0 %v6289
    %7285 = vmatprep.subr.bf16.mxu0 %v6298
    %7286 = vmatpush1.bf16.msra.mxu0 %v6297
    %7287 = vmatprep.subr.bf16.mxu0 %v6306
    %7288 = vmatpush1.bf16.msra.mxu0 %v6305
    %7289 = vmatprep.subr.bf16.mxu0 %v6314
    %7290 = vmatpush1.bf16.msra.mxu0 %v6313
    %7291 = vmatprep.subr.bf16.mxu0 %v6322
    %7292 = vmatpush1.bf16.msra.mxu0 %v6321
    %7293 = vmatprep.subr.bf16.mxu0 %v6330
    %7294 = vmatpush1.bf16.msra.mxu0 %v6329
    %7295 = vmatprep.subr.bf16.mxu0 %v6338
    %7296 = vmatpush1.bf16.msra.mxu0 %v6337
    %7297 = vmatprep.subr.bf16.mxu0 %v6346
    %7298 = vmatpush1.bf16.msra.mxu0 %v6345
    %7299 = vmatprep.subr.bf16.mxu0 %v6354
    %7300 = vmatpush1.bf16.msra.mxu0 %v6353
    %7301 = vmatprep.subr.bf16.mxu0 %v6362
    %7302 = vmatpush1.bf16.msra.mxu0 %v6361
    %7303 = vmatprep.subr.bf16.mxu0 %v6370
    %7304 = vmatpush1.bf16.msra.mxu0 %v6369
    %7305 = vmatprep.subr.bf16.mxu0 %v6378
    %7306 = vmatpush1.bf16.msra.mxu0 %v6377
    %7307 = vmatprep.subr.bf16.mxu0 %v6386
    %7308 = vmatpush1.bf16.msra.mxu0 %v6385
    %7309 = vmatprep.mubr.bf16.mxu0 %v3914
    %7310 = vmatmul.mubr.bf16.gmra.mrb[0].mxu0 %v3913
    %v7311 = vpop.f32.mrb[0].mxu0
    %v7312 = vadd.f32 %v7271, %v7311
    %v7313 = vpop.f32.mrb[0].mxu0
    %v7314 = vadd.f32 %v7273, %v7313
    %v7315 = vpop.f32.mrb[0].mxu0
    %v7316 = vpop.f32.mrb[0].mxu0
    %7317 = vdwg.mxu0
    %7318 = vmatprep.subr.bf16.mxu0 %v6394
    %7319 = vmatpush1.bf16.msra.mxu0 %v6393
    %7320 = vmatprep.subr.bf16.mxu0 %v6402
    %7321 = vmatpush1.bf16.msra.mxu0 %v6401
    %7322 = vmatprep.subr.bf16.mxu0 %v6410
    %7323 = vmatpush1.bf16.msra.mxu0 %v6409
    %7324 = vmatprep.subr.bf16.mxu0 %v6418
    %7325 = vmatpush1.bf16.msra.mxu0 %v6417
    %7326 = vmatprep.subr.bf16.mxu0 %v6426
    %7327 = vmatpush1.bf16.msra.mxu0 %v6425
    %7328 = vmatprep.subr.bf16.mxu0 %v6434
    %7329 = vmatpush1.bf16.msra.mxu0 %v6433
    %7330 = vmatprep.subr.bf16.mxu0 %v6442
    %7331 = vmatpush1.bf16.msra.mxu0 %v6441
    %7332 = vmatprep.subr.bf16.mxu0 %v6450
    %7333 = vmatpush1.bf16.msra.mxu0 %v6449
    %7334 = vmatprep.subr.bf16.mxu0 %v6458
    %7335 = vmatpush1.bf16.msra.mxu0 %v6457
    %7336 = vmatprep.subr.bf16.mxu0 %v6466
    %7337 = vmatpush1.bf16.msra.mxu0 %v6465
    %7338 = vmatprep.subr.bf16.mxu0 %v6474
    %7339 = vmatpush1.bf16.msra.mxu0 %v6473
    %7340 = vmatprep.subr.bf16.mxu0 %v6482
    %7341 = vmatpush1.bf16.msra.mxu0 %v6481
    %7342 = vmatprep.subr.bf16.mxu0 %v6490
    %7343 = vmatpush1.bf16.msra.mxu0 %v6489
    %7344 = vmatprep.subr.bf16.mxu0 %v6498
    %7345 = vmatpush1.bf16.msra.mxu0 %v6497
    %7346 = vmatprep.subr.bf16.mxu0 %v6506
    %7347 = vmatpush1.bf16.msra.mxu0 %v6505
    %7348 = vmatprep.subr.bf16.mxu0 %v6514
    %7349 = vmatpush1.bf16.msra.mxu0 %v6513
    %7350 = vmatprep.mubr.bf16.mxu0 %v3916
    %7351 = vmatmul.mubr.bf16.gmra.mrb[0].mxu0 %v3915
    %v7352 = vpop.f32.mrb[0].mxu0
    %v7353 = vadd.f32 %v7312, %v7352
    %v7354 = vpop.f32.mrb[0].mxu0
    %v7355 = vadd.f32 %v7314, %v7354
    %v7356 = vpop.f32.mrb[0].mxu0
    %v7357 = vpop.f32.mrb[0].mxu0
    %7358 = vdwg.mxu0
    %7359 = vmatprep.subr.bf16.mxu0 %v6012
    %7360 = vmatpush1.bf16.msra.mxu0 %v6011
    %7361 = vmatprep.subr.bf16.mxu0 %v6020
    %7362 = vmatpush1.bf16.msra.mxu0 %v6019
    %7363 = vmatprep.subr.bf16.mxu0 %v6028
    %7364 = vmatpush1.bf16.msra.mxu0 %v6027
    %7365 = vmatprep.subr.bf16.mxu0 %v6036
    %7366 = vmatpush1.bf16.msra.mxu0 %v6035
    %7367 = vmatprep.subr.bf16.mxu0 %v6044
    %7368 = vmatpush1.bf16.msra.mxu0 %v6043
    %7369 = vmatprep.subr.bf16.mxu0 %v6052
    %7370 = vmatpush1.bf16.msra.mxu0 %v6051
    %7371 = vmatprep.subr.bf16.mxu0 %v6060
    %7372 = vmatpush1.bf16.msra.mxu0 %v6059
    %7373 = vmatprep.subr.bf16.mxu0 %v6068
    %7374 = vmatpush1.bf16.msra.mxu0 %v6067
    %7375 = vmatprep.subr.bf16.mxu0 %v6076
    %7376 = vmatpush1.bf16.msra.mxu0 %v6075
    %7377 = vmatprep.subr.bf16.mxu0 %v6084
    %7378 = vmatpush1.bf16.msra.mxu0 %v6083
    %7379 = vmatprep.subr.bf16.mxu0 %v6092
    %7380 = vmatpush1.bf16.msra.mxu0 %v6091
    %7381 = vmatprep.subr.bf16.mxu0 %v6100
    %7382 = vmatpush1.bf16.msra.mxu0 %v6099
    %7383 = vmatprep.subr.bf16.mxu0 %v6108
    %7384 = vmatpush1.bf16.msra.mxu0 %v6107
    %7385 = vmatprep.subr.bf16.mxu0 %v6116
    %7386 = vmatpush1.bf16.msra.mxu0 %v6115
    %7387 = vmatprep.subr.bf16.mxu0 %v6124
    %7388 = vmatpush1.bf16.msra.mxu0 %v6123
    %7389 = vmatprep.subr.bf16.mxu0 %v6132
    %7390 = vmatpush1.bf16.msra.mxu0 %v6131
    %7391 = vmatprep.mubr.bf16.mxu0 %v3910
    %7392 = vmatmul.mubr.bf16.gmra.mrb[0].mxu0 %v3909
    %v7393 = vpop.f32.mrb[0].mxu0
    %v7394 = vadd.f32 %v4450, %v7393
    %v7395 = vpop.f32.mrb[0].mxu0
    %v7396 = vadd.f32 %v4454, %v7395
    %v7397 = vpop.f32.mrb[0].mxu0
    %v7398 = vpop.f32.mrb[0].mxu0
    %7399 = vdwg.mxu0
    %7400 = vmatprep.subr.bf16.mxu0 %v6140
    %7401 = vmatpush1.bf16.msra.mxu0 %v6139
    %7402 = vmatprep.subr.bf16.mxu0 %v6148
    %7403 = vmatpush1.bf16.msra.mxu0 %v6147
    %7404 = vmatprep.subr.bf16.mxu0 %v6156
    %7405 = vmatpush1.bf16.msra.mxu0 %v6155
    %7406 = vmatprep.subr.bf16.mxu0 %v6164
    %7407 = vmatpush1.bf16.msra.mxu0 %v6163
    %7408 = vmatprep.subr.bf16.mxu0 %v6172
    %7409 = vmatpush1.bf16.msra.mxu0 %v6171
    %7410 = vmatprep.subr.bf16.mxu0 %v6180
    %7411 = vmatpush1.bf16.msra.mxu0 %v6179
    %7412 = vmatprep.subr.bf16.mxu0 %v6188
    %7413 = vmatpush1.bf16.msra.mxu0 %v6187
    %7414 = vmatprep.subr.bf16.mxu0 %v6196
    %7415 = vmatpush1.bf16.msra.mxu0 %v6195
    %7416 = vmatprep.subr.bf16.mxu0 %v6204
    %7417 = vmatpush1.bf16.msra.mxu0 %v6203
    %7418 = vmatprep.subr.bf16.mxu0 %v6212
    %7419 = vmatpush1.bf16.msra.mxu0 %v6211
    %7420 = vmatprep.subr.bf16.mxu0 %v6220
    %7421 = vmatpush1.bf16.msra.mxu0 %v6219
    %7422 = vmatprep.subr.bf16.mxu0 %v6228
    %7423 = vmatpush1.bf16.msra.mxu0 %v6227
    %7424 = vmatprep.subr.bf16.mxu0 %v6236
    %7425 = vmatpush1.bf16.msra.mxu0 %v6235
    %7426 = vmatprep.subr.bf16.mxu0 %v6244
    %7427 = vmatpush1.bf16.msra.mxu0 %v6243
    %7428 = vmatprep.subr.bf16.mxu0 %v6252
    %7429 = vmatpush1.bf16.msra.mxu0 %v6251
    %7430 = vmatprep.subr.bf16.mxu0 %v6260
    %7431 = vmatpush1.bf16.msra.mxu0 %v6259
    %7432 = vmatprep.mubr.bf16.mxu0 %v3912
    %7433 = vmatmul.mubr.bf16.gmra.mrb[0].mxu0 %v3911
    %v7434 = vpop.f32.mrb[0].mxu0
    %v7435 = vadd.f32 %v7394, %v7434
    %v7436 = vpop.f32.mrb[0].mxu0
    %v7437 = vadd.f32 %v7396, %v7436
    %v7438 = vpop.f32.mrb[0].mxu0
    %v7439 = vpop.f32.mrb[0].mxu0
    %7440 = vdwg.mxu0
    %7441 = vmatprep.subr.bf16.mxu0 %v6268
    %7442 = vmatpush1.bf16.msra.mxu0 %v6267
    %7443 = vmatprep.subr.bf16.mxu0 %v6276
    %7444 = vmatpush1.bf16.msra.mxu0 %v6275
    %7445 = vmatprep.subr.bf16.mxu0 %v6284
    %7446 = vmatpush1.bf16.msra.mxu0 %v6283
    %7447 = vmatprep.subr.bf16.mxu0 %v6292
    %7448 = vmatpush1.bf16.msra.mxu0 %v6291
    %7449 = vmatprep.subr.bf16.mxu0 %v6300
    %7450 = vmatpush1.bf16.msra.mxu0 %v6299
    %7451 = vmatprep.subr.bf16.mxu0 %v6308
    %7452 = vmatpush1.bf16.msra.mxu0 %v6307
    %7453 = vmatprep.subr.bf16.mxu0 %v6316
    %7454 = vmatpush1.bf16.msra.mxu0 %v6315
    %7455 = vmatprep.subr.bf16.mxu0 %v6324
    %7456 = vmatpush1.bf16.msra.mxu0 %v6323
    %7457 = vmatprep.subr.bf16.mxu0 %v6332
    %7458 = vmatpush1.bf16.msra.mxu0 %v6331
    %7459 = vmatprep.subr.bf16.mxu0 %v6340
    %7460 = vmatpush1.bf16.msra.mxu0 %v6339
    %7461 = vmatprep.subr.bf16.mxu0 %v6348
    %7462 = vmatpush1.bf16.msra.mxu0 %v6347
    %7463 = vmatprep.subr.bf16.mxu0 %v6356
    %7464 = vmatpush1.bf16.msra.mxu0 %v6355
    %7465 = vmatprep.subr.bf16.mxu0 %v6364
    %7466 = vmatpush1.bf16.msra.mxu0 %v6363
    %7467 = vmatprep.subr.bf16.mxu0 %v6372
    %7468 = vmatpush1.bf16.msra.mxu0 %v6371
    %7469 = vmatprep.subr.bf16.mxu0 %v6380
    %7470 = vmatpush1.bf16.msra.mxu0 %v6379
    %7471 = vmatprep.subr.bf16.mxu0 %v6388
    %7472 = vmatpush1.bf16.msra.mxu0 %v6387
    %7473 = vmatprep.mubr.bf16.mxu0 %v3914
    %7474 = vmatmul.mubr.bf16.gmra.mrb[0].mxu0 %v3913
    %v7475 = vpop.f32.mrb[0].mxu0
    %v7476 = vadd.f32 %v7435, %v7475
    %v7477 = vpop.f32.mrb[0].mxu0
    %v7478 = vadd.f32 %v7437, %v7477
    %v7479 = vpop.f32.mrb[0].mxu0
    %v7480 = vpop.f32.mrb[0].mxu0
    %7481 = vdwg.mxu0
    %7482 = vmatprep.subr.bf16.mxu0 %v6396
    %7483 = vmatpush1.bf16.msra.mxu0 %v6395
    %7484 = vmatprep.subr.bf16.mxu0 %v6404
    %7485 = vmatpush1.bf16.msra.mxu0 %v6403
    %7486 = vmatprep.subr.bf16.mxu0 %v6412
    %7487 = vmatpush1.bf16.msra.mxu0 %v6411
    %7488 = vmatprep.subr.bf16.mxu0 %v6420
    %7489 = vmatpush1.bf16.msra.mxu0 %v6419
    %7490 = vmatprep.subr.bf16.mxu0 %v6428
    %7491 = vmatpush1.bf16.msra.mxu0 %v6427
    %7492 = vmatprep.subr.bf16.mxu0 %v6436
    %7493 = vmatpush1.bf16.msra.mxu0 %v6435
    %7494 = vmatprep.subr.bf16.mxu0 %v6444
    %7495 = vmatpush1.bf16.msra.mxu0 %v6443
    %7496 = vmatprep.subr.bf16.mxu0 %v6452
    %7497 = vmatpush1.bf16.msra.mxu0 %v6451
    %7498 = vmatprep.subr.bf16.mxu0 %v6460
    %7499 = vmatpush1.bf16.msra.mxu0 %v6459
    %7500 = vmatprep.subr.bf16.mxu0 %v6468
    %7501 = vmatpush1.bf16.msra.mxu0 %v6467
    %7502 = vmatprep.subr.bf16.mxu0 %v6476
    %7503 = vmatpush1.bf16.msra.mxu0 %v6475
    %7504 = vmatprep.subr.bf16.mxu0 %v6484
    %7505 = vmatpush1.bf16.msra.mxu0 %v6483
    %7506 = vmatprep.subr.bf16.mxu0 %v6492
    %7507 = vmatpush1.bf16.msra.mxu0 %v6491
    %7508 = vmatprep.subr.bf16.mxu0 %v6500
    %7509 = vmatpush1.bf16.msra.mxu0 %v6499
    %7510 = vmatprep.subr.bf16.mxu0 %v6508
    %7511 = vmatpush1.bf16.msra.mxu0 %v6507
    %7512 = vmatprep.subr.bf16.mxu0 %v6516
    %7513 = vmatpush1.bf16.msra.mxu0 %v6515
    %7514 = vmatprep.mubr.bf16.mxu0 %v3916
    %7515 = vmatmul.mubr.bf16.gmra.mrb[0].mxu0 %v3915
    %v7516 = vpop.f32.mrb[0].mxu0
    %v7517 = vadd.f32 %v7476, %v7516
    %v7518 = vpop.f32.mrb[0].mxu0
    %v7519 = vadd.f32 %v7478, %v7518
    %v7520 = vpop.f32.mrb[0].mxu0
    %v7521 = vpop.f32.mrb[0].mxu0
    %7522 = vdwg.mxu0
    %7523 = vmatprep.subr.bf16.mxu0 %v6014
    %7524 = vmatpush1.bf16.msra.mxu0 %v6013
    %7525 = vmatprep.subr.bf16.mxu0 %v6022
    %7526 = vmatpush1.bf16.msra.mxu0 %v6021
    %7527 = vmatprep.subr.bf16.mxu0 %v6030
    %7528 = vmatpush1.bf16.msra.mxu0 %v6029
    %7529 = vmatprep.subr.bf16.mxu0 %v6038
    %7530 = vmatpush1.bf16.msra.mxu0 %v6037
    %7531 = vmatprep.subr.bf16.mxu0 %v6046
    %7532 = vmatpush1.bf16.msra.mxu0 %v6045
    %7533 = vmatprep.subr.bf16.mxu0 %v6054
    %7534 = vmatpush1.bf16.msra.mxu0 %v6053
    %7535 = vmatprep.subr.bf16.mxu0 %v6062
    %7536 = vmatpush1.bf16.msra.mxu0 %v6061
    %7537 = vmatprep.subr.bf16.mxu0 %v6070
    %7538 = vmatpush1.bf16.msra.mxu0 %v6069
    %7539 = vmatprep.subr.bf16.mxu0 %v6078
    %7540 = vmatpush1.bf16.msra.mxu0 %v6077
    %7541 = vmatprep.subr.bf16.mxu0 %v6086
    %7542 = vmatpush1.bf16.msra.mxu0 %v6085
    %7543 = vmatprep.subr.bf16.mxu0 %v6094
    %7544 = vmatpush1.bf16.msra.mxu0 %v6093
    %7545 = vmatprep.subr.bf16.mxu0 %v6102
    %7546 = vmatpush1.bf16.msra.mxu0 %v6101
    %7547 = vmatprep.subr.bf16.mxu0 %v6110
    %7548 = vmatpush1.bf16.msra.mxu0 %v6109
    %7549 = vmatprep.subr.bf16.mxu0 %v6118
    %7550 = vmatpush1.bf16.msra.mxu0 %v6117
    %7551 = vmatprep.subr.bf16.mxu0 %v6126
    %7552 = vmatpush1.bf16.msra.mxu0 %v6125
    %7553 = vmatprep.subr.bf16.mxu0 %v6134
    %7554 = vmatpush1.bf16.msra.mxu0 %v6133
    %7555 = vmatprep.mubr.bf16.mxu0 %v3910
    %7556 = vmatmul.mubr.bf16.gmra.mrb[0].mxu0 %v3909
    %v7557 = vpop.f32.mrb[0].mxu0
    %v7558 = vadd.f32 %v4458, %v7557
    %v7559 = vpop.f32.mrb[0].mxu0
    %v7560 = vadd.f32 %v4462, %v7559
    %v7561 = vpop.f32.mrb[0].mxu0
    %v7562 = vpop.f32.mrb[0].mxu0
    %7563 = vdwg.mxu0
    %7564 = vmatprep.subr.bf16.mxu0 %v6142
    %7565 = vmatpush1.bf16.msra.mxu0 %v6141
    %7566 = vmatprep.subr.bf16.mxu0 %v6150
    %7567 = vmatpush1.bf16.msra.mxu0 %v6149
    %7568 = vmatprep.subr.bf16.mxu0 %v6158
    %7569 = vmatpush1.bf16.msra.mxu0 %v6157
    %7570 = vmatprep.subr.bf16.mxu0 %v6166
    %7571 = vmatpush1.bf16.msra.mxu0 %v6165
    %7572 = vmatprep.subr.bf16.mxu0 %v6174
    %7573 = vmatpush1.bf16.msra.mxu0 %v6173
    %7574 = vmatprep.subr.bf16.mxu0 %v6182
    %7575 = vmatpush1.bf16.msra.mxu0 %v6181
    %7576 = vmatprep.subr.bf16.mxu0 %v6190
    %7577 = vmatpush1.bf16.msra.mxu0 %v6189
    %7578 = vmatprep.subr.bf16.mxu0 %v6198
    %7579 = vmatpush1.bf16.msra.mxu0 %v6197
    %7580 = vmatprep.subr.bf16.mxu0 %v6206
    %7581 = vmatpush1.bf16.msra.mxu0 %v6205
    %7582 = vmatprep.subr.bf16.mxu0 %v6214
    %7583 = vmatpush1.bf16.msra.mxu0 %v6213
    %7584 = vmatprep.subr.bf16.mxu0 %v6222
    %7585 = vmatpush1.bf16.msra.mxu0 %v6221
    %7586 = vmatprep.subr.bf16.mxu0 %v6230
    %7587 = vmatpush1.bf16.msra.mxu0 %v6229
    %7588 = vmatprep.subr.bf16.mxu0 %v6238
    %7589 = vmatpush1.bf16.msra.mxu0 %v6237
    %7590 = vmatprep.subr.bf16.mxu0 %v6246
    %7591 = vmatpush1.bf16.msra.mxu0 %v6245
    %7592 = vmatprep.subr.bf16.mxu0 %v6254
    %7593 = vmatpush1.bf16.msra.mxu0 %v6253
    %7594 = vmatprep.subr.bf16.mxu0 %v6262
    %7595 = vmatpush1.bf16.msra.mxu0 %v6261
    %7596 = vmatprep.mubr.bf16.mxu0 %v3912
    %7597 = vmatmul.mubr.bf16.gmra.mrb[0].mxu0 %v3911
    %v7598 = vpop.f32.mrb[0].mxu0
    %v7599 = vadd.f32 %v7558, %v7598
    %v7600 = vpop.f32.mrb[0].mxu0
    %v7601 = vadd.f32 %v7560, %v7600
    %v7602 = vpop.f32.mrb[0].mxu0
    %v7603 = vpop.f32.mrb[0].mxu0
    %7604 = vdwg.mxu0
    %7605 = vmatprep.subr.bf16.mxu0 %v6270
    %7606 = vmatpush1.bf16.msra.mxu0 %v6269
    %7607 = vmatprep.subr.bf16.mxu0 %v6278
    %7608 = vmatpush1.bf16.msra.mxu0 %v6277
    %7609 = vmatprep.subr.bf16.mxu0 %v6286
    %7610 = vmatpush1.bf16.msra.mxu0 %v6285
    %7611 = vmatprep.subr.bf16.mxu0 %v6294
    %7612 = vmatpush1.bf16.msra.mxu0 %v6293
    %7613 = vmatprep.subr.bf16.mxu0 %v6302
    %7614 = vmatpush1.bf16.msra.mxu0 %v6301
    %7615 = vmatprep.subr.bf16.mxu0 %v6310
    %7616 = vmatpush1.bf16.msra.mxu0 %v6309
    %7617 = vmatprep.subr.bf16.mxu0 %v6318
    %7618 = vmatpush1.bf16.msra.mxu0 %v6317
    %7619 = vmatprep.subr.bf16.mxu0 %v6326
    %7620 = vmatpush1.bf16.msra.mxu0 %v6325
    %7621 = vmatprep.subr.bf16.mxu0 %v6334
    %7622 = vmatpush1.bf16.msra.mxu0 %v6333
    %7623 = vmatprep.subr.bf16.mxu0 %v6342
    %7624 = vmatpush1.bf16.msra.mxu0 %v6341
    %7625 = vmatprep.subr.bf16.mxu0 %v6350
    %7626 = vmatpush1.bf16.msra.mxu0 %v6349
    %7627 = vmatprep.subr.bf16.mxu0 %v6358
    %7628 = vmatpush1.bf16.msra.mxu0 %v6357
    %7629 = vmatprep.subr.bf16.mxu0 %v6366
    %7630 = vmatpush1.bf16.msra.mxu0 %v6365
    %7631 = vmatprep.subr.bf16.mxu0 %v6374
    %7632 = vmatpush1.bf16.msra.mxu0 %v6373
    %7633 = vmatprep.subr.bf16.mxu0 %v6382
    %7634 = vmatpush1.bf16.msra.mxu0 %v6381
    %7635 = vmatprep.subr.bf16.mxu0 %v6390
    %7636 = vmatpush1.bf16.msra.mxu0 %v6389
    %7637 = vmatprep.mubr.bf16.mxu0 %v3914
    %7638 = vmatmul.mubr.bf16.gmra.mrb[0].mxu0 %v3913
    %v7639 = vpop.f32.mrb[0].mxu0
    %v7640 = vadd.f32 %v7599, %v7639
    %v7641 = vpop.f32.mrb[0].mxu0
    %v7642 = vadd.f32 %v7601, %v7641
    %v7643 = vpop.f32.mrb[0].mxu0
    %v7644 = vpop.f32.mrb[0].mxu0
    %7645 = vdwg.mxu0
    %7646 = vmatprep.subr.bf16.mxu0 %v6398
    %7647 = vmatpush1.bf16.msra.mxu0 %v6397
    %7648 = vmatprep.subr.bf16.mxu0 %v6406
    %7649 = vmatpush1.bf16.msra.mxu0 %v6405
    %7650 = vmatprep.subr.bf16.mxu0 %v6414
    %7651 = vmatpush1.bf16.msra.mxu0 %v6413
    %7652 = vmatprep.subr.bf16.mxu0 %v6422
    %7653 = vmatpush1.bf16.msra.mxu0 %v6421
    %7654 = vmatprep.subr.bf16.mxu0 %v6430
    %7655 = vmatpush1.bf16.msra.mxu0 %v6429
    %7656 = vmatprep.subr.bf16.mxu0 %v6438
    %7657 = vmatpush1.bf16.msra.mxu0 %v6437
    %7658 = vmatprep.subr.bf16.mxu0 %v6446
    %7659 = vmatpush1.bf16.msra.mxu0 %v6445
    %7660 = vmatprep.subr.bf16.mxu0 %v6454
    %7661 = vmatpush1.bf16.msra.mxu0 %v6453
    %7662 = vmatprep.subr.bf16.mxu0 %v6462
    %7663 = vmatpush1.bf16.msra.mxu0 %v6461
    %7664 = vmatprep.subr.bf16.mxu0 %v6470
    %7665 = vmatpush1.bf16.msra.mxu0 %v6469
    %7666 = vmatprep.subr.bf16.mxu0 %v6478
    %7667 = vmatpush1.bf16.msra.mxu0 %v6477
    %7668 = vmatprep.subr.bf16.mxu0 %v6486
    %7669 = vmatpush1.bf16.msra.mxu0 %v6485
    %7670 = vmatprep.subr.bf16.mxu0 %v6494
    %7671 = vmatpush1.bf16.msra.mxu0 %v6493
    %7672 = vmatprep.subr.bf16.mxu0 %v6502
    %7673 = vmatpush1.bf16.msra.mxu0 %v6501
    %7674 = vmatprep.subr.bf16.mxu0 %v6510
    %7675 = vmatpush1.bf16.msra.mxu0 %v6509
    %7676 = vmatprep.subr.bf16.mxu0 %v6518
    %7677 = vmatpush1.bf16.msra.mxu0 %v6517
    %7678 = vmatprep.mubr.bf16.mxu0 %v3916
    %7679 = vmatmul.mubr.bf16.gmra.mrb[0].mxu0 %v3915
    %v7680 = vpop.f32.mrb[0].mxu0
    %v7681 = vadd.f32 %v7640, %v7680
    %v7682 = vpop.f32.mrb[0].mxu0
    %v7683 = vadd.f32 %v7642, %v7682
    %v7684 = vpop.f32.mrb[0].mxu0
    %v7685 = vpop.f32.mrb[0].mxu0
    %7686 = vdwg.mxu0
    %v7687 = vmax.f32 %v7189, 0.0
    %v7688 = vmax.f32 %v7191, 0.0
    %v7689 = vmax.f32 %v7353, 0.0
    %v7690 = vmax.f32 %v7355, 0.0
    %v7691 = vmax.f32 %v7517, 0.0
    %v7692 = vmax.f32 %v7519, 0.0
    %v7693 = vmax.f32 %v7681, 0.0
    %v7694 = vmax.f32 %v7683, 0.0
    %v7695 = vpack.c.bf16 %v7687, %v7687
    %v7696 = vpack.c.bf16 %v7688, %v7688
    %v7697 = vpack.c.bf16 %v7689, %v7689
    %v7698 = vpack.c.bf16 %v7690, %v7690
    %v7699 = vpack.c.bf16 %v7691, %v7691
    %v7700 = vpack.c.bf16 %v7692, %v7692
    %v7701 = vpack.c.bf16 %v7693, %v7693
    %v7702 = vpack.c.bf16 %v7694, %v7694
    %v7703 = vld [vmem:[#allocation11] sm:$0xf]
    %v7704 = vld [vmem:[#allocation11 + $0x4] sm:$0xf]
    %v7705 = vld [vmem:[#allocation11 + $0x8] sm:$0xf]
    %v7706 = vld [vmem:[#allocation11 + $0xc] sm:$0xf]
    %v7707 = vld [vmem:[#allocation11 + $0x10] sm:$0xf]
    %v7708 = vld [vmem:[#allocation11 + $0x14] sm:$0xf]
    %v7709 = vld [vmem:[#allocation11 + $0x18] sm:$0xf]
    %v7710 = vld [vmem:[#allocation11 + $0x1c] sm:$0xf]
    %v7711 = vld [vmem:[#allocation11 + $0x20] sm:$0xf]
    %v7712 = vld [vmem:[#allocation11 + $0x24] sm:$0xf]
    %v7713 = vld [vmem:[#allocation11 + $0x28] sm:$0xf]
    %v7714 = vld [vmem:[#allocation11 + $0x2c] sm:$0xf]
    %v7715 = vld [vmem:[#allocation11 + $0x30] sm:$0xf]
    %v7716 = vld [vmem:[#allocation11 + $0x34] sm:$0xf]
    %v7717 = vld [vmem:[#allocation11 + $0x38] sm:$0xf]
    %v7718 = vld [vmem:[#allocation11 + $0x3c] sm:$0xf]
    %v7719 = vld [vmem:[#allocation11 + $0x40] sm:$0xf]
    %v7720 = vld [vmem:[#allocation11 + $0x44] sm:$0xf]
    %v7721 = vld [vmem:[#allocation11 + $0x48] sm:$0xf]
    %v7722 = vld [vmem:[#allocation11 + $0x4c] sm:$0xf]
    %v7723 = vld [vmem:[#allocation11 + $0x50] sm:$0xf]
    %v7724 = vld [vmem:[#allocation11 + $0x54] sm:$0xf]
    %v7725 = vld [vmem:[#allocation11 + $0x58] sm:$0xf]
    %v7726 = vld [vmem:[#allocation11 + $0x5c] sm:$0xf]
    %v7727 = vld [vmem:[#allocation11 + $0x60] sm:$0xf]
    %v7728 = vld [vmem:[#allocation11 + $0x64] sm:$0xf]
    %v7729 = vld [vmem:[#allocation11 + $0x68] sm:$0xf]
    %v7730 = vld [vmem:[#allocation11 + $0x6c] sm:$0xf]
    %v7731 = vld [vmem:[#allocation11 + $0x70] sm:$0xf]
    %v7732 = vld [vmem:[#allocation11 + $0x74] sm:$0xf]
    %v7733 = vld [vmem:[#allocation11 + $0x78] sm:$0xf]
    %v7734 = vld [vmem:[#allocation11 + $0x7c] sm:$0xf]
    %v7735 = vld [vmem:[#allocation11 + $0x80] sm:$0xf]
    %v7736 = vld [vmem:[#allocation11 + $0x84] sm:$0xf]
    %v7737 = vld [vmem:[#allocation11 + $0x88] sm:$0xf]
    %v7738 = vld [vmem:[#allocation11 + $0x8c] sm:$0xf]
    %v7739 = vld [vmem:[#allocation11 + $0x90] sm:$0xf]
    %v7740 = vld [vmem:[#allocation11 + $0x94] sm:$0xf]
    %v7741 = vld [vmem:[#allocation11 + $0x98] sm:$0xf]
    %v7742 = vld [vmem:[#allocation11 + $0x9c] sm:$0xf]
    %v7743 = vld [vmem:[#allocation11 + $0xa0] sm:$0xf]
    %v7744 = vld [vmem:[#allocation11 + $0xa4] sm:$0xf]
    %v7745 = vld [vmem:[#allocation11 + $0xa8] sm:$0xf]
    %v7746 = vld [vmem:[#allocation11 + $0xac] sm:$0xf]
    %v7747 = vld [vmem:[#allocation11 + $0xb0] sm:$0xf]
    %v7748 = vld [vmem:[#allocation11 + $0xb4] sm:$0xf]
    %v7749 = vld [vmem:[#allocation11 + $0xb8] sm:$0xf]
    %v7750 = vld [vmem:[#allocation11 + $0xbc] sm:$0xf]
    %v7751 = vld [vmem:[#allocation11 + $0xc0] sm:$0xf]
    %v7752 = vld [vmem:[#allocation11 + $0xc4] sm:$0xf]
    %v7753 = vld [vmem:[#allocation11 + $0xc8] sm:$0xf]
    %v7754 = vld [vmem:[#allocation11 + $0xcc] sm:$0xf]
    %v7755 = vld [vmem:[#allocation11 + $0xd0] sm:$0xf]
    %v7756 = vld [vmem:[#allocation11 + $0xd4] sm:$0xf]
    %v7757 = vld [vmem:[#allocation11 + $0xd8] sm:$0xf]
    %v7758 = vld [vmem:[#allocation11 + $0xdc] sm:$0xf]
    %v7759 = vld [vmem:[#allocation11 + $0xe0] sm:$0xf]
    %v7760 = vld [vmem:[#allocation11 + $0xe4] sm:$0xf]
    %v7761 = vld [vmem:[#allocation11 + $0xe8] sm:$0xf]
    %v7762 = vld [vmem:[#allocation11 + $0xec] sm:$0xf]
    %v7763 = vld [vmem:[#allocation11 + $0xf0] sm:$0xf]
    %v7764 = vld [vmem:[#allocation11 + $0xf4] sm:$0xf]
    %v7765 = vld [vmem:[#allocation11 + $0xf8] sm:$0xf]
    %v7766 = vld [vmem:[#allocation11 + $0xfc] sm:$0xf]
    %v7767 = vld [vmem:[#allocation11 + $0x100] sm:$0xf]
    %v7768 = vld [vmem:[#allocation11 + $0x104] sm:$0xf]
    %v7769 = vld [vmem:[#allocation11 + $0x108] sm:$0xf]
    %v7770 = vld [vmem:[#allocation11 + $0x10c] sm:$0xf]
    %v7771 = vld [vmem:[#allocation11 + $0x110] sm:$0xf]
    %v7772 = vld [vmem:[#allocation11 + $0x114] sm:$0xf]
    %v7773 = vld [vmem:[#allocation11 + $0x118] sm:$0xf]
    %v7774 = vld [vmem:[#allocation11 + $0x11c] sm:$0xf]
    %v7775 = vld [vmem:[#allocation11 + $0x120] sm:$0xf]
    %v7776 = vld [vmem:[#allocation11 + $0x124] sm:$0xf]
    %v7777 = vld [vmem:[#allocation11 + $0x128] sm:$0xf]
    %v7778 = vld [vmem:[#allocation11 + $0x12c] sm:$0xf]
    %v7779 = vld [vmem:[#allocation11 + $0x130] sm:$0xf]
    %v7780 = vld [vmem:[#allocation11 + $0x134] sm:$0xf]
    %v7781 = vld [vmem:[#allocation11 + $0x138] sm:$0xf]
    %v7782 = vld [vmem:[#allocation11 + $0x13c] sm:$0xf]
    %v7783 = vld [vmem:[#allocation11 + $0x140] sm:$0xf]
    %v7784 = vld [vmem:[#allocation11 + $0x144] sm:$0xf]
    %v7785 = vld [vmem:[#allocation11 + $0x148] sm:$0xf]
    %v7786 = vld [vmem:[#allocation11 + $0x14c] sm:$0xf]
    %v7787 = vld [vmem:[#allocation11 + $0x150] sm:$0xf]
    %v7788 = vld [vmem:[#allocation11 + $0x154] sm:$0xf]
    %v7789 = vld [vmem:[#allocation11 + $0x158] sm:$0xf]
    %v7790 = vld [vmem:[#allocation11 + $0x15c] sm:$0xf]
    %v7791 = vld [vmem:[#allocation11 + $0x160] sm:$0xf]
    %v7792 = vld [vmem:[#allocation11 + $0x164] sm:$0xf]
    %v7793 = vld [vmem:[#allocation11 + $0x168] sm:$0xf]
    %v7794 = vld [vmem:[#allocation11 + $0x16c] sm:$0xf]
    %v7795 = vld [vmem:[#allocation11 + $0x170] sm:$0xf]
    %v7796 = vld [vmem:[#allocation11 + $0x174] sm:$0xf]
    %v7797 = vld [vmem:[#allocation11 + $0x178] sm:$0xf]
    %v7798 = vld [vmem:[#allocation11 + $0x17c] sm:$0xf]
    %v7799 = vld [vmem:[#allocation11 + $0x180] sm:$0xf]
    %v7800 = vld [vmem:[#allocation11 + $0x184] sm:$0xf]
    %v7801 = vld [vmem:[#allocation11 + $0x188] sm:$0xf]
    %v7802 = vld [vmem:[#allocation11 + $0x18c] sm:$0xf]
    %v7803 = vld [vmem:[#allocation11 + $0x190] sm:$0xf]
    %v7804 = vld [vmem:[#allocation11 + $0x194] sm:$0xf]
    %v7805 = vld [vmem:[#allocation11 + $0x198] sm:$0xf]
    %v7806 = vld [vmem:[#allocation11 + $0x19c] sm:$0xf]
    %v7807 = vld [vmem:[#allocation11 + $0x1a0] sm:$0xf]
    %v7808 = vld [vmem:[#allocation11 + $0x1a4] sm:$0xf]
    %v7809 = vld [vmem:[#allocation11 + $0x1a8] sm:$0xf]
    %v7810 = vld [vmem:[#allocation11 + $0x1ac] sm:$0xf]
    %v7811 = vld [vmem:[#allocation11 + $0x1b0] sm:$0xf]
    %v7812 = vld [vmem:[#allocation11 + $0x1b4] sm:$0xf]
    %v7813 = vld [vmem:[#allocation11 + $0x1b8] sm:$0xf]
    %v7814 = vld [vmem:[#allocation11 + $0x1bc] sm:$0xf]
    %v7815 = vld [vmem:[#allocation11 + $0x1c0] sm:$0xf]
    %v7816 = vld [vmem:[#allocation11 + $0x1c4] sm:$0xf]
    %v7817 = vld [vmem:[#allocation11 + $0x1c8] sm:$0xf]
    %v7818 = vld [vmem:[#allocation11 + $0x1cc] sm:$0xf]
    %v7819 = vld [vmem:[#allocation11 + $0x1d0] sm:$0xf]
    %v7820 = vld [vmem:[#allocation11 + $0x1d4] sm:$0xf]
    %v7821 = vld [vmem:[#allocation11 + $0x1d8] sm:$0xf]
    %v7822 = vld [vmem:[#allocation11 + $0x1dc] sm:$0xf]
    %v7823 = vld [vmem:[#allocation11 + $0x1e0] sm:$0xf]
    %v7824 = vld [vmem:[#allocation11 + $0x1e4] sm:$0xf]
    %v7825 = vld [vmem:[#allocation11 + $0x1e8] sm:$0xf]
    %v7826 = vld [vmem:[#allocation11 + $0x1ec] sm:$0xf]
    %v7827 = vld [vmem:[#allocation11 + $0x1f0] sm:$0xf]
    %v7828 = vld [vmem:[#allocation11 + $0x1f4] sm:$0xf]
    %v7829 = vld [vmem:[#allocation11 + $0x1f8] sm:$0xf]
    %v7830 = vld [vmem:[#allocation11 + $0x1fc] sm:$0xf]
    %v7831 = vld [vmem:[#allocation13] sm:$0x1]
    %v7833 = vlaneseq
    %v7834 = vshrl.u32 %v7833, 7
    %v7835 = vsub.s32 0, %v7834
    %v7836 = vrot.slane %v7831, %v7835
    %v7966 = vunpack.c.l.b16 %v7703
    %v7967 = vunpack.c.l.b16 %v7704
    %v7968 = vunpack.c.l.b16 %v7705
    %v7969 = vunpack.c.l.b16 %v7706
    %v7970 = vunpack.c.l.b16 %v7707
    %v7971 = vunpack.c.l.b16 %v7708
    %v7972 = vunpack.c.l.b16 %v7709
    %v7973 = vunpack.c.l.b16 %v7710
    %v7974 = vunpack.c.l.b16 %v7711
    %v7975 = vunpack.c.l.b16 %v7712
    %v7976 = vunpack.c.l.b16 %v7713
    %v7977 = vunpack.c.l.b16 %v7714
    %v7978 = vunpack.c.l.b16 %v7715
    %v7979 = vunpack.c.l.b16 %v7716
    %v7980 = vunpack.c.l.b16 %v7717
    %v7981 = vunpack.c.l.b16 %v7718
    %v7982 = vunpack.c.l.b16 %v7719
    %v7983 = vunpack.c.l.b16 %v7720
    %v7984 = vunpack.c.l.b16 %v7721
    %v7985 = vunpack.c.l.b16 %v7722
    %v7986 = vunpack.c.l.b16 %v7723
    %v7987 = vunpack.c.l.b16 %v7724
    %v7988 = vunpack.c.l.b16 %v7725
    %v7989 = vunpack.c.l.b16 %v7726
    %v7990 = vunpack.c.l.b16 %v7727
    %v7991 = vunpack.c.l.b16 %v7728
    %v7992 = vunpack.c.l.b16 %v7729
    %v7993 = vunpack.c.l.b16 %v7730
    %v7994 = vunpack.c.l.b16 %v7731
    %v7995 = vunpack.c.l.b16 %v7732
    %v7996 = vunpack.c.l.b16 %v7733
    %v7997 = vunpack.c.l.b16 %v7734
    %v7998 = vunpack.c.l.b16 %v7735
    %v7999 = vunpack.c.l.b16 %v7736
    %v8000 = vunpack.c.l.b16 %v7737
    %v8001 = vunpack.c.l.b16 %v7738
    %v8002 = vunpack.c.l.b16 %v7739
    %v8003 = vunpack.c.l.b16 %v7740
    %v8004 = vunpack.c.l.b16 %v7741
    %v8005 = vunpack.c.l.b16 %v7742
    %v8006 = vunpack.c.l.b16 %v7743
    %v8007 = vunpack.c.l.b16 %v7744
    %v8008 = vunpack.c.l.b16 %v7745
    %v8009 = vunpack.c.l.b16 %v7746
    %v8010 = vunpack.c.l.b16 %v7747
    %v8011 = vunpack.c.l.b16 %v7748
    %v8012 = vunpack.c.l.b16 %v7749
    %v8013 = vunpack.c.l.b16 %v7750
    %v8014 = vunpack.c.l.b16 %v7751
    %v8015 = vunpack.c.l.b16 %v7752
    %v8016 = vunpack.c.l.b16 %v7753
    %v8017 = vunpack.c.l.b16 %v7754
    %v8018 = vunpack.c.l.b16 %v7755
    %v8019 = vunpack.c.l.b16 %v7756
    %v8020 = vunpack.c.l.b16 %v7757
    %v8021 = vunpack.c.l.b16 %v7758
    %v8022 = vunpack.c.l.b16 %v7759
    %v8023 = vunpack.c.l.b16 %v7760
    %v8024 = vunpack.c.l.b16 %v7761
    %v8025 = vunpack.c.l.b16 %v7762
    %v8026 = vunpack.c.l.b16 %v7763
    %v8027 = vunpack.c.l.b16 %v7764
    %v8028 = vunpack.c.l.b16 %v7765
    %v8029 = vunpack.c.l.b16 %v7766
    %v8030 = vunpack.c.l.b16 %v7767
    %v8031 = vunpack.c.l.b16 %v7768
    %v8032 = vunpack.c.l.b16 %v7769
    %v8033 = vunpack.c.l.b16 %v7770
    %v8034 = vunpack.c.l.b16 %v7771
    %v8035 = vunpack.c.l.b16 %v7772
    %v8036 = vunpack.c.l.b16 %v7773
    %v8037 = vunpack.c.l.b16 %v7774
    %v8038 = vunpack.c.l.b16 %v7775
    %v8039 = vunpack.c.l.b16 %v7776
    %v8040 = vunpack.c.l.b16 %v7777
    %v8041 = vunpack.c.l.b16 %v7778
    %v8042 = vunpack.c.l.b16 %v7779
    %v8043 = vunpack.c.l.b16 %v7780
    %v8044 = vunpack.c.l.b16 %v7781
    %v8045 = vunpack.c.l.b16 %v7782
    %v8046 = vunpack.c.l.b16 %v7783
    %v8047 = vunpack.c.l.b16 %v7784
    %v8048 = vunpack.c.l.b16 %v7785
    %v8049 = vunpack.c.l.b16 %v7786
    %v8050 = vunpack.c.l.b16 %v7787
    %v8051 = vunpack.c.l.b16 %v7788
    %v8052 = vunpack.c.l.b16 %v7789
    %v8053 = vunpack.c.l.b16 %v7790
    %v8054 = vunpack.c.l.b16 %v7791
    %v8055 = vunpack.c.l.b16 %v7792
    %v8056 = vunpack.c.l.b16 %v7793
    %v8057 = vunpack.c.l.b16 %v7794
    %v8058 = vunpack.c.l.b16 %v7795
    %v8059 = vunpack.c.l.b16 %v7796
    %v8060 = vunpack.c.l.b16 %v7797
    %v8061 = vunpack.c.l.b16 %v7798
    %v8062 = vunpack.c.l.b16 %v7799
    %v8063 = vunpack.c.l.b16 %v7800
    %v8064 = vunpack.c.l.b16 %v7801
    %v8065 = vunpack.c.l.b16 %v7802
    %v8066 = vunpack.c.l.b16 %v7803
    %v8067 = vunpack.c.l.b16 %v7804
    %v8068 = vunpack.c.l.b16 %v7805
    %v8069 = vunpack.c.l.b16 %v7806
    %v8070 = vunpack.c.l.b16 %v7807
    %v8071 = vunpack.c.l.b16 %v7808
    %v8072 = vunpack.c.l.b16 %v7809
    %v8073 = vunpack.c.l.b16 %v7810
    %v8074 = vunpack.c.l.b16 %v7811
    %v8075 = vunpack.c.l.b16 %v7812
    %v8076 = vunpack.c.l.b16 %v7813
    %v8077 = vunpack.c.l.b16 %v7814
    %v8078 = vunpack.c.l.b16 %v7815
    %v8079 = vunpack.c.l.b16 %v7816
    %v8080 = vunpack.c.l.b16 %v7817
    %v8081 = vunpack.c.l.b16 %v7818
    %v8082 = vunpack.c.l.b16 %v7819
    %v8083 = vunpack.c.l.b16 %v7820
    %v8084 = vunpack.c.l.b16 %v7821
    %v8085 = vunpack.c.l.b16 %v7822
    %v8086 = vunpack.c.l.b16 %v7823
    %v8087 = vunpack.c.l.b16 %v7824
    %v8088 = vunpack.c.l.b16 %v7825
    %v8089 = vunpack.c.l.b16 %v7826
    %v8090 = vunpack.c.l.b16 %v7827
    %v8091 = vunpack.c.l.b16 %v7828
    %v8092 = vunpack.c.l.b16 %v7829
    %v8093 = vunpack.c.l.b16 %v7830
    %v8094 = vpack.c.b16 %v7967, %v7966
    %v8095 = vpack.c.b16 %v7969, %v7968
    %v8096 = vpack.c.b16 %v7971, %v7970
    %v8097 = vpack.c.b16 %v7973, %v7972
    %v8098 = vpack.c.b16 %v7975, %v7974
    %v8099 = vpack.c.b16 %v7977, %v7976
    %v8100 = vpack.c.b16 %v7979, %v7978
    %v8101 = vpack.c.b16 %v7981, %v7980
    %v8102 = vpack.c.b16 %v7983, %v7982
    %v8103 = vpack.c.b16 %v7985, %v7984
    %v8104 = vpack.c.b16 %v7987, %v7986
    %v8105 = vpack.c.b16 %v7989, %v7988
    %v8106 = vpack.c.b16 %v7991, %v7990
    %v8107 = vpack.c.b16 %v7993, %v7992
    %v8108 = vpack.c.b16 %v7995, %v7994
    %v8109 = vpack.c.b16 %v7997, %v7996
    %v8110 = vpack.c.b16 %v7999, %v7998
    %v8111 = vpack.c.b16 %v8001, %v8000
    %v8112 = vpack.c.b16 %v8003, %v8002
    %v8113 = vpack.c.b16 %v8005, %v8004
    %v8114 = vpack.c.b16 %v8007, %v8006
    %v8115 = vpack.c.b16 %v8009, %v8008
    %v8116 = vpack.c.b16 %v8011, %v8010
    %v8117 = vpack.c.b16 %v8013, %v8012
    %v8118 = vpack.c.b16 %v8015, %v8014
    %v8119 = vpack.c.b16 %v8017, %v8016
    %v8120 = vpack.c.b16 %v8019, %v8018
    %v8121 = vpack.c.b16 %v8021, %v8020
    %v8122 = vpack.c.b16 %v8023, %v8022
    %v8123 = vpack.c.b16 %v8025, %v8024
    %v8124 = vpack.c.b16 %v8027, %v8026
    %v8125 = vpack.c.b16 %v8029, %v8028
    %v8126 = vpack.c.b16 %v8031, %v8030
    %v8127 = vpack.c.b16 %v8033, %v8032
    %v8128 = vpack.c.b16 %v8035, %v8034
    %v8129 = vpack.c.b16 %v8037, %v8036
    %v8130 = vpack.c.b16 %v8039, %v8038
    %v8131 = vpack.c.b16 %v8041, %v8040
    %v8132 = vpack.c.b16 %v8043, %v8042
    %v8133 = vpack.c.b16 %v8045, %v8044
    %v8134 = vpack.c.b16 %v8047, %v8046
    %v8135 = vpack.c.b16 %v8049, %v8048
    %v8136 = vpack.c.b16 %v8051, %v8050
    %v8137 = vpack.c.b16 %v8053, %v8052
    %v8138 = vpack.c.b16 %v8055, %v8054
    %v8139 = vpack.c.b16 %v8057, %v8056
    %v8140 = vpack.c.b16 %v8059, %v8058
    %v8141 = vpack.c.b16 %v8061, %v8060
    %v8142 = vpack.c.b16 %v8063, %v8062
    %v8143 = vpack.c.b16 %v8065, %v8064
    %v8144 = vpack.c.b16 %v8067, %v8066
    %v8145 = vpack.c.b16 %v8069, %v8068
    %v8146 = vpack.c.b16 %v8071, %v8070
    %v8147 = vpack.c.b16 %v8073, %v8072
    %v8148 = vpack.c.b16 %v8075, %v8074
    %v8149 = vpack.c.b16 %v8077, %v8076
    %v8150 = vpack.c.b16 %v8079, %v8078
    %v8151 = vpack.c.b16 %v8081, %v8080
    %v8152 = vpack.c.b16 %v8083, %v8082
    %v8153 = vpack.c.b16 %v8085, %v8084
    %v8154 = vpack.c.b16 %v8087, %v8086
    %v8155 = vpack.c.b16 %v8089, %v8088
    %v8156 = vpack.c.b16 %v8091, %v8090
    %v8157 = vpack.c.b16 %v8093, %v8092
    %8222 = vmatprep.subr.bf16.mxu0 0
    %8223 = vmatpush1.bf16.msra.mxu0 %v8094
    %8224 = vmatprep.subr.bf16.mxu0 0
    %8225 = vmatpush1.bf16.msra.mxu0 %v8095
    %8226 = vmatprep.subr.bf16.mxu0 0
    %8227 = vmatpush1.bf16.msra.mxu0 %v8096
    %8228 = vmatprep.subr.bf16.mxu0 0
    %8229 = vmatpush1.bf16.msra.mxu0 %v8097
    %8230 = vmatprep.subr.bf16.mxu0 0
    %8231 = vmatpush1.bf16.msra.mxu0 %v8098
    %8232 = vmatprep.subr.bf16.mxu0 0
    %8233 = vmatpush1.bf16.msra.mxu0 %v8099
    %8234 = vmatprep.subr.bf16.mxu0 0
    %8235 = vmatpush1.bf16.msra.mxu0 %v8100
    %8236 = vmatprep.subr.bf16.mxu0 0
    %8237 = vmatpush1.bf16.msra.mxu0 %v8101
    %8238 = vmatprep.subr.bf16.mxu0 0
    %8239 = vmatpush1.bf16.msra.mxu0 %v8102
    %8240 = vmatprep.subr.bf16.mxu0 0
    %8241 = vmatpush1.bf16.msra.mxu0 %v8103
    %8242 = vmatprep.subr.bf16.mxu0 0
    %8243 = vmatpush1.bf16.msra.mxu0 %v8104
    %8244 = vmatprep.subr.bf16.mxu0 0
    %8245 = vmatpush1.bf16.msra.mxu0 %v8105
    %8246 = vmatprep.subr.bf16.mxu0 0
    %8247 = vmatpush1.bf16.msra.mxu0 %v8106
    %8248 = vmatprep.subr.bf16.mxu0 0
    %8249 = vmatpush1.bf16.msra.mxu0 %v8107
    %8250 = vmatprep.subr.bf16.mxu0 0
    %8251 = vmatpush1.bf16.msra.mxu0 %v8108
    %8252 = vmatprep.subr.bf16.mxu0 0
    %8253 = vmatpush1.bf16.msra.mxu0 %v8109
    %8254 = vmatprep.mubr.bf16.mxu0 %v7696
    %8255 = vmatmul.mubr.bf16.gmra.mrb[0].mxu0 %v7695
    %v8256 = vpop.f32.mrb[0].mxu0
    %v8257 = vadd.f32 %v7836, %v8256
    %v8258 = vpop.f32.mrb[0].mxu0
    %v8259 = vpop.f32.mrb[0].mxu0
    %v8260 = vpop.f32.mrb[0].mxu0
    %8261 = vdwg.mxu0
    %8262 = vmatprep.subr.bf16.mxu0 0
    %8263 = vmatpush1.bf16.msra.mxu0 %v8110
    %8264 = vmatprep.subr.bf16.mxu0 0
    %8265 = vmatpush1.bf16.msra.mxu0 %v8111
    %8266 = vmatprep.subr.bf16.mxu0 0
    %8267 = vmatpush1.bf16.msra.mxu0 %v8112
    %8268 = vmatprep.subr.bf16.mxu0 0
    %8269 = vmatpush1.bf16.msra.mxu0 %v8113
    %8270 = vmatprep.subr.bf16.mxu0 0
    %8271 = vmatpush1.bf16.msra.mxu0 %v8114
    %8272 = vmatprep.subr.bf16.mxu0 0
    %8273 = vmatpush1.bf16.msra.mxu0 %v8115
    %8274 = vmatprep.subr.bf16.mxu0 0
    %8275 = vmatpush1.bf16.msra.mxu0 %v8116
    %8276 = vmatprep.subr.bf16.mxu0 0
    %8277 = vmatpush1.bf16.msra.mxu0 %v8117
    %8278 = vmatprep.subr.bf16.mxu0 0
    %8279 = vmatpush1.bf16.msra.mxu0 %v8118
    %8280 = vmatprep.subr.bf16.mxu0 0
    %8281 = vmatpush1.bf16.msra.mxu0 %v8119
    %8282 = vmatprep.subr.bf16.mxu0 0
    %8283 = vmatpush1.bf16.msra.mxu0 %v8120
    %8284 = vmatprep.subr.bf16.mxu0 0
    %8285 = vmatpush1.bf16.msra.mxu0 %v8121
    %8286 = vmatprep.subr.bf16.mxu0 0
    %8287 = vmatpush1.bf16.msra.mxu0 %v8122
    %8288 = vmatprep.subr.bf16.mxu0 0
    %8289 = vmatpush1.bf16.msra.mxu0 %v8123
    %8290 = vmatprep.subr.bf16.mxu0 0
    %8291 = vmatpush1.bf16.msra.mxu0 %v8124
    %8292 = vmatprep.subr.bf16.mxu0 0
    %8293 = vmatpush1.bf16.msra.mxu0 %v8125
    %8294 = vmatprep.mubr.bf16.mxu0 %v7698
    %8295 = vmatmul.mubr.bf16.gmra.mrb[0].mxu0 %v7697
    %v8296 = vpop.f32.mrb[0].mxu0
    %v8297 = vadd.f32 %v8257, %v8296
    %v8298 = vpop.f32.mrb[0].mxu0
    %v8299 = vpop.f32.mrb[0].mxu0
    %v8300 = vpop.f32.mrb[0].mxu0
    %8301 = vdwg.mxu0
    %8302 = vmatprep.subr.bf16.mxu0 0
    %8303 = vmatpush1.bf16.msra.mxu0 %v8126
    %8304 = vmatprep.subr.bf16.mxu0 0
    %8305 = vmatpush1.bf16.msra.mxu0 %v8127
    %8306 = vmatprep.subr.bf16.mxu0 0
    %8307 = vmatpush1.bf16.msra.mxu0 %v8128
    %8308 = vmatprep.subr.bf16.mxu0 0
    %8309 = vmatpush1.bf16.msra.mxu0 %v8129
    %8310 = vmatprep.subr.bf16.mxu0 0
    %8311 = vmatpush1.bf16.msra.mxu0 %v8130
    %8312 = vmatprep.subr.bf16.mxu0 0
    %8313 = vmatpush1.bf16.msra.mxu0 %v8131
    %8314 = vmatprep.subr.bf16.mxu0 0
    %8315 = vmatpush1.bf16.msra.mxu0 %v8132
    %8316 = vmatprep.subr.bf16.mxu0 0
    %8317 = vmatpush1.bf16.msra.mxu0 %v8133
    %8318 = vmatprep.subr.bf16.mxu0 0
    %8319 = vmatpush1.bf16.msra.mxu0 %v8134
    %8320 = vmatprep.subr.bf16.mxu0 0
    %8321 = vmatpush1.bf16.msra.mxu0 %v8135
    %8322 = vmatprep.subr.bf16.mxu0 0
    %8323 = vmatpush1.bf16.msra.mxu0 %v8136
    %8324 = vmatprep.subr.bf16.mxu0 0
    %8325 = vmatpush1.bf16.msra.mxu0 %v8137
    %8326 = vmatprep.subr.bf16.mxu0 0
    %8327 = vmatpush1.bf16.msra.mxu0 %v8138
    %8328 = vmatprep.subr.bf16.mxu0 0
    %8329 = vmatpush1.bf16.msra.mxu0 %v8139
    %8330 = vmatprep.subr.bf16.mxu0 0
    %8331 = vmatpush1.bf16.msra.mxu0 %v8140
    %8332 = vmatprep.subr.bf16.mxu0 0
    %8333 = vmatpush1.bf16.msra.mxu0 %v8141
    %8334 = vmatprep.mubr.bf16.mxu0 %v7700
    %8335 = vmatmul.mubr.bf16.gmra.mrb[0].mxu0 %v7699
    %v8336 = vpop.f32.mrb[0].mxu0
    %v8337 = vadd.f32 %v8297, %v8336
    %v8338 = vpop.f32.mrb[0].mxu0
    %v8339 = vpop.f32.mrb[0].mxu0
    %v8340 = vpop.f32.mrb[0].mxu0
    %8341 = vdwg.mxu0
    %8342 = vmatprep.subr.bf16.mxu0 0
    %8343 = vmatpush1.bf16.msra.mxu0 %v8142
    %8344 = vmatprep.subr.bf16.mxu0 0
    %8345 = vmatpush1.bf16.msra.mxu0 %v8143
    %8346 = vmatprep.subr.bf16.mxu0 0
    %8347 = vmatpush1.bf16.msra.mxu0 %v8144
    %8348 = vmatprep.subr.bf16.mxu0 0
    %8349 = vmatpush1.bf16.msra.mxu0 %v8145
    %8350 = vmatprep.subr.bf16.mxu0 0
    %8351 = vmatpush1.bf16.msra.mxu0 %v8146
    %8352 = vmatprep.subr.bf16.mxu0 0
    %8353 = vmatpush1.bf16.msra.mxu0 %v8147
    %8354 = vmatprep.subr.bf16.mxu0 0
    %8355 = vmatpush1.bf16.msra.mxu0 %v8148
    %8356 = vmatprep.subr.bf16.mxu0 0
    %8357 = vmatpush1.bf16.msra.mxu0 %v8149
    %8358 = vmatprep.subr.bf16.mxu0 0
    %8359 = vmatpush1.bf16.msra.mxu0 %v8150
    %8360 = vmatprep.subr.bf16.mxu0 0
    %8361 = vmatpush1.bf16.msra.mxu0 %v8151
    %8362 = vmatprep.subr.bf16.mxu0 0
    %8363 = vmatpush1.bf16.msra.mxu0 %v8152
    %8364 = vmatprep.subr.bf16.mxu0 0
    %8365 = vmatpush1.bf16.msra.mxu0 %v8153
    %8366 = vmatprep.subr.bf16.mxu0 0
    %8367 = vmatpush1.bf16.msra.mxu0 %v8154
    %8368 = vmatprep.subr.bf16.mxu0 0
    %8369 = vmatpush1.bf16.msra.mxu0 %v8155
    %8370 = vmatprep.subr.bf16.mxu0 0
    %8371 = vmatpush1.bf16.msra.mxu0 %v8156
    %8372 = vmatprep.subr.bf16.mxu0 0
    %8373 = vmatpush1.bf16.msra.mxu0 %v8157
    %8374 = vmatprep.mubr.bf16.mxu0 %v7702
    %8375 = vmatmul.mubr.bf16.gmra.mrb[0].mxu0 %v7701
    %v8376 = vpop.f32.mrb[0].mxu0
    %v8377 = vadd.f32 %v8337, %v8376
    %v8378 = vpop.f32.mrb[0].mxu0
    %v8379 = vpop.f32.mrb[0].mxu0
    %v8380 = vpop.f32.mrb[0].mxu0
    %8381 = vdwg.mxu0
    %8382 = vst [vmem:[#allocation14] sm:$0xff] %v8377
    // Predicated region
    $region58: #{tpu_custom_call.1} parent=1 // pred_check
      _
    $region59: #{tpu_custom_call.1} parent=1 // pred_check_branch
      %8384 = sbr.rel (0) target = $region61
    $region60: #{tpu_custom_call.1} parent=1 // pred_region
      %s8386 = ssub.s32 128, 128
      %8387 = vsyncadd [#allocation4], %s8386
      %s8389 = sshll.u32 [#allocation14], 4
      %s8390 = int_to_ptr.vmem [resolvable:$true] %s8389
      %8392 = dma.vmem_to_hbm [thread:$0]  %s8390, 128, %s7, [#allocation4]
    $region61: #{tpu_custom_call.1} parent=1 // pred_fallthru
      _
    // Predicated region
    $region62: #{tpu_custom_call.1} parent=1 // pred_check
      _
    $region63: #{tpu_custom_call.1} parent=1 // pred_check_branch
      %8394 = sbr.rel (0) target = $region65
    $region64: #{tpu_custom_call.1} parent=1 // pred_region
      %8395 = dma.done [#allocation4], 128
    $region65: #{tpu_custom_call.1} parent=1 // pred_fallthru
      _
    %8396 = vsyncpa [#allocation3], 1
    %8397 = vsyncpa [#allocation6], 1
    %8398 = vsyncpa [#allocation9], 1
    %8399 = vsyncpa [#allocation12], 1
    %8400 = vsyncpa [#allocation4], 1

</llo_original>
